<compile_context>
chip_gen: v5e
topology: v5e:2x2
jax: 0.10.0
libtpu: 0.0.40
codegen_flags: <defaults>
</compile_context>

<pallas_src>
import functools
import math

import jax
import jax.numpy as jnp
from jax.experimental import pallas as pl
from jax.experimental.pallas import tpu as pltpu

N_HEAD = 8                  # MultiheadAttention default
LN_EPS = 1e-5               # nn.LayerNorm default eps
LANE = 128                  # TPU lane width: per-head blocks are padded to this
NEG_INF = -1e30             # finite "minus infinity" for masked keys / softmax init
MIB = 1024 * 1024


# --------------------------------------------------------------------------
# Per-generation budgets and tiling helpers
# --------------------------------------------------------------------------

def _tpu_budget():
    """(vmem_limit_bytes, row_tile_target, seq_tile_target) per TPU generation.

    128 MiB parts (v5e / v6e): ~96 MiB scoped VMEM and 512-row tiles.
    64 MiB parts (v7x) or unknown: stay at ~48 MiB and 256-row tiles.
    """
    vmem_cap = None
    try:
        info = pltpu.get_tpu_info()
        vmem_cap = getattr(info, "vmem_capacity_bytes", None)
    except Exception:
        vmem_cap = None
    if vmem_cap is not None and vmem_cap >= 128 * MIB:
        return 96 * MIB, 512, 512
    return 48 * MIB, 256, 256


def _round_up(n, m):
    return ((n + m - 1) // m) * m


def _pick_seq_tile(s, target):
    """Sequence tile: a multiple of 8 (<= target) minimizing padding of s."""
    s8 = _round_up(s, 8)
    if s8 <= target:
        return s8
    for t in range(target, 7, -8):
        if s8 % t == 0:
            return t
    return target                     # no divisor: pad s up to a multiple of `target`


def _pick_row_tile(m, seq_tile, target):
    """Row tile for the flattened (B * S_pad) axis: a multiple of seq_tile dividing m."""
    for k in range(max(target // seq_tile, 1), 1, -1):
        if m % (k * seq_tile) == 0:
            return k * seq_tile
    return seq_tile


def _row_spec(tm, ncols):
    return pl.BlockSpec((tm, ncols), lambda i: (i, 0))


def _const_spec(shape):
    """Full-array block whose index never changes: single-buffer it (halves VMEM cost)."""
    nd = len(shape)
    index_map = lambda i: (0,) * nd
    try:
        return pl.BlockSpec(shape, index_map, pipeline_mode=pl.Buffered(buffer_count=1))
    except TypeError:                 # older JAX without pipeline_mode support
        return pl.BlockSpec(shape, index_map)


def _cparams(vmem_limit, *semantics):
    return pltpu.CompilerParams(dimension_semantics=semantics,
                                vmem_limit_bytes=vmem_limit)


# --------------------------------------------------------------------------
# In-kernel math helpers (f32 unless feeding the MXU)
# --------------------------------------------------------------------------

def _layer_norm(x, g, b):
    mu = jnp.mean(x, axis=-1, keepdims=True)
    var = jnp.mean((x - mu) ** 2, axis=-1, keepdims=True)
    return (x - mu) * jax.lax.rsqrt(var + LN_EPS) * g + b


def _gelu_exact(x):
    return 0.5 * x * (1.0 + jax.lax.erf(x * (1.0 / math.sqrt(2.0))))


def _tail_math(x, ctx, wo, g1, b1, wl, bl, g2, b2):
    """out_proj + residual + LN1 + (GELU(x) + Linear(x)) + LN2."""
    attn = jnp.dot(ctx, wo, preferred_element_type=jnp.float32)      # bf16 x bf16 -> f32
    x1 = x + attn
    xn = _layer_norm(x1, g1, b1)
    res = jnp.dot(xn.astype(jnp.bfloat16), wl,
                  preferred_element_type=jnp.float32) + bl
    x2 = _gelu_exact(xn) + res                                       # x = GELU(x) + Linear(x)
    return _layer_norm(x2, g2, b2)


# --------------------------------------------------------------------------
# Pallas kernels
# --------------------------------------------------------------------------

def _in_qkv_kernel(x_ref, w_in_ref, b_in_ref, w_qkv_ref, h_ref, qkv_ref):
    # linear_in (f32 accumulate, bias) fused with layer-0's fused/padded QKV projection.
    h = jnp.dot(x_ref[...].astype(jnp.bfloat16), w_in_ref[...],
                preferred_element_type=jnp.float32) + b_in_ref[...]
    h_ref[...] = h
    qkv_ref[...] = jnp.dot(h.astype(jnp.bfloat16), w_qkv_ref[...],
                           preferred_element_type=jnp.float32).astype(qkv_ref.dtype)


def _tail_qkv_kernel(x_ref, ctx_ref, wo_ref, g1_ref, b1_ref, wl_ref, bl_ref,
                     g2_ref, b2_ref, w_qkv_ref, h_ref, qkv_ref):
    # Block tail fused with the NEXT layer's QKV projection: the hidden state never
    # round-trips HBM between a block tail and the following matmul.
    h = _tail_math(x_ref[...], ctx_ref[...], wo_ref[...], g1_ref[...], b1_ref[...],
                   wl_ref[...], bl_ref[...], g2_ref[...], b2_ref[...])
    h_ref[...] = h
    qkv_ref[...] = jnp.dot(h.astype(jnp.bfloat16), w_qkv_ref[...],
                           preferred_element_type=jnp.float32).astype(qkv_ref.dtype)


def _tail_out_kernel(x_ref, ctx_ref, wo_ref, g1_ref, b1_ref, wl_ref, bl_ref,
                     g2_ref, b2_ref, w_out_ref, b_out_ref, o_ref):
    # Last layer: block tail fused with the final output projection (bias=True).
    h = _tail_math(x_ref[...], ctx_ref[...], wo_ref[...], g1_ref[...], b1_ref[...],
                   wl_ref[...], bl_ref[...], g2_ref[...], b2_ref[...])
    o_ref[...] = jnp.dot(h.astype(jnp.bfloat16), w_out_ref[...],
                         preferred_element_type=jnp.float32) + b_out_ref[...]


def _flash_attn_kernel(k_ref, q_ref, v_ref, o_ref, m_sc, l_sc, acc_sc, *,
                       scale, seq_real, tk, masked):
    # One (batch, head, q-tile) flash-attention block per KV step: online softmax with
    # m/l/acc resident in VMEM scratch, so VMEM stays O(tq*tk) regardless of S.
    ki = pl.program_id(3)

    @pl.when(ki == 0)
    def _init():
        m_sc[...] = jnp.full(m_sc.shape, NEG_INF, jnp.float32)
        l_sc[...] = jnp.zeros(l_sc.shape, jnp.float32)
        acc_sc[...] = jnp.zeros(acc_sc.shape, jnp.float32)

    # Reference Attention.forward is called as (k=q_proj, q=k_proj, v=v_proj), so the
    # score matrix is  scale * (k_proj @ q_proj^T): k_proj rows index the output rows.
    kb = k_ref[0] * scale                                  # fold 1/sqrt(D) into K rows
    s = jax.lax.dot_general(kb, q_ref[0], (((1,), (1,)), ((), ())),
                            preferred_element_type=jnp.float32)       # (tq, tk)
    if masked:                                             # static: only when S was padded
        col = ki * tk + jax.lax.broadcasted_iota(jnp.int32, s.shape, 1)
        s = jnp.where(col < seq_real, s, NEG_INF)

    m_prev = m_sc[...]
    m_new = jnp.maximum(m_prev, jnp.max(s, axis=-1, keepdims=True))
    alpha = jnp.exp(m_prev - m_new)
    p = jnp.exp(s - m_new)
    l_sc[...] = alpha * l_sc[...] + jnp.sum(p, axis=-1, keepdims=True)
    acc_sc[...] = alpha * acc_sc[...] + jnp.dot(p.astype(jnp.bfloat16), v_ref[0],
                                                preferred_element_type=jnp.float32)
    m_sc[...] = m_new

    @pl.when(ki == pl.num_programs(3) - 1)
    def _finalize():
        o_ref[0] = (acc_sc[...] *
                    pl.reciprocal(l_sc[...], approx=True)).astype(o_ref.dtype)


# --------------------------------------------------------------------------
# pallas_call wrappers
# --------------------------------------------------------------------------

def fused_in_qkv(x2d, w_in, b_in, w_qkv, tm, vmem_limit):
    m, n_in = x2d.shape
    e = w_in.shape[1]
    e3p = w_qkv.shape[1]
    cost = pl.CostEstimate(
        flops=2 * m * n_in * e + 2 * m * e * e3p,
        transcendentals=0,
        bytes_accessed=(m * n_in * 4 + n_in * e * 2 + e * 4 + e * e3p * 2
                        + m * e * 4 + m * e3p * 2))
    return pl.pallas_call(
        _in_qkv_kernel,
        grid=(m // tm,),
        in_specs=[_row_spec(tm, n_in),
                  _const_spec((n_in, e)),
                  _const_spec((1, e)),
                  _const_spec((e, e3p))],
        out_specs=(_row_spec(tm, e), _row_spec(tm, e3p)),
        out_shape=(jax.ShapeDtypeStruct((m, e), jnp.float32),
                   jax.ShapeDtypeStruct((m, e3p), jnp.bfloat16)),
        compiler_params=_cparams(vmem_limit, "parallel"),
        cost_estimate=cost,
    )(x2d, w_in, b_in.reshape(1, e), w_qkv)


def flash_attention(qkv, n_head, d_pad, scale, tq, tk, seq_real, vmem_limit):
    b, s_pad, _ = qkv.shape
    ep = n_head * d_pad
    nq, nk = s_pad // tq, s_pad // tk
    masked = seq_real != s_pad
    kernel = functools.partial(_flash_attn_kernel, scale=scale, seq_real=seq_real,
                               tk=tk, masked=masked)
    cost = pl.CostEstimate(
        flops=4 * b * n_head * s_pad * s_pad * d_pad,
        transcendentals=2 * b * n_head * s_pad * s_pad,
        bytes_accessed=b * s_pad * ep * 2 * (2 + 2 * nq))
    # q/k/v are three lane-aligned, head-padded views into the SAME fused qkv slab:
    # last-axis blocks of size Dp at block index h (q), n_head+h (k), 2*n_head+h (v).
    # B, H and the q-tile axis are all "parallel" so both v7x TensorCores get work
    # even when B == 1; the KV axis is the "arbitrary" reduction axis.
    return pl.pallas_call(
        kernel,
        grid=(b, n_head, nq, nk),
        in_specs=[
            pl.BlockSpec((1, tq, d_pad), lambda bi, h, qi, ki: (bi, qi, n_head + h)),
            pl.BlockSpec((1, tk, d_pad), lambda bi, h, qi, ki: (bi, ki, h)),
            pl.BlockSpec((1, tk, d_pad), lambda bi, h, qi, ki: (bi, ki, 2 * n_head + h)),
        ],
        out_specs=pl.BlockSpec((1, tq, d_pad), lambda bi, h, qi, ki: (bi, qi, h)),
        out_shape=jax.ShapeDtypeStruct((b, s_pad, ep), jnp.bfloat16),
        scratch_shapes=[pltpu.VMEM((tq, 1), jnp.float32),
                        pltpu.VMEM((tq, 1), jnp.float32),
                        pltpu.VMEM((tq, d_pad), jnp.float32)],
        compiler_params=_cparams(vmem_limit, "parallel", "parallel", "parallel",
                                 "arbitrary"),
        cost_estimate=cost,
    )(qkv, qkv, qkv)


def fused_tail_qkv(h2d, ctx2d, layer, w_qkv_next, tm, vmem_limit):
    m, e = h2d.shape
    ep = ctx2d.shape[1]
    e3p = w_qkv_next.shape[1]
    row_e = _row_spec(tm, e)
    cost = pl.CostEstimate(
        flops=2 * m * (ep * e + e * e + e * e3p) + 20 * m * e,
        transcendentals=m * e,
        bytes_accessed=(m * e * 4 + m * ep * 2 + ep * e * 2 + e * e * 2 + e * e3p * 2
                        + 6 * e * 4 + m * e * 4 + m * e3p * 2))
    return pl.pallas_call(
        _tail_qkv_kernel,
        grid=(m // tm,),
        in_specs=[row_e, _row_spec(tm, ep),
                  _const_spec((ep, e)),
                  _const_spec((1, e)), _const_spec((1, e)),
                  _const_spec((e, e)), _const_spec((1, e)),
                  _const_spec((1, e)), _const_spec((1, e)),
                  _const_spec((e, e3p))],
        out_specs=(row_e, _row_spec(tm, e3p)),
        out_shape=(jax.ShapeDtypeStruct((m, e), jnp.float32),
                   jax.ShapeDtypeStruct((m, e3p), jnp.bfloat16)),
        compiler_params=_cparams(vmem_limit, "parallel"),
        cost_estimate=cost,
    )(h2d, ctx2d, layer["wo_p"],
      layer["g1"].reshape(1, e), layer["b1"].reshape(1, e),
      layer["wl"], layer["bl"].reshape(1, e),
      layer["g2"].reshape(1, e), layer["b2"].reshape(1, e),
      w_qkv_next)


def fused_tail_out(h2d, ctx2d, layer, w_out, b_out, tm, vmem_limit):
    m, e = h2d.shape
    ep = ctx2d.shape[1]
    n_out = w_out.shape[1]
    cost = pl.CostEstimate(
        flops=2 * m * (ep * e + e * e + e * n_out) + 20 * m * e,
        transcendentals=m * e,
        bytes_accessed=(m * e * 4 + m * ep * 2 + ep * e * 2 + e * e * 2
                        + e * n_out * 2 + 6 * e * 4 + m * n_out * 4))
    return pl.pallas_call(
        _tail_out_kernel,
        grid=(m // tm,),
        in_specs=[_row_spec(tm, e), _row_spec(tm, ep),
                  _const_spec((ep, e)),
                  _const_spec((1, e)), _const_spec((1, e)),
                  _const_spec((e, e)), _const_spec((1, e)),
                  _const_spec((1, e)), _const_spec((1, e)),
                  _const_spec((e, n_out)), _const_spec((1, n_out))],
        out_specs=_row_spec(tm, n_out),
        out_shape=jax.ShapeDtypeStruct((m, n_out), jnp.float32),
        compiler_params=_cparams(vmem_limit, "parallel"),
        cost_estimate=cost,
    )(h2d, ctx2d, layer["wo_p"],
      layer["g1"].reshape(1, e), layer["b1"].reshape(1, e),
      layer["wl"], layer["bl"].reshape(1, e),
      layer["g2"].reshape(1, e), layer["b2"].reshape(1, e),
      w_out, b_out.reshape(1, n_out))


# --------------------------------------------------------------------------
# Full Transformer forward (takes pack_params() output)
# --------------------------------------------------------------------------

def transformer_forward(x, params, n_head=N_HEAD):
    b, s, _ = x.shape
    e = params["w_in"].shape[1]
    layers = params["layers"]
    assert layers, "need at least one transformer block"
    assert e % n_head == 0
    d = e // n_head
    ep3 = layers[0]["w_qkv_p"].shape[1]
    ep = ep3 // 3
    d_pad = ep // n_head
    scale = 1.0 / math.sqrt(d)                 # reference scale uses the TRUE head dim

    vmem_limit, row_target, seq_target = _tpu_budget()
    tq = _pick_seq_tile(s, seq_target)
    tk = tq                                    # padding < tk -> every KV tile has a real key
    s_pad = _round_up(s, tq)
    m = b * s_pad
    tm = _pick_row_tile(m, tq, row_target)

    if s_pad != s:
        x = jnp.pad(x, ((0, 0), (0, s_pad - s), (0, 0)))
    x2d = x.reshape(m, -1)

    # linear_in fused with layer-0's QKV projection (hidden state read from HBM once).
    h, qkv = fused_in_qkv(x2d, params["w_in"], params["b_in"],
                          layers[0]["w_qkv_p"], tm, vmem_limit)

    out = None
    for li, layer in enumerate(layers):
        ctx = flash_attention(qkv.reshape(b, s_pad, ep3), n_head, d_pad, scale,
                              tq, tk, s, vmem_limit)
        ctx2d = ctx.reshape(m, ep)
        if li + 1 < len(layers):
            h, qkv = fused_tail_qkv(h, ctx2d, layer, layers[li + 1]["w_qkv_p"],
                                    tm, vmem_limit)
        else:
            out = fused_tail_out(h, ctx2d, layer, params["w_out"], params["b_out"],
                                 tm, vmem_limit)
    out = out.reshape(b, s_pad, -1)
    return out[:, :s, :] if s_pad != s else out


# --------------------------------------------------------------------------
# Parameters: raw f32 init (PyTorch-shaped), kernel-ready packing, pure-JAX reference
# --------------------------------------------------------------------------

def init_params(key, n_in, n_out, n_model, num_layer):
    """Deterministic f32 parameters; Linear weights stored as (in_features, out_features)."""
    def dense(k, fan_in, fan_out):
        return jax.random.normal(k, (fan_in, fan_out), jnp.float32) / math.sqrt(fan_in)

    keys = list(jax.random.split(key, 4 + 7 * num_layer))
    p = {
        "w_in": dense(keys[0], n_in, n_model),
        "b_in": 0.01 * jax.random.normal(keys[1], (n_model,), jnp.float32),
        "w_out": dense(keys[2], n_model, n_out),
        "b_out": 0.01 * jax.random.normal(keys[3], (n_out,), jnp.float32),
        "layers": [],
    }
    for li in range(num_layer):
        k = keys[4 + 7 * li: 4 + 7 * (li + 1)]
        p["layers"].append({
            "wq": dense(k[0], n_model, n_model),
            "wk": dense(k[1], n_model, n_model),
            "wv": dense(k[2], n_model, n_model),
            "wo": dense(k[3], n_model, n_model),
            "wl": dense(k[4], n_model, n_model),
            "bl": 0.01 * jax.random.normal(k[5], (n_model,), jnp.float32),
            "g1": jnp.ones((n_model,), jnp.float32),
            "b1": jnp.zeros((n_model,), jnp.float32),
            "g2": jnp.ones((n_model,), jnp.float32),
            "b2": jnp.zeros((n_model,), jnp.float32),
        })
    return p


def pack_params(params, n_head=N_HEAD):
    """Kernel-ready parameters: bf16 matmul weights, one fused (E, 3*H*Dp) QKV weight with
    each head's D columns zero-padded to Dp (lane-aligned per-head BlockSpec blocks), and
    the out_proj weight row-padded to match.  Biases / LayerNorm params stay f32."""
    e = params["w_in"].shape[1]
    d = e // n_head
    d_pad = _round_up(d, LANE)

    def pad_head_cols(w):                      # (E, E) -> (E, H*Dp)
        w3 = w.reshape(e, n_head, d)
        return jnp.pad(w3, ((0, 0), (0, 0), (0, d_pad - d))).reshape(e, n_head * d_pad)

    def pad_head_rows(w):                      # (E, E) -> (H*Dp, E)
        w3 = w.reshape(n_head, d, e)
        return jnp.pad(w3, ((0, 0), (0, d_pad - d), (0, 0))).reshape(n_head * d_pad, e)

    bf16 = lambda a: a.astype(jnp.bfloat16)
    packed = {
        "w_in": bf16(params["w_in"]),
        "b_in": params["b_in"],
        "w_out": bf16(params["w_out"]),
        "b_out": params["b_out"],
        "layers": [],
    }
    for layer in params["layers"]:
        packed["layers"].append({
            "w_qkv_p": bf16(jnp.concatenate([pad_head_cols(layer["wq"]),
                                             pad_head_cols(layer["wk"]),
                                             pad_head_cols(layer["wv"])], axis=1)),
            "wo_p": bf16(pad_head_rows(layer["wo"])),
            "wl": bf16(layer["wl"]),
            "bl": layer["bl"],
            "g1": layer["g1"], "b1": layer["b1"],
            "g2": layer["g2"], "b2": layer["b2"],
        })
    return packed


def transformer_reference(x, params, n_head=N_HEAD):
    """Pure-JAX f32 reference with the exact PyTorch-module semantics (incl. the k/q swap)."""
    bsz, s, _ = x.shape
    e = params["w_in"].shape[1]
    d = e // n_head
    split = lambda t: t.reshape(bsz, s, n_head, d).transpose(0, 2, 1, 3)
    h = x @ params["w_in"] + params["b_in"]
    for layer in params["layers"]:
        qh = split(h @ layer["wq"])
        kh = split(h @ layer["wk"])
        vh = split(h @ layer["wv"])
        scores = jnp.einsum("bhid,bhjd->bhij", kh, qh) / math.sqrt(d)
        ctx = jnp.einsum("bhij,bhjd->bhid", jax.nn.softmax(scores, axis=-1), vh)
        ctx = ctx.transpose(0, 2, 1, 3).reshape(bsz, s, e)
        x1 = h + ctx @ layer["wo"]
        xn = _layer_norm(x1, layer["g1"], layer["b1"])
        x2 = _gelu_exact(xn) + (xn @ layer["wl"] + layer["bl"])
        h = _layer_norm(x2, layer["g2"], layer["b2"])
    return h @ params["w_out"] + params["b_out"]


if __name__ == "__main__":
    bsz, seq = 2, 16
    n_in, n_model, n_out, num_layer = 16, 128, 8, 2   # n_model % n_head == 0

    key = jax.random.PRNGKey(0)
    k_x, k_p = jax.random.split(key)
    x = jax.random.normal(k_x, (bsz, seq, n_in), jnp.float32)
    raw_params = init_params(k_p, n_in, n_out, n_model, num_layer)
    packed_params = pack_params(raw_params, N_HEAD)

    fwd = jax.jit(transformer_forward)
    out = jax.block_until_ready(fwd(x, packed_params))
    assert out.shape == (bsz, seq, n_out), out.shape

    # Sanity check against a pure-JAX f32 reference (bf16 MXU operands + approximate
    # softmax reciprocal introduce a small, bounded drift).
    ref = transformer_reference(x, raw_params, N_HEAD)
    max_err = float(jnp.max(jnp.abs(out - ref)))
    assert max_err < 0.25, f"kernel vs f32 reference max abs err = {max_err}"
    print("KERNEL_OK")
</pallas_src>

<mosaic_0001>
module attributes {stable_mosaic.version = 11 : i64} {
  func.func @_flash_attn_kernel(%arg0: i32, %arg1: i32, %arg2: i32, %arg3: i32, %arg4: memref<1x16x128xbf16, #tpu.memory_space<vmem>>, %arg5: memref<1x16x128xbf16, #tpu.memory_space<vmem>>, %arg6: memref<1x16x128xbf16, #tpu.memory_space<vmem>>, %arg7: memref<1x16x128xbf16, #tpu.memory_space<vmem>>, %arg8: memref<16x1xf32, #tpu.memory_space<vmem>>, %arg9: memref<16x1xf32, #tpu.memory_space<vmem>>, %arg10: memref<16x128xf32, #tpu.memory_space<vmem>>) attributes {dimension_semantics = [#tpu.dimension_semantics<parallel>, #tpu.dimension_semantics<parallel>, #tpu.dimension_semantics<parallel>, #tpu.dimension_semantics<arbitrary>], iteration_bounds = array<i64: 2, 8, 1, 1>, scalar_prefetch = 0 : i64, scratch_operands = 3 : i64, tpu.core_type = #tpu.core_type<tc>, window_params = [{transform_indices = @transform_0, window_bounds = array<i64: 1, 16, 128>}, {transform_indices = @transform_1, window_bounds = array<i64: 1, 16, 128>}, {transform_indices = @transform_2, window_bounds = array<i64: 1, 16, 128>}, {transform_indices = @transform_3, window_bounds = array<i64: 1, 16, 128>}]} {
    %c0_i32 = arith.constant 0 : i32
    %0 = arith.cmpi eq, %arg3, %c0_i32 : i32
    %1 = arith.extui %0 : i1 to i32
    %c0_i32_0 = arith.constant 0 : i32
    %2 = arith.cmpi ne, %1, %c0_i32_0 : i32
    scf.if %2 {
      %cst_27 = arith.constant -1.000000e+30 : f32
      %38 = vector.broadcast %cst_27 : f32 to vector<16x1xf32>
      %c0_28 = arith.constant 0 : index
      %c0_29 = arith.constant 0 : index
      %39 = vector.load %arg8[%c0_28, %c0_29] : memref<16x1xf32, #tpu.memory_space<vmem>>, vector<16x1xf32>
      tpu.vector_store %arg8[%c0_28, %c0_29], %38 {strides = array<i32>} : memref<16x1xf32, #tpu.memory_space<vmem>>, vector<16x1xf32>,
      %cst_30 = arith.constant 0.000000e+00 : f32
      %40 = vector.broadcast %cst_30 : f32 to vector<16x1xf32>
      %c0_31 = arith.constant 0 : index
      %c0_32 = arith.constant 0 : index
      %41 = vector.load %arg9[%c0_31, %c0_32] : memref<16x1xf32, #tpu.memory_space<vmem>>, vector<16x1xf32>
      tpu.vector_store %arg9[%c0_31, %c0_32], %40 {strides = array<i32>} : memref<16x1xf32, #tpu.memory_space<vmem>>, vector<16x1xf32>,
      %cst_33 = arith.constant 0.000000e+00 : f32
      %42 = vector.broadcast %cst_33 : f32 to vector<16x128xf32>
      %c0_34 = arith.constant 0 : index
      %c0_35 = arith.constant 0 : index
      %43 = vector.load %arg10[%c0_34, %c0_35] : memref<16x128xf32, #tpu.memory_space<vmem>>, vector<16x128xf32>
      tpu.vector_store %arg10[%c0_34, %c0_35], %42 {strides = array<i32>} : memref<16x128xf32, #tpu.memory_space<vmem>>, vector<16x128xf32>,
    } else {
    }
    %c0 = arith.constant 0 : index
    %c0_1 = arith.constant 0 : index
    %c0_2 = arith.constant 0 : index
    %3 = vector.load %arg4[%c0, %c0_1, %c0_2] : memref<1x16x128xbf16, #tpu.memory_space<vmem>>, vector<1x16x128xbf16>
    %4 = vector.shape_cast %3 : vector<1x16x128xbf16> to vector<16x128xbf16>
    %cst = arith.constant 2.500000e-01 : bf16
    %5 = vector.broadcast %cst : bf16 to vector<16x128xbf16>
    %6 = arith.mulf %4, %5 : vector<16x128xbf16>
    %c0_3 = arith.constant 0 : index
    %c0_4 = arith.constant 0 : index
    %c0_5 = arith.constant 0 : index
    %7 = vector.load %arg5[%c0_3, %c0_4, %c0_5] : memref<1x16x128xbf16, #tpu.memory_space<vmem>>, vector<1x16x128xbf16>
    %8 = vector.shape_cast %7 : vector<1x16x128xbf16> to vector<16x128xbf16>
    %cst_6 = arith.constant dense<0.000000e+00> : vector<16x16xf32>
    %9 = tpu.matmul %6, %8, %cst_6 {dimension_numbers = #tpu.dot_dimension_numbers<[1], [1], [0], [0], [0, 0, 1, 0], [], []>} : vector<16x128xbf16>, vector<16x128xbf16>, vector<16x16xf32> -> vector<16x16xf32>
    %c0_7 = arith.constant 0 : index
    %c0_8 = arith.constant 0 : index
    %10 = vector.load %arg8[%c0_7, %c0_8] : memref<16x1xf32, #tpu.memory_space<vmem>>, vector<16x1xf32>
    %cst_9 = arith.constant dense<0xFF800000> : vector<16xf32>
    %11 = vector.multi_reduction <maximumf>, %9, %cst_9 [1] : vector<16x16xf32> to vector<16xf32>
    %12 = vector.shape_cast %11 : vector<16xf32> to vector<16x1xf32>
    %13 = arith.maximumf %10, %12 : vector<16x1xf32>
    %14 = arith.subf %10, %13 : vector<16x1xf32>
    %15 = math.exp %14 : vector<16x1xf32>
    %16 = vector.broadcast %13 : vector<16x1xf32> to vector<16x16xf32>
    %17 = arith.subf %9, %16 : vector<16x16xf32>
    %18 = math.exp %17 : vector<16x16xf32>
    %c0_10 = arith.constant 0 : index
    %c0_11 = arith.constant 0 : index
    %19 = vector.load %arg9[%c0_10, %c0_11] : memref<16x1xf32, #tpu.memory_space<vmem>>, vector<16x1xf32>
    %20 = arith.mulf %15, %19 : vector<16x1xf32>
    %cst_12 = arith.constant dense<0.000000e+00> : vector<16xf32>
    %21 = vector.multi_reduction <add>, %18, %cst_12 [1] : vector<16x16xf32> to vector<16xf32>
    %22 = vector.shape_cast %21 : vector<16xf32> to vector<16x1xf32>
    %23 = arith.addf %20, %22 : vector<16x1xf32>
    %c0_13 = arith.constant 0 : index
    %c0_14 = arith.constant 0 : index
    %24 = vector.load %arg9[%c0_13, %c0_14] : memref<16x1xf32, #tpu.memory_space<vmem>>, vector<16x1xf32>
    tpu.vector_store %arg9[%c0_13, %c0_14], %23 {strides = array<i32>} : memref<16x1xf32, #tpu.memory_space<vmem>>, vector<16x1xf32>,
    %c0_15 = arith.constant 0 : index
    %c0_16 = arith.constant 0 : index
    %25 = vector.load %arg10[%c0_15, %c0_16] : memref<16x128xf32, #tpu.memory_space<vmem>>, vector<16x128xf32>
    %26 = vector.broadcast %15 : vector<16x1xf32> to vector<16x128xf32>
    %27 = arith.mulf %26, %25 : vector<16x128xf32>
    %28 = arith.truncf %18 : vector<16x16xf32> to vector<16x16xbf16>
    %c0_17 = arith.constant 0 : index
    %c0_18 = arith.constant 0 : index
    %c0_19 = arith.constant 0 : index
    %29 = vector.load %arg6[%c0_17, %c0_18, %c0_19] : memref<1x16x128xbf16, #tpu.memory_space<vmem>>, vector<1x16x128xbf16>
    %30 = vector.shape_cast %29 : vector<1x16x128xbf16> to vector<16x128xbf16>
    %cst_20 = arith.constant dense<0.000000e+00> : vector<16x128xf32>
    %31 = tpu.matmul %28, %30, %cst_20 {dimension_numbers = #tpu.dot_dimension_numbers<[1], [0], [0], [1], [0, 0, 1, 1], [], []>} : vector<16x16xbf16>, vector<16x128xbf16>, vector<16x128xf32> -> vector<16x128xf32>
    %32 = arith.addf %27, %31 : vector<16x128xf32>
    %c0_21 = arith.constant 0 : index
    %c0_22 = arith.constant 0 : index
    %33 = vector.load %arg10[%c0_21, %c0_22] : memref<16x128xf32, #tpu.memory_space<vmem>>, vector<16x128xf32>
    tpu.vector_store %arg10[%c0_21, %c0_22], %32 {strides = array<i32>} : memref<16x128xf32, #tpu.memory_space<vmem>>, vector<16x128xf32>,
    %c0_23 = arith.constant 0 : index
    %c0_24 = arith.constant 0 : index
    %34 = vector.load %arg8[%c0_23, %c0_24] : memref<16x1xf32, #tpu.memory_space<vmem>>, vector<16x1xf32>
    tpu.vector_store %arg8[%c0_23, %c0_24], %13 {strides = array<i32>} : memref<16x1xf32, #tpu.memory_space<vmem>>, vector<16x1xf32>,
    %c0_i32_25 = arith.constant 0 : i32
    %35 = arith.cmpi eq, %arg3, %c0_i32_25 : i32
    %36 = arith.extui %35 : i1 to i32
    %c0_i32_26 = arith.constant 0 : i32
    %37 = arith.cmpi ne, %36, %c0_i32_26 : i32
    scf.if %37 {
      %c0_27 = arith.constant 0 : index
      %c0_28 = arith.constant 0 : index
      %38 = vector.load %arg10[%c0_27, %c0_28] : memref<16x128xf32, #tpu.memory_space<vmem>>, vector<16x128xf32>
      %c0_29 = arith.constant 0 : index
      %c0_30 = arith.constant 0 : index
      %39 = vector.load %arg9[%c0_29, %c0_30] : memref<16x1xf32, #tpu.memory_space<vmem>>, vector<16x1xf32>
      %40 = tpu.reciprocal %39 {approx = true} : vector<16x1xf32> -> vector<16x1xf32>
      %41 = vector.broadcast %40 : vector<16x1xf32> to vector<16x128xf32>
      %42 = arith.mulf %38, %41 : vector<16x128xf32>
      %43 = arith.truncf %42 : vector<16x128xf32> to vector<16x128xbf16>
      %c0_31 = arith.constant 0 : index
      %c0_32 = arith.constant 0 : index
      %c0_33 = arith.constant 0 : index
      %44 = vector.load %arg7[%c0_31, %c0_32, %c0_33] : memref<1x16x128xbf16, #tpu.memory_space<vmem>>, vector<1x16x128xbf16>
      %45 = vector.shape_cast %44 : vector<1x16x128xbf16> to vector<16x128xbf16>
      %46 = vector.shape_cast %43 : vector<16x128xbf16> to vector<1x16x128xbf16>
      tpu.vector_store %arg7[%c0_31, %c0_32, %c0_33], %46 {strides = array<i32>} : memref<1x16x128xbf16, #tpu.memory_space<vmem>>, vector<1x16x128xbf16>,
    } else {
    }
    return
  }
  func.func @transform_0(%arg0: i32, %arg1: i32, %arg2: i32, %arg3: i32) -> (i32, i32, i32) {
    %c8_i32 = arith.constant 8 : i32
    %0 = arith.addi %c8_i32, %arg1 : i32
    %c0_i32 = arith.constant 0 : i32
    return %arg0, %arg2, %0 : i32, i32, i32
  }
  func.func @transform_1(%arg0: i32, %arg1: i32, %arg2: i32, %arg3: i32) -> (i32, i32, i32) {
    %c0_i32 = arith.constant 0 : i32
    return %arg0, %arg3, %arg1 : i32, i32, i32
  }
  func.func @transform_2(%arg0: i32, %arg1: i32, %arg2: i32, %arg3: i32) -> (i32, i32, i32) {
    %c16_i32 = arith.constant 16 : i32
    %0 = arith.addi %c16_i32, %arg1 : i32
    %c0_i32 = arith.constant 0 : i32
    return %arg0, %arg3, %0 : i32, i32, i32
  }
  func.func @transform_3(%arg0: i32, %arg1: i32, %arg2: i32, %arg3: i32) -> (i32, i32, i32) {
    %c0_i32 = arith.constant 0 : i32
    return %arg0, %arg2, %arg1 : i32, i32, i32
  }
}

module attributes {stable_mosaic.version = 11 : i64} {
  func.func @_in_qkv_kernel(%arg0: i32, %arg1: memref<32x16xf32, #tpu.memory_space<vmem>>, %arg2: memref<16x128xbf16, #tpu.memory_space<vmem>>, %arg3: memref<1x128xf32, #tpu.memory_space<vmem>>, %arg4: memref<128x3072xbf16, #tpu.memory_space<vmem>>, %arg5: memref<32x128xf32, #tpu.memory_space<vmem>>, %arg6: memref<32x3072xbf16, #tpu.memory_space<vmem>>) attributes {dimension_semantics = [#tpu.dimension_semantics<parallel>], iteration_bounds = array<i64: 1>, scalar_prefetch = 0 : i64, scratch_operands = 0 : i64, tpu.core_type = #tpu.core_type<tc>, window_params = [{transform_indices = @transform_0, window_bounds = array<i64: 32, 16>}, {pipeline_mode = #tpu.pipeline_mode<synchronous>, transform_indices = @transform_1, window_bounds = array<i64: 16, 128>}, {pipeline_mode = #tpu.pipeline_mode<synchronous>, transform_indices = @transform_2, window_bounds = array<i64: 1, 128>}, {pipeline_mode = #tpu.pipeline_mode<synchronous>, transform_indices = @transform_3, window_bounds = array<i64: 128, 3072>}, {transform_indices = @transform_4, window_bounds = array<i64: 32, 128>}, {transform_indices = @transform_5, window_bounds = array<i64: 32, 3072>}]} {
    %c0 = arith.constant 0 : index
    %c0_0 = arith.constant 0 : index
    %0 = vector.load %arg1[%c0, %c0_0] : memref<32x16xf32, #tpu.memory_space<vmem>>, vector<32x16xf32>
    %1 = arith.truncf %0 : vector<32x16xf32> to vector<32x16xbf16>
    %c0_1 = arith.constant 0 : index
    %c0_2 = arith.constant 0 : index
    %2 = vector.load %arg2[%c0_1, %c0_2] : memref<16x128xbf16, #tpu.memory_space<vmem>>, vector<16x128xbf16>
    %cst = arith.constant dense<0.000000e+00> : vector<32x128xf32>
    %3 = tpu.matmul %1, %2, %cst {dimension_numbers = #tpu.dot_dimension_numbers<[1], [0], [0], [1], [0, 0, 1, 1], [], []>} : vector<32x16xbf16>, vector<16x128xbf16>, vector<32x128xf32> -> vector<32x128xf32>
    %c0_3 = arith.constant 0 : index
    %c0_4 = arith.constant 0 : index
    %4 = vector.load %arg3[%c0_3, %c0_4] : memref<1x128xf32, #tpu.memory_space<vmem>>, vector<1x128xf32>
    %5 = vector.broadcast %4 : vector<1x128xf32> to vector<32x128xf32>
    %6 = arith.addf %3, %5 : vector<32x128xf32>
    %c0_5 = arith.constant 0 : index
    %c0_6 = arith.constant 0 : index
    %7 = vector.load %arg5[%c0_5, %c0_6] : memref<32x128xf32, #tpu.memory_space<vmem>>, vector<32x128xf32>
    tpu.vector_store %arg5[%c0_5, %c0_6], %6 {strides = array<i32>} : memref<32x128xf32, #tpu.memory_space<vmem>>, vector<32x128xf32>,
    %8 = arith.truncf %6 : vector<32x128xf32> to vector<32x128xbf16>
    %c0_7 = arith.constant 0 : index
    %c0_8 = arith.constant 0 : index
    %9 = vector.load %arg4[%c0_7, %c0_8] : memref<128x3072xbf16, #tpu.memory_space<vmem>>, vector<128x3072xbf16>
    %cst_9 = arith.constant dense<0.000000e+00> : vector<32x3072xf32>
    %10 = tpu.matmul %8, %9, %cst_9 {dimension_numbers = #tpu.dot_dimension_numbers<[1], [0], [0], [1], [0, 0, 1, 1], [], []>} : vector<32x128xbf16>, vector<128x3072xbf16>, vector<32x3072xf32> -> vector<32x3072xf32>
    %11 = arith.truncf %10 : vector<32x3072xf32> to vector<32x3072xbf16>
    %c0_10 = arith.constant 0 : index
    %c0_11 = arith.constant 0 : index
    %12 = vector.load %arg6[%c0_10, %c0_11] : memref<32x3072xbf16, #tpu.memory_space<vmem>>, vector<32x3072xbf16>
    tpu.vector_store %arg6[%c0_10, %c0_11], %11 {strides = array<i32>} : memref<32x3072xbf16, #tpu.memory_space<vmem>>, vector<32x3072xbf16>,
    return
  }
  func.func @transform_0(%arg0: i32) -> (i32, i32) {
    %c0_i32 = arith.constant 0 : i32
    %c0_i32_0 = arith.constant 0 : i32
    return %arg0, %c0_i32 : i32, i32
  }
  func.func @transform_1(%arg0: i32) -> (i32, i32) {
    %c0_i32 = arith.constant 0 : i32
    %c0_i32_0 = arith.constant 0 : i32
    %c0_i32_1 = arith.constant 0 : i32
    return %c0_i32, %c0_i32_0 : i32, i32
  }
  func.func @transform_2(%arg0: i32) -> (i32, i32) {
    %c0_i32 = arith.constant 0 : i32
    %c0_i32_0 = arith.constant 0 : i32
    %c0_i32_1 = arith.constant 0 : i32
    return %c0_i32, %c0_i32_0 : i32, i32
  }
  func.func @transform_3(%arg0: i32) -> (i32, i32) {
    %c0_i32 = arith.constant 0 : i32
    %c0_i32_0 = arith.constant 0 : i32
    %c0_i32_1 = arith.constant 0 : i32
    return %c0_i32, %c0_i32_0 : i32, i32
  }
  func.func @transform_4(%arg0: i32) -> (i32, i32) {
    %c0_i32 = arith.constant 0 : i32
    %c0_i32_0 = arith.constant 0 : i32
    return %arg0, %c0_i32 : i32, i32
  }
  func.func @transform_5(%arg0: i32) -> (i32, i32) {
    %c0_i32 = arith.constant 0 : i32
    %c0_i32_0 = arith.constant 0 : i32
    return %arg0, %c0_i32 : i32, i32
  }
}

module attributes {stable_mosaic.version = 11 : i64} {
  func.func @_tail_qkv_kernel(%arg0: i32, %arg1: memref<32x128xf32, #tpu.memory_space<vmem>>, %arg2: memref<32x1024xbf16, #tpu.memory_space<vmem>>, %arg3: memref<1024x128xbf16, #tpu.memory_space<vmem>>, %arg4: memref<1x128xf32, #tpu.memory_space<vmem>>, %arg5: memref<1x128xf32, #tpu.memory_space<vmem>>, %arg6: memref<128x128xbf16, #tpu.memory_space<vmem>>, %arg7: memref<1x128xf32, #tpu.memory_space<vmem>>, %arg8: memref<1x128xf32, #tpu.memory_space<vmem>>, %arg9: memref<1x128xf32, #tpu.memory_space<vmem>>, %arg10: memref<128x3072xbf16, #tpu.memory_space<vmem>>, %arg11: memref<32x128xf32, #tpu.memory_space<vmem>>, %arg12: memref<32x3072xbf16, #tpu.memory_space<vmem>>) attributes {dimension_semantics = [#tpu.dimension_semantics<parallel>], iteration_bounds = array<i64: 1>, scalar_prefetch = 0 : i64, scratch_operands = 0 : i64, tpu.core_type = #tpu.core_type<tc>, window_params = [{transform_indices = @transform_0, window_bounds = array<i64: 32, 128>}, {transform_indices = @transform_1, window_bounds = array<i64: 32, 1024>}, {pipeline_mode = #tpu.pipeline_mode<synchronous>, transform_indices = @transform_2, window_bounds = array<i64: 1024, 128>}, {pipeline_mode = #tpu.pipeline_mode<synchronous>, transform_indices = @transform_3, window_bounds = array<i64: 1, 128>}, {pipeline_mode = #tpu.pipeline_mode<synchronous>, transform_indices = @transform_4, window_bounds = array<i64: 1, 128>}, {pipeline_mode = #tpu.pipeline_mode<synchronous>, transform_indices = @transform_5, window_bounds = array<i64: 128, 128>}, {pipeline_mode = #tpu.pipeline_mode<synchronous>, transform_indices = @transform_6, window_bounds = array<i64: 1, 128>}, {pipeline_mode = #tpu.pipeline_mode<synchronous>, transform_indices = @transform_7, window_bounds = array<i64: 1, 128>}, {pipeline_mode = #tpu.pipeline_mode<synchronous>, transform_indices = @transform_8, window_bounds = array<i64: 1, 128>}, {pipeline_mode = #tpu.pipeline_mode<synchronous>, transform_indices = @transform_9, window_bounds = array<i64: 128, 3072>}, {transform_indices = @transform_10, window_bounds = array<i64: 32, 128>}, {transform_indices = @transform_11, window_bounds = array<i64: 32, 3072>}]} {
    %c0 = arith.constant 0 : index
    %c0_0 = arith.constant 0 : index
    %0 = vector.load %arg1[%c0, %c0_0] : memref<32x128xf32, #tpu.memory_space<vmem>>, vector<32x128xf32>
    %c0_1 = arith.constant 0 : index
    %c0_2 = arith.constant 0 : index
    %1 = vector.load %arg2[%c0_1, %c0_2] : memref<32x1024xbf16, #tpu.memory_space<vmem>>, vector<32x1024xbf16>
    %c0_3 = arith.constant 0 : index
    %c0_4 = arith.constant 0 : index
    %2 = vector.load %arg3[%c0_3, %c0_4] : memref<1024x128xbf16, #tpu.memory_space<vmem>>, vector<1024x128xbf16>
    %c0_5 = arith.constant 0 : index
    %c0_6 = arith.constant 0 : index
    %3 = vector.load %arg4[%c0_5, %c0_6] : memref<1x128xf32, #tpu.memory_space<vmem>>, vector<1x128xf32>
    %c0_7 = arith.constant 0 : index
    %c0_8 = arith.constant 0 : index
    %4 = vector.load %arg5[%c0_7, %c0_8] : memref<1x128xf32, #tpu.memory_space<vmem>>, vector<1x128xf32>
    %c0_9 = arith.constant 0 : index
    %c0_10 = arith.constant 0 : index
    %5 = vector.load %arg6[%c0_9, %c0_10] : memref<128x128xbf16, #tpu.memory_space<vmem>>, vector<128x128xbf16>
    %c0_11 = arith.constant 0 : index
    %c0_12 = arith.constant 0 : index
    %6 = vector.load %arg7[%c0_11, %c0_12] : memref<1x128xf32, #tpu.memory_space<vmem>>, vector<1x128xf32>
    %c0_13 = arith.constant 0 : index
    %c0_14 = arith.constant 0 : index
    %7 = vector.load %arg8[%c0_13, %c0_14] : memref<1x128xf32, #tpu.memory_space<vmem>>, vector<1x128xf32>
    %c0_15 = arith.constant 0 : index
    %c0_16 = arith.constant 0 : index
    %8 = vector.load %arg9[%c0_15, %c0_16] : memref<1x128xf32, #tpu.memory_space<vmem>>, vector<1x128xf32>
    %cst = arith.constant dense<0.000000e+00> : vector<32x128xf32>
    %9 = tpu.matmul %1, %2, %cst {dimension_numbers = #tpu.dot_dimension_numbers<[1], [0], [0], [1], [0, 0, 1, 1], [], []>} : vector<32x1024xbf16>, vector<1024x128xbf16>, vector<32x128xf32> -> vector<32x128xf32>
    %10 = arith.addf %0, %9 : vector<32x128xf32>
    %cst_17 = arith.constant dense<0.000000e+00> : vector<32xf32>
    %11 = vector.multi_reduction <add>, %10, %cst_17 [1] : vector<32x128xf32> to vector<32xf32>
    %12 = vector.shape_cast %11 : vector<32xf32> to vector<32x1xf32>
    %cst_18 = arith.constant 1.280000e+02 : f32
    %13 = vector.broadcast %cst_18 : f32 to vector<32x1xf32>
    %14 = arith.divf %12, %13 : vector<32x1xf32>
    %15 = vector.broadcast %14 : vector<32x1xf32> to vector<32x128xf32>
    %16 = arith.subf %10, %15 : vector<32x128xf32>
    %17 = arith.mulf %16, %16 : vector<32x128xf32>
    %cst_19 = arith.constant dense<0.000000e+00> : vector<32xf32>
    %18 = vector.multi_reduction <add>, %17, %cst_19 [1] : vector<32x128xf32> to vector<32xf32>
    %19 = vector.shape_cast %18 : vector<32xf32> to vector<32x1xf32>
    %cst_20 = arith.constant 1.280000e+02 : f32
    %20 = vector.broadcast %cst_20 : f32 to vector<32x1xf32>
    %21 = arith.divf %19, %20 : vector<32x1xf32>
    %22 = vector.broadcast %14 : vector<32x1xf32> to vector<32x128xf32>
    %23 = arith.subf %10, %22 : vector<32x128xf32>
    %cst_21 = arith.constant 9.99999974E-6 : f32
    %24 = vector.broadcast %cst_21 : f32 to vector<32x1xf32>
    %25 = arith.addf %21, %24 : vector<32x1xf32>
    %26 = math.rsqrt %25 : vector<32x1xf32>
    %27 = vector.broadcast %26 : vector<32x1xf32> to vector<32x128xf32>
    %28 = arith.mulf %23, %27 : vector<32x128xf32>
    %29 = vector.broadcast %3 : vector<1x128xf32> to vector<32x128xf32>
    %30 = arith.mulf %28, %29 : vector<32x128xf32>
    %31 = vector.broadcast %4 : vector<1x128xf32> to vector<32x128xf32>
    %32 = arith.addf %30, %31 : vector<32x128xf32>
    %33 = arith.truncf %32 : vector<32x128xf32> to vector<32x128xbf16>
    %cst_22 = arith.constant dense<0.000000e+00> : vector<32x128xf32>
    %34 = tpu.matmul %33, %5, %cst_22 {dimension_numbers = #tpu.dot_dimension_numbers<[1], [0], [0], [1], [0, 0, 1, 1], [], []>} : vector<32x128xbf16>, vector<128x128xbf16>, vector<32x128xf32> -> vector<32x128xf32>
    %35 = vector.broadcast %6 : vector<1x128xf32> to vector<32x128xf32>
    %36 = arith.addf %34, %35 : vector<32x128xf32>
    %cst_23 = arith.constant 5.000000e-01 : f32
    %37 = vector.broadcast %cst_23 : f32 to vector<32x128xf32>
    %38 = arith.mulf %37, %32 : vector<32x128xf32>
    %cst_24 = arith.constant 0.707106769 : f32
    %39 = vector.broadcast %cst_24 : f32 to vector<32x128xf32>
    %40 = arith.mulf %32, %39 : vector<32x128xf32>
    %41 = math.erf %40 : vector<32x128xf32>
    %cst_25 = arith.constant 1.000000e+00 : f32
    %42 = vector.broadcast %cst_25 : f32 to vector<32x128xf32>
    %43 = arith.addf %42, %41 : vector<32x128xf32>
    %44 = arith.mulf %38, %43 : vector<32x128xf32>
    %45 = arith.addf %44, %36 : vector<32x128xf32>
    %cst_26 = arith.constant dense<0.000000e+00> : vector<32xf32>
    %46 = vector.multi_reduction <add>, %45, %cst_26 [1] : vector<32x128xf32> to vector<32xf32>
    %47 = vector.shape_cast %46 : vector<32xf32> to vector<32x1xf32>
    %cst_27 = arith.constant 1.280000e+02 : f32
    %48 = vector.broadcast %cst_27 : f32 to vector<32x1xf32>
    %49 = arith.divf %47, %48 : vector<32x1xf32>
    %50 = vector.broadcast %49 : vector<32x1xf32> to vector<32x128xf32>
    %51 = arith.subf %45, %50 : vector<32x128xf32>
    %52 = arith.mulf %51, %51 : vector<32x128xf32>
    %cst_28 = arith.constant dense<0.000000e+00> : vector<32xf32>
    %53 = vector.multi_reduction <add>, %52, %cst_28 [1] : vector<32x128xf32> to vector<32xf32>
    %54 = vector.shape_cast %53 : vector<32xf32> to vector<32x1xf32>
    %cst_29 = arith.constant 1.280000e+02 : f32
    %55 = vector.broadcast %cst_29 : f32 to vector<32x1xf32>
    %56 = arith.divf %54, %55 : vector<32x1xf32>
    %57 = vector.broadcast %49 : vector<32x1xf32> to vector<32x128xf32>
    %58 = arith.subf %45, %57 : vector<32x128xf32>
    %cst_30 = arith.constant 9.99999974E-6 : f32
    %59 = vector.broadcast %cst_30 : f32 to vector<32x1xf32>
    %60 = arith.addf %56, %59 : vector<32x1xf32>
    %61 = math.rsqrt %60 : vector<32x1xf32>
    %62 = vector.broadcast %61 : vector<32x1xf32> to vector<32x128xf32>
    %63 = arith.mulf %58, %62 : vector<32x128xf32>
    %64 = vector.broadcast %7 : vector<1x128xf32> to vector<32x128xf32>
    %65 = arith.mulf %63, %64 : vector<32x128xf32>
    %66 = vector.broadcast %8 : vector<1x128xf32> to vector<32x128xf32>
    %67 = arith.addf %65, %66 : vector<32x128xf32>
    %c0_31 = arith.constant 0 : index
    %c0_32 = arith.constant 0 : index
    %68 = vector.load %arg11[%c0_31, %c0_32] : memref<32x128xf32, #tpu.memory_space<vmem>>, vector<32x128xf32>
    tpu.vector_store %arg11[%c0_31, %c0_32], %67 {strides = array<i32>} : memref<32x128xf32, #tpu.memory_space<vmem>>, vector<32x128xf32>,
    %69 = arith.truncf %67 : vector<32x128xf32> to vector<32x128xbf16>
    %c0_33 = arith.constant 0 : index
    %c0_34 = arith.constant 0 : index
    %70 = vector.load %arg10[%c0_33, %c0_34] : memref<128x3072xbf16, #tpu.memory_space<vmem>>, vector<128x3072xbf16>
    %cst_35 = arith.constant dense<0.000000e+00> : vector<32x3072xf32>
    %71 = tpu.matmul %69, %70, %cst_35 {dimension_numbers = #tpu.dot_dimension_numbers<[1], [0], [0], [1], [0, 0, 1, 1], [], []>} : vector<32x128xbf16>, vector<128x3072xbf16>, vector<32x3072xf32> -> vector<32x3072xf32>
    %72 = arith.truncf %71 : vector<32x3072xf32> to vector<32x3072xbf16>
    %c0_36 = arith.constant 0 : index
    %c0_37 = arith.constant 0 : index
    %73 = vector.load %arg12[%c0_36, %c0_37] : memref<32x3072xbf16, #tpu.memory_space<vmem>>, vector<32x3072xbf16>
    tpu.vector_store %arg12[%c0_36, %c0_37], %72 {strides = array<i32>} : memref<32x3072xbf16, #tpu.memory_space<vmem>>, vector<32x3072xbf16>,
    return
  }
  func.func @transform_0(%arg0: i32) -> (i32, i32) {
    %c0_i32 = arith.constant 0 : i32
    %c0_i32_0 = arith.constant 0 : i32
    return %arg0, %c0_i32 : i32, i32
  }
  func.func @transform_1(%arg0: i32) -> (i32, i32) {
    %c0_i32 = arith.constant 0 : i32
    %c0_i32_0 = arith.constant 0 : i32
    return %arg0, %c0_i32 : i32, i32
  }
  func.func @transform_2(%arg0: i32) -> (i32, i32) {
    %c0_i32 = arith.constant 0 : i32
    %c0_i32_0 = arith.constant 0 : i32
    %c0_i32_1 = arith.constant 0 : i32
    return %c0_i32, %c0_i32_0 : i32, i32
  }
  func.func @transform_3(%arg0: i32) -> (i32, i32) {
    %c0_i32 = arith.constant 0 : i32
    %c0_i32_0 = arith.constant 0 : i32
    %c0_i32_1 = arith.constant 0 : i32
    return %c0_i32, %c0_i32_0 : i32, i32
  }
  func.func @transform_4(%arg0: i32) -> (i32, i32) {
    %c0_i32 = arith.constant 0 : i32
    %c0_i32_0 = arith.constant 0 : i32
    %c0_i32_1 = arith.constant 0 : i32
    return %c0_i32, %c0_i32_0 : i32, i32
  }
  func.func @transform_5(%arg0: i32) -> (i32, i32) {
    %c0_i32 = arith.constant 0 : i32
    %c0_i32_0 = arith.constant 0 : i32
    %c0_i32_1 = arith.constant 0 : i32
    return %c0_i32, %c0_i32_0 : i32, i32
  }
  func.func @transform_6(%arg0: i32) -> (i32, i32) {
    %c0_i32 = arith.constant 0 : i32
    %c0_i32_0 = arith.constant 0 : i32
    %c0_i32_1 = arith.constant 0 : i32
    return %c0_i32, %c0_i32_0 : i32, i32
  }
  func.func @transform_7(%arg0: i32) -> (i32, i32) {
    %c0_i32 = arith.constant 0 : i32
    %c0_i32_0 = arith.constant 0 : i32
    %c0_i32_1 = arith.constant 0 : i32
    return %c0_i32, %c0_i32_0 : i32, i32
  }
  func.func @transform_8(%arg0: i32) -> (i32, i32) {
    %c0_i32 = arith.constant 0 : i32
    %c0_i32_0 = arith.constant 0 : i32
    %c0_i32_1 = arith.constant 0 : i32
    return %c0_i32, %c0_i32_0 : i32, i32
  }
  func.func @transform_9(%arg0: i32) -> (i32, i32) {
    %c0_i32 = arith.constant 0 : i32
    %c0_i32_0 = arith.constant 0 : i32
    %c0_i32_1 = arith.constant 0 : i32
    return %c0_i32, %c0_i32_0 : i32, i32
  }
  func.func @transform_10(%arg0: i32) -> (i32, i32) {
    %c0_i32 = arith.constant 0 : i32
    %c0_i32_0 = arith.constant 0 : i32
    return %arg0, %c0_i32 : i32, i32
  }
  func.func @transform_11(%arg0: i32) -> (i32, i32) {
    %c0_i32 = arith.constant 0 : i32
    %c0_i32_0 = arith.constant 0 : i32
    return %arg0, %c0_i32 : i32, i32
  }
}

module attributes {stable_mosaic.version = 11 : i64} {
  func.func @_tail_out_kernel(%arg0: i32, %arg1: memref<32x128xf32, #tpu.memory_space<vmem>>, %arg2: memref<32x1024xbf16, #tpu.memory_space<vmem>>, %arg3: memref<1024x128xbf16, #tpu.memory_space<vmem>>, %arg4: memref<1x128xf32, #tpu.memory_space<vmem>>, %arg5: memref<1x128xf32, #tpu.memory_space<vmem>>, %arg6: memref<128x128xbf16, #tpu.memory_space<vmem>>, %arg7: memref<1x128xf32, #tpu.memory_space<vmem>>, %arg8: memref<1x128xf32, #tpu.memory_space<vmem>>, %arg9: memref<1x128xf32, #tpu.memory_space<vmem>>, %arg10: memref<128x8xbf16, #tpu.memory_space<vmem>>, %arg11: memref<1x8xf32, #tpu.memory_space<vmem>>, %arg12: memref<32x8xf32, #tpu.memory_space<vmem>>) attributes {dimension_semantics = [#tpu.dimension_semantics<parallel>], iteration_bounds = array<i64: 1>, scalar_prefetch = 0 : i64, scratch_operands = 0 : i64, tpu.core_type = #tpu.core_type<tc>, window_params = [{transform_indices = @transform_0, window_bounds = array<i64: 32, 128>}, {transform_indices = @transform_1, window_bounds = array<i64: 32, 1024>}, {pipeline_mode = #tpu.pipeline_mode<synchronous>, transform_indices = @transform_2, window_bounds = array<i64: 1024, 128>}, {pipeline_mode = #tpu.pipeline_mode<synchronous>, transform_indices = @transform_3, window_bounds = array<i64: 1, 128>}, {pipeline_mode = #tpu.pipeline_mode<synchronous>, transform_indices = @transform_4, window_bounds = array<i64: 1, 128>}, {pipeline_mode = #tpu.pipeline_mode<synchronous>, transform_indices = @transform_5, window_bounds = array<i64: 128, 128>}, {pipeline_mode = #tpu.pipeline_mode<synchronous>, transform_indices = @transform_6, window_bounds = array<i64: 1, 128>}, {pipeline_mode = #tpu.pipeline_mode<synchronous>, transform_indices = @transform_7, window_bounds = array<i64: 1, 128>}, {pipeline_mode = #tpu.pipeline_mode<synchronous>, transform_indices = @transform_8, window_bounds = array<i64: 1, 128>}, {pipeline_mode = #tpu.pipeline_mode<synchronous>, transform_indices = @transform_9, window_bounds = array<i64: 128, 8>}, {pipeline_mode = #tpu.pipeline_mode<synchronous>, transform_indices = @transform_10, window_bounds = array<i64: 1, 8>}, {transform_indices = @transform_11, window_bounds = array<i64: 32, 8>}]} {
    %c0 = arith.constant 0 : index
    %c0_0 = arith.constant 0 : index
    %0 = vector.load %arg1[%c0, %c0_0] : memref<32x128xf32, #tpu.memory_space<vmem>>, vector<32x128xf32>
    %c0_1 = arith.constant 0 : index
    %c0_2 = arith.constant 0 : index
    %1 = vector.load %arg2[%c0_1, %c0_2] : memref<32x1024xbf16, #tpu.memory_space<vmem>>, vector<32x1024xbf16>
    %c0_3 = arith.constant 0 : index
    %c0_4 = arith.constant 0 : index
    %2 = vector.load %arg3[%c0_3, %c0_4] : memref<1024x128xbf16, #tpu.memory_space<vmem>>, vector<1024x128xbf16>
    %c0_5 = arith.constant 0 : index
    %c0_6 = arith.constant 0 : index
    %3 = vector.load %arg4[%c0_5, %c0_6] : memref<1x128xf32, #tpu.memory_space<vmem>>, vector<1x128xf32>
    %c0_7 = arith.constant 0 : index
    %c0_8 = arith.constant 0 : index
    %4 = vector.load %arg5[%c0_7, %c0_8] : memref<1x128xf32, #tpu.memory_space<vmem>>, vector<1x128xf32>
    %c0_9 = arith.constant 0 : index
    %c0_10 = arith.constant 0 : index
    %5 = vector.load %arg6[%c0_9, %c0_10] : memref<128x128xbf16, #tpu.memory_space<vmem>>, vector<128x128xbf16>
    %c0_11 = arith.constant 0 : index
    %c0_12 = arith.constant 0 : index
    %6 = vector.load %arg7[%c0_11, %c0_12] : memref<1x128xf32, #tpu.memory_space<vmem>>, vector<1x128xf32>
    %c0_13 = arith.constant 0 : index
    %c0_14 = arith.constant 0 : index
    %7 = vector.load %arg8[%c0_13, %c0_14] : memref<1x128xf32, #tpu.memory_space<vmem>>, vector<1x128xf32>
    %c0_15 = arith.constant 0 : index
    %c0_16 = arith.constant 0 : index
    %8 = vector.load %arg9[%c0_15, %c0_16] : memref<1x128xf32, #tpu.memory_space<vmem>>, vector<1x128xf32>
    %cst = arith.constant dense<0.000000e+00> : vector<32x128xf32>
    %9 = tpu.matmul %1, %2, %cst {dimension_numbers = #tpu.dot_dimension_numbers<[1], [0], [0], [1], [0, 0, 1, 1], [], []>} : vector<32x1024xbf16>, vector<1024x128xbf16>, vector<32x128xf32> -> vector<32x128xf32>
    %10 = arith.addf %0, %9 : vector<32x128xf32>
    %cst_17 = arith.constant dense<0.000000e+00> : vector<32xf32>
    %11 = vector.multi_reduction <add>, %10, %cst_17 [1] : vector<32x128xf32> to vector<32xf32>
    %12 = vector.shape_cast %11 : vector<32xf32> to vector<32x1xf32>
    %cst_18 = arith.constant 1.280000e+02 : f32
    %13 = vector.broadcast %cst_18 : f32 to vector<32x1xf32>
    %14 = arith.divf %12, %13 : vector<32x1xf32>
    %15 = vector.broadcast %14 : vector<32x1xf32> to vector<32x128xf32>
    %16 = arith.subf %10, %15 : vector<32x128xf32>
    %17 = arith.mulf %16, %16 : vector<32x128xf32>
    %cst_19 = arith.constant dense<0.000000e+00> : vector<32xf32>
    %18 = vector.multi_reduction <add>, %17, %cst_19 [1] : vector<32x128xf32> to vector<32xf32>
    %19 = vector.shape_cast %18 : vector<32xf32> to vector<32x1xf32>
    %cst_20 = arith.constant 1.280000e+02 : f32
    %20 = vector.broadcast %cst_20 : f32 to vector<32x1xf32>
    %21 = arith.divf %19, %20 : vector<32x1xf32>
    %22 = vector.broadcast %14 : vector<32x1xf32> to vector<32x128xf32>
    %23 = arith.subf %10, %22 : vector<32x128xf32>
    %cst_21 = arith.constant 9.99999974E-6 : f32
    %24 = vector.broadcast %cst_21 : f32 to vector<32x1xf32>
    %25 = arith.addf %21, %24 : vector<32x1xf32>
    %26 = math.rsqrt %25 : vector<32x1xf32>
    %27 = vector.broadcast %26 : vector<32x1xf32> to vector<32x128xf32>
    %28 = arith.mulf %23, %27 : vector<32x128xf32>
    %29 = vector.broadcast %3 : vector<1x128xf32> to vector<32x128xf32>
    %30 = arith.mulf %28, %29 : vector<32x128xf32>
    %31 = vector.broadcast %4 : vector<1x128xf32> to vector<32x128xf32>
    %32 = arith.addf %30, %31 : vector<32x128xf32>
    %33 = arith.truncf %32 : vector<32x128xf32> to vector<32x128xbf16>
    %cst_22 = arith.constant dense<0.000000e+00> : vector<32x128xf32>
    %34 = tpu.matmul %33, %5, %cst_22 {dimension_numbers = #tpu.dot_dimension_numbers<[1], [0], [0], [1], [0, 0, 1, 1], [], []>} : vector<32x128xbf16>, vector<128x128xbf16>, vector<32x128xf32> -> vector<32x128xf32>
    %35 = vector.broadcast %6 : vector<1x128xf32> to vector<32x128xf32>
    %36 = arith.addf %34, %35 : vector<32x128xf32>
    %cst_23 = arith.constant 5.000000e-01 : f32
    %37 = vector.broadcast %cst_23 : f32 to vector<32x128xf32>
    %38 = arith.mulf %37, %32 : vector<32x128xf32>
    %cst_24 = arith.constant 0.707106769 : f32
    %39 = vector.broadcast %cst_24 : f32 to vector<32x128xf32>
    %40 = arith.mulf %32, %39 : vector<32x128xf32>
    %41 = math.erf %40 : vector<32x128xf32>
    %cst_25 = arith.constant 1.000000e+00 : f32
    %42 = vector.broadcast %cst_25 : f32 to vector<32x128xf32>
    %43 = arith.addf %42, %41 : vector<32x128xf32>
    %44 = arith.mulf %38, %43 : vector<32x128xf32>
    %45 = arith.addf %44, %36 : vector<32x128xf32>
    %cst_26 = arith.constant dense<0.000000e+00> : vector<32xf32>
    %46 = vector.multi_reduction <add>, %45, %cst_26 [1] : vector<32x128xf32> to vector<32xf32>
    %47 = vector.shape_cast %46 : vector<32xf32> to vector<32x1xf32>
    %cst_27 = arith.constant 1.280000e+02 : f32
    %48 = vector.broadcast %cst_27 : f32 to vector<32x1xf32>
    %49 = arith.divf %47, %48 : vector<32x1xf32>
    %50 = vector.broadcast %49 : vector<32x1xf32> to vector<32x128xf32>
    %51 = arith.subf %45, %50 : vector<32x128xf32>
    %52 = arith.mulf %51, %51 : vector<32x128xf32>
    %cst_28 = arith.constant dense<0.000000e+00> : vector<32xf32>
    %53 = vector.multi_reduction <add>, %52, %cst_28 [1] : vector<32x128xf32> to vector<32xf32>
    %54 = vector.shape_cast %53 : vector<32xf32> to vector<32x1xf32>
    %cst_29 = arith.constant 1.280000e+02 : f32
    %55 = vector.broadcast %cst_29 : f32 to vector<32x1xf32>
    %56 = arith.divf %54, %55 : vector<32x1xf32>
    %57 = vector.broadcast %49 : vector<32x1xf32> to vector<32x128xf32>
    %58 = arith.subf %45, %57 : vector<32x128xf32>
    %cst_30 = arith.constant 9.99999974E-6 : f32
    %59 = vector.broadcast %cst_30 : f32 to vector<32x1xf32>
    %60 = arith.addf %56, %59 : vector<32x1xf32>
    %61 = math.rsqrt %60 : vector<32x1xf32>
    %62 = vector.broadcast %61 : vector<32x1xf32> to vector<32x128xf32>
    %63 = arith.mulf %58, %62 : vector<32x128xf32>
    %64 = vector.broadcast %7 : vector<1x128xf32> to vector<32x128xf32>
    %65 = arith.mulf %63, %64 : vector<32x128xf32>
    %66 = vector.broadcast %8 : vector<1x128xf32> to vector<32x128xf32>
    %67 = arith.addf %65, %66 : vector<32x128xf32>
    %68 = arith.truncf %67 : vector<32x128xf32> to vector<32x128xbf16>
    %c0_31 = arith.constant 0 : index
    %c0_32 = arith.constant 0 : index
    %69 = vector.load %arg10[%c0_31, %c0_32] : memref<128x8xbf16, #tpu.memory_space<vmem>>, vector<128x8xbf16>
    %cst_33 = arith.constant dense<0.000000e+00> : vector<32x8xf32>
    %70 = tpu.matmul %68, %69, %cst_33 {dimension_numbers = #tpu.dot_dimension_numbers<[1], [0], [0], [1], [0, 0, 1, 1], [], []>} : vector<32x128xbf16>, vector<128x8xbf16>, vector<32x8xf32> -> vector<32x8xf32>
    %c0_34 = arith.constant 0 : index
    %c0_35 = arith.constant 0 : index
    %71 = vector.load %arg11[%c0_34, %c0_35] : memref<1x8xf32, #tpu.memory_space<vmem>>, vector<1x8xf32>
    %72 = vector.broadcast %71 : vector<1x8xf32> to vector<32x8xf32>
    %73 = arith.addf %70, %72 : vector<32x8xf32>
    %c0_36 = arith.constant 0 : index
    %c0_37 = arith.constant 0 : index
    %74 = vector.load %arg12[%c0_36, %c0_37] : memref<32x8xf32, #tpu.memory_space<vmem>>, vector<32x8xf32>
    tpu.vector_store %arg12[%c0_36, %c0_37], %73 {strides = array<i32>} : memref<32x8xf32, #tpu.memory_space<vmem>>, vector<32x8xf32>,
    return
  }
  func.func @transform_0(%arg0: i32) -> (i32, i32) {
    %c0_i32 = arith.constant 0 : i32
    %c0_i32_0 = arith.constant 0 : i32
    return %arg0, %c0_i32 : i32, i32
  }
  func.func @transform_1(%arg0: i32) -> (i32, i32) {
    %c0_i32 = arith.constant 0 : i32
    %c0_i32_0 = arith.constant 0 : i32
    return %arg0, %c0_i32 : i32, i32
  }
  func.func @transform_2(%arg0: i32) -> (i32, i32) {
    %c0_i32 = arith.constant 0 : i32
    %c0_i32_0 = arith.constant 0 : i32
    %c0_i32_1 = arith.constant 0 : i32
    return %c0_i32, %c0_i32_0 : i32, i32
  }
  func.func @transform_3(%arg0: i32) -> (i32, i32) {
    %c0_i32 = arith.constant 0 : i32
    %c0_i32_0 = arith.constant 0 : i32
    %c0_i32_1 = arith.constant 0 : i32
    return %c0_i32, %c0_i32_0 : i32, i32
  }
  func.func @transform_4(%arg0: i32) -> (i32, i32) {
    %c0_i32 = arith.constant 0 : i32
    %c0_i32_0 = arith.constant 0 : i32
    %c0_i32_1 = arith.constant 0 : i32
    return %c0_i32, %c0_i32_0 : i32, i32
  }
  func.func @transform_5(%arg0: i32) -> (i32, i32) {
    %c0_i32 = arith.constant 0 : i32
    %c0_i32_0 = arith.constant 0 : i32
    %c0_i32_1 = arith.constant 0 : i32
    return %c0_i32, %c0_i32_0 : i32, i32
  }
  func.func @transform_6(%arg0: i32) -> (i32, i32) {
    %c0_i32 = arith.constant 0 : i32
    %c0_i32_0 = arith.constant 0 : i32
    %c0_i32_1 = arith.constant 0 : i32
    return %c0_i32, %c0_i32_0 : i32, i32
  }
  func.func @transform_7(%arg0: i32) -> (i32, i32) {
    %c0_i32 = arith.constant 0 : i32
    %c0_i32_0 = arith.constant 0 : i32
    %c0_i32_1 = arith.constant 0 : i32
    return %c0_i32, %c0_i32_0 : i32, i32
  }
  func.func @transform_8(%arg0: i32) -> (i32, i32) {
    %c0_i32 = arith.constant 0 : i32
    %c0_i32_0 = arith.constant 0 : i32
    %c0_i32_1 = arith.constant 0 : i32
    return %c0_i32, %c0_i32_0 : i32, i32
  }
  func.func @transform_9(%arg0: i32) -> (i32, i32) {
    %c0_i32 = arith.constant 0 : i32
    %c0_i32_0 = arith.constant 0 : i32
    %c0_i32_1 = arith.constant 0 : i32
    return %c0_i32, %c0_i32_0 : i32, i32
  }
  func.func @transform_10(%arg0: i32) -> (i32, i32) {
    %c0_i32 = arith.constant 0 : i32
    %c0_i32_0 = arith.constant 0 : i32
    %c0_i32_1 = arith.constant 0 : i32
    return %c0_i32, %c0_i32_0 : i32, i32
  }
  func.func @transform_11(%arg0: i32) -> (i32, i32) {
    %c0_i32 = arith.constant 0 : i32
    %c0_i32_0 = arith.constant 0 : i32
    return %arg0, %c0_i32 : i32, i32
  }
}

</mosaic_0001>

<llo_original>
// kernel: transformer_forward.6
$region0: #{transformer_forward.6}
  #allocation0 [shape = 'u32[]', space=smem, size = 0x4, offset = 0x4, fixed_abs, tag = 'smem constant byte address 0x4 - core index']
  #allocation1 [shape = 'u32[72,128]{1,0:T(1,128)}', space=vmem, size = 0x9000, scoped, tag = 'internal scratch']
  #allocation2 [shape = 'f32[16,1]{1,0:T(8,128)}', space=vmem, size = 0x2000, scoped, tag = 'scratch operand']
  #allocation3 [shape = 'f32[16,1]{1,0:T(8,128)}', space=vmem, size = 0x2000, scoped, tag = 'scratch operand']
  #allocation4 [shape = 'f32[16,128]{1,0:T(8,128)}', space=vmem, size = 0x2000, scoped, tag = 'scratch operand']
  %s0 = inlined_call_operand.vmem [shape: bf16[2,16,3072], index: 0, kind: input, shape index: {}, may-alias: {0,1,2}]
  %s1 = inlined_call_operand.vmem [shape: bf16[2,16,3072], index: 1, kind: input, shape index: {}, may-alias: {0,1,2}]
  %s2 = inlined_call_operand.vmem [shape: bf16[2,16,3072], index: 2, kind: input, shape index: {}, may-alias: {0,1,2}]
  %s3 = inlined_call_operand.vmem [shape: bf16[2,16,1024], index: 3, kind: output, shape index: {}]
  %s4 = sld [smem:[#allocation0]]
  $region213: #{transformer_forward.6} parent=0
    _
  %s6 = ssub.s32 1, %s4
  %s7 = scalar_select 0, %s6, %s4
  $region1: #{transformer_forward.6} parent=0
    #allocation5 [shape = 'u8[8192]{0}', space=vmem, size = 0x2000, scoped, tag = 'input window, operand 0']
    #allocation6 [shape = 'u8[8192]{0}', space=vmem, size = 0x2000, scoped, tag = 'input window, operand 1']
    #allocation7 [shape = 'u8[8192]{0}', space=vmem, size = 0x2000, scoped, tag = 'input window, operand 2']
    #allocation8 [shape = 'u8[8192]{0}', space=vmem, size = 0x2000, scoped, tag = 'output window, operand 0']
    loop: start=0, step=1, limit=18
    $region2: #{transformer_forward.6} parent=1 // loop_pre_header
      _
    $region3: #{transformer_forward.6} parent=1 // loop_header
      %s9 = sphi 0, %s13
      %p10 = scmp.ge.s32.totalorder %s9, 18
      %s16 = sphi 0, %s42
      %s17 = sphi 0, %s38
      %s18 = sphi 0, %s34
      %s19 = sphi 0, %s30
      %s20 = sphi 0, %s16
      %s21 = sphi 0, %s17
      %s22 = sphi 0, %s18
      %s23 = sphi 0, %s19
      %s24 = sphi 0, %s20
      %s25 = sphi 0, %s21
      %s26 = sphi 0, %s22
      %s27 = sphi 0, %s23
      %s51 = sphi 0, %s53
      %s54 = sphi 0, %s51
      %s55 = sphi 0, %s54
      %s71 = sphi 0, %s55
      %s81 = sphi 0, %s83
      %s84 = sphi 0, %s81
      %s85 = sphi 0, %s84
      %s101 = sphi 0, %s85
      %s113 = sphi 0, %s115
      %s116 = sphi 0, %s113
      %s117 = sphi 0, %s116
      %s133 = sphi 0, %s117
      %s143 = sphi 0, %s145
      %s146 = sphi 0, %s143
      %s147 = sphi 0, %s146
      %s163 = sphi 0, %s147
    $region4: #{transformer_forward.6} parent=1 // loop_header_branch
      %12 = sbr.rel (%p10) target = $region8
    $region5: #{transformer_forward.6} parent=1 // loop_body
      %s14 = ssub.s32 %s9, 1
      %s15 = ssub.s32 %s9, 2
      %s28 = sadd.s32 1, %s19
      %p29 = scmp.ge.s32.totalorder %s28, 1
      %s30 = scalar_select %p29, 0, %s28
      %s31 = sadd.s32 1, %s18
      %s32 = scalar_select %p29, %s31, %s18
      %p33 = scmp.ge.s32.totalorder %s32, 1
      %s34 = scalar_select %p33, 0, %s32
      %s35 = sadd.s32 1, %s17
      %s36 = scalar_select %p33, %s35, %s17
      %p37 = scmp.ge.s32.totalorder %s36, 8
      %s38 = scalar_select %p37, 0, %s36
      %s39 = sadd.s32 1, %s16
      %s40 = scalar_select %p37, %s39, %s16
      %p41 = scmp.ge.s32.totalorder %s40, 2
      %s42 = scalar_select %p41, 0, %s40
      %s43 = sadd.s32 %s17, 8
      %s44 = sadd.s32 %s38, 8
      %s45 = ssub.s32 %s16, %s42
      %s46 = ssub.s32 %s18, %s34
      %s47 = sor.u32 %s45, %s46
      %s48 = ssub.s32 %s43, %s44
      %s49 = sor.u32 %s47, %s48
      %p50 = scmp.eq.s32.totalorder %s49, 0
      %s52 = sadd.s32 %s51, 1
      %s53 = scalar_select %p50, %s51, %s52
      %p56 = pneg %p50
      %p57 = scmp.eq.s32.totalorder %s9, 15
      %p58 = por %p56, %p57
      %p59 = scmp.ne.s32.totalorder %s51, %s54
      %p60 = scmp.eq.s32.totalorder %s9, 0
      %p61 = por %p59, %p60
      %p62 = scmp.ne.s32.totalorder %s51, %s54
      %p63 = scmp.eq.s32.totalorder %s14, 15
      %p64 = por %p62, %p63
      %p65 = scmp.ne.s32.totalorder %s54, %s55
      %p66 = scmp.eq.s32.totalorder %s14, 0
      %p67 = por %p65, %p66
      %p68 = scmp.ne.s32.totalorder %s54, %s55
      %p69 = scmp.eq.s32.totalorder %s15, 15
      %p70 = por %p68, %p69
      %p72 = scmp.ne.s32.totalorder %s55, %s71
      %p73 = scmp.eq.s32.totalorder %s15, 0
      %p74 = por %p72, %p73
      %s75 = ssub.s32 %s16, %s42
      %s76 = ssub.s32 %s19, %s30
      %s77 = sor.u32 %s75, %s76
      %s78 = ssub.s32 %s17, %s38
      %s79 = sor.u32 %s77, %s78
      %p80 = scmp.eq.s32.totalorder %s79, 0
      %s82 = sadd.s32 %s81, 1
      %s83 = scalar_select %p80, %s81, %s82
      %p86 = pneg %p80
      %p87 = scmp.eq.s32.totalorder %s9, 15
      %p88 = por %p86, %p87
      %p89 = scmp.ne.s32.totalorder %s81, %s84
      %p90 = scmp.eq.s32.totalorder %s9, 0
      %p91 = por %p89, %p90
      %p92 = scmp.ne.s32.totalorder %s81, %s84
      %p93 = scmp.eq.s32.totalorder %s14, 15
      %p94 = por %p92, %p93
      %p95 = scmp.ne.s32.totalorder %s84, %s85
      %p96 = scmp.eq.s32.totalorder %s14, 0
      %p97 = por %p95, %p96
      %p98 = scmp.ne.s32.totalorder %s84, %s85
      %p99 = scmp.eq.s32.totalorder %s15, 15
      %p100 = por %p98, %p99
      %p102 = scmp.ne.s32.totalorder %s85, %s101
      %p103 = scmp.eq.s32.totalorder %s15, 0
      %p104 = por %p102, %p103
      %s105 = sadd.s32 %s17, 16
      %s106 = sadd.s32 %s38, 16
      %s107 = ssub.s32 %s16, %s42
      %s108 = ssub.s32 %s19, %s30
      %s109 = sor.u32 %s107, %s108
      %s110 = ssub.s32 %s105, %s106
      %s111 = sor.u32 %s109, %s110
      %p112 = scmp.eq.s32.totalorder %s111, 0
      %s114 = sadd.s32 %s113, 1
      %s115 = scalar_select %p112, %s113, %s114
      %p118 = pneg %p112
      %p119 = scmp.eq.s32.totalorder %s9, 15
      %p120 = por %p118, %p119
      %p121 = scmp.ne.s32.totalorder %s113, %s116
      %p122 = scmp.eq.s32.totalorder %s9, 0
      %p123 = por %p121, %p122
      %p124 = scmp.ne.s32.totalorder %s113, %s116
      %p125 = scmp.eq.s32.totalorder %s14, 15
      %p126 = por %p124, %p125
      %p127 = scmp.ne.s32.totalorder %s116, %s117
      %p128 = scmp.eq.s32.totalorder %s14, 0
      %p129 = por %p127, %p128
      %p130 = scmp.ne.s32.totalorder %s116, %s117
      %p131 = scmp.eq.s32.totalorder %s15, 15
      %p132 = por %p130, %p131
      %p134 = scmp.ne.s32.totalorder %s117, %s133
      %p135 = scmp.eq.s32.totalorder %s15, 0
      %p136 = por %p134, %p135
      %s137 = ssub.s32 %s16, %s42
      %s138 = ssub.s32 %s18, %s34
      %s139 = sor.u32 %s137, %s138
      %s140 = ssub.s32 %s17, %s38
      %s141 = sor.u32 %s139, %s140
      %p142 = scmp.eq.s32.totalorder %s141, 0
      %s144 = sadd.s32 %s143, 1
      %s145 = scalar_select %p142, %s143, %s144
      %p148 = pneg %p142
      %p149 = scmp.eq.s32.totalorder %s9, 15
      %p150 = por %p148, %p149
      %p151 = scmp.ne.s32.totalorder %s143, %s146
      %p152 = scmp.eq.s32.totalorder %s9, 0
      %p153 = por %p151, %p152
      %p154 = scmp.ne.s32.totalorder %s143, %s146
      %p155 = scmp.eq.s32.totalorder %s14, 15
      %p156 = por %p154, %p155
      %p157 = scmp.ne.s32.totalorder %s146, %s147
      %p158 = scmp.eq.s32.totalorder %s14, 0
      %p159 = por %p157, %p158
      %p160 = scmp.ne.s32.totalorder %s146, %s147
      %p161 = scmp.eq.s32.totalorder %s15, 15
      %p162 = por %p160, %p161
      %p164 = scmp.ne.s32.totalorder %s147, %s163
      %p165 = scmp.eq.s32.totalorder %s15, 0
      %p166 = por %p164, %p165
      %p167 = scmp.le.s32.totalorder 1, %s9
      %p168 = scmp.lt.s32.totalorder %s9, 17
      %p169 = pnand %p167, %p168
      %p170 = pneg %p169
      // Predicated region
      $region9: #{transformer_forward.6} parent=5 // pred_check
        _
      $region10: #{transformer_forward.6} parent=5 // pred_check_branch
        %172 = sbr.rel (%p169) target = $region12
      $region11: #{transformer_forward.6} parent=5 // pred_region
        %s173 = ssub.s32 %s9, 1
      $region12: #{transformer_forward.6} parent=5 // pred_fallthru
        _
      %p174 = scmp.lt.s32.totalorder %s9, 16
      // Predicated region
      $region13: #{transformer_forward.6} parent=5 // pred_check
        %p175 = pneg %p174
      $region14: #{transformer_forward.6} parent=5 // pred_check_branch
        %177 = sbr.rel (%p175) target = $region16
      $region15: #{transformer_forward.6} parent=5 // pred_region
        // Predicated region
        $region17: #{transformer_forward.6} parent=15 // pred_check
          %p178 = pneg %p61
        $region18: #{transformer_forward.6} parent=15 // pred_check_branch
          %180 = sbr.rel (%p178) target = $region20
        $region19: #{transformer_forward.6} parent=15 // pred_region
          %s181 = sand.u32 %s51, 1
          %s182 = sand.u32 %s51, 1
          %s183 = smul.addr %s182, 8
          %s184 = scalar_lea.vmem [#allocation5], %s183
          %s185 = sadd.s32 %s17, 8
          %s186 = smul.u32 2, %s18
          %s187 = smul.addr %s186, 24
          %s188 = sadd.s32 %s185, %s187
          %s189 = smul.addr %s16, 48
          %s190 = sadd.s32 %s188, %s189
          %s191 = smul.addr %s190, 4
          %s192 = scalar_lea.vmem %s0, %s191
          // Predicated region
          $region21: #{transformer_forward.6} parent=19 // pred_check
            _
          $region22: #{transformer_forward.6} parent=19 // pred_check_branch
            %194 = sbr.rel (0) target = $region24
          $region23: #{transformer_forward.6} parent=19 // pred_region
            // Predicated region
            $region25: #{transformer_forward.6} parent=23 // pred_check
              _
            $region26: #{transformer_forward.6} parent=23 // pred_check_branch
              %196 = sbr.rel target = $region28
            $region27: #{transformer_forward.6} parent=23 // pred_region
              // Predicated region
              $region40: #{transformer_forward.6} parent=27 // pred_check
                _
              $region41: #{transformer_forward.6} parent=27 // pred_check_branch
                %214 = sbr.rel (0) target = $region43
              $region42: #{transformer_forward.6} parent=27 // pred_region
                loop: start=0, step=1, limit=1
                $region44: #{transformer_forward.6} parent=42 // loop_pre_header
                  _
                $region45: #{transformer_forward.6} parent=42 // loop_header
                  %s216 = sphi 0, %s220
                  %p217 = scmp.ge.s32.totalorder %s216, 1
                  %s221 = sphi %s192, %s192
                  %s222 = sphi %s184, %s184
                $region46: #{transformer_forward.6} parent=42 // loop_header_branch
                  %219 = sbr.rel (%p217) target = $region50
                $region47: #{transformer_forward.6} parent=42 // loop_body
                  _
                $region48: #{transformer_forward.6} parent=42 // loop_footer
                  %s220 = sadd.s32 1, %s216
                $region49: #{transformer_forward.6} parent=42 // loop_footer_branch
                  %215 = sbr.rel target = $region45
                $region50: #{transformer_forward.6} parent=42 // loop_exit
                  _
                %s224 = ssub.s32 16, 1
                loop: start=0, step=1, limit=1
                $region51: #{transformer_forward.6} parent=42 // loop_pre_header
                  _
                $region52: #{transformer_forward.6} parent=42 // loop_header
                  %s226 = sphi 0, %s230
                  %p227 = scmp.ge.s32.totalorder %s226, 1
                  %s231 = sphi %s192, %s192
                  %s232 = sphi %s184, %s184
                $region53: #{transformer_forward.6} parent=42 // loop_header_branch
                  %229 = sbr.rel (%p227) target = $region57
                $region54: #{transformer_forward.6} parent=42 // loop_body
                  %v233 = vld [vmem:[%s231] sm:%s224]
                  %234 = vst [vmem:[%s232] sm:%s224] %v233
                  %v235 = vld [vmem:[%s231 + $0x60] sm:%s224]
                  %236 = vst [vmem:[%s232 + $0x4] sm:%s224] %v235
                $region55: #{transformer_forward.6} parent=42 // loop_footer
                  %s230 = sadd.s32 1, %s226
                $region56: #{transformer_forward.6} parent=42 // loop_footer_branch
                  %225 = sbr.rel target = $region52
                $region57: #{transformer_forward.6} parent=42 // loop_exit
                  _
              $region43: #{transformer_forward.6} parent=27 // pred_fallthru
                _
            $region28: #{transformer_forward.6} parent=23 // pred_fallthru
              _
            // Predicated region
            $region29: #{transformer_forward.6} parent=23 // pred_check
              _
            $region30: #{transformer_forward.6} parent=23 // pred_check_branch
              %198 = sbr.rel (0) target = $region32
            $region31: #{transformer_forward.6} parent=23 // pred_region
              %s200 = ssub.s32 16, 1
              loop: start=0, step=1, limit=1
              $region33: #{transformer_forward.6} parent=31 // loop_pre_header
                _
              $region34: #{transformer_forward.6} parent=31 // loop_header
                %s202 = sphi 0, %s206
                %p203 = scmp.ge.s32.totalorder %s202, 1
                %s207 = sphi %s192, %s192
                %s208 = sphi %s184, %s184
              $region35: #{transformer_forward.6} parent=31 // loop_header_branch
                %205 = sbr.rel (%p203) target = $region39
              $region36: #{transformer_forward.6} parent=31 // loop_body
                %v209 = vld [vmem:[%s207] sm:%s200]
                %210 = vst [vmem:[%s208] sm:%s200] %v209
                %v211 = vld [vmem:[%s207 + $0x60] sm:%s200]
                %212 = vst [vmem:[%s208 + $0x4] sm:%s200] %v211
              $region37: #{transformer_forward.6} parent=31 // loop_footer
                %s206 = sadd.s32 1, %s202
              $region38: #{transformer_forward.6} parent=31 // loop_footer_branch
                %201 = sbr.rel target = $region34
              $region39: #{transformer_forward.6} parent=31 // loop_exit
                _
            $region32: #{transformer_forward.6} parent=23 // pred_fallthru
              _
          $region24: #{transformer_forward.6} parent=19 // pred_fallthru
            _
          %237 = vnop
        $region20: #{transformer_forward.6} parent=15 // pred_fallthru
          _
        // Predicated region
        $region58: #{transformer_forward.6} parent=15 // pred_check
          %p238 = pneg %p91
        $region59: #{transformer_forward.6} parent=15 // pred_check_branch
          %240 = sbr.rel (%p238) target = $region61
        $region60: #{transformer_forward.6} parent=15 // pred_region
          %s241 = sand.u32 %s81, 1
          %s242 = sand.u32 %s81, 1
          %s243 = smul.addr %s242, 8
          %s244 = scalar_lea.vmem [#allocation6], %s243
          %s245 = smul.u32 2, %s19
          %s246 = smul.addr %s245, 24
          %s247 = sadd.s32 %s17, %s246
          %s248 = smul.addr %s16, 48
          %s249 = sadd.s32 %s247, %s248
          %s250 = smul.addr %s249, 4
          %s251 = scalar_lea.vmem %s1, %s250
          // Predicated region
          $region62: #{transformer_forward.6} parent=60 // pred_check
            _
          $region63: #{transformer_forward.6} parent=60 // pred_check_branch
            %253 = sbr.rel (0) target = $region65
          $region64: #{transformer_forward.6} parent=60 // pred_region
            // Predicated region
            $region66: #{transformer_forward.6} parent=64 // pred_check
              _
            $region67: #{transformer_forward.6} parent=64 // pred_check_branch
              %255 = sbr.rel target = $region69
            $region68: #{transformer_forward.6} parent=64 // pred_region
              // Predicated region
              $region81: #{transformer_forward.6} parent=68 // pred_check
                _
              $region82: #{transformer_forward.6} parent=68 // pred_check_branch
                %273 = sbr.rel (0) target = $region84
              $region83: #{transformer_forward.6} parent=68 // pred_region
                loop: start=0, step=1, limit=1
                $region85: #{transformer_forward.6} parent=83 // loop_pre_header
                  _
                $region86: #{transformer_forward.6} parent=83 // loop_header
                  %s275 = sphi 0, %s279
                  %p276 = scmp.ge.s32.totalorder %s275, 1
                  %s280 = sphi %s251, %s251
                  %s281 = sphi %s244, %s244
                $region87: #{transformer_forward.6} parent=83 // loop_header_branch
                  %278 = sbr.rel (%p276) target = $region91
                $region88: #{transformer_forward.6} parent=83 // loop_body
                  _
                $region89: #{transformer_forward.6} parent=83 // loop_footer
                  %s279 = sadd.s32 1, %s275
                $region90: #{transformer_forward.6} parent=83 // loop_footer_branch
                  %274 = sbr.rel target = $region86
                $region91: #{transformer_forward.6} parent=83 // loop_exit
                  _
                %s283 = ssub.s32 16, 1
                loop: start=0, step=1, limit=1
                $region92: #{transformer_forward.6} parent=83 // loop_pre_header
                  _
                $region93: #{transformer_forward.6} parent=83 // loop_header
                  %s285 = sphi 0, %s289
                  %p286 = scmp.ge.s32.totalorder %s285, 1
                  %s290 = sphi %s251, %s251
                  %s291 = sphi %s244, %s244
                $region94: #{transformer_forward.6} parent=83 // loop_header_branch
                  %288 = sbr.rel (%p286) target = $region98
                $region95: #{transformer_forward.6} parent=83 // loop_body
                  %v292 = vld [vmem:[%s290] sm:%s283]
                  %293 = vst [vmem:[%s291] sm:%s283] %v292
                  %v294 = vld [vmem:[%s290 + $0x60] sm:%s283]
                  %295 = vst [vmem:[%s291 + $0x4] sm:%s283] %v294
                $region96: #{transformer_forward.6} parent=83 // loop_footer
                  %s289 = sadd.s32 1, %s285
                $region97: #{transformer_forward.6} parent=83 // loop_footer_branch
                  %284 = sbr.rel target = $region93
                $region98: #{transformer_forward.6} parent=83 // loop_exit
                  _
              $region84: #{transformer_forward.6} parent=68 // pred_fallthru
                _
            $region69: #{transformer_forward.6} parent=64 // pred_fallthru
              _
            // Predicated region
            $region70: #{transformer_forward.6} parent=64 // pred_check
              _
            $region71: #{transformer_forward.6} parent=64 // pred_check_branch
              %257 = sbr.rel (0) target = $region73
            $region72: #{transformer_forward.6} parent=64 // pred_region
              %s259 = ssub.s32 16, 1
              loop: start=0, step=1, limit=1
              $region74: #{transformer_forward.6} parent=72 // loop_pre_header
                _
              $region75: #{transformer_forward.6} parent=72 // loop_header
                %s261 = sphi 0, %s265
                %p262 = scmp.ge.s32.totalorder %s261, 1
                %s266 = sphi %s251, %s251
                %s267 = sphi %s244, %s244
              $region76: #{transformer_forward.6} parent=72 // loop_header_branch
                %264 = sbr.rel (%p262) target = $region80
              $region77: #{transformer_forward.6} parent=72 // loop_body
                %v268 = vld [vmem:[%s266] sm:%s259]
                %269 = vst [vmem:[%s267] sm:%s259] %v268
                %v270 = vld [vmem:[%s266 + $0x60] sm:%s259]
                %271 = vst [vmem:[%s267 + $0x4] sm:%s259] %v270
              $region78: #{transformer_forward.6} parent=72 // loop_footer
                %s265 = sadd.s32 1, %s261
              $region79: #{transformer_forward.6} parent=72 // loop_footer_branch
                %260 = sbr.rel target = $region75
              $region80: #{transformer_forward.6} parent=72 // loop_exit
                _
            $region73: #{transformer_forward.6} parent=64 // pred_fallthru
              _
          $region65: #{transformer_forward.6} parent=60 // pred_fallthru
            _
          %296 = vnop
        $region61: #{transformer_forward.6} parent=15 // pred_fallthru
          _
        // Predicated region
        $region99: #{transformer_forward.6} parent=15 // pred_check
          %p297 = pneg %p123
        $region100: #{transformer_forward.6} parent=15 // pred_check_branch
          %299 = sbr.rel (%p297) target = $region102
        $region101: #{transformer_forward.6} parent=15 // pred_region
          %s300 = sand.u32 %s113, 1
          %s301 = sand.u32 %s113, 1
          %s302 = smul.addr %s301, 8
          %s303 = scalar_lea.vmem [#allocation7], %s302
          %s304 = sadd.s32 %s17, 16
          %s305 = smul.u32 2, %s19
          %s306 = smul.addr %s305, 24
          %s307 = sadd.s32 %s304, %s306
          %s308 = smul.addr %s16, 48
          %s309 = sadd.s32 %s307, %s308
          %s310 = smul.addr %s309, 4
          %s311 = scalar_lea.vmem %s2, %s310
          // Predicated region
          $region103: #{transformer_forward.6} parent=101 // pred_check
            _
          $region104: #{transformer_forward.6} parent=101 // pred_check_branch
            %313 = sbr.rel (0) target = $region106
          $region105: #{transformer_forward.6} parent=101 // pred_region
            // Predicated region
            $region107: #{transformer_forward.6} parent=105 // pred_check
              _
            $region108: #{transformer_forward.6} parent=105 // pred_check_branch
              %315 = sbr.rel target = $region110
            $region109: #{transformer_forward.6} parent=105 // pred_region
              // Predicated region
              $region122: #{transformer_forward.6} parent=109 // pred_check
                _
              $region123: #{transformer_forward.6} parent=109 // pred_check_branch
                %333 = sbr.rel (0) target = $region125
              $region124: #{transformer_forward.6} parent=109 // pred_region
                loop: start=0, step=1, limit=1
                $region126: #{transformer_forward.6} parent=124 // loop_pre_header
                  _
                $region127: #{transformer_forward.6} parent=124 // loop_header
                  %s335 = sphi 0, %s339
                  %p336 = scmp.ge.s32.totalorder %s335, 1
                  %s340 = sphi %s311, %s311
                  %s341 = sphi %s303, %s303
                $region128: #{transformer_forward.6} parent=124 // loop_header_branch
                  %338 = sbr.rel (%p336) target = $region132
                $region129: #{transformer_forward.6} parent=124 // loop_body
                  _
                $region130: #{transformer_forward.6} parent=124 // loop_footer
                  %s339 = sadd.s32 1, %s335
                $region131: #{transformer_forward.6} parent=124 // loop_footer_branch
                  %334 = sbr.rel target = $region127
                $region132: #{transformer_forward.6} parent=124 // loop_exit
                  _
                %s343 = ssub.s32 16, 1
                loop: start=0, step=1, limit=1
                $region133: #{transformer_forward.6} parent=124 // loop_pre_header
                  _
                $region134: #{transformer_forward.6} parent=124 // loop_header
                  %s345 = sphi 0, %s349
                  %p346 = scmp.ge.s32.totalorder %s345, 1
                  %s350 = sphi %s311, %s311
                  %s351 = sphi %s303, %s303
                $region135: #{transformer_forward.6} parent=124 // loop_header_branch
                  %348 = sbr.rel (%p346) target = $region139
                $region136: #{transformer_forward.6} parent=124 // loop_body
                  %v352 = vld [vmem:[%s350] sm:%s343]
                  %353 = vst [vmem:[%s351] sm:%s343] %v352
                  %v354 = vld [vmem:[%s350 + $0x60] sm:%s343]
                  %355 = vst [vmem:[%s351 + $0x4] sm:%s343] %v354
                $region137: #{transformer_forward.6} parent=124 // loop_footer
                  %s349 = sadd.s32 1, %s345
                $region138: #{transformer_forward.6} parent=124 // loop_footer_branch
                  %344 = sbr.rel target = $region134
                $region139: #{transformer_forward.6} parent=124 // loop_exit
                  _
              $region125: #{transformer_forward.6} parent=109 // pred_fallthru
                _
            $region110: #{transformer_forward.6} parent=105 // pred_fallthru
              _
            // Predicated region
            $region111: #{transformer_forward.6} parent=105 // pred_check
              _
            $region112: #{transformer_forward.6} parent=105 // pred_check_branch
              %317 = sbr.rel (0) target = $region114
            $region113: #{transformer_forward.6} parent=105 // pred_region
              %s319 = ssub.s32 16, 1
              loop: start=0, step=1, limit=1
              $region115: #{transformer_forward.6} parent=113 // loop_pre_header
                _
              $region116: #{transformer_forward.6} parent=113 // loop_header
                %s321 = sphi 0, %s325
                %p322 = scmp.ge.s32.totalorder %s321, 1
                %s326 = sphi %s311, %s311
                %s327 = sphi %s303, %s303
              $region117: #{transformer_forward.6} parent=113 // loop_header_branch
                %324 = sbr.rel (%p322) target = $region121
              $region118: #{transformer_forward.6} parent=113 // loop_body
                %v328 = vld [vmem:[%s326] sm:%s319]
                %329 = vst [vmem:[%s327] sm:%s319] %v328
                %v330 = vld [vmem:[%s326 + $0x60] sm:%s319]
                %331 = vst [vmem:[%s327 + $0x4] sm:%s319] %v330
              $region119: #{transformer_forward.6} parent=113 // loop_footer
                %s325 = sadd.s32 1, %s321
              $region120: #{transformer_forward.6} parent=113 // loop_footer_branch
                %320 = sbr.rel target = $region116
              $region121: #{transformer_forward.6} parent=113 // loop_exit
                _
            $region114: #{transformer_forward.6} parent=105 // pred_fallthru
              _
          $region106: #{transformer_forward.6} parent=101 // pred_fallthru
            _
          %356 = vnop
        $region102: #{transformer_forward.6} parent=15 // pred_fallthru
          _
      $region16: #{transformer_forward.6} parent=5 // pred_fallthru
        _
      %p357 = scmp.le.s32.totalorder 1, %s9
      %p358 = scmp.lt.s32.totalorder %s9, 17
      %p359 = pnand %p357, %p358
      %p360 = pneg %p359
      // Predicated region
      $region140: #{transformer_forward.6} parent=5 // pred_check
        _
      $region141: #{transformer_forward.6} parent=5 // pred_check_branch
        %362 = sbr.rel (%p359) target = $region143
      $region142: #{transformer_forward.6} parent=5 // pred_region
        %s363 = ssub.s32 %s9, 1
        %s364 = sand.u32 %s54, 1
        %s365 = sand.u32 %s54, 1
        %s366 = smul.addr %s365, 8
        %s367 = scalar_lea.vmem [#allocation5], %s366
        // Predicated region
        $region144: #{transformer_forward.6} parent=142 // pred_check
          %p368 = pneg %p67
        $region145: #{transformer_forward.6} parent=142 // pred_check_branch
          %370 = sbr.rel (%p368) target = $region147
        $region146: #{transformer_forward.6} parent=142 // pred_region
          _
        $region147: #{transformer_forward.6} parent=142 // pred_fallthru
          _
        %s371 = sand.u32 %s84, 1
        %s372 = sand.u32 %s84, 1
        %s373 = smul.addr %s372, 8
        %s374 = scalar_lea.vmem [#allocation6], %s373
        // Predicated region
        $region148: #{transformer_forward.6} parent=142 // pred_check
          %p375 = pneg %p97
        $region149: #{transformer_forward.6} parent=142 // pred_check_branch
          %377 = sbr.rel (%p375) target = $region151
        $region150: #{transformer_forward.6} parent=142 // pred_region
          _
        $region151: #{transformer_forward.6} parent=142 // pred_fallthru
          _
        %s378 = sand.u32 %s116, 1
        %s379 = sand.u32 %s116, 1
        %s380 = smul.addr %s379, 8
        %s381 = scalar_lea.vmem [#allocation7], %s380
        // Predicated region
        $region152: #{transformer_forward.6} parent=142 // pred_check
          %p382 = pneg %p129
        $region153: #{transformer_forward.6} parent=142 // pred_check_branch
          %384 = sbr.rel (%p382) target = $region155
        $region154: #{transformer_forward.6} parent=142 // pred_region
          _
        $region155: #{transformer_forward.6} parent=142 // pred_fallthru
          _
        %s385 = sand.u32 %s54, 1
        %s386 = sand.u32 %s54, 1
        %s387 = smul.addr %s386, 8
        %s388 = scalar_lea.vmem [#allocation5], %s387
        %p389 = pneg %p67
        %p390 = pneg %p64
        %s391 = sand.u32 %s84, 1
        %s392 = sand.u32 %s84, 1
        %s393 = smul.addr %s392, 8
        %s394 = scalar_lea.vmem [#allocation6], %s393
        %p395 = pneg %p97
        %p396 = pneg %p94
        %s397 = sand.u32 %s116, 1
        %s398 = sand.u32 %s116, 1
        %s399 = smul.addr %s398, 8
        %s400 = scalar_lea.vmem [#allocation7], %s399
        %p401 = pneg %p129
        %p402 = pneg %p126
        %p403 = pneg %p159
        %p404 = pneg %p156
        %s405 = sand.u32 %s146, 1
        %s406 = sand.u32 %s146, 1
        %s407 = smul.addr %s406, 8
        %s408 = scalar_lea.vmem [#allocation8], %s407
        %s409 = sadd.s32 %s21, 8
        %s410 = smul.u32 2, %s22
        %s411 = smul.u32 2, %s23
        %s412 = sadd.s32 %s21, 16
        %s413 = smul.u32 2, %s23
        %s414 = smul.u32 2, %s22
        %p416 = scmp.eq.s32.totalorder %s23, 0
        // Predicated region
        $region156: #{transformer_forward.6} parent=142 // pred_check
          %p417 = pneg %p416
        $region157: #{transformer_forward.6} parent=142 // pred_check_branch
          %419 = sbr.rel (%p417) target = $region159
        $region158: #{transformer_forward.6} parent=142 // pred_region
          %vm420 = vcmask 7168
          %421 = vst.msk [vmem:[#allocation2] sm:$0xff] %vm420, -1e+30
          %422 = vst.msk [vmem:[#allocation2 + $0x8] sm:$0xff] %vm420, -1e+30
          %423 = vst.msk [vmem:[#allocation3] sm:$0xff] %vm420, 0.0
          %424 = vst.msk [vmem:[#allocation3 + $0x8] sm:$0xff] %vm420, 0.0
          %425 = vst [vmem:[#allocation4] sm:$0xff] 0.0
          %426 = vst [vmem:[#allocation4 + $0x8] sm:$0xff] 0.0
        $region159: #{transformer_forward.6} parent=142 // pred_fallthru
          _
        %v427 = vld [vmem:[%s367] sm:$0xf]
        %v428 = vld [vmem:[%s367 + $0x4] sm:$0xf]
        %v429 = vunpack.c.l.bf16 %v427
        %v430 = vunpack.c.l.bf16 %v428
        %v431 = vmul.f32 %v429, 0.25
        %v432 = vmul.f32 %v430, 0.25
        %v433 = vpack.c.bf16 %v432, %v431
        %v434 = vld [vmem:[%s374] sm:$0xf]
        %v435 = vld [vmem:[%s374 + $0x4] sm:$0xf]
        %v438 = vunpack.c.l.b16 %v434
        %v439 = vunpack.c.l.b16 %v435
        %v440 = vpack.c.b16 %v439, %v438
        %442 = vmatpush.bf16.xpose.msra.mxu0 0
        %443 = vmatpush.bf16.xpose.msra.mxu0 0
        %444 = vmatpush.bf16.xpose.msra.mxu0 0
        %445 = vmatpush.bf16.xpose.msra.mxu0 0
        %446 = vmatpush.bf16.xpose.msra.mxu0 0
        %447 = vmatpush.bf16.xpose.msra.mxu0 0
        %448 = vmatpush.bf16.xpose.msra.mxu0 0
        %449 = vmatpush.bf16.xpose.msra.mxu0 %v440
        %450 = vmatmul.bf16.gmra.mxu0 %v433
        %v451 = vpop.f32.mrf.mxu0
        %v452 = vadd.f32 0.0, %v451
        %v453 = vpop.f32.mrf.mxu0
        %v454 = vadd.f32 0.0, %v453
        %455 = vdwg.mxu0
        %v456 = vld [vmem:[#allocation2] sm:$0xff]
        %v457 = vld [vmem:[#allocation2 + $0x8] sm:$0xff]
        %vm458 = vcmask 130048
        %v459 = vsel %vm458, %v452, -inf
        %460 = vmax.xlane.f32.xlu0 %v459
        %v461 = vpop.xlane.xlu0 %460
        %v462 = vsel %vm458, %v454, -inf
        %463 = vmax.xlane.f32.xlu0 %v462
        %v464 = vpop.xlane.xlu0 %463
        %v465 = vmax.f32 %v456, %v461
        %v466 = vmax.f32 %v457, %v464
        %v467 = vsub.f32 %v456, %v465
        %v468 = vsub.f32 %v457, %v466
        %v469 = vmul.f32 %v467, 1.442695
        %v470 = vpow.pop %v469
        %v471 = vmul.f32 %v468, 1.442695
        %v472 = vpow.pop %v471
        %474 = vset.pattern.permute.xlu0 0
        %475 = vperm.xlu0 %474, %v465
        %v476 = vpop.permute.xlu0 %475
        %479 = vset.pattern.permute.xlu0 0
        %480 = vperm.xlu0 %479, %v466
        %v481 = vpop.permute.xlu0 %480
        %v483 = vsub.f32 %v452, %v476
        %v484 = vsub.f32 %v454, %v481
        %v485 = vmul.f32 %v483, 1.442695
        %v486 = vpow.pop %v485
        %v487 = vmul.f32 %v484, 1.442695
        %v488 = vpow.pop %v487
        %v489 = vld [vmem:[#allocation3] sm:$0xff]
        %v490 = vld [vmem:[#allocation3 + $0x8] sm:$0xff]
        %v491 = vmul.f32 %v470, %v489
        %v492 = vmul.f32 %v472, %v490
        %v493 = vsel %vm458, %v486, 0.0
        %494 = vadd.xlane.f32.xlu0 %v493
        %v495 = vpop.xlane.xlu0 %494
        %v496 = vsel %vm458, %v488, 0.0
        %497 = vadd.xlane.f32.xlu0 %v496
        %v498 = vpop.xlane.xlu0 %497
        %v499 = vadd.f32 %v491, %v495
        %v500 = vadd.f32 %v492, %v498
        %vm501 = vcmask 7168
        %502 = vst.msk [vmem:[#allocation3] sm:$0xff] %vm501, %v499
        %503 = vst.msk [vmem:[#allocation3 + $0x8] sm:$0xff] %vm501, %v500
        %v504 = vld [vmem:[#allocation4] sm:$0xff]
        %v505 = vld [vmem:[#allocation4 + $0x8] sm:$0xff]
        %507 = vset.pattern.permute.xlu0 0
        %508 = vperm.xlu0 %507, %v470
        %v509 = vpop.permute.xlu0 %508
        %512 = vset.pattern.permute.xlu0 0
        %513 = vperm.xlu0 %512, %v472
        %v514 = vpop.permute.xlu0 %513
        %v516 = vmul.f32 %v509, %v504
        %v517 = vmul.f32 %v514, %v505
        %v518 = vpack.c.bf16 %v488, %v486
        %v519 = vld [vmem:[%s381] sm:$0xf]
        %v520 = vld [vmem:[%s381 + $0x4] sm:$0xf]
        %v523 = vunpack.c.l.b16 %v519
        %v524 = vunpack.c.l.b16 %v520
        %v525 = vpack.c.b16 %v524, %v523
        %v528 = vsel %vm458, %v518, 0
        %530 = vmatpush.bf16.msra.mxu0 0
        %531 = vmatpush.bf16.msra.mxu0 0
        %532 = vmatpush.bf16.msra.mxu0 0
        %533 = vmatpush.bf16.msra.mxu0 0
        %534 = vmatpush.bf16.msra.mxu0 0
        %535 = vmatpush.bf16.msra.mxu0 0
        %536 = vmatpush.bf16.msra.mxu0 0
        %537 = vmatpush.bf16.msra.mxu0 %v525
        %538 = vmatmul.bf16.gmra.mxu0 %v528
        %v539 = vpop.f32.mrf.mxu0
        %v540 = vadd.f32 0.0, %v539
        %v541 = vpop.f32.mrf.mxu0
        %v542 = vadd.f32 0.0, %v541
        %543 = vdwg.mxu0
        %v544 = vadd.f32 %v516, %v540
        %v545 = vadd.f32 %v517, %v542
        %546 = vst [vmem:[#allocation4] sm:$0xff] %v544
        %547 = vst [vmem:[#allocation4 + $0x8] sm:$0xff] %v545
        %548 = vst.msk [vmem:[#allocation2] sm:$0xff] %vm501, %v465
        %549 = vst.msk [vmem:[#allocation2 + $0x8] sm:$0xff] %vm501, %v466
        // Predicated region
        $region160: #{transformer_forward.6} parent=142 // pred_check
          %p550 = pneg %p416
        $region161: #{transformer_forward.6} parent=142 // pred_check_branch
          %552 = sbr.rel (%p550) target = $region163
        $region162: #{transformer_forward.6} parent=142 // pred_region
          %v553 = vld [vmem:[#allocation4] sm:$0xff]
          %v554 = vld [vmem:[#allocation4 + $0x8] sm:$0xff]
          %v555 = vld [vmem:[#allocation3] sm:$0xff]
          %v556 = vld [vmem:[#allocation3 + $0x8] sm:$0xff]
          %v557 = vrcp.pop %v555
          %v558 = vrcp.pop %v556
          %560 = vset.pattern.permute.xlu0 0
          %561 = vperm.xlu0 %560, %v557
          %v562 = vpop.permute.xlu0 %561
          %565 = vset.pattern.permute.xlu0 0
          %566 = vperm.xlu0 %565, %v558
          %v567 = vpop.permute.xlu0 %566
          %v569 = vmul.f32 %v553, %v562
          %v570 = vmul.f32 %v554, %v567
          %v571 = vpack.c.bf16 %v569, %v569
          %v572 = vpack.c.bf16 %v570, %v570
          %573 = vst [vmem:[%s408] sm:$0xf] %v571
          %574 = vst [vmem:[%s408 + $0x4] sm:$0xf] %v572
        $region163: #{transformer_forward.6} parent=142 // pred_fallthru
          _
        %s575 = sand.u32 %s146, 1
        %s576 = sand.u32 %s146, 1
        %s577 = smul.addr %s576, 8
        %s578 = scalar_lea.vmem [#allocation8], %s577
        // Predicated region
        $region164: #{transformer_forward.6} parent=142 // pred_check
          %p579 = pneg %p156
        $region165: #{transformer_forward.6} parent=142 // pred_check_branch
          %581 = sbr.rel (%p579) target = $region167
        $region166: #{transformer_forward.6} parent=142 // pred_region
          %s582 = smul.u32 2, %s22
          %s583 = smul.addr %s582, 8
          %s584 = sadd.s32 %s21, %s583
          %s585 = smul.addr %s20, 16
          %s586 = sadd.s32 %s584, %s585
          %s587 = smul.addr %s586, 4
          %s588 = scalar_lea.vmem %s3, %s587
          // Predicated region
          $region168: #{transformer_forward.6} parent=166 // pred_check
            _
          $region169: #{transformer_forward.6} parent=166 // pred_check_branch
            %590 = sbr.rel (0) target = $region171
          $region170: #{transformer_forward.6} parent=166 // pred_region
            // Predicated region
            $region172: #{transformer_forward.6} parent=170 // pred_check
              _
            $region173: #{transformer_forward.6} parent=170 // pred_check_branch
              %592 = sbr.rel target = $region175
            $region174: #{transformer_forward.6} parent=170 // pred_region
              // Predicated region
              $region187: #{transformer_forward.6} parent=174 // pred_check
                _
              $region188: #{transformer_forward.6} parent=174 // pred_check_branch
                %610 = sbr.rel (0) target = $region190
              $region189: #{transformer_forward.6} parent=174 // pred_region
                loop: start=0, step=1, limit=1
                $region191: #{transformer_forward.6} parent=189 // loop_pre_header
                  _
                $region192: #{transformer_forward.6} parent=189 // loop_header
                  %s612 = sphi 0, %s616
                  %p613 = scmp.ge.s32.totalorder %s612, 1
                  %s617 = sphi %s578, %s578
                  %s618 = sphi %s588, %s588
                $region193: #{transformer_forward.6} parent=189 // loop_header_branch
                  %615 = sbr.rel (%p613) target = $region197
                $region194: #{transformer_forward.6} parent=189 // loop_body
                  _
                $region195: #{transformer_forward.6} parent=189 // loop_footer
                  %s616 = sadd.s32 1, %s612
                $region196: #{transformer_forward.6} parent=189 // loop_footer_branch
                  %611 = sbr.rel target = $region192
                $region197: #{transformer_forward.6} parent=189 // loop_exit
                  _
                %s620 = ssub.s32 16, 1
                loop: start=0, step=1, limit=1
                $region198: #{transformer_forward.6} parent=189 // loop_pre_header
                  _
                $region199: #{transformer_forward.6} parent=189 // loop_header
                  %s622 = sphi 0, %s626
                  %p623 = scmp.ge.s32.totalorder %s622, 1
                  %s627 = sphi %s578, %s578
                  %s628 = sphi %s588, %s588
                $region200: #{transformer_forward.6} parent=189 // loop_header_branch
                  %625 = sbr.rel (%p623) target = $region204
                $region201: #{transformer_forward.6} parent=189 // loop_body
                  %v629 = vld [vmem:[%s627] sm:%s620]
                  %630 = vst [vmem:[%s628] sm:%s620] %v629
                  %v631 = vld [vmem:[%s627 + $0x4] sm:%s620]
                  %632 = vst [vmem:[%s628 + $0x20] sm:%s620] %v631
                $region202: #{transformer_forward.6} parent=189 // loop_footer
                  %s626 = sadd.s32 1, %s622
                $region203: #{transformer_forward.6} parent=189 // loop_footer_branch
                  %621 = sbr.rel target = $region199
                $region204: #{transformer_forward.6} parent=189 // loop_exit
                  _
              $region190: #{transformer_forward.6} parent=174 // pred_fallthru
                _
            $region175: #{transformer_forward.6} parent=170 // pred_fallthru
              _
            // Predicated region
            $region176: #{transformer_forward.6} parent=170 // pred_check
              _
            $region177: #{transformer_forward.6} parent=170 // pred_check_branch
              %594 = sbr.rel (0) target = $region179
            $region178: #{transformer_forward.6} parent=170 // pred_region
              %s596 = ssub.s32 16, 1
              loop: start=0, step=1, limit=1
              $region180: #{transformer_forward.6} parent=178 // loop_pre_header
                _
              $region181: #{transformer_forward.6} parent=178 // loop_header
                %s598 = sphi 0, %s602
                %p599 = scmp.ge.s32.totalorder %s598, 1
                %s603 = sphi %s578, %s578
                %s604 = sphi %s588, %s588
              $region182: #{transformer_forward.6} parent=178 // loop_header_branch
                %601 = sbr.rel (%p599) target = $region186
              $region183: #{transformer_forward.6} parent=178 // loop_body
                %v605 = vld [vmem:[%s603] sm:%s596]
                %606 = vst [vmem:[%s604] sm:%s596] %v605
                %v607 = vld [vmem:[%s603 + $0x4] sm:%s596]
                %608 = vst [vmem:[%s604 + $0x20] sm:%s596] %v607
              $region184: #{transformer_forward.6} parent=178 // loop_footer
                %s602 = sadd.s32 1, %s598
              $region185: #{transformer_forward.6} parent=178 // loop_footer_branch
                %597 = sbr.rel target = $region181
              $region186: #{transformer_forward.6} parent=178 // loop_exit
                _
            $region179: #{transformer_forward.6} parent=170 // pred_fallthru
              _
          $region171: #{transformer_forward.6} parent=166 // pred_fallthru
            _
          %633 = vnop
        $region167: #{transformer_forward.6} parent=142 // pred_fallthru
          _
      $region143: #{transformer_forward.6} parent=5 // pred_fallthru
        _
      %p634 = scmp.le.s32.totalorder 2, %s9
      // Predicated region
      $region205: #{transformer_forward.6} parent=5 // pred_check
        %p635 = pneg %p634
      $region206: #{transformer_forward.6} parent=5 // pred_check_branch
        %637 = sbr.rel (%p635) target = $region208
      $region207: #{transformer_forward.6} parent=5 // pred_region
        %s638 = ssub.s32 %s9, 2
        // Predicated region
        $region209: #{transformer_forward.6} parent=207 // pred_check
          %p639 = pneg %p162
        $region210: #{transformer_forward.6} parent=207 // pred_check_branch
          %641 = sbr.rel (%p639) target = $region212
        $region211: #{transformer_forward.6} parent=207 // pred_region
          %s642 = sand.u32 %s147, 1
          %s643 = sand.u32 %s147, 1
          %s644 = smul.addr %s643, 8
          %s645 = scalar_lea.vmem [#allocation8], %s644
        $region212: #{transformer_forward.6} parent=207 // pred_fallthru
          _
      $region208: #{transformer_forward.6} parent=5 // pred_fallthru
        _
    $region6: #{transformer_forward.6} parent=1 // loop_footer
      %s13 = sadd.s32 1, %s9
    $region7: #{transformer_forward.6} parent=1 // loop_footer_branch
      %8 = sbr.rel target = $region3
    $region8: #{transformer_forward.6} parent=1 // loop_exit
      _

// kernel: transformer_forward.9
$region0: #{transformer_forward.9}
  #allocation0 [shape = 'u32[]', space=smem, size = 0x4, offset = 0x4, fixed_abs, tag = 'smem constant byte address 0x4 - core index']
  #allocation1 [shape = 'u32[72,128]{1,0:T(1,128)}', space=vmem, size = 0x9000, scoped, tag = 'internal scratch']
  %s0 = inlined_call_operand.vmem [shape: f32[32,128], index: 0, kind: input, shape index: {}]
  %s1 = inlined_call_operand.vmem [shape: bf16[32,1024], index: 1, kind: input, shape index: {}]
  %s2 = inlined_call_operand.vmem [shape: bf16[1024,128], index: 2, kind: input, shape index: {}]
  %s3 = inlined_call_operand.vmem [shape: f32[1,128], index: 3, kind: input, shape index: {}]
  %s4 = inlined_call_operand.vmem [shape: f32[1,128], index: 4, kind: input, shape index: {}]
  %s5 = inlined_call_operand.vmem [shape: bf16[128,128], index: 5, kind: input, shape index: {}]
  %s6 = inlined_call_operand.vmem [shape: f32[1,128], index: 6, kind: input, shape index: {}]
  %s7 = inlined_call_operand.vmem [shape: f32[1,128], index: 7, kind: input, shape index: {}]
  %s8 = inlined_call_operand.vmem [shape: f32[1,128], index: 8, kind: input, shape index: {}]
  %s9 = inlined_call_operand.vmem [shape: bf16[128,8], index: 9, kind: input, shape index: {}]
  %s10 = inlined_call_operand.vmem [shape: f32[1,8], index: 10, kind: input, shape index: {}]
  %s11 = inlined_call_operand.vmem [shape: f32[32,8], index: 11, kind: output, shape index: {}]
  %s12 = sld [smem:[#allocation0]]
  $region54: #{transformer_forward.9} parent=0
    _
  %s14 = ssub.s32 1, %s12
  %s15 = scalar_select 0, %s14, %s12
  // Predicated region
  $region2: #{transformer_forward.9} parent=0 // pred_check
    _
  $region3: #{transformer_forward.9} parent=0 // pred_check_branch
    %17 = sbr.rel (0) target = $region5
  $region4: #{transformer_forward.9} parent=0 // pred_region
    _
  $region5: #{transformer_forward.9} parent=0 // pred_fallthru
    _
  // Predicated region
  $region6: #{transformer_forward.9} parent=0 // pred_check
    _
  $region7: #{transformer_forward.9} parent=0 // pred_check_branch
    %19 = sbr.rel (0) target = $region9
  $region8: #{transformer_forward.9} parent=0 // pred_region
    _
  $region9: #{transformer_forward.9} parent=0 // pred_fallthru
    _
  // Predicated region
  $region10: #{transformer_forward.9} parent=0 // pred_check
    _
  $region11: #{transformer_forward.9} parent=0 // pred_check_branch
    %21 = sbr.rel (0) target = $region13
  $region12: #{transformer_forward.9} parent=0 // pred_region
    _
  $region13: #{transformer_forward.9} parent=0 // pred_fallthru
    _
  // Predicated region
  $region14: #{transformer_forward.9} parent=0 // pred_check
    _
  $region15: #{transformer_forward.9} parent=0 // pred_check_branch
    %23 = sbr.rel (0) target = $region17
  $region16: #{transformer_forward.9} parent=0 // pred_region
    _
  $region17: #{transformer_forward.9} parent=0 // pred_fallthru
    _
  // Predicated region
  $region18: #{transformer_forward.9} parent=0 // pred_check
    _
  $region19: #{transformer_forward.9} parent=0 // pred_check_branch
    %25 = sbr.rel (0) target = $region21
  $region20: #{transformer_forward.9} parent=0 // pred_region
    _
  $region21: #{transformer_forward.9} parent=0 // pred_fallthru
    _
  // Predicated region
  $region22: #{transformer_forward.9} parent=0 // pred_check
    _
  $region23: #{transformer_forward.9} parent=0 // pred_check_branch
    %27 = sbr.rel (0) target = $region25
  $region24: #{transformer_forward.9} parent=0 // pred_region
    _
  $region25: #{transformer_forward.9} parent=0 // pred_fallthru
    _
  // Predicated region
  $region26: #{transformer_forward.9} parent=0 // pred_check
    _
  $region27: #{transformer_forward.9} parent=0 // pred_check_branch
    %29 = sbr.rel (0) target = $region29
  $region28: #{transformer_forward.9} parent=0 // pred_region
    _
  $region29: #{transformer_forward.9} parent=0 // pred_fallthru
    _
  // Predicated region
  $region30: #{transformer_forward.9} parent=0 // pred_check
    _
  $region31: #{transformer_forward.9} parent=0 // pred_check_branch
    %31 = sbr.rel (0) target = $region33
  $region32: #{transformer_forward.9} parent=0 // pred_region
    _
  $region33: #{transformer_forward.9} parent=0 // pred_fallthru
    _
  // Predicated region
  $region34: #{transformer_forward.9} parent=0 // pred_check
    _
  $region35: #{transformer_forward.9} parent=0 // pred_check_branch
    %33 = sbr.rel (0) target = $region37
  $region36: #{transformer_forward.9} parent=0 // pred_region
    _
  $region37: #{transformer_forward.9} parent=0 // pred_fallthru
    _
  // Predicated region
  $region38: #{transformer_forward.9} parent=0 // pred_check
    _
  $region39: #{transformer_forward.9} parent=0 // pred_check_branch
    %35 = sbr.rel (0) target = $region41
  $region40: #{transformer_forward.9} parent=0 // pred_region
    _
  $region41: #{transformer_forward.9} parent=0 // pred_fallthru
    _
  // Predicated region
  $region42: #{transformer_forward.9} parent=0 // pred_check
    _
  $region43: #{transformer_forward.9} parent=0 // pred_check_branch
    %37 = sbr.rel (0) target = $region45
  $region44: #{transformer_forward.9} parent=0 // pred_region
    _
  $region45: #{transformer_forward.9} parent=0 // pred_fallthru
    _
  %v38 = vld [vmem:[%s0] sm:$0xff]
  %v39 = vld [vmem:[%s0 + $0x8] sm:$0xff]
  %v40 = vld [vmem:[%s0 + $0x10] sm:$0xff]
  %v41 = vld [vmem:[%s0 + $0x18] sm:$0xff]
  %v42 = vld [vmem:[%s1] sm:$0xff]
  %v43 = vld [vmem:[%s1 + $0x8] sm:$0xff]
  %v44 = vld [vmem:[%s1 + $0x10] sm:$0xff]
  %v45 = vld [vmem:[%s1 + $0x18] sm:$0xff]
  %v46 = vld [vmem:[%s1 + $0x20] sm:$0xff]
  %v47 = vld [vmem:[%s1 + $0x28] sm:$0xff]
  %v48 = vld [vmem:[%s1 + $0x30] sm:$0xff]
  %v49 = vld [vmem:[%s1 + $0x38] sm:$0xff]
  %v50 = vld [vmem:[%s1 + $0x40] sm:$0xff]
  %v51 = vld [vmem:[%s1 + $0x48] sm:$0xff]
  %v52 = vld [vmem:[%s1 + $0x50] sm:$0xff]
  %v53 = vld [vmem:[%s1 + $0x58] sm:$0xff]
  %v54 = vld [vmem:[%s1 + $0x60] sm:$0xff]
  %v55 = vld [vmem:[%s1 + $0x68] sm:$0xff]
  %v56 = vld [vmem:[%s1 + $0x70] sm:$0xff]
  %v57 = vld [vmem:[%s1 + $0x78] sm:$0xff]
  %v58 = vld [vmem:[%s2] sm:$0xf]
  %v59 = vld [vmem:[%s2 + $0x4] sm:$0xf]
  %v60 = vld [vmem:[%s2 + $0x8] sm:$0xf]
  %v61 = vld [vmem:[%s2 + $0xc] sm:$0xf]
  %v62 = vld [vmem:[%s2 + $0x10] sm:$0xf]
  %v63 = vld [vmem:[%s2 + $0x14] sm:$0xf]
  %v64 = vld [vmem:[%s2 + $0x18] sm:$0xf]
  %v65 = vld [vmem:[%s2 + $0x1c] sm:$0xf]
  %v66 = vld [vmem:[%s2 + $0x20] sm:$0xf]
  %v67 = vld [vmem:[%s2 + $0x24] sm:$0xf]
  %v68 = vld [vmem:[%s2 + $0x28] sm:$0xf]
  %v69 = vld [vmem:[%s2 + $0x2c] sm:$0xf]
  %v70 = vld [vmem:[%s2 + $0x30] sm:$0xf]
  %v71 = vld [vmem:[%s2 + $0x34] sm:$0xf]
  %v72 = vld [vmem:[%s2 + $0x38] sm:$0xf]
  %v73 = vld [vmem:[%s2 + $0x3c] sm:$0xf]
  %v74 = vld [vmem:[%s2 + $0x40] sm:$0xf]
  %v75 = vld [vmem:[%s2 + $0x44] sm:$0xf]
  %v76 = vld [vmem:[%s2 + $0x48] sm:$0xf]
  %v77 = vld [vmem:[%s2 + $0x4c] sm:$0xf]
  %v78 = vld [vmem:[%s2 + $0x50] sm:$0xf]
  %v79 = vld [vmem:[%s2 + $0x54] sm:$0xf]
  %v80 = vld [vmem:[%s2 + $0x58] sm:$0xf]
  %v81 = vld [vmem:[%s2 + $0x5c] sm:$0xf]
  %v82 = vld [vmem:[%s2 + $0x60] sm:$0xf]
  %v83 = vld [vmem:[%s2 + $0x64] sm:$0xf]
  %v84 = vld [vmem:[%s2 + $0x68] sm:$0xf]
  %v85 = vld [vmem:[%s2 + $0x6c] sm:$0xf]
  %v86 = vld [vmem:[%s2 + $0x70] sm:$0xf]
  %v87 = vld [vmem:[%s2 + $0x74] sm:$0xf]
  %v88 = vld [vmem:[%s2 + $0x78] sm:$0xf]
  %v89 = vld [vmem:[%s2 + $0x7c] sm:$0xf]
  %v90 = vld [vmem:[%s2 + $0x80] sm:$0xf]
  %v91 = vld [vmem:[%s2 + $0x84] sm:$0xf]
  %v92 = vld [vmem:[%s2 + $0x88] sm:$0xf]
  %v93 = vld [vmem:[%s2 + $0x8c] sm:$0xf]
  %v94 = vld [vmem:[%s2 + $0x90] sm:$0xf]
  %v95 = vld [vmem:[%s2 + $0x94] sm:$0xf]
  %v96 = vld [vmem:[%s2 + $0x98] sm:$0xf]
  %v97 = vld [vmem:[%s2 + $0x9c] sm:$0xf]
  %v98 = vld [vmem:[%s2 + $0xa0] sm:$0xf]
  %v99 = vld [vmem:[%s2 + $0xa4] sm:$0xf]
  %v100 = vld [vmem:[%s2 + $0xa8] sm:$0xf]
  %v101 = vld [vmem:[%s2 + $0xac] sm:$0xf]
  %v102 = vld [vmem:[%s2 + $0xb0] sm:$0xf]
  %v103 = vld [vmem:[%s2 + $0xb4] sm:$0xf]
  %v104 = vld [vmem:[%s2 + $0xb8] sm:$0xf]
  %v105 = vld [vmem:[%s2 + $0xbc] sm:$0xf]
  %v106 = vld [vmem:[%s2 + $0xc0] sm:$0xf]
  %v107 = vld [vmem:[%s2 + $0xc4] sm:$0xf]
  %v108 = vld [vmem:[%s2 + $0xc8] sm:$0xf]
  %v109 = vld [vmem:[%s2 + $0xcc] sm:$0xf]
  %v110 = vld [vmem:[%s2 + $0xd0] sm:$0xf]
  %v111 = vld [vmem:[%s2 + $0xd4] sm:$0xf]
  %v112 = vld [vmem:[%s2 + $0xd8] sm:$0xf]
  %v113 = vld [vmem:[%s2 + $0xdc] sm:$0xf]
  %v114 = vld [vmem:[%s2 + $0xe0] sm:$0xf]
  %v115 = vld [vmem:[%s2 + $0xe4] sm:$0xf]
  %v116 = vld [vmem:[%s2 + $0xe8] sm:$0xf]
  %v117 = vld [vmem:[%s2 + $0xec] sm:$0xf]
  %v118 = vld [vmem:[%s2 + $0xf0] sm:$0xf]
  %v119 = vld [vmem:[%s2 + $0xf4] sm:$0xf]
  %v120 = vld [vmem:[%s2 + $0xf8] sm:$0xf]
  %v121 = vld [vmem:[%s2 + $0xfc] sm:$0xf]
  %v122 = vld [vmem:[%s2 + $0x100] sm:$0xf]
  %v123 = vld [vmem:[%s2 + $0x104] sm:$0xf]
  %v124 = vld [vmem:[%s2 + $0x108] sm:$0xf]
  %v125 = vld [vmem:[%s2 + $0x10c] sm:$0xf]
  %v126 = vld [vmem:[%s2 + $0x110] sm:$0xf]
  %v127 = vld [vmem:[%s2 + $0x114] sm:$0xf]
  %v128 = vld [vmem:[%s2 + $0x118] sm:$0xf]
  %v129 = vld [vmem:[%s2 + $0x11c] sm:$0xf]
  %v130 = vld [vmem:[%s2 + $0x120] sm:$0xf]
  %v131 = vld [vmem:[%s2 + $0x124] sm:$0xf]
  %v132 = vld [vmem:[%s2 + $0x128] sm:$0xf]
  %v133 = vld [vmem:[%s2 + $0x12c] sm:$0xf]
  %v134 = vld [vmem:[%s2 + $0x130] sm:$0xf]
  %v135 = vld [vmem:[%s2 + $0x134] sm:$0xf]
  %v136 = vld [vmem:[%s2 + $0x138] sm:$0xf]
  %v137 = vld [vmem:[%s2 + $0x13c] sm:$0xf]
  %v138 = vld [vmem:[%s2 + $0x140] sm:$0xf]
  %v139 = vld [vmem:[%s2 + $0x144] sm:$0xf]
  %v140 = vld [vmem:[%s2 + $0x148] sm:$0xf]
  %v141 = vld [vmem:[%s2 + $0x14c] sm:$0xf]
  %v142 = vld [vmem:[%s2 + $0x150] sm:$0xf]
  %v143 = vld [vmem:[%s2 + $0x154] sm:$0xf]
  %v144 = vld [vmem:[%s2 + $0x158] sm:$0xf]
  %v145 = vld [vmem:[%s2 + $0x15c] sm:$0xf]
  %v146 = vld [vmem:[%s2 + $0x160] sm:$0xf]
  %v147 = vld [vmem:[%s2 + $0x164] sm:$0xf]
  %v148 = vld [vmem:[%s2 + $0x168] sm:$0xf]
  %v149 = vld [vmem:[%s2 + $0x16c] sm:$0xf]
  %v150 = vld [vmem:[%s2 + $0x170] sm:$0xf]
  %v151 = vld [vmem:[%s2 + $0x174] sm:$0xf]
  %v152 = vld [vmem:[%s2 + $0x178] sm:$0xf]
  %v153 = vld [vmem:[%s2 + $0x17c] sm:$0xf]
  %v154 = vld [vmem:[%s2 + $0x180] sm:$0xf]
  %v155 = vld [vmem:[%s2 + $0x184] sm:$0xf]
  %v156 = vld [vmem:[%s2 + $0x188] sm:$0xf]
  %v157 = vld [vmem:[%s2 + $0x18c] sm:$0xf]
  %v158 = vld [vmem:[%s2 + $0x190] sm:$0xf]
  %v159 = vld [vmem:[%s2 + $0x194] sm:$0xf]
  %v160 = vld [vmem:[%s2 + $0x198] sm:$0xf]
  %v161 = vld [vmem:[%s2 + $0x19c] sm:$0xf]
  %v162 = vld [vmem:[%s2 + $0x1a0] sm:$0xf]
  %v163 = vld [vmem:[%s2 + $0x1a4] sm:$0xf]
  %v164 = vld [vmem:[%s2 + $0x1a8] sm:$0xf]
  %v165 = vld [vmem:[%s2 + $0x1ac] sm:$0xf]
  %v166 = vld [vmem:[%s2 + $0x1b0] sm:$0xf]
  %v167 = vld [vmem:[%s2 + $0x1b4] sm:$0xf]
  %v168 = vld [vmem:[%s2 + $0x1b8] sm:$0xf]
  %v169 = vld [vmem:[%s2 + $0x1bc] sm:$0xf]
  %v170 = vld [vmem:[%s2 + $0x1c0] sm:$0xf]
  %v171 = vld [vmem:[%s2 + $0x1c4] sm:$0xf]
  %v172 = vld [vmem:[%s2 + $0x1c8] sm:$0xf]
  %v173 = vld [vmem:[%s2 + $0x1cc] sm:$0xf]
  %v174 = vld [vmem:[%s2 + $0x1d0] sm:$0xf]
  %v175 = vld [vmem:[%s2 + $0x1d4] sm:$0xf]
  %v176 = vld [vmem:[%s2 + $0x1d8] sm:$0xf]
  %v177 = vld [vmem:[%s2 + $0x1dc] sm:$0xf]
  %v178 = vld [vmem:[%s2 + $0x1e0] sm:$0xf]
  %v179 = vld [vmem:[%s2 + $0x1e4] sm:$0xf]
  %v180 = vld [vmem:[%s2 + $0x1e8] sm:$0xf]
  %v181 = vld [vmem:[%s2 + $0x1ec] sm:$0xf]
  %v182 = vld [vmem:[%s2 + $0x1f0] sm:$0xf]
  %v183 = vld [vmem:[%s2 + $0x1f4] sm:$0xf]
  %v184 = vld [vmem:[%s2 + $0x1f8] sm:$0xf]
  %v185 = vld [vmem:[%s2 + $0x1fc] sm:$0xf]
  %v186 = vld [vmem:[%s3] sm:$0x1]
  %v187 = vld [vmem:[%s4] sm:$0x1]
  %v188 = vld [vmem:[%s5] sm:$0xf]
  %v189 = vld [vmem:[%s5 + $0x4] sm:$0xf]
  %v190 = vld [vmem:[%s5 + $0x8] sm:$0xf]
  %v191 = vld [vmem:[%s5 + $0xc] sm:$0xf]
  %v192 = vld [vmem:[%s5 + $0x10] sm:$0xf]
  %v193 = vld [vmem:[%s5 + $0x14] sm:$0xf]
  %v194 = vld [vmem:[%s5 + $0x18] sm:$0xf]
  %v195 = vld [vmem:[%s5 + $0x1c] sm:$0xf]
  %v196 = vld [vmem:[%s5 + $0x20] sm:$0xf]
  %v197 = vld [vmem:[%s5 + $0x24] sm:$0xf]
  %v198 = vld [vmem:[%s5 + $0x28] sm:$0xf]
  %v199 = vld [vmem:[%s5 + $0x2c] sm:$0xf]
  %v200 = vld [vmem:[%s5 + $0x30] sm:$0xf]
  %v201 = vld [vmem:[%s5 + $0x34] sm:$0xf]
  %v202 = vld [vmem:[%s5 + $0x38] sm:$0xf]
  %v203 = vld [vmem:[%s5 + $0x3c] sm:$0xf]
  %v204 = vld [vmem:[%s6] sm:$0x1]
  %v205 = vld [vmem:[%s7] sm:$0x1]
  %v206 = vld [vmem:[%s8] sm:$0x1]
  %v223 = vunpack.c.l.b16 %v42
  %v224 = vunpack.c.h.b16 %v42
  %v225 = vunpack.c.l.b16 %v43
  %v226 = vunpack.c.h.b16 %v43
  %v227 = vunpack.c.l.b16 %v44
  %v228 = vunpack.c.h.b16 %v44
  %v229 = vunpack.c.l.b16 %v45
  %v230 = vunpack.c.h.b16 %v45
  %v231 = vunpack.c.l.b16 %v46
  %v232 = vunpack.c.h.b16 %v46
  %v233 = vunpack.c.l.b16 %v47
  %v234 = vunpack.c.h.b16 %v47
  %v235 = vunpack.c.l.b16 %v48
  %v236 = vunpack.c.h.b16 %v48
  %v237 = vunpack.c.l.b16 %v49
  %v238 = vunpack.c.h.b16 %v49
  %v239 = vunpack.c.l.b16 %v50
  %v240 = vunpack.c.h.b16 %v50
  %v241 = vunpack.c.l.b16 %v51
  %v242 = vunpack.c.h.b16 %v51
  %v243 = vunpack.c.l.b16 %v52
  %v244 = vunpack.c.h.b16 %v52
  %v245 = vunpack.c.l.b16 %v53
  %v246 = vunpack.c.h.b16 %v53
  %v247 = vunpack.c.l.b16 %v54
  %v248 = vunpack.c.h.b16 %v54
  %v249 = vunpack.c.l.b16 %v55
  %v250 = vunpack.c.h.b16 %v55
  %v251 = vunpack.c.l.b16 %v56
  %v252 = vunpack.c.h.b16 %v56
  %v253 = vunpack.c.l.b16 %v57
  %v254 = vunpack.c.h.b16 %v57
  %v255 = vpack.c.b16 %v231, %v223
  %v256 = vpack.c.b16 %v232, %v224
  %v257 = vpack.c.b16 %v233, %v225
  %v258 = vpack.c.b16 %v234, %v226
  %v259 = vpack.c.b16 %v235, %v227
  %v260 = vpack.c.b16 %v236, %v228
  %v261 = vpack.c.b16 %v237, %v229
  %v262 = vpack.c.b16 %v238, %v230
  %v263 = vpack.c.b16 %v247, %v239
  %v264 = vpack.c.b16 %v248, %v240
  %v265 = vpack.c.b16 %v249, %v241
  %v266 = vpack.c.b16 %v250, %v242
  %v267 = vpack.c.b16 %v251, %v243
  %v268 = vpack.c.b16 %v252, %v244
  %v269 = vpack.c.b16 %v253, %v245
  %v270 = vpack.c.b16 %v254, %v246
  %v415 = vunpack.c.l.b16 %v58
  %v416 = vunpack.c.l.b16 %v59
  %v417 = vunpack.c.l.b16 %v60
  %v418 = vunpack.c.l.b16 %v61
  %v419 = vunpack.c.l.b16 %v62
  %v420 = vunpack.c.l.b16 %v63
  %v421 = vunpack.c.l.b16 %v64
  %v422 = vunpack.c.l.b16 %v65
  %v423 = vunpack.c.l.b16 %v66
  %v424 = vunpack.c.l.b16 %v67
  %v425 = vunpack.c.l.b16 %v68
  %v426 = vunpack.c.l.b16 %v69
  %v427 = vunpack.c.l.b16 %v70
  %v428 = vunpack.c.l.b16 %v71
  %v429 = vunpack.c.l.b16 %v72
  %v430 = vunpack.c.l.b16 %v73
  %v431 = vunpack.c.l.b16 %v74
  %v432 = vunpack.c.l.b16 %v75
  %v433 = vunpack.c.l.b16 %v76
  %v434 = vunpack.c.l.b16 %v77
  %v435 = vunpack.c.l.b16 %v78
  %v436 = vunpack.c.l.b16 %v79
  %v437 = vunpack.c.l.b16 %v80
  %v438 = vunpack.c.l.b16 %v81
  %v439 = vunpack.c.l.b16 %v82
  %v440 = vunpack.c.l.b16 %v83
  %v441 = vunpack.c.l.b16 %v84
  %v442 = vunpack.c.l.b16 %v85
  %v443 = vunpack.c.l.b16 %v86
  %v444 = vunpack.c.l.b16 %v87
  %v445 = vunpack.c.l.b16 %v88
  %v446 = vunpack.c.l.b16 %v89
  %v447 = vunpack.c.l.b16 %v90
  %v448 = vunpack.c.l.b16 %v91
  %v449 = vunpack.c.l.b16 %v92
  %v450 = vunpack.c.l.b16 %v93
  %v451 = vunpack.c.l.b16 %v94
  %v452 = vunpack.c.l.b16 %v95
  %v453 = vunpack.c.l.b16 %v96
  %v454 = vunpack.c.l.b16 %v97
  %v455 = vunpack.c.l.b16 %v98
  %v456 = vunpack.c.l.b16 %v99
  %v457 = vunpack.c.l.b16 %v100
  %v458 = vunpack.c.l.b16 %v101
  %v459 = vunpack.c.l.b16 %v102
  %v460 = vunpack.c.l.b16 %v103
  %v461 = vunpack.c.l.b16 %v104
  %v462 = vunpack.c.l.b16 %v105
  %v463 = vunpack.c.l.b16 %v106
  %v464 = vunpack.c.l.b16 %v107
  %v465 = vunpack.c.l.b16 %v108
  %v466 = vunpack.c.l.b16 %v109
  %v467 = vunpack.c.l.b16 %v110
  %v468 = vunpack.c.l.b16 %v111
  %v469 = vunpack.c.l.b16 %v112
  %v470 = vunpack.c.l.b16 %v113
  %v471 = vunpack.c.l.b16 %v114
  %v472 = vunpack.c.l.b16 %v115
  %v473 = vunpack.c.l.b16 %v116
  %v474 = vunpack.c.l.b16 %v117
  %v475 = vunpack.c.l.b16 %v118
  %v476 = vunpack.c.l.b16 %v119
  %v477 = vunpack.c.l.b16 %v120
  %v478 = vunpack.c.l.b16 %v121
  %v479 = vunpack.c.l.b16 %v122
  %v480 = vunpack.c.l.b16 %v123
  %v481 = vunpack.c.l.b16 %v124
  %v482 = vunpack.c.l.b16 %v125
  %v483 = vunpack.c.l.b16 %v126
  %v484 = vunpack.c.l.b16 %v127
  %v485 = vunpack.c.l.b16 %v128
  %v486 = vunpack.c.l.b16 %v129
  %v487 = vunpack.c.l.b16 %v130
  %v488 = vunpack.c.l.b16 %v131
  %v489 = vunpack.c.l.b16 %v132
  %v490 = vunpack.c.l.b16 %v133
  %v491 = vunpack.c.l.b16 %v134
  %v492 = vunpack.c.l.b16 %v135
  %v493 = vunpack.c.l.b16 %v136
  %v494 = vunpack.c.l.b16 %v137
  %v495 = vunpack.c.l.b16 %v138
  %v496 = vunpack.c.l.b16 %v139
  %v497 = vunpack.c.l.b16 %v140
  %v498 = vunpack.c.l.b16 %v141
  %v499 = vunpack.c.l.b16 %v142
  %v500 = vunpack.c.l.b16 %v143
  %v501 = vunpack.c.l.b16 %v144
  %v502 = vunpack.c.l.b16 %v145
  %v503 = vunpack.c.l.b16 %v146
  %v504 = vunpack.c.l.b16 %v147
  %v505 = vunpack.c.l.b16 %v148
  %v506 = vunpack.c.l.b16 %v149
  %v507 = vunpack.c.l.b16 %v150
  %v508 = vunpack.c.l.b16 %v151
  %v509 = vunpack.c.l.b16 %v152
  %v510 = vunpack.c.l.b16 %v153
  %v511 = vunpack.c.l.b16 %v154
  %v512 = vunpack.c.l.b16 %v155
  %v513 = vunpack.c.l.b16 %v156
  %v514 = vunpack.c.l.b16 %v157
  %v515 = vunpack.c.l.b16 %v158
  %v516 = vunpack.c.l.b16 %v159
  %v517 = vunpack.c.l.b16 %v160
  %v518 = vunpack.c.l.b16 %v161
  %v519 = vunpack.c.l.b16 %v162
  %v520 = vunpack.c.l.b16 %v163
  %v521 = vunpack.c.l.b16 %v164
  %v522 = vunpack.c.l.b16 %v165
  %v523 = vunpack.c.l.b16 %v166
  %v524 = vunpack.c.l.b16 %v167
  %v525 = vunpack.c.l.b16 %v168
  %v526 = vunpack.c.l.b16 %v169
  %v527 = vunpack.c.l.b16 %v170
  %v528 = vunpack.c.l.b16 %v171
  %v529 = vunpack.c.l.b16 %v172
  %v530 = vunpack.c.l.b16 %v173
  %v531 = vunpack.c.l.b16 %v174
  %v532 = vunpack.c.l.b16 %v175
  %v533 = vunpack.c.l.b16 %v176
  %v534 = vunpack.c.l.b16 %v177
  %v535 = vunpack.c.l.b16 %v178
  %v536 = vunpack.c.l.b16 %v179
  %v537 = vunpack.c.l.b16 %v180
  %v538 = vunpack.c.l.b16 %v181
  %v539 = vunpack.c.l.b16 %v182
  %v540 = vunpack.c.l.b16 %v183
  %v541 = vunpack.c.l.b16 %v184
  %v542 = vunpack.c.l.b16 %v185
  %v543 = vpack.c.b16 %v416, %v415
  %v544 = vpack.c.b16 %v418, %v417
  %v545 = vpack.c.b16 %v420, %v419
  %v546 = vpack.c.b16 %v422, %v421
  %v547 = vpack.c.b16 %v424, %v423
  %v548 = vpack.c.b16 %v426, %v425
  %v549 = vpack.c.b16 %v428, %v427
  %v550 = vpack.c.b16 %v430, %v429
  %v551 = vpack.c.b16 %v432, %v431
  %v552 = vpack.c.b16 %v434, %v433
  %v553 = vpack.c.b16 %v436, %v435
  %v554 = vpack.c.b16 %v438, %v437
  %v555 = vpack.c.b16 %v440, %v439
  %v556 = vpack.c.b16 %v442, %v441
  %v557 = vpack.c.b16 %v444, %v443
  %v558 = vpack.c.b16 %v446, %v445
  %v559 = vpack.c.b16 %v448, %v447
  %v560 = vpack.c.b16 %v450, %v449
  %v561 = vpack.c.b16 %v452, %v451
  %v562 = vpack.c.b16 %v454, %v453
  %v563 = vpack.c.b16 %v456, %v455
  %v564 = vpack.c.b16 %v458, %v457
  %v565 = vpack.c.b16 %v460, %v459
  %v566 = vpack.c.b16 %v462, %v461
  %v567 = vpack.c.b16 %v464, %v463
  %v568 = vpack.c.b16 %v466, %v465
  %v569 = vpack.c.b16 %v468, %v467
  %v570 = vpack.c.b16 %v470, %v469
  %v571 = vpack.c.b16 %v472, %v471
  %v572 = vpack.c.b16 %v474, %v473
  %v573 = vpack.c.b16 %v476, %v475
  %v574 = vpack.c.b16 %v478, %v477
  %v575 = vpack.c.b16 %v480, %v479
  %v576 = vpack.c.b16 %v482, %v481
  %v577 = vpack.c.b16 %v484, %v483
  %v578 = vpack.c.b16 %v486, %v485
  %v579 = vpack.c.b16 %v488, %v487
  %v580 = vpack.c.b16 %v490, %v489
  %v581 = vpack.c.b16 %v492, %v491
  %v582 = vpack.c.b16 %v494, %v493
  %v583 = vpack.c.b16 %v496, %v495
  %v584 = vpack.c.b16 %v498, %v497
  %v585 = vpack.c.b16 %v500, %v499
  %v586 = vpack.c.b16 %v502, %v501
  %v587 = vpack.c.b16 %v504, %v503
  %v588 = vpack.c.b16 %v506, %v505
  %v589 = vpack.c.b16 %v508, %v507
  %v590 = vpack.c.b16 %v510, %v509
  %v591 = vpack.c.b16 %v512, %v511
  %v592 = vpack.c.b16 %v514, %v513
  %v593 = vpack.c.b16 %v516, %v515
  %v594 = vpack.c.b16 %v518, %v517
  %v595 = vpack.c.b16 %v520, %v519
  %v596 = vpack.c.b16 %v522, %v521
  %v597 = vpack.c.b16 %v524, %v523
  %v598 = vpack.c.b16 %v526, %v525
  %v599 = vpack.c.b16 %v528, %v527
  %v600 = vpack.c.b16 %v530, %v529
  %v601 = vpack.c.b16 %v532, %v531
  %v602 = vpack.c.b16 %v534, %v533
  %v603 = vpack.c.b16 %v536, %v535
  %v604 = vpack.c.b16 %v538, %v537
  %v605 = vpack.c.b16 %v540, %v539
  %v606 = vpack.c.b16 %v542, %v541
  %671 = vmatpush.bf16.msra.mxu0 %v550
  %672 = vmatpush.bf16.msra.mxu0 %v549
  %673 = vmatpush.bf16.msra.mxu0 %v548
  %674 = vmatpush.bf16.msra.mxu0 %v547
  %675 = vmatpush.bf16.msra.mxu0 %v546
  %676 = vmatpush.bf16.msra.mxu0 %v545
  %677 = vmatpush.bf16.msra.mxu0 %v544
  %678 = vmatpush.bf16.msra.mxu0 %v543
  %679 = vmatmul.bf16.gmra.mxu0 %v255
  %v680 = vpop.f32.mrf.mxu0
  %v681 = vadd.f32 0.0, %v680
  %v682 = vpop.f32.mrf.mxu0
  %v683 = vadd.f32 0.0, %v682
  %684 = vmatmul.bf16.gmra.mxu0 %v263
  %v685 = vpop.f32.mrf.mxu0
  %v686 = vadd.f32 0.0, %v685
  %v687 = vpop.f32.mrf.mxu0
  %v688 = vadd.f32 0.0, %v687
  %689 = vdwg.mxu0
  %690 = vmatpush.bf16.msra.mxu0 %v558
  %691 = vmatpush.bf16.msra.mxu0 %v557
  %692 = vmatpush.bf16.msra.mxu0 %v556
  %693 = vmatpush.bf16.msra.mxu0 %v555
  %694 = vmatpush.bf16.msra.mxu0 %v554
  %695 = vmatpush.bf16.msra.mxu0 %v553
  %696 = vmatpush.bf16.msra.mxu0 %v552
  %697 = vmatpush.bf16.msra.mxu0 %v551
  %698 = vmatmul.bf16.gmra.mxu0 %v256
  %v699 = vpop.f32.mrf.mxu0
  %v700 = vadd.f32 %v681, %v699
  %v701 = vpop.f32.mrf.mxu0
  %v702 = vadd.f32 %v683, %v701
  %703 = vmatmul.bf16.gmra.mxu0 %v264
  %v704 = vpop.f32.mrf.mxu0
  %v705 = vadd.f32 %v686, %v704
  %v706 = vpop.f32.mrf.mxu0
  %v707 = vadd.f32 %v688, %v706
  %708 = vdwg.mxu0
  %709 = vmatpush.bf16.msra.mxu0 %v566
  %710 = vmatpush.bf16.msra.mxu0 %v565
  %711 = vmatpush.bf16.msra.mxu0 %v564
  %712 = vmatpush.bf16.msra.mxu0 %v563
  %713 = vmatpush.bf16.msra.mxu0 %v562
  %714 = vmatpush.bf16.msra.mxu0 %v561
  %715 = vmatpush.bf16.msra.mxu0 %v560
  %716 = vmatpush.bf16.msra.mxu0 %v559
  %717 = vmatmul.bf16.gmra.mxu0 %v257
  %v718 = vpop.f32.mrf.mxu0
  %v719 = vadd.f32 %v700, %v718
  %v720 = vpop.f32.mrf.mxu0
  %v721 = vadd.f32 %v702, %v720
  %722 = vmatmul.bf16.gmra.mxu0 %v265
  %v723 = vpop.f32.mrf.mxu0
  %v724 = vadd.f32 %v705, %v723
  %v725 = vpop.f32.mrf.mxu0
  %v726 = vadd.f32 %v707, %v725
  %727 = vdwg.mxu0
  %728 = vmatpush.bf16.msra.mxu0 %v574
  %729 = vmatpush.bf16.msra.mxu0 %v573
  %730 = vmatpush.bf16.msra.mxu0 %v572
  %731 = vmatpush.bf16.msra.mxu0 %v571
  %732 = vmatpush.bf16.msra.mxu0 %v570
  %733 = vmatpush.bf16.msra.mxu0 %v569
  %734 = vmatpush.bf16.msra.mxu0 %v568
  %735 = vmatpush.bf16.msra.mxu0 %v567
  %736 = vmatmul.bf16.gmra.mxu0 %v258
  %v737 = vpop.f32.mrf.mxu0
  %v738 = vadd.f32 %v719, %v737
  %v739 = vpop.f32.mrf.mxu0
  %v740 = vadd.f32 %v721, %v739
  %741 = vmatmul.bf16.gmra.mxu0 %v266
  %v742 = vpop.f32.mrf.mxu0
  %v743 = vadd.f32 %v724, %v742
  %v744 = vpop.f32.mrf.mxu0
  %v745 = vadd.f32 %v726, %v744
  %746 = vdwg.mxu0
  %747 = vmatpush.bf16.msra.mxu0 %v582
  %748 = vmatpush.bf16.msra.mxu0 %v581
  %749 = vmatpush.bf16.msra.mxu0 %v580
  %750 = vmatpush.bf16.msra.mxu0 %v579
  %751 = vmatpush.bf16.msra.mxu0 %v578
  %752 = vmatpush.bf16.msra.mxu0 %v577
  %753 = vmatpush.bf16.msra.mxu0 %v576
  %754 = vmatpush.bf16.msra.mxu0 %v575
  %755 = vmatmul.bf16.gmra.mxu0 %v259
  %v756 = vpop.f32.mrf.mxu0
  %v757 = vadd.f32 %v738, %v756
  %v758 = vpop.f32.mrf.mxu0
  %v759 = vadd.f32 %v740, %v758
  %760 = vmatmul.bf16.gmra.mxu0 %v267
  %v761 = vpop.f32.mrf.mxu0
  %v762 = vadd.f32 %v743, %v761
  %v763 = vpop.f32.mrf.mxu0
  %v764 = vadd.f32 %v745, %v763
  %765 = vdwg.mxu0
  %766 = vmatpush.bf16.msra.mxu0 %v590
  %767 = vmatpush.bf16.msra.mxu0 %v589
  %768 = vmatpush.bf16.msra.mxu0 %v588
  %769 = vmatpush.bf16.msra.mxu0 %v587
  %770 = vmatpush.bf16.msra.mxu0 %v586
  %771 = vmatpush.bf16.msra.mxu0 %v585
  %772 = vmatpush.bf16.msra.mxu0 %v584
  %773 = vmatpush.bf16.msra.mxu0 %v583
  %774 = vmatmul.bf16.gmra.mxu0 %v260
  %v775 = vpop.f32.mrf.mxu0
  %v776 = vadd.f32 %v757, %v775
  %v777 = vpop.f32.mrf.mxu0
  %v778 = vadd.f32 %v759, %v777
  %779 = vmatmul.bf16.gmra.mxu0 %v268
  %v780 = vpop.f32.mrf.mxu0
  %v781 = vadd.f32 %v762, %v780
  %v782 = vpop.f32.mrf.mxu0
  %v783 = vadd.f32 %v764, %v782
  %784 = vdwg.mxu0
  %785 = vmatpush.bf16.msra.mxu0 %v598
  %786 = vmatpush.bf16.msra.mxu0 %v597
  %787 = vmatpush.bf16.msra.mxu0 %v596
  %788 = vmatpush.bf16.msra.mxu0 %v595
  %789 = vmatpush.bf16.msra.mxu0 %v594
  %790 = vmatpush.bf16.msra.mxu0 %v593
  %791 = vmatpush.bf16.msra.mxu0 %v592
  %792 = vmatpush.bf16.msra.mxu0 %v591
  %793 = vmatmul.bf16.gmra.mxu0 %v261
  %v794 = vpop.f32.mrf.mxu0
  %v795 = vadd.f32 %v776, %v794
  %v796 = vpop.f32.mrf.mxu0
  %v797 = vadd.f32 %v778, %v796
  %798 = vmatmul.bf16.gmra.mxu0 %v269
  %v799 = vpop.f32.mrf.mxu0
  %v800 = vadd.f32 %v781, %v799
  %v801 = vpop.f32.mrf.mxu0
  %v802 = vadd.f32 %v783, %v801
  %803 = vdwg.mxu0
  %804 = vmatpush.bf16.msra.mxu0 %v606
  %805 = vmatpush.bf16.msra.mxu0 %v605
  %806 = vmatpush.bf16.msra.mxu0 %v604
  %807 = vmatpush.bf16.msra.mxu0 %v603
  %808 = vmatpush.bf16.msra.mxu0 %v602
  %809 = vmatpush.bf16.msra.mxu0 %v601
  %810 = vmatpush.bf16.msra.mxu0 %v600
  %811 = vmatpush.bf16.msra.mxu0 %v599
  %812 = vmatmul.bf16.gmra.mxu0 %v262
  %v813 = vpop.f32.mrf.mxu0
  %v814 = vadd.f32 %v795, %v813
  %v815 = vpop.f32.mrf.mxu0
  %v816 = vadd.f32 %v797, %v815
  %817 = vmatmul.bf16.gmra.mxu0 %v270
  %v818 = vpop.f32.mrf.mxu0
  %v819 = vadd.f32 %v800, %v818
  %v820 = vpop.f32.mrf.mxu0
  %v821 = vadd.f32 %v802, %v820
  %822 = vdwg.mxu0
  %v823 = vadd.f32 %v38, %v814
  %v824 = vadd.f32 %v39, %v816
  %v825 = vadd.f32 %v40, %v819
  %v826 = vadd.f32 %v41, %v821
  %827 = vadd.xlane.f32.xlu0 %v823
  %v828 = vpop.xlane.xlu0 %827
  %829 = vadd.xlane.f32.xlu0 %v824
  %v830 = vpop.xlane.xlu0 %829
  %831 = vadd.xlane.f32.xlu0 %v825
  %v832 = vpop.xlane.xlu0 %831
  %833 = vadd.xlane.f32.xlu0 %v826
  %v834 = vpop.xlane.xlu0 %833
  %v835 = vrcp.pop 128.0
  %v836 = vmul.f32 128.0, %v835
  %v837 = vsub.f32 1.0, %v836
  %v838 = vmul.f32 %v835, %v837
  %v839 = vadd.f32 %v835, %v838
  %vm840 = vweird.f32 %v835
  %v841 = vsel %vm840, %v835, %v839
  %v842 = vmul.f32 %v828, %v841
  %v843 = vmul.f32 %v830, %v841
  %v844 = vmul.f32 %v832, %v841
  %v845 = vmul.f32 %v834, %v841
  %v846 = vsub.f32 %v823, %v842
  %v847 = vsub.f32 %v824, %v843
  %v848 = vsub.f32 %v825, %v844
  %v849 = vsub.f32 %v826, %v845
  %v850 = vmul.f32 %v846, %v846
  %v851 = vmul.f32 %v847, %v847
  %v852 = vmul.f32 %v848, %v848
  %v853 = vmul.f32 %v849, %v849
  %854 = vadd.xlane.f32.xlu0 %v850
  %v855 = vpop.xlane.xlu0 %854
  %856 = vadd.xlane.f32.xlu0 %v851
  %v857 = vpop.xlane.xlu0 %856
  %858 = vadd.xlane.f32.xlu0 %v852
  %v859 = vpop.xlane.xlu0 %858
  %860 = vadd.xlane.f32.xlu0 %v853
  %v861 = vpop.xlane.xlu0 %860
  %v862 = vmul.f32 %v855, %v841
  %v863 = vmul.f32 %v857, %v841
  %v864 = vmul.f32 %v859, %v841
  %v865 = vmul.f32 %v861, %v841
  %v866 = vadd.f32 %v862, 1e-05
  %v867 = vadd.f32 %v863, 1e-05
  %v868 = vadd.f32 %v864, 1e-05
  %v869 = vadd.f32 %v865, 1e-05
  %v870 = vrsqrt.pop %v866
  %v871 = vmul.f32 %v870, %v866
  %v872 = vmul.f32 %v871, %v870
  %v873 = vmul.f32 0.5, %v872
  %v874 = vsub.f32 1.5, %v873
  %v875 = vmul.f32 %v870, %v874
  %vm876 = vweird.f32 %v866
  %vm877 = vweird.f32 %v870
  %vm878 = vmor %vm876, %vm877
  %v879 = vsel %vm878, %v870, %v875
  %v880 = vrsqrt.pop %v867
  %v881 = vmul.f32 %v880, %v867
  %v882 = vmul.f32 %v881, %v880
  %v883 = vmul.f32 0.5, %v882
  %v884 = vsub.f32 1.5, %v883
  %v885 = vmul.f32 %v880, %v884
  %vm886 = vweird.f32 %v867
  %vm887 = vweird.f32 %v880
  %vm888 = vmor %vm886, %vm887
  %v889 = vsel %vm888, %v880, %v885
  %v890 = vrsqrt.pop %v868
  %v891 = vmul.f32 %v890, %v868
  %v892 = vmul.f32 %v891, %v890
  %v893 = vmul.f32 0.5, %v892
  %v894 = vsub.f32 1.5, %v893
  %v895 = vmul.f32 %v890, %v894
  %vm896 = vweird.f32 %v868
  %vm897 = vweird.f32 %v890
  %vm898 = vmor %vm896, %vm897
  %v899 = vsel %vm898, %v890, %v895
  %v900 = vrsqrt.pop %v869
  %v901 = vmul.f32 %v900, %v869
  %v902 = vmul.f32 %v901, %v900
  %v903 = vmul.f32 0.5, %v902
  %v904 = vsub.f32 1.5, %v903
  %v905 = vmul.f32 %v900, %v904
  %vm906 = vweird.f32 %v869
  %vm907 = vweird.f32 %v900
  %vm908 = vmor %vm906, %vm907
  %v909 = vsel %vm908, %v900, %v905
  %v910 = vmul.f32 %v846, %v879
  %v911 = vmul.f32 %v847, %v889
  %v912 = vmul.f32 %v848, %v899
  %v913 = vmul.f32 %v849, %v909
  %v915 = vperm.slane %v186, 0
  %v917 = vmul.f32 %v910, %v915
  %v918 = vmul.f32 %v911, %v915
  %v919 = vmul.f32 %v912, %v915
  %v920 = vmul.f32 %v913, %v915
  %v922 = vperm.slane %v187, 0
  %v924 = vadd.f32 %v917, %v922
  %v925 = vadd.f32 %v918, %v922
  %v926 = vadd.f32 %v919, %v922
  %v927 = vadd.f32 %v920, %v922
  %v928 = vpack.c.bf16 %v925, %v924
  %v929 = vpack.c.bf16 %v927, %v926
  %v931 = vperm.slane %v204, 0
  %v949 = vunpack.c.l.b16 %v188
  %v950 = vunpack.c.l.b16 %v189
  %v951 = vunpack.c.l.b16 %v190
  %v952 = vunpack.c.l.b16 %v191
  %v953 = vunpack.c.l.b16 %v192
  %v954 = vunpack.c.l.b16 %v193
  %v955 = vunpack.c.l.b16 %v194
  %v956 = vunpack.c.l.b16 %v195
  %v957 = vunpack.c.l.b16 %v196
  %v958 = vunpack.c.l.b16 %v197
  %v959 = vunpack.c.l.b16 %v198
  %v960 = vunpack.c.l.b16 %v199
  %v961 = vunpack.c.l.b16 %v200
  %v962 = vunpack.c.l.b16 %v201
  %v963 = vunpack.c.l.b16 %v202
  %v964 = vunpack.c.l.b16 %v203
  %v965 = vpack.c.b16 %v950, %v949
  %v966 = vpack.c.b16 %v952, %v951
  %v967 = vpack.c.b16 %v954, %v953
  %v968 = vpack.c.b16 %v956, %v955
  %v969 = vpack.c.b16 %v958, %v957
  %v970 = vpack.c.b16 %v960, %v959
  %v971 = vpack.c.b16 %v962, %v961
  %v972 = vpack.c.b16 %v964, %v963
  %981 = vmatpush.bf16.msra.mxu0 %v972
  %982 = vmatpush.bf16.msra.mxu0 %v971
  %983 = vmatpush.bf16.msra.mxu0 %v970
  %984 = vmatpush.bf16.msra.mxu0 %v969
  %985 = vmatpush.bf16.msra.mxu0 %v968
  %986 = vmatpush.bf16.msra.mxu0 %v967
  %987 = vmatpush.bf16.msra.mxu0 %v966
  %988 = vmatpush.bf16.msra.mxu0 %v965
  %989 = vmatmul.bf16.gmra.mxu0 %v928
  %v990 = vpop.f32.mrf.mxu0
  %v991 = vadd.f32 %v931, %v990
  %v992 = vpop.f32.mrf.mxu0
  %v993 = vadd.f32 %v931, %v992
  %994 = vmatmul.bf16.gmra.mxu0 %v929
  %v995 = vpop.f32.mrf.mxu0
  %v996 = vadd.f32 %v931, %v995
  %v997 = vpop.f32.mrf.mxu0
  %v998 = vadd.f32 %v931, %v997
  %999 = vdwg.mxu0
  %v1000 = vmul.f32 %v924, 0.5
  %v1001 = vmul.f32 %v925, 0.5
  %v1002 = vmul.f32 %v926, 0.5
  %v1003 = vmul.f32 %v927, 0.5
  %v1004 = vmul.f32 %v924, 0.70710677
  %v1005 = vmul.f32 %v925, 0.70710677
  %v1006 = vmul.f32 %v926, 0.70710677
  %v1007 = vmul.f32 %v927, 0.70710677
  %v1008 = vmul.f32 %v1004, %v1004
  %v1009 = vmin.f32 16.0, %v1008
  %v1010 = vmul.f32 %v1009, 2.1237322e-06
  %v1011 = vadd.f32 %v1010, 0.00028619796
  %v1012 = vmul.f32 %v1009, %v1011
  %v1013 = vadd.f32 %v1012, 0.0036580483
  %v1014 = vmul.f32 %v1009, %v1013
  %v1015 = vadd.f32 %v1014, 0.05243302
  %v1016 = vmul.f32 %v1009, %v1015
  %v1017 = vadd.f32 %v1016, 0.18741608
  %v1018 = vmul.f32 %v1009, %v1017
  %v1019 = vadd.f32 %v1018, 1.1283791
  %v1020 = vmul.f32 %v1004, %v1019
  %v1021 = vmul.f32 %v1009, 3.8918573e-05
  %v1022 = vadd.f32 %v1021, 0.001143296
  %v1023 = vmul.f32 %v1009, %v1022
  %v1024 = vadd.f32 %v1023, 0.014752088
  %v1025 = vmul.f32 %v1009, %v1024
  %v1026 = vadd.f32 %v1025, 0.112945676
  %v1027 = vmul.f32 %v1009, %v1026
  %v1028 = vadd.f32 %v1027, 0.4994258
  %v1029 = vmul.f32 %v1009, %v1028
  %v1030 = vadd.f32 %v1029, 1.0
  %v1031 = vrcp.pop %v1030
  %v1032 = vmul.f32 %v1030, %v1031
  %v1033 = vsub.f32 1.0, %v1032
  %v1034 = vmul.f32 %v1031, %v1033
  %v1035 = vadd.f32 %v1031, %v1034
  %vm1036 = vweird.f32 %v1030
  %vm1037 = vweird.f32 %v1031
  %vm1038 = vmor %vm1036, %vm1037
  %v1039 = vsel %vm1038, %v1031, %v1035
  %v1040 = vand.u32 2147483647, %v1030
  %vm1041 = vcmp.eq.f32.partialorder %v1040, 8.507059e+37
  %v1042 = vand.u32 %v1030, 2147483648
  %v1043 = vor.u32 1.1754944e-38, %v1042
  %v1044 = vsel %vm1041, %v1043, %v1039
  %v1045 = vmul.f32 %v1020, %v1044
  %v1046 = vmin.f32 %v1045, 1.0
  %v1047 = vmax.f32 %v1046, -1.0
  %v1048 = vmul.f32 %v1005, %v1005
  %v1049 = vmin.f32 16.0, %v1048
  %v1050 = vmul.f32 %v1049, 2.1237322e-06
  %v1051 = vadd.f32 %v1050, 0.00028619796
  %v1052 = vmul.f32 %v1049, %v1051
  %v1053 = vadd.f32 %v1052, 0.0036580483
  %v1054 = vmul.f32 %v1049, %v1053
  %v1055 = vadd.f32 %v1054, 0.05243302
  %v1056 = vmul.f32 %v1049, %v1055
  %v1057 = vadd.f32 %v1056, 0.18741608
  %v1058 = vmul.f32 %v1049, %v1057
  %v1059 = vadd.f32 %v1058, 1.1283791
  %v1060 = vmul.f32 %v1005, %v1059
  %v1061 = vmul.f32 %v1049, 3.8918573e-05
  %v1062 = vadd.f32 %v1061, 0.001143296
  %v1063 = vmul.f32 %v1049, %v1062
  %v1064 = vadd.f32 %v1063, 0.014752088
  %v1065 = vmul.f32 %v1049, %v1064
  %v1066 = vadd.f32 %v1065, 0.112945676
  %v1067 = vmul.f32 %v1049, %v1066
  %v1068 = vadd.f32 %v1067, 0.4994258
  %v1069 = vmul.f32 %v1049, %v1068
  %v1070 = vadd.f32 %v1069, 1.0
  %v1071 = vrcp.pop %v1070
  %v1072 = vmul.f32 %v1070, %v1071
  %v1073 = vsub.f32 1.0, %v1072
  %v1074 = vmul.f32 %v1071, %v1073
  %v1075 = vadd.f32 %v1071, %v1074
  %vm1076 = vweird.f32 %v1070
  %vm1077 = vweird.f32 %v1071
  %vm1078 = vmor %vm1076, %vm1077
  %v1079 = vsel %vm1078, %v1071, %v1075
  %v1080 = vand.u32 2147483647, %v1070
  %vm1081 = vcmp.eq.f32.partialorder %v1080, 8.507059e+37
  %v1082 = vand.u32 %v1070, 2147483648
  %v1083 = vor.u32 1.1754944e-38, %v1082
  %v1084 = vsel %vm1081, %v1083, %v1079
  %v1085 = vmul.f32 %v1060, %v1084
  %v1086 = vmin.f32 %v1085, 1.0
  %v1087 = vmax.f32 %v1086, -1.0
  %v1088 = vmul.f32 %v1006, %v1006
  %v1089 = vmin.f32 16.0, %v1088
  %v1090 = vmul.f32 %v1089, 2.1237322e-06
  %v1091 = vadd.f32 %v1090, 0.00028619796
  %v1092 = vmul.f32 %v1089, %v1091
  %v1093 = vadd.f32 %v1092, 0.0036580483
  %v1094 = vmul.f32 %v1089, %v1093
  %v1095 = vadd.f32 %v1094, 0.05243302
  %v1096 = vmul.f32 %v1089, %v1095
  %v1097 = vadd.f32 %v1096, 0.18741608
  %v1098 = vmul.f32 %v1089, %v1097
  %v1099 = vadd.f32 %v1098, 1.1283791
  %v1100 = vmul.f32 %v1006, %v1099
  %v1101 = vmul.f32 %v1089, 3.8918573e-05
  %v1102 = vadd.f32 %v1101, 0.001143296
  %v1103 = vmul.f32 %v1089, %v1102
  %v1104 = vadd.f32 %v1103, 0.014752088
  %v1105 = vmul.f32 %v1089, %v1104
  %v1106 = vadd.f32 %v1105, 0.112945676
  %v1107 = vmul.f32 %v1089, %v1106
  %v1108 = vadd.f32 %v1107, 0.4994258
  %v1109 = vmul.f32 %v1089, %v1108
  %v1110 = vadd.f32 %v1109, 1.0
  %v1111 = vrcp.pop %v1110
  %v1112 = vmul.f32 %v1110, %v1111
  %v1113 = vsub.f32 1.0, %v1112
  %v1114 = vmul.f32 %v1111, %v1113
  %v1115 = vadd.f32 %v1111, %v1114
  %vm1116 = vweird.f32 %v1110
  %vm1117 = vweird.f32 %v1111
  %vm1118 = vmor %vm1116, %vm1117
  %v1119 = vsel %vm1118, %v1111, %v1115
  %v1120 = vand.u32 2147483647, %v1110
  %vm1121 = vcmp.eq.f32.partialorder %v1120, 8.507059e+37
  %v1122 = vand.u32 %v1110, 2147483648
  %v1123 = vor.u32 1.1754944e-38, %v1122
  %v1124 = vsel %vm1121, %v1123, %v1119
  %v1125 = vmul.f32 %v1100, %v1124
  %v1126 = vmin.f32 %v1125, 1.0
  %v1127 = vmax.f32 %v1126, -1.0
  %v1128 = vmul.f32 %v1007, %v1007
  %v1129 = vmin.f32 16.0, %v1128
  %v1130 = vmul.f32 %v1129, 2.1237322e-06
  %v1131 = vadd.f32 %v1130, 0.00028619796
  %v1132 = vmul.f32 %v1129, %v1131
  %v1133 = vadd.f32 %v1132, 0.0036580483
  %v1134 = vmul.f32 %v1129, %v1133
  %v1135 = vadd.f32 %v1134, 0.05243302
  %v1136 = vmul.f32 %v1129, %v1135
  %v1137 = vadd.f32 %v1136, 0.18741608
  %v1138 = vmul.f32 %v1129, %v1137
  %v1139 = vadd.f32 %v1138, 1.1283791
  %v1140 = vmul.f32 %v1007, %v1139
  %v1141 = vmul.f32 %v1129, 3.8918573e-05
  %v1142 = vadd.f32 %v1141, 0.001143296
  %v1143 = vmul.f32 %v1129, %v1142
  %v1144 = vadd.f32 %v1143, 0.014752088
  %v1145 = vmul.f32 %v1129, %v1144
  %v1146 = vadd.f32 %v1145, 0.112945676
  %v1147 = vmul.f32 %v1129, %v1146
  %v1148 = vadd.f32 %v1147, 0.4994258
  %v1149 = vmul.f32 %v1129, %v1148
  %v1150 = vadd.f32 %v1149, 1.0
  %v1151 = vrcp.pop %v1150
  %v1152 = vmul.f32 %v1150, %v1151
  %v1153 = vsub.f32 1.0, %v1152
  %v1154 = vmul.f32 %v1151, %v1153
  %v1155 = vadd.f32 %v1151, %v1154
  %vm1156 = vweird.f32 %v1150
  %vm1157 = vweird.f32 %v1151
  %vm1158 = vmor %vm1156, %vm1157
  %v1159 = vsel %vm1158, %v1151, %v1155
  %v1160 = vand.u32 2147483647, %v1150
  %vm1161 = vcmp.eq.f32.partialorder %v1160, 8.507059e+37
  %v1162 = vand.u32 %v1150, 2147483648
  %v1163 = vor.u32 1.1754944e-38, %v1162
  %v1164 = vsel %vm1161, %v1163, %v1159
  %v1165 = vmul.f32 %v1140, %v1164
  %v1166 = vmin.f32 %v1165, 1.0
  %v1167 = vmax.f32 %v1166, -1.0
  %v1168 = vadd.f32 %v1047, 1.0
  %v1169 = vadd.f32 %v1087, 1.0
  %v1170 = vadd.f32 %v1127, 1.0
  %v1171 = vadd.f32 %v1167, 1.0
  %v1172 = vmul.f32 %v1000, %v1168
  %v1173 = vmul.f32 %v1001, %v1169
  %v1174 = vmul.f32 %v1002, %v1170
  %v1175 = vmul.f32 %v1003, %v1171
  %v1176 = vadd.f32 %v1172, %v991
  %v1177 = vadd.f32 %v1173, %v993
  %v1178 = vadd.f32 %v1174, %v996
  %v1179 = vadd.f32 %v1175, %v998
  %1180 = vadd.xlane.f32.xlu0 %v1176
  %v1181 = vpop.xlane.xlu0 %1180
  %1182 = vadd.xlane.f32.xlu0 %v1177
  %v1183 = vpop.xlane.xlu0 %1182
  %1184 = vadd.xlane.f32.xlu0 %v1178
  %v1185 = vpop.xlane.xlu0 %1184
  %1186 = vadd.xlane.f32.xlu0 %v1179
  %v1187 = vpop.xlane.xlu0 %1186
  %v1188 = vmul.f32 %v1181, %v841
  %v1189 = vmul.f32 %v1183, %v841
  %v1190 = vmul.f32 %v1185, %v841
  %v1191 = vmul.f32 %v1187, %v841
  %v1192 = vsub.f32 %v1176, %v1188
  %v1193 = vsub.f32 %v1177, %v1189
  %v1194 = vsub.f32 %v1178, %v1190
  %v1195 = vsub.f32 %v1179, %v1191
  %v1196 = vmul.f32 %v1192, %v1192
  %v1197 = vmul.f32 %v1193, %v1193
  %v1198 = vmul.f32 %v1194, %v1194
  %v1199 = vmul.f32 %v1195, %v1195
  %1200 = vadd.xlane.f32.xlu0 %v1196
  %v1201 = vpop.xlane.xlu0 %1200
  %1202 = vadd.xlane.f32.xlu0 %v1197
  %v1203 = vpop.xlane.xlu0 %1202
  %1204 = vadd.xlane.f32.xlu0 %v1198
  %v1205 = vpop.xlane.xlu0 %1204
  %1206 = vadd.xlane.f32.xlu0 %v1199
  %v1207 = vpop.xlane.xlu0 %1206
  %v1208 = vmul.f32 %v1201, %v841
  %v1209 = vmul.f32 %v1203, %v841
  %v1210 = vmul.f32 %v1205, %v841
  %v1211 = vmul.f32 %v1207, %v841
  %v1212 = vadd.f32 %v1208, 1e-05
  %v1213 = vadd.f32 %v1209, 1e-05
  %v1214 = vadd.f32 %v1210, 1e-05
  %v1215 = vadd.f32 %v1211, 1e-05
  %v1216 = vrsqrt.pop %v1212
  %v1217 = vmul.f32 %v1216, %v1212
  %v1218 = vmul.f32 %v1217, %v1216
  %v1219 = vmul.f32 0.5, %v1218
  %v1220 = vsub.f32 1.5, %v1219
  %v1221 = vmul.f32 %v1216, %v1220
  %vm1222 = vweird.f32 %v1212
  %vm1223 = vweird.f32 %v1216
  %vm1224 = vmor %vm1222, %vm1223
  %v1225 = vsel %vm1224, %v1216, %v1221
  %v1226 = vrsqrt.pop %v1213
  %v1227 = vmul.f32 %v1226, %v1213
  %v1228 = vmul.f32 %v1227, %v1226
  %v1229 = vmul.f32 0.5, %v1228
  %v1230 = vsub.f32 1.5, %v1229
  %v1231 = vmul.f32 %v1226, %v1230
  %vm1232 = vweird.f32 %v1213
  %vm1233 = vweird.f32 %v1226
  %vm1234 = vmor %vm1232, %vm1233
  %v1235 = vsel %vm1234, %v1226, %v1231
  %v1236 = vrsqrt.pop %v1214
  %v1237 = vmul.f32 %v1236, %v1214
  %v1238 = vmul.f32 %v1237, %v1236
  %v1239 = vmul.f32 0.5, %v1238
  %v1240 = vsub.f32 1.5, %v1239
  %v1241 = vmul.f32 %v1236, %v1240
  %vm1242 = vweird.f32 %v1214
  %vm1243 = vweird.f32 %v1236
  %vm1244 = vmor %vm1242, %vm1243
  %v1245 = vsel %vm1244, %v1236, %v1241
  %v1246 = vrsqrt.pop %v1215
  %v1247 = vmul.f32 %v1246, %v1215
  %v1248 = vmul.f32 %v1247, %v1246
  %v1249 = vmul.f32 0.5, %v1248
  %v1250 = vsub.f32 1.5, %v1249
  %v1251 = vmul.f32 %v1246, %v1250
  %vm1252 = vweird.f32 %v1215
  %vm1253 = vweird.f32 %v1246
  %vm1254 = vmor %vm1252, %vm1253
  %v1255 = vsel %vm1254, %v1246, %v1251
  %v1256 = vmul.f32 %v1192, %v1225
  %v1257 = vmul.f32 %v1193, %v1235
  %v1258 = vmul.f32 %v1194, %v1245
  %v1259 = vmul.f32 %v1195, %v1255
  %v1261 = vperm.slane %v205, 0
  %v1263 = vmul.f32 %v1256, %v1261
  %v1264 = vmul.f32 %v1257, %v1261
  %v1265 = vmul.f32 %v1258, %v1261
  %v1266 = vmul.f32 %v1259, %v1261
  %v1268 = vperm.slane %v206, 0
  %v1270 = vadd.f32 %v1263, %v1268
  %v1271 = vadd.f32 %v1264, %v1268
  %v1272 = vadd.f32 %v1265, %v1268
  %v1273 = vadd.f32 %v1266, %v1268
  %v1274 = vpack.c.bf16 %v1271, %v1270
  %v1275 = vpack.c.bf16 %v1273, %v1272
  %v1276 = vld [vmem:[%s9] sm:$0xf]
  %v1277 = vld [vmem:[%s9 + $0x4] sm:$0xf]
  %v1278 = vld [vmem:[%s9 + $0x8] sm:$0xf]
  %v1279 = vld [vmem:[%s9 + $0xc] sm:$0xf]
  %v1280 = vld [vmem:[%s9 + $0x10] sm:$0xf]
  %v1281 = vld [vmem:[%s9 + $0x14] sm:$0xf]
  %v1282 = vld [vmem:[%s9 + $0x18] sm:$0xf]
  %v1283 = vld [vmem:[%s9 + $0x1c] sm:$0xf]
  %v1284 = vld [vmem:[%s9 + $0x20] sm:$0xf]
  %v1285 = vld [vmem:[%s9 + $0x24] sm:$0xf]
  %v1286 = vld [vmem:[%s9 + $0x28] sm:$0xf]
  %v1287 = vld [vmem:[%s9 + $0x2c] sm:$0xf]
  %v1288 = vld [vmem:[%s9 + $0x30] sm:$0xf]
  %v1289 = vld [vmem:[%s9 + $0x34] sm:$0xf]
  %v1290 = vld [vmem:[%s9 + $0x38] sm:$0xf]
  %v1291 = vld [vmem:[%s9 + $0x3c] sm:$0xf]
  %v1292 = vld [vmem:[%s10] sm:$0x1]
  %v1294 = vperm.slane %v1292, 0
  %v1312 = vunpack.c.l.b16 %v1276
  %v1313 = vunpack.c.l.b16 %v1277
  %v1314 = vunpack.c.l.b16 %v1278
  %v1315 = vunpack.c.l.b16 %v1279
  %v1316 = vunpack.c.l.b16 %v1280
  %v1317 = vunpack.c.l.b16 %v1281
  %v1318 = vunpack.c.l.b16 %v1282
  %v1319 = vunpack.c.l.b16 %v1283
  %v1320 = vunpack.c.l.b16 %v1284
  %v1321 = vunpack.c.l.b16 %v1285
  %v1322 = vunpack.c.l.b16 %v1286
  %v1323 = vunpack.c.l.b16 %v1287
  %v1324 = vunpack.c.l.b16 %v1288
  %v1325 = vunpack.c.l.b16 %v1289
  %v1326 = vunpack.c.l.b16 %v1290
  %v1327 = vunpack.c.l.b16 %v1291
  %v1328 = vpack.c.b16 %v1313, %v1312
  %v1329 = vpack.c.b16 %v1315, %v1314
  %v1330 = vpack.c.b16 %v1317, %v1316
  %v1331 = vpack.c.b16 %v1319, %v1318
  %v1332 = vpack.c.b16 %v1321, %v1320
  %v1333 = vpack.c.b16 %v1323, %v1322
  %v1334 = vpack.c.b16 %v1325, %v1324
  %v1335 = vpack.c.b16 %v1327, %v1326
  %1344 = vmatpush.bf16.msra.mxu0 %v1335
  %1345 = vmatpush.bf16.msra.mxu0 %v1334
  %1346 = vmatpush.bf16.msra.mxu0 %v1333
  %1347 = vmatpush.bf16.msra.mxu0 %v1332
  %1348 = vmatpush.bf16.msra.mxu0 %v1331
  %1349 = vmatpush.bf16.msra.mxu0 %v1330
  %1350 = vmatpush.bf16.msra.mxu0 %v1329
  %1351 = vmatpush.bf16.msra.mxu0 %v1328
  %1352 = vmatmul.bf16.gmra.mxu0 %v1274
  %v1353 = vpop.f32.mrf.mxu0
  %v1354 = vadd.f32 %v1294, %v1353
  %v1355 = vpop.f32.mrf.mxu0
  %v1356 = vadd.f32 %v1294, %v1355
  %1357 = vmatmul.bf16.gmra.mxu0 %v1275
  %v1358 = vpop.f32.mrf.mxu0
  %v1359 = vadd.f32 %v1294, %v1358
  %v1360 = vpop.f32.mrf.mxu0
  %v1361 = vadd.f32 %v1294, %v1360
  %1362 = vdwg.mxu0
  %vm1363 = vcmask 64512
  %1364 = vst.msk [vmem:[%s11] sm:$0xff] %vm1363, %v1354
  %1365 = vst.msk [vmem:[%s11 + $0x8] sm:$0xff] %vm1363, %v1356
  %1366 = vst.msk [vmem:[%s11 + $0x10] sm:$0xff] %vm1363, %v1359
  %1367 = vst.msk [vmem:[%s11 + $0x18] sm:$0xff] %vm1363, %v1361
  // Predicated region
  $region46: #{transformer_forward.9} parent=0 // pred_check
    _
  $region47: #{transformer_forward.9} parent=0 // pred_check_branch
    %1369 = sbr.rel (0) target = $region49
  $region48: #{transformer_forward.9} parent=0 // pred_region
    _
  $region49: #{transformer_forward.9} parent=0 // pred_fallthru
    _
  // Predicated region
  $region50: #{transformer_forward.9} parent=0 // pred_check
    _
  $region51: #{transformer_forward.9} parent=0 // pred_check_branch
    %1371 = sbr.rel (0) target = $region53
  $region52: #{transformer_forward.9} parent=0 // pred_region
    _
  $region53: #{transformer_forward.9} parent=0 // pred_fallthru
    _

// kernel: transformer_forward.5
$region0: #{transformer_forward.5}
  #allocation0 [shape = 'u32[]', space=smem, size = 0x4, offset = 0x4, fixed_abs, tag = 'smem constant byte address 0x4 - core index']
  #allocation1 [shape = 'u32[72,128]{1,0:T(1,128)}', space=vmem, size = 0x9000, scoped, tag = 'internal scratch']
  %s0 = inlined_call_operand.hbm [shape: f32[32,16], index: 0, kind: input, shape index: {}]
  %s1 = inlined_call_operand.vmem [shape: bf16[16,128], index: 1, kind: input, shape index: {}]
  %s2 = inlined_call_operand.vmem [shape: f32[1,128], index: 2, kind: input, shape index: {}]
  %s3 = inlined_call_operand.hbm [shape: bf16[128,3072], index: 3, kind: input, shape index: {}]
  %s4 = inlined_call_operand.vmem [shape: f32[32,128], index: 4, kind: output, shape index: {0}]
  %s5 = inlined_call_operand.vmem [shape: bf16[32,3072], index: 5, kind: output, shape index: {1}]
  %6 = xla_tuple %s4, %s5
  %s7 = sld [smem:[#allocation0]]
  $region42: #{transformer_forward.5} parent=0
    _
  %s9 = ssub.s32 1, %s7
  %s10 = scalar_select 0, %s9, %s7
  $region1: #{transformer_forward.5} parent=0
    #allocation2 [shape = 'u8[16384]{0}', space=vmem, size = 0x4000, scoped, tag = 'input window, operand 0, single buffered']
    #allocation3 [shape = 's32[1]{0}', space=sflag, size = 0x4, scoped, tag = 'scoped memory for transformer_forward.5']
    #allocation4 [shape = 'u8[786432]{0}', space=vmem, size = 0xc0000, scoped, tag = 'input window, operand 3, single buffered']
    #allocation5 [shape = 's32[1]{0}', space=sflag, size = 0x4, scoped, tag = 'scoped memory for transformer_forward.5']
    %11 = vsyncpa [#allocation3], 0
    %12 = vsyncpa [#allocation5], 0
    // Predicated region
    $region2: #{transformer_forward.5} parent=1 // pred_check
      _
    $region3: #{transformer_forward.5} parent=1 // pred_check_branch
      %14 = sbr.rel (0) target = $region5
    $region4: #{transformer_forward.5} parent=1 // pred_region
      %16 = vsyncadd [#allocation3], 0
      %s17 = sshll.u32 %s0, 4
      %s18 = int_to_ptr.hbm [resolvable:$true] %s17
      %s19 = sshll.u32 [#allocation2], 4
      %s20 = int_to_ptr.vmem [resolvable:$true] %s19
      %25 = dma.hbm_to_vmem [thread:$0]  %s18, 512, %s20, [#allocation3], 128, 128, 8
    $region5: #{transformer_forward.5} parent=1 // pred_fallthru
      _
    // Predicated region
    $region6: #{transformer_forward.5} parent=1 // pred_check
      _
    $region7: #{transformer_forward.5} parent=1 // pred_check_branch
      %27 = sbr.rel (0) target = $region9
    $region8: #{transformer_forward.5} parent=1 // pred_region
      _
    $region9: #{transformer_forward.5} parent=1 // pred_fallthru
      _
    // Predicated region
    $region10: #{transformer_forward.5} parent=1 // pred_check
      _
    $region11: #{transformer_forward.5} parent=1 // pred_check_branch
      %29 = sbr.rel (0) target = $region13
    $region12: #{transformer_forward.5} parent=1 // pred_region
      _
    $region13: #{transformer_forward.5} parent=1 // pred_fallthru
      _
    // Predicated region
    $region14: #{transformer_forward.5} parent=1 // pred_check
      _
    $region15: #{transformer_forward.5} parent=1 // pred_check_branch
      %31 = sbr.rel (0) target = $region17
    $region16: #{transformer_forward.5} parent=1 // pred_region
      %33 = vsyncadd [#allocation5], 0
      %s34 = sshll.u32 %s3, 4
      %s35 = int_to_ptr.hbm [resolvable:$true] %s34
      %s36 = sshll.u32 [#allocation4], 4
      %s37 = int_to_ptr.vmem [resolvable:$true] %s36
      %42 = dma.hbm_to_vmem [thread:$0]  %s35, 24576, %s37, [#allocation5], 1536, 1536, 96
    $region17: #{transformer_forward.5} parent=1 // pred_fallthru
      _
    // Predicated region
    $region18: #{transformer_forward.5} parent=1 // pred_check
      _
    $region19: #{transformer_forward.5} parent=1 // pred_check_branch
      %44 = sbr.rel (0) target = $region21
    $region20: #{transformer_forward.5} parent=1 // pred_region
      %46 = dma.done [#allocation3], 512
    $region21: #{transformer_forward.5} parent=1 // pred_fallthru
      _
    // Predicated region
    $region22: #{transformer_forward.5} parent=1 // pred_check
      _
    $region23: #{transformer_forward.5} parent=1 // pred_check_branch
      %48 = sbr.rel (0) target = $region25
    $region24: #{transformer_forward.5} parent=1 // pred_region
      %50 = dma.done [#allocation5], 24576
    $region25: #{transformer_forward.5} parent=1 // pred_fallthru
      _
    %v52 = vld [vmem:[#allocation2] sm:$0xff]
    %v53 = vld [vmem:[#allocation2 + $0x8] sm:$0xff]
    %v54 = vld [vmem:[#allocation2 + $0x10] sm:$0xff]
    %v55 = vld [vmem:[#allocation2 + $0x18] sm:$0xff]
    %v56 = vpack.c.bf16 %v53, %v52
    %v57 = vpack.c.bf16 %v55, %v54
    %v58 = vld [vmem:[%s1] sm:$0xf]
    %v59 = vld [vmem:[%s1 + $0x4] sm:$0xf]
    %v60 = vld [vmem:[%s2] sm:$0x1]
    %v62 = vperm.slane %v60, 0
    %v66 = vunpack.c.l.b16 %v58
    %v67 = vunpack.c.l.b16 %v59
    %v68 = vpack.c.b16 %v67, %v66
    %vm70 = vcmask 130048
    %v72 = vsel %vm70, %v56, 0
    %v75 = vsel %vm70, %v57, 0
    %77 = vmatpush.bf16.msra.mxu0 0
    %78 = vmatpush.bf16.msra.mxu0 0
    %79 = vmatpush.bf16.msra.mxu0 0
    %80 = vmatpush.bf16.msra.mxu0 0
    %81 = vmatpush.bf16.msra.mxu0 0
    %82 = vmatpush.bf16.msra.mxu0 0
    %83 = vmatpush.bf16.msra.mxu0 0
    %84 = vmatpush.bf16.msra.mxu0 %v68
    %85 = vmatmul.bf16.gmra.mxu0 %v72
    %v86 = vpop.f32.mrf.mxu0
    %v87 = vadd.f32 %v62, %v86
    %v88 = vpop.f32.mrf.mxu0
    %v89 = vadd.f32 %v62, %v88
    %90 = vmatmul.bf16.gmra.mxu0 %v75
    %v91 = vpop.f32.mrf.mxu0
    %v92 = vadd.f32 %v62, %v91
    %v93 = vpop.f32.mrf.mxu0
    %v94 = vadd.f32 %v62, %v93
    %95 = vdwg.mxu0
    %96 = vst [vmem:[%s4] sm:$0xff] %v87
    %97 = vst [vmem:[%s4 + $0x8] sm:$0xff] %v89
    %98 = vst [vmem:[%s4 + $0x10] sm:$0xff] %v92
    %99 = vst [vmem:[%s4 + $0x18] sm:$0xff] %v94
    %v100 = vpack.c.bf16 %v89, %v87
    %v101 = vpack.c.bf16 %v94, %v92
    %v102 = vld [vmem:[#allocation4] sm:$0xff]
    %v103 = vld [vmem:[#allocation4 + $0x8] sm:$0xff]
    %v104 = vld [vmem:[#allocation4 + $0x10] sm:$0xff]
    %v105 = vld [vmem:[#allocation4 + $0x18] sm:$0xff]
    %v106 = vld [vmem:[#allocation4 + $0x20] sm:$0xff]
    %v107 = vld [vmem:[#allocation4 + $0x28] sm:$0xff]
    %v108 = vld [vmem:[#allocation4 + $0x30] sm:$0xff]
    %v109 = vld [vmem:[#allocation4 + $0x38] sm:$0xff]
    %v110 = vld [vmem:[#allocation4 + $0x40] sm:$0xff]
    %v111 = vld [vmem:[#allocation4 + $0x48] sm:$0xff]
    %v112 = vld [vmem:[#allocation4 + $0x50] sm:$0xff]
    %v113 = vld [vmem:[#allocation4 + $0x58] sm:$0xff]
    %v114 = vld [vmem:[#allocation4 + $0x60] sm:$0xff]
    %v115 = vld [vmem:[#allocation4 + $0x68] sm:$0xff]
    %v116 = vld [vmem:[#allocation4 + $0x70] sm:$0xff]
    %v117 = vld [vmem:[#allocation4 + $0x78] sm:$0xff]
    %v118 = vld [vmem:[#allocation4 + $0x80] sm:$0xff]
    %v119 = vld [vmem:[#allocation4 + $0x88] sm:$0xff]
    %v120 = vld [vmem:[#allocation4 + $0x90] sm:$0xff]
    %v121 = vld [vmem:[#allocation4 + $0x98] sm:$0xff]
    %v122 = vld [vmem:[#allocation4 + $0xa0] sm:$0xff]
    %v123 = vld [vmem:[#allocation4 + $0xa8] sm:$0xff]
    %v124 = vld [vmem:[#allocation4 + $0xb0] sm:$0xff]
    %v125 = vld [vmem:[#allocation4 + $0xb8] sm:$0xff]
    %v126 = vld [vmem:[#allocation4 + $0xc0] sm:$0xff]
    %v127 = vld [vmem:[#allocation4 + $0xc8] sm:$0xff]
    %v128 = vld [vmem:[#allocation4 + $0xd0] sm:$0xff]
    %v129 = vld [vmem:[#allocation4 + $0xd8] sm:$0xff]
    %v130 = vld [vmem:[#allocation4 + $0xe0] sm:$0xff]
    %v131 = vld [vmem:[#allocation4 + $0xe8] sm:$0xff]
    %v132 = vld [vmem:[#allocation4 + $0xf0] sm:$0xff]
    %v133 = vld [vmem:[#allocation4 + $0xf8] sm:$0xff]
    %v134 = vld [vmem:[#allocation4 + $0x100] sm:$0xff]
    %v135 = vld [vmem:[#allocation4 + $0x108] sm:$0xff]
    %v136 = vld [vmem:[#allocation4 + $0x110] sm:$0xff]
    %v137 = vld [vmem:[#allocation4 + $0x118] sm:$0xff]
    %v138 = vld [vmem:[#allocation4 + $0x120] sm:$0xff]
    %v139 = vld [vmem:[#allocation4 + $0x128] sm:$0xff]
    %v140 = vld [vmem:[#allocation4 + $0x130] sm:$0xff]
    %v141 = vld [vmem:[#allocation4 + $0x138] sm:$0xff]
    %v142 = vld [vmem:[#allocation4 + $0x140] sm:$0xff]
    %v143 = vld [vmem:[#allocation4 + $0x148] sm:$0xff]
    %v144 = vld [vmem:[#allocation4 + $0x150] sm:$0xff]
    %v145 = vld [vmem:[#allocation4 + $0x158] sm:$0xff]
    %v146 = vld [vmem:[#allocation4 + $0x160] sm:$0xff]
    %v147 = vld [vmem:[#allocation4 + $0x168] sm:$0xff]
    %v148 = vld [vmem:[#allocation4 + $0x170] sm:$0xff]
    %v149 = vld [vmem:[#allocation4 + $0x178] sm:$0xff]
    %v150 = vld [vmem:[#allocation4 + $0x180] sm:$0xff]
    %v151 = vld [vmem:[#allocation4 + $0x188] sm:$0xff]
    %v152 = vld [vmem:[#allocation4 + $0x190] sm:$0xff]
    %v153 = vld [vmem:[#allocation4 + $0x198] sm:$0xff]
    %v154 = vld [vmem:[#allocation4 + $0x1a0] sm:$0xff]
    %v155 = vld [vmem:[#allocation4 + $0x1a8] sm:$0xff]
    %v156 = vld [vmem:[#allocation4 + $0x1b0] sm:$0xff]
    %v157 = vld [vmem:[#allocation4 + $0x1b8] sm:$0xff]
    %v158 = vld [vmem:[#allocation4 + $0x1c0] sm:$0xff]
    %v159 = vld [vmem:[#allocation4 + $0x1c8] sm:$0xff]
    %v160 = vld [vmem:[#allocation4 + $0x1d0] sm:$0xff]
    %v161 = vld [vmem:[#allocation4 + $0x1d8] sm:$0xff]
    %v162 = vld [vmem:[#allocation4 + $0x1e0] sm:$0xff]
    %v163 = vld [vmem:[#allocation4 + $0x1e8] sm:$0xff]
    %v164 = vld [vmem:[#allocation4 + $0x1f0] sm:$0xff]
    %v165 = vld [vmem:[#allocation4 + $0x1f8] sm:$0xff]
    %v166 = vld [vmem:[#allocation4 + $0x200] sm:$0xff]
    %v167 = vld [vmem:[#allocation4 + $0x208] sm:$0xff]
    %v168 = vld [vmem:[#allocation4 + $0x210] sm:$0xff]
    %v169 = vld [vmem:[#allocation4 + $0x218] sm:$0xff]
    %v170 = vld [vmem:[#allocation4 + $0x220] sm:$0xff]
    %v171 = vld [vmem:[#allocation4 + $0x228] sm:$0xff]
    %v172 = vld [vmem:[#allocation4 + $0x230] sm:$0xff]
    %v173 = vld [vmem:[#allocation4 + $0x238] sm:$0xff]
    %v174 = vld [vmem:[#allocation4 + $0x240] sm:$0xff]
    %v175 = vld [vmem:[#allocation4 + $0x248] sm:$0xff]
    %v176 = vld [vmem:[#allocation4 + $0x250] sm:$0xff]
    %v177 = vld [vmem:[#allocation4 + $0x258] sm:$0xff]
    %v178 = vld [vmem:[#allocation4 + $0x260] sm:$0xff]
    %v179 = vld [vmem:[#allocation4 + $0x268] sm:$0xff]
    %v180 = vld [vmem:[#allocation4 + $0x270] sm:$0xff]
    %v181 = vld [vmem:[#allocation4 + $0x278] sm:$0xff]
    %v182 = vld [vmem:[#allocation4 + $0x280] sm:$0xff]
    %v183 = vld [vmem:[#allocation4 + $0x288] sm:$0xff]
    %v184 = vld [vmem:[#allocation4 + $0x290] sm:$0xff]
    %v185 = vld [vmem:[#allocation4 + $0x298] sm:$0xff]
    %v186 = vld [vmem:[#allocation4 + $0x2a0] sm:$0xff]
    %v187 = vld [vmem:[#allocation4 + $0x2a8] sm:$0xff]
    %v188 = vld [vmem:[#allocation4 + $0x2b0] sm:$0xff]
    %v189 = vld [vmem:[#allocation4 + $0x2b8] sm:$0xff]
    %v190 = vld [vmem:[#allocation4 + $0x2c0] sm:$0xff]
    %v191 = vld [vmem:[#allocation4 + $0x2c8] sm:$0xff]
    %v192 = vld [vmem:[#allocation4 + $0x2d0] sm:$0xff]
    %v193 = vld [vmem:[#allocation4 + $0x2d8] sm:$0xff]
    %v194 = vld [vmem:[#allocation4 + $0x2e0] sm:$0xff]
    %v195 = vld [vmem:[#allocation4 + $0x2e8] sm:$0xff]
    %v196 = vld [vmem:[#allocation4 + $0x2f0] sm:$0xff]
    %v197 = vld [vmem:[#allocation4 + $0x2f8] sm:$0xff]
    %v198 = vld [vmem:[#allocation4 + $0x300] sm:$0xff]
    %v199 = vld [vmem:[#allocation4 + $0x308] sm:$0xff]
    %v200 = vld [vmem:[#allocation4 + $0x310] sm:$0xff]
    %v201 = vld [vmem:[#allocation4 + $0x318] sm:$0xff]
    %v202 = vld [vmem:[#allocation4 + $0x320] sm:$0xff]
    %v203 = vld [vmem:[#allocation4 + $0x328] sm:$0xff]
    %v204 = vld [vmem:[#allocation4 + $0x330] sm:$0xff]
    %v205 = vld [vmem:[#allocation4 + $0x338] sm:$0xff]
    %v206 = vld [vmem:[#allocation4 + $0x340] sm:$0xff]
    %v207 = vld [vmem:[#allocation4 + $0x348] sm:$0xff]
    %v208 = vld [vmem:[#allocation4 + $0x350] sm:$0xff]
    %v209 = vld [vmem:[#allocation4 + $0x358] sm:$0xff]
    %v210 = vld [vmem:[#allocation4 + $0x360] sm:$0xff]
    %v211 = vld [vmem:[#allocation4 + $0x368] sm:$0xff]
    %v212 = vld [vmem:[#allocation4 + $0x370] sm:$0xff]
    %v213 = vld [vmem:[#allocation4 + $0x378] sm:$0xff]
    %v214 = vld [vmem:[#allocation4 + $0x380] sm:$0xff]
    %v215 = vld [vmem:[#allocation4 + $0x388] sm:$0xff]
    %v216 = vld [vmem:[#allocation4 + $0x390] sm:$0xff]
    %v217 = vld [vmem:[#allocation4 + $0x398] sm:$0xff]
    %v218 = vld [vmem:[#allocation4 + $0x3a0] sm:$0xff]
    %v219 = vld [vmem:[#allocation4 + $0x3a8] sm:$0xff]
    %v220 = vld [vmem:[#allocation4 + $0x3b0] sm:$0xff]
    %v221 = vld [vmem:[#allocation4 + $0x3b8] sm:$0xff]
    %v222 = vld [vmem:[#allocation4 + $0x3c0] sm:$0xff]
    %v223 = vld [vmem:[#allocation4 + $0x3c8] sm:$0xff]
    %v224 = vld [vmem:[#allocation4 + $0x3d0] sm:$0xff]
    %v225 = vld [vmem:[#allocation4 + $0x3d8] sm:$0xff]
    %v226 = vld [vmem:[#allocation4 + $0x3e0] sm:$0xff]
    %v227 = vld [vmem:[#allocation4 + $0x3e8] sm:$0xff]
    %v228 = vld [vmem:[#allocation4 + $0x3f0] sm:$0xff]
    %v229 = vld [vmem:[#allocation4 + $0x3f8] sm:$0xff]
    %v230 = vld [vmem:[#allocation4 + $0x400] sm:$0xff]
    %v231 = vld [vmem:[#allocation4 + $0x408] sm:$0xff]
    %v232 = vld [vmem:[#allocation4 + $0x410] sm:$0xff]
    %v233 = vld [vmem:[#allocation4 + $0x418] sm:$0xff]
    %v234 = vld [vmem:[#allocation4 + $0x420] sm:$0xff]
    %v235 = vld [vmem:[#allocation4 + $0x428] sm:$0xff]
    %v236 = vld [vmem:[#allocation4 + $0x430] sm:$0xff]
    %v237 = vld [vmem:[#allocation4 + $0x438] sm:$0xff]
    %v238 = vld [vmem:[#allocation4 + $0x440] sm:$0xff]
    %v239 = vld [vmem:[#allocation4 + $0x448] sm:$0xff]
    %v240 = vld [vmem:[#allocation4 + $0x450] sm:$0xff]
    %v241 = vld [vmem:[#allocation4 + $0x458] sm:$0xff]
    %v242 = vld [vmem:[#allocation4 + $0x460] sm:$0xff]
    %v243 = vld [vmem:[#allocation4 + $0x468] sm:$0xff]
    %v244 = vld [vmem:[#allocation4 + $0x470] sm:$0xff]
    %v245 = vld [vmem:[#allocation4 + $0x478] sm:$0xff]
    %v246 = vld [vmem:[#allocation4 + $0x480] sm:$0xff]
    %v247 = vld [vmem:[#allocation4 + $0x488] sm:$0xff]
    %v248 = vld [vmem:[#allocation4 + $0x490] sm:$0xff]
    %v249 = vld [vmem:[#allocation4 + $0x498] sm:$0xff]
    %v250 = vld [vmem:[#allocation4 + $0x4a0] sm:$0xff]
    %v251 = vld [vmem:[#allocation4 + $0x4a8] sm:$0xff]
    %v252 = vld [vmem:[#allocation4 + $0x4b0] sm:$0xff]
    %v253 = vld [vmem:[#allocation4 + $0x4b8] sm:$0xff]
    %v254 = vld [vmem:[#allocation4 + $0x4c0] sm:$0xff]
    %v255 = vld [vmem:[#allocation4 + $0x4c8] sm:$0xff]
    %v256 = vld [vmem:[#allocation4 + $0x4d0] sm:$0xff]
    %v257 = vld [vmem:[#allocation4 + $0x4d8] sm:$0xff]
    %v258 = vld [vmem:[#allocation4 + $0x4e0] sm:$0xff]
    %v259 = vld [vmem:[#allocation4 + $0x4e8] sm:$0xff]
    %v260 = vld [vmem:[#allocation4 + $0x4f0] sm:$0xff]
    %v261 = vld [vmem:[#allocation4 + $0x4f8] sm:$0xff]
    %v262 = vld [vmem:[#allocation4 + $0x500] sm:$0xff]
    %v263 = vld [vmem:[#allocation4 + $0x508] sm:$0xff]
    %v264 = vld [vmem:[#allocation4 + $0x510] sm:$0xff]
    %v265 = vld [vmem:[#allocation4 + $0x518] sm:$0xff]
    %v266 = vld [vmem:[#allocation4 + $0x520] sm:$0xff]
    %v267 = vld [vmem:[#allocation4 + $0x528] sm:$0xff]
    %v268 = vld [vmem:[#allocation4 + $0x530] sm:$0xff]
    %v269 = vld [vmem:[#allocation4 + $0x538] sm:$0xff]
    %v270 = vld [vmem:[#allocation4 + $0x540] sm:$0xff]
    %v271 = vld [vmem:[#allocation4 + $0x548] sm:$0xff]
    %v272 = vld [vmem:[#allocation4 + $0x550] sm:$0xff]
    %v273 = vld [vmem:[#allocation4 + $0x558] sm:$0xff]
    %v274 = vld [vmem:[#allocation4 + $0x560] sm:$0xff]
    %v275 = vld [vmem:[#allocation4 + $0x568] sm:$0xff]
    %v276 = vld [vmem:[#allocation4 + $0x570] sm:$0xff]
    %v277 = vld [vmem:[#allocation4 + $0x578] sm:$0xff]
    %v278 = vld [vmem:[#allocation4 + $0x580] sm:$0xff]
    %v279 = vld [vmem:[#allocation4 + $0x588] sm:$0xff]
    %v280 = vld [vmem:[#allocation4 + $0x590] sm:$0xff]
    %v281 = vld [vmem:[#allocation4 + $0x598] sm:$0xff]
    %v282 = vld [vmem:[#allocation4 + $0x5a0] sm:$0xff]
    %v283 = vld [vmem:[#allocation4 + $0x5a8] sm:$0xff]
    %v284 = vld [vmem:[#allocation4 + $0x5b0] sm:$0xff]
    %v285 = vld [vmem:[#allocation4 + $0x5b8] sm:$0xff]
    %v286 = vld [vmem:[#allocation4 + $0x5c0] sm:$0xff]
    %v287 = vld [vmem:[#allocation4 + $0x5c8] sm:$0xff]
    %v288 = vld [vmem:[#allocation4 + $0x5d0] sm:$0xff]
    %v289 = vld [vmem:[#allocation4 + $0x5d8] sm:$0xff]
    %v290 = vld [vmem:[#allocation4 + $0x5e0] sm:$0xff]
    %v291 = vld [vmem:[#allocation4 + $0x5e8] sm:$0xff]
    %v292 = vld [vmem:[#allocation4 + $0x5f0] sm:$0xff]
    %v293 = vld [vmem:[#allocation4 + $0x5f8] sm:$0xff]
    %v486 = vunpack.c.l.b16 %v102
    %v487 = vunpack.c.h.b16 %v102
    %v488 = vunpack.c.l.b16 %v103
    %v489 = vunpack.c.h.b16 %v103
    %v490 = vunpack.c.l.b16 %v104
    %v491 = vunpack.c.h.b16 %v104
    %v492 = vunpack.c.l.b16 %v105
    %v493 = vunpack.c.h.b16 %v105
    %v494 = vunpack.c.l.b16 %v106
    %v495 = vunpack.c.h.b16 %v106
    %v496 = vunpack.c.l.b16 %v107
    %v497 = vunpack.c.h.b16 %v107
    %v498 = vunpack.c.l.b16 %v108
    %v499 = vunpack.c.h.b16 %v108
    %v500 = vunpack.c.l.b16 %v109
    %v501 = vunpack.c.h.b16 %v109
    %v502 = vunpack.c.l.b16 %v110
    %v503 = vunpack.c.h.b16 %v110
    %v504 = vunpack.c.l.b16 %v111
    %v505 = vunpack.c.h.b16 %v111
    %v506 = vunpack.c.l.b16 %v112
    %v507 = vunpack.c.h.b16 %v112
    %v508 = vunpack.c.l.b16 %v113
    %v509 = vunpack.c.h.b16 %v113
    %v510 = vunpack.c.l.b16 %v114
    %v511 = vunpack.c.h.b16 %v114
    %v512 = vunpack.c.l.b16 %v115
    %v513 = vunpack.c.h.b16 %v115
    %v514 = vunpack.c.l.b16 %v116
    %v515 = vunpack.c.h.b16 %v116
    %v516 = vunpack.c.l.b16 %v117
    %v517 = vunpack.c.h.b16 %v117
    %v518 = vunpack.c.l.b16 %v118
    %v519 = vunpack.c.h.b16 %v118
    %v520 = vunpack.c.l.b16 %v119
    %v521 = vunpack.c.h.b16 %v119
    %v522 = vunpack.c.l.b16 %v120
    %v523 = vunpack.c.h.b16 %v120
    %v524 = vunpack.c.l.b16 %v121
    %v525 = vunpack.c.h.b16 %v121
    %v526 = vunpack.c.l.b16 %v122
    %v527 = vunpack.c.h.b16 %v122
    %v528 = vunpack.c.l.b16 %v123
    %v529 = vunpack.c.h.b16 %v123
    %v530 = vunpack.c.l.b16 %v124
    %v531 = vunpack.c.h.b16 %v124
    %v532 = vunpack.c.l.b16 %v125
    %v533 = vunpack.c.h.b16 %v125
    %v534 = vunpack.c.l.b16 %v126
    %v535 = vunpack.c.h.b16 %v126
    %v536 = vunpack.c.l.b16 %v127
    %v537 = vunpack.c.h.b16 %v127
    %v538 = vunpack.c.l.b16 %v128
    %v539 = vunpack.c.h.b16 %v128
    %v540 = vunpack.c.l.b16 %v129
    %v541 = vunpack.c.h.b16 %v129
    %v542 = vunpack.c.l.b16 %v130
    %v543 = vunpack.c.h.b16 %v130
    %v544 = vunpack.c.l.b16 %v131
    %v545 = vunpack.c.h.b16 %v131
    %v546 = vunpack.c.l.b16 %v132
    %v547 = vunpack.c.h.b16 %v132
    %v548 = vunpack.c.l.b16 %v133
    %v549 = vunpack.c.h.b16 %v133
    %v550 = vunpack.c.l.b16 %v134
    %v551 = vunpack.c.h.b16 %v134
    %v552 = vunpack.c.l.b16 %v135
    %v553 = vunpack.c.h.b16 %v135
    %v554 = vunpack.c.l.b16 %v136
    %v555 = vunpack.c.h.b16 %v136
    %v556 = vunpack.c.l.b16 %v137
    %v557 = vunpack.c.h.b16 %v137
    %v558 = vunpack.c.l.b16 %v138
    %v559 = vunpack.c.h.b16 %v138
    %v560 = vunpack.c.l.b16 %v139
    %v561 = vunpack.c.h.b16 %v139
    %v562 = vunpack.c.l.b16 %v140
    %v563 = vunpack.c.h.b16 %v140
    %v564 = vunpack.c.l.b16 %v141
    %v565 = vunpack.c.h.b16 %v141
    %v566 = vunpack.c.l.b16 %v142
    %v567 = vunpack.c.h.b16 %v142
    %v568 = vunpack.c.l.b16 %v143
    %v569 = vunpack.c.h.b16 %v143
    %v570 = vunpack.c.l.b16 %v144
    %v571 = vunpack.c.h.b16 %v144
    %v572 = vunpack.c.l.b16 %v145
    %v573 = vunpack.c.h.b16 %v145
    %v574 = vunpack.c.l.b16 %v146
    %v575 = vunpack.c.h.b16 %v146
    %v576 = vunpack.c.l.b16 %v147
    %v577 = vunpack.c.h.b16 %v147
    %v578 = vunpack.c.l.b16 %v148
    %v579 = vunpack.c.h.b16 %v148
    %v580 = vunpack.c.l.b16 %v149
    %v581 = vunpack.c.h.b16 %v149
    %v582 = vunpack.c.l.b16 %v150
    %v583 = vunpack.c.h.b16 %v150
    %v584 = vunpack.c.l.b16 %v151
    %v585 = vunpack.c.h.b16 %v151
    %v586 = vunpack.c.l.b16 %v152
    %v587 = vunpack.c.h.b16 %v152
    %v588 = vunpack.c.l.b16 %v153
    %v589 = vunpack.c.h.b16 %v153
    %v590 = vunpack.c.l.b16 %v154
    %v591 = vunpack.c.h.b16 %v154
    %v592 = vunpack.c.l.b16 %v155
    %v593 = vunpack.c.h.b16 %v155
    %v594 = vunpack.c.l.b16 %v156
    %v595 = vunpack.c.h.b16 %v156
    %v596 = vunpack.c.l.b16 %v157
    %v597 = vunpack.c.h.b16 %v157
    %v598 = vunpack.c.l.b16 %v158
    %v599 = vunpack.c.h.b16 %v158
    %v600 = vunpack.c.l.b16 %v159
    %v601 = vunpack.c.h.b16 %v159
    %v602 = vunpack.c.l.b16 %v160
    %v603 = vunpack.c.h.b16 %v160
    %v604 = vunpack.c.l.b16 %v161
    %v605 = vunpack.c.h.b16 %v161
    %v606 = vunpack.c.l.b16 %v162
    %v607 = vunpack.c.h.b16 %v162
    %v608 = vunpack.c.l.b16 %v163
    %v609 = vunpack.c.h.b16 %v163
    %v610 = vunpack.c.l.b16 %v164
    %v611 = vunpack.c.h.b16 %v164
    %v612 = vunpack.c.l.b16 %v165
    %v613 = vunpack.c.h.b16 %v165
    %v614 = vunpack.c.l.b16 %v166
    %v615 = vunpack.c.h.b16 %v166
    %v616 = vunpack.c.l.b16 %v167
    %v617 = vunpack.c.h.b16 %v167
    %v618 = vunpack.c.l.b16 %v168
    %v619 = vunpack.c.h.b16 %v168
    %v620 = vunpack.c.l.b16 %v169
    %v621 = vunpack.c.h.b16 %v169
    %v622 = vunpack.c.l.b16 %v170
    %v623 = vunpack.c.h.b16 %v170
    %v624 = vunpack.c.l.b16 %v171
    %v625 = vunpack.c.h.b16 %v171
    %v626 = vunpack.c.l.b16 %v172
    %v627 = vunpack.c.h.b16 %v172
    %v628 = vunpack.c.l.b16 %v173
    %v629 = vunpack.c.h.b16 %v173
    %v630 = vunpack.c.l.b16 %v174
    %v631 = vunpack.c.h.b16 %v174
    %v632 = vunpack.c.l.b16 %v175
    %v633 = vunpack.c.h.b16 %v175
    %v634 = vunpack.c.l.b16 %v176
    %v635 = vunpack.c.h.b16 %v176
    %v636 = vunpack.c.l.b16 %v177
    %v637 = vunpack.c.h.b16 %v177
    %v638 = vunpack.c.l.b16 %v178
    %v639 = vunpack.c.h.b16 %v178
    %v640 = vunpack.c.l.b16 %v179
    %v641 = vunpack.c.h.b16 %v179
    %v642 = vunpack.c.l.b16 %v180
    %v643 = vunpack.c.h.b16 %v180
    %v644 = vunpack.c.l.b16 %v181
    %v645 = vunpack.c.h.b16 %v181
    %v646 = vunpack.c.l.b16 %v182
    %v647 = vunpack.c.h.b16 %v182
    %v648 = vunpack.c.l.b16 %v183
    %v649 = vunpack.c.h.b16 %v183
    %v650 = vunpack.c.l.b16 %v184
    %v651 = vunpack.c.h.b16 %v184
    %v652 = vunpack.c.l.b16 %v185
    %v653 = vunpack.c.h.b16 %v185
    %v654 = vunpack.c.l.b16 %v186
    %v655 = vunpack.c.h.b16 %v186
    %v656 = vunpack.c.l.b16 %v187
    %v657 = vunpack.c.h.b16 %v187
    %v658 = vunpack.c.l.b16 %v188
    %v659 = vunpack.c.h.b16 %v188
    %v660 = vunpack.c.l.b16 %v189
    %v661 = vunpack.c.h.b16 %v189
    %v662 = vunpack.c.l.b16 %v190
    %v663 = vunpack.c.h.b16 %v190
    %v664 = vunpack.c.l.b16 %v191
    %v665 = vunpack.c.h.b16 %v191
    %v666 = vunpack.c.l.b16 %v192
    %v667 = vunpack.c.h.b16 %v192
    %v668 = vunpack.c.l.b16 %v193
    %v669 = vunpack.c.h.b16 %v193
    %v670 = vunpack.c.l.b16 %v194
    %v671 = vunpack.c.h.b16 %v194
    %v672 = vunpack.c.l.b16 %v195
    %v673 = vunpack.c.h.b16 %v195
    %v674 = vunpack.c.l.b16 %v196
    %v675 = vunpack.c.h.b16 %v196
    %v676 = vunpack.c.l.b16 %v197
    %v677 = vunpack.c.h.b16 %v197
    %v678 = vunpack.c.l.b16 %v198
    %v679 = vunpack.c.h.b16 %v198
    %v680 = vunpack.c.l.b16 %v199
    %v681 = vunpack.c.h.b16 %v199
    %v682 = vunpack.c.l.b16 %v200
    %v683 = vunpack.c.h.b16 %v200
    %v684 = vunpack.c.l.b16 %v201
    %v685 = vunpack.c.h.b16 %v201
    %v686 = vunpack.c.l.b16 %v202
    %v687 = vunpack.c.h.b16 %v202
    %v688 = vunpack.c.l.b16 %v203
    %v689 = vunpack.c.h.b16 %v203
    %v690 = vunpack.c.l.b16 %v204
    %v691 = vunpack.c.h.b16 %v204
    %v692 = vunpack.c.l.b16 %v205
    %v693 = vunpack.c.h.b16 %v205
    %v694 = vunpack.c.l.b16 %v206
    %v695 = vunpack.c.h.b16 %v206
    %v696 = vunpack.c.l.b16 %v207
    %v697 = vunpack.c.h.b16 %v207
    %v698 = vunpack.c.l.b16 %v208
    %v699 = vunpack.c.h.b16 %v208
    %v700 = vunpack.c.l.b16 %v209
    %v701 = vunpack.c.h.b16 %v209
    %v702 = vunpack.c.l.b16 %v210
    %v703 = vunpack.c.h.b16 %v210
    %v704 = vunpack.c.l.b16 %v211
    %v705 = vunpack.c.h.b16 %v211
    %v706 = vunpack.c.l.b16 %v212
    %v707 = vunpack.c.h.b16 %v212
    %v708 = vunpack.c.l.b16 %v213
    %v709 = vunpack.c.h.b16 %v213
    %v710 = vunpack.c.l.b16 %v214
    %v711 = vunpack.c.h.b16 %v214
    %v712 = vunpack.c.l.b16 %v215
    %v713 = vunpack.c.h.b16 %v215
    %v714 = vunpack.c.l.b16 %v216
    %v715 = vunpack.c.h.b16 %v216
    %v716 = vunpack.c.l.b16 %v217
    %v717 = vunpack.c.h.b16 %v217
    %v718 = vunpack.c.l.b16 %v218
    %v719 = vunpack.c.h.b16 %v218
    %v720 = vunpack.c.l.b16 %v219
    %v721 = vunpack.c.h.b16 %v219
    %v722 = vunpack.c.l.b16 %v220
    %v723 = vunpack.c.h.b16 %v220
    %v724 = vunpack.c.l.b16 %v221
    %v725 = vunpack.c.h.b16 %v221
    %v726 = vunpack.c.l.b16 %v222
    %v727 = vunpack.c.h.b16 %v222
    %v728 = vunpack.c.l.b16 %v223
    %v729 = vunpack.c.h.b16 %v223
    %v730 = vunpack.c.l.b16 %v224
    %v731 = vunpack.c.h.b16 %v224
    %v732 = vunpack.c.l.b16 %v225
    %v733 = vunpack.c.h.b16 %v225
    %v734 = vunpack.c.l.b16 %v226
    %v735 = vunpack.c.h.b16 %v226
    %v736 = vunpack.c.l.b16 %v227
    %v737 = vunpack.c.h.b16 %v227
    %v738 = vunpack.c.l.b16 %v228
    %v739 = vunpack.c.h.b16 %v228
    %v740 = vunpack.c.l.b16 %v229
    %v741 = vunpack.c.h.b16 %v229
    %v742 = vunpack.c.l.b16 %v230
    %v743 = vunpack.c.h.b16 %v230
    %v744 = vunpack.c.l.b16 %v231
    %v745 = vunpack.c.h.b16 %v231
    %v746 = vunpack.c.l.b16 %v232
    %v747 = vunpack.c.h.b16 %v232
    %v748 = vunpack.c.l.b16 %v233
    %v749 = vunpack.c.h.b16 %v233
    %v750 = vunpack.c.l.b16 %v234
    %v751 = vunpack.c.h.b16 %v234
    %v752 = vunpack.c.l.b16 %v235
    %v753 = vunpack.c.h.b16 %v235
    %v754 = vunpack.c.l.b16 %v236
    %v755 = vunpack.c.h.b16 %v236
    %v756 = vunpack.c.l.b16 %v237
    %v757 = vunpack.c.h.b16 %v237
    %v758 = vunpack.c.l.b16 %v238
    %v759 = vunpack.c.h.b16 %v238
    %v760 = vunpack.c.l.b16 %v239
    %v761 = vunpack.c.h.b16 %v239
    %v762 = vunpack.c.l.b16 %v240
    %v763 = vunpack.c.h.b16 %v240
    %v764 = vunpack.c.l.b16 %v241
    %v765 = vunpack.c.h.b16 %v241
    %v766 = vunpack.c.l.b16 %v242
    %v767 = vunpack.c.h.b16 %v242
    %v768 = vunpack.c.l.b16 %v243
    %v769 = vunpack.c.h.b16 %v243
    %v770 = vunpack.c.l.b16 %v244
    %v771 = vunpack.c.h.b16 %v244
    %v772 = vunpack.c.l.b16 %v245
    %v773 = vunpack.c.h.b16 %v245
    %v774 = vunpack.c.l.b16 %v246
    %v775 = vunpack.c.h.b16 %v246
    %v776 = vunpack.c.l.b16 %v247
    %v777 = vunpack.c.h.b16 %v247
    %v778 = vunpack.c.l.b16 %v248
    %v779 = vunpack.c.h.b16 %v248
    %v780 = vunpack.c.l.b16 %v249
    %v781 = vunpack.c.h.b16 %v249
    %v782 = vunpack.c.l.b16 %v250
    %v783 = vunpack.c.h.b16 %v250
    %v784 = vunpack.c.l.b16 %v251
    %v785 = vunpack.c.h.b16 %v251
    %v786 = vunpack.c.l.b16 %v252
    %v787 = vunpack.c.h.b16 %v252
    %v788 = vunpack.c.l.b16 %v253
    %v789 = vunpack.c.h.b16 %v253
    %v790 = vunpack.c.l.b16 %v254
    %v791 = vunpack.c.h.b16 %v254
    %v792 = vunpack.c.l.b16 %v255
    %v793 = vunpack.c.h.b16 %v255
    %v794 = vunpack.c.l.b16 %v256
    %v795 = vunpack.c.h.b16 %v256
    %v796 = vunpack.c.l.b16 %v257
    %v797 = vunpack.c.h.b16 %v257
    %v798 = vunpack.c.l.b16 %v258
    %v799 = vunpack.c.h.b16 %v258
    %v800 = vunpack.c.l.b16 %v259
    %v801 = vunpack.c.h.b16 %v259
    %v802 = vunpack.c.l.b16 %v260
    %v803 = vunpack.c.h.b16 %v260
    %v804 = vunpack.c.l.b16 %v261
    %v805 = vunpack.c.h.b16 %v261
    %v806 = vunpack.c.l.b16 %v262
    %v807 = vunpack.c.h.b16 %v262
    %v808 = vunpack.c.l.b16 %v263
    %v809 = vunpack.c.h.b16 %v263
    %v810 = vunpack.c.l.b16 %v264
    %v811 = vunpack.c.h.b16 %v264
    %v812 = vunpack.c.l.b16 %v265
    %v813 = vunpack.c.h.b16 %v265
    %v814 = vunpack.c.l.b16 %v266
    %v815 = vunpack.c.h.b16 %v266
    %v816 = vunpack.c.l.b16 %v267
    %v817 = vunpack.c.h.b16 %v267
    %v818 = vunpack.c.l.b16 %v268
    %v819 = vunpack.c.h.b16 %v268
    %v820 = vunpack.c.l.b16 %v269
    %v821 = vunpack.c.h.b16 %v269
    %v822 = vunpack.c.l.b16 %v270
    %v823 = vunpack.c.h.b16 %v270
    %v824 = vunpack.c.l.b16 %v271
    %v825 = vunpack.c.h.b16 %v271
    %v826 = vunpack.c.l.b16 %v272
    %v827 = vunpack.c.h.b16 %v272
    %v828 = vunpack.c.l.b16 %v273
    %v829 = vunpack.c.h.b16 %v273
    %v830 = vunpack.c.l.b16 %v274
    %v831 = vunpack.c.h.b16 %v274
    %v832 = vunpack.c.l.b16 %v275
    %v833 = vunpack.c.h.b16 %v275
    %v834 = vunpack.c.l.b16 %v276
    %v835 = vunpack.c.h.b16 %v276
    %v836 = vunpack.c.l.b16 %v277
    %v837 = vunpack.c.h.b16 %v277
    %v838 = vunpack.c.l.b16 %v278
    %v839 = vunpack.c.h.b16 %v278
    %v840 = vunpack.c.l.b16 %v279
    %v841 = vunpack.c.h.b16 %v279
    %v842 = vunpack.c.l.b16 %v280
    %v843 = vunpack.c.h.b16 %v280
    %v844 = vunpack.c.l.b16 %v281
    %v845 = vunpack.c.h.b16 %v281
    %v846 = vunpack.c.l.b16 %v282
    %v847 = vunpack.c.h.b16 %v282
    %v848 = vunpack.c.l.b16 %v283
    %v849 = vunpack.c.h.b16 %v283
    %v850 = vunpack.c.l.b16 %v284
    %v851 = vunpack.c.h.b16 %v284
    %v852 = vunpack.c.l.b16 %v285
    %v853 = vunpack.c.h.b16 %v285
    %v854 = vunpack.c.l.b16 %v286
    %v855 = vunpack.c.h.b16 %v286
    %v856 = vunpack.c.l.b16 %v287
    %v857 = vunpack.c.h.b16 %v287
    %v858 = vunpack.c.l.b16 %v288
    %v859 = vunpack.c.h.b16 %v288
    %v860 = vunpack.c.l.b16 %v289
    %v861 = vunpack.c.h.b16 %v289
    %v862 = vunpack.c.l.b16 %v290
    %v863 = vunpack.c.h.b16 %v290
    %v864 = vunpack.c.l.b16 %v291
    %v865 = vunpack.c.h.b16 %v291
    %v866 = vunpack.c.l.b16 %v292
    %v867 = vunpack.c.h.b16 %v292
    %v868 = vunpack.c.l.b16 %v293
    %v869 = vunpack.c.h.b16 %v293
    %v870 = vpack.c.b16 %v510, %v486
    %v871 = vpack.c.b16 %v511, %v487
    %v872 = vpack.c.b16 %v512, %v488
    %v873 = vpack.c.b16 %v513, %v489
    %v874 = vpack.c.b16 %v514, %v490
    %v875 = vpack.c.b16 %v515, %v491
    %v876 = vpack.c.b16 %v516, %v492
    %v877 = vpack.c.b16 %v517, %v493
    %v878 = vpack.c.b16 %v518, %v494
    %v879 = vpack.c.b16 %v519, %v495
    %v880 = vpack.c.b16 %v520, %v496
    %v881 = vpack.c.b16 %v521, %v497
    %v882 = vpack.c.b16 %v522, %v498
    %v883 = vpack.c.b16 %v523, %v499
    %v884 = vpack.c.b16 %v524, %v500
    %v885 = vpack.c.b16 %v525, %v501
    %v886 = vpack.c.b16 %v526, %v502
    %v887 = vpack.c.b16 %v527, %v503
    %v888 = vpack.c.b16 %v528, %v504
    %v889 = vpack.c.b16 %v529, %v505
    %v890 = vpack.c.b16 %v530, %v506
    %v891 = vpack.c.b16 %v531, %v507
    %v892 = vpack.c.b16 %v532, %v508
    %v893 = vpack.c.b16 %v533, %v509
    %v894 = vpack.c.b16 %v558, %v534
    %v895 = vpack.c.b16 %v559, %v535
    %v896 = vpack.c.b16 %v560, %v536
    %v897 = vpack.c.b16 %v561, %v537
    %v898 = vpack.c.b16 %v562, %v538
    %v899 = vpack.c.b16 %v563, %v539
    %v900 = vpack.c.b16 %v564, %v540
    %v901 = vpack.c.b16 %v565, %v541
    %v902 = vpack.c.b16 %v566, %v542
    %v903 = vpack.c.b16 %v567, %v543
    %v904 = vpack.c.b16 %v568, %v544
    %v905 = vpack.c.b16 %v569, %v545
    %v906 = vpack.c.b16 %v570, %v546
    %v907 = vpack.c.b16 %v571, %v547
    %v908 = vpack.c.b16 %v572, %v548
    %v909 = vpack.c.b16 %v573, %v549
    %v910 = vpack.c.b16 %v574, %v550
    %v911 = vpack.c.b16 %v575, %v551
    %v912 = vpack.c.b16 %v576, %v552
    %v913 = vpack.c.b16 %v577, %v553
    %v914 = vpack.c.b16 %v578, %v554
    %v915 = vpack.c.b16 %v579, %v555
    %v916 = vpack.c.b16 %v580, %v556
    %v917 = vpack.c.b16 %v581, %v557
    %v918 = vpack.c.b16 %v606, %v582
    %v919 = vpack.c.b16 %v607, %v583
    %v920 = vpack.c.b16 %v608, %v584
    %v921 = vpack.c.b16 %v609, %v585
    %v922 = vpack.c.b16 %v610, %v586
    %v923 = vpack.c.b16 %v611, %v587
    %v924 = vpack.c.b16 %v612, %v588
    %v925 = vpack.c.b16 %v613, %v589
    %v926 = vpack.c.b16 %v614, %v590
    %v927 = vpack.c.b16 %v615, %v591
    %v928 = vpack.c.b16 %v616, %v592
    %v929 = vpack.c.b16 %v617, %v593
    %v930 = vpack.c.b16 %v618, %v594
    %v931 = vpack.c.b16 %v619, %v595
    %v932 = vpack.c.b16 %v620, %v596
    %v933 = vpack.c.b16 %v621, %v597
    %v934 = vpack.c.b16 %v622, %v598
    %v935 = vpack.c.b16 %v623, %v599
    %v936 = vpack.c.b16 %v624, %v600
    %v937 = vpack.c.b16 %v625, %v601
    %v938 = vpack.c.b16 %v626, %v602
    %v939 = vpack.c.b16 %v627, %v603
    %v940 = vpack.c.b16 %v628, %v604
    %v941 = vpack.c.b16 %v629, %v605
    %v942 = vpack.c.b16 %v654, %v630
    %v943 = vpack.c.b16 %v655, %v631
    %v944 = vpack.c.b16 %v656, %v632
    %v945 = vpack.c.b16 %v657, %v633
    %v946 = vpack.c.b16 %v658, %v634
    %v947 = vpack.c.b16 %v659, %v635
    %v948 = vpack.c.b16 %v660, %v636
    %v949 = vpack.c.b16 %v661, %v637
    %v950 = vpack.c.b16 %v662, %v638
    %v951 = vpack.c.b16 %v663, %v639
    %v952 = vpack.c.b16 %v664, %v640
    %v953 = vpack.c.b16 %v665, %v641
    %v954 = vpack.c.b16 %v666, %v642
    %v955 = vpack.c.b16 %v667, %v643
    %v956 = vpack.c.b16 %v668, %v644
    %v957 = vpack.c.b16 %v669, %v645
    %v958 = vpack.c.b16 %v670, %v646
    %v959 = vpack.c.b16 %v671, %v647
    %v960 = vpack.c.b16 %v672, %v648
    %v961 = vpack.c.b16 %v673, %v649
    %v962 = vpack.c.b16 %v674, %v650
    %v963 = vpack.c.b16 %v675, %v651
    %v964 = vpack.c.b16 %v676, %v652
    %v965 = vpack.c.b16 %v677, %v653
    %v966 = vpack.c.b16 %v702, %v678
    %v967 = vpack.c.b16 %v703, %v679
    %v968 = vpack.c.b16 %v704, %v680
    %v969 = vpack.c.b16 %v705, %v681
    %v970 = vpack.c.b16 %v706, %v682
    %v971 = vpack.c.b16 %v707, %v683
    %v972 = vpack.c.b16 %v708, %v684
    %v973 = vpack.c.b16 %v709, %v685
    %v974 = vpack.c.b16 %v710, %v686
    %v975 = vpack.c.b16 %v711, %v687
    %v976 = vpack.c.b16 %v712, %v688
    %v977 = vpack.c.b16 %v713, %v689
    %v978 = vpack.c.b16 %v714, %v690
    %v979 = vpack.c.b16 %v715, %v691
    %v980 = vpack.c.b16 %v716, %v692
    %v981 = vpack.c.b16 %v717, %v693
    %v982 = vpack.c.b16 %v718, %v694
    %v983 = vpack.c.b16 %v719, %v695
    %v984 = vpack.c.b16 %v720, %v696
    %v985 = vpack.c.b16 %v721, %v697
    %v986 = vpack.c.b16 %v722, %v698
    %v987 = vpack.c.b16 %v723, %v699
    %v988 = vpack.c.b16 %v724, %v700
    %v989 = vpack.c.b16 %v725, %v701
    %v990 = vpack.c.b16 %v750, %v726
    %v991 = vpack.c.b16 %v751, %v727
    %v992 = vpack.c.b16 %v752, %v728
    %v993 = vpack.c.b16 %v753, %v729
    %v994 = vpack.c.b16 %v754, %v730
    %v995 = vpack.c.b16 %v755, %v731
    %v996 = vpack.c.b16 %v756, %v732
    %v997 = vpack.c.b16 %v757, %v733
    %v998 = vpack.c.b16 %v758, %v734
    %v999 = vpack.c.b16 %v759, %v735
    %v1000 = vpack.c.b16 %v760, %v736
    %v1001 = vpack.c.b16 %v761, %v737
    %v1002 = vpack.c.b16 %v762, %v738
    %v1003 = vpack.c.b16 %v763, %v739
    %v1004 = vpack.c.b16 %v764, %v740
    %v1005 = vpack.c.b16 %v765, %v741
    %v1006 = vpack.c.b16 %v766, %v742
    %v1007 = vpack.c.b16 %v767, %v743
    %v1008 = vpack.c.b16 %v768, %v744
    %v1009 = vpack.c.b16 %v769, %v745
    %v1010 = vpack.c.b16 %v770, %v746
    %v1011 = vpack.c.b16 %v771, %v747
    %v1012 = vpack.c.b16 %v772, %v748
    %v1013 = vpack.c.b16 %v773, %v749
    %v1014 = vpack.c.b16 %v798, %v774
    %v1015 = vpack.c.b16 %v799, %v775
    %v1016 = vpack.c.b16 %v800, %v776
    %v1017 = vpack.c.b16 %v801, %v777
    %v1018 = vpack.c.b16 %v802, %v778
    %v1019 = vpack.c.b16 %v803, %v779
    %v1020 = vpack.c.b16 %v804, %v780
    %v1021 = vpack.c.b16 %v805, %v781
    %v1022 = vpack.c.b16 %v806, %v782
    %v1023 = vpack.c.b16 %v807, %v783
    %v1024 = vpack.c.b16 %v808, %v784
    %v1025 = vpack.c.b16 %v809, %v785
    %v1026 = vpack.c.b16 %v810, %v786
    %v1027 = vpack.c.b16 %v811, %v787
    %v1028 = vpack.c.b16 %v812, %v788
    %v1029 = vpack.c.b16 %v813, %v789
    %v1030 = vpack.c.b16 %v814, %v790
    %v1031 = vpack.c.b16 %v815, %v791
    %v1032 = vpack.c.b16 %v816, %v792
    %v1033 = vpack.c.b16 %v817, %v793
    %v1034 = vpack.c.b16 %v818, %v794
    %v1035 = vpack.c.b16 %v819, %v795
    %v1036 = vpack.c.b16 %v820, %v796
    %v1037 = vpack.c.b16 %v821, %v797
    %v1038 = vpack.c.b16 %v846, %v822
    %v1039 = vpack.c.b16 %v847, %v823
    %v1040 = vpack.c.b16 %v848, %v824
    %v1041 = vpack.c.b16 %v849, %v825
    %v1042 = vpack.c.b16 %v850, %v826
    %v1043 = vpack.c.b16 %v851, %v827
    %v1044 = vpack.c.b16 %v852, %v828
    %v1045 = vpack.c.b16 %v853, %v829
    %v1046 = vpack.c.b16 %v854, %v830
    %v1047 = vpack.c.b16 %v855, %v831
    %v1048 = vpack.c.b16 %v856, %v832
    %v1049 = vpack.c.b16 %v857, %v833
    %v1050 = vpack.c.b16 %v858, %v834
    %v1051 = vpack.c.b16 %v859, %v835
    %v1052 = vpack.c.b16 %v860, %v836
    %v1053 = vpack.c.b16 %v861, %v837
    %v1054 = vpack.c.b16 %v862, %v838
    %v1055 = vpack.c.b16 %v863, %v839
    %v1056 = vpack.c.b16 %v864, %v840
    %v1057 = vpack.c.b16 %v865, %v841
    %v1058 = vpack.c.b16 %v866, %v842
    %v1059 = vpack.c.b16 %v867, %v843
    %v1060 = vpack.c.b16 %v868, %v844
    %v1061 = vpack.c.b16 %v869, %v845
    %1254 = vmatpush.bf16.msra.mxu0 %v1038
    %1255 = vmatpush.bf16.msra.mxu0 %v1014
    %1256 = vmatpush.bf16.msra.mxu0 %v990
    %1257 = vmatpush.bf16.msra.mxu0 %v966
    %1258 = vmatpush.bf16.msra.mxu0 %v942
    %1259 = vmatpush.bf16.msra.mxu0 %v918
    %1260 = vmatpush.bf16.msra.mxu0 %v894
    %1261 = vmatpush.bf16.msra.mxu0 %v870
    %1262 = vmatmul.bf16.gmra.mxu0 %v100
    %v1263 = vpop.f32.mrf.mxu0
    %v1264 = vadd.f32 0.0, %v1263
    %v1265 = vpop.f32.mrf.mxu0
    %v1266 = vadd.f32 0.0, %v1265
    %1267 = vmatmul.bf16.gmra.mxu0 %v101
    %v1268 = vpop.f32.mrf.mxu0
    %v1269 = vadd.f32 0.0, %v1268
    %v1270 = vpop.f32.mrf.mxu0
    %v1271 = vadd.f32 0.0, %v1270
    %1272 = vdwg.mxu0
    %1273 = vmatpush.bf16.msra.mxu0 %v1039
    %1274 = vmatpush.bf16.msra.mxu0 %v1015
    %1275 = vmatpush.bf16.msra.mxu0 %v991
    %1276 = vmatpush.bf16.msra.mxu0 %v967
    %1277 = vmatpush.bf16.msra.mxu0 %v943
    %1278 = vmatpush.bf16.msra.mxu0 %v919
    %1279 = vmatpush.bf16.msra.mxu0 %v895
    %1280 = vmatpush.bf16.msra.mxu0 %v871
    %1281 = vmatmul.bf16.gmra.mxu0 %v100
    %v1282 = vpop.f32.mrf.mxu0
    %v1283 = vadd.f32 0.0, %v1282
    %v1284 = vpop.f32.mrf.mxu0
    %v1285 = vadd.f32 0.0, %v1284
    %1286 = vmatmul.bf16.gmra.mxu0 %v101
    %v1287 = vpop.f32.mrf.mxu0
    %v1288 = vadd.f32 0.0, %v1287
    %v1289 = vpop.f32.mrf.mxu0
    %v1290 = vadd.f32 0.0, %v1289
    %1291 = vdwg.mxu0
    %1292 = vmatpush.bf16.msra.mxu0 %v1040
    %1293 = vmatpush.bf16.msra.mxu0 %v1016
    %1294 = vmatpush.bf16.msra.mxu0 %v992
    %1295 = vmatpush.bf16.msra.mxu0 %v968
    %1296 = vmatpush.bf16.msra.mxu0 %v944
    %1297 = vmatpush.bf16.msra.mxu0 %v920
    %1298 = vmatpush.bf16.msra.mxu0 %v896
    %1299 = vmatpush.bf16.msra.mxu0 %v872
    %1300 = vmatmul.bf16.gmra.mxu0 %v100
    %v1301 = vpop.f32.mrf.mxu0
    %v1302 = vadd.f32 0.0, %v1301
    %v1303 = vpop.f32.mrf.mxu0
    %v1304 = vadd.f32 0.0, %v1303
    %1305 = vmatmul.bf16.gmra.mxu0 %v101
    %v1306 = vpop.f32.mrf.mxu0
    %v1307 = vadd.f32 0.0, %v1306
    %v1308 = vpop.f32.mrf.mxu0
    %v1309 = vadd.f32 0.0, %v1308
    %1310 = vdwg.mxu0
    %1311 = vmatpush.bf16.msra.mxu0 %v1041
    %1312 = vmatpush.bf16.msra.mxu0 %v1017
    %1313 = vmatpush.bf16.msra.mxu0 %v993
    %1314 = vmatpush.bf16.msra.mxu0 %v969
    %1315 = vmatpush.bf16.msra.mxu0 %v945
    %1316 = vmatpush.bf16.msra.mxu0 %v921
    %1317 = vmatpush.bf16.msra.mxu0 %v897
    %1318 = vmatpush.bf16.msra.mxu0 %v873
    %1319 = vmatmul.bf16.gmra.mxu0 %v100
    %v1320 = vpop.f32.mrf.mxu0
    %v1321 = vadd.f32 0.0, %v1320
    %v1322 = vpop.f32.mrf.mxu0
    %v1323 = vadd.f32 0.0, %v1322
    %1324 = vmatmul.bf16.gmra.mxu0 %v101
    %v1325 = vpop.f32.mrf.mxu0
    %v1326 = vadd.f32 0.0, %v1325
    %v1327 = vpop.f32.mrf.mxu0
    %v1328 = vadd.f32 0.0, %v1327
    %1329 = vdwg.mxu0
    %1330 = vmatpush.bf16.msra.mxu0 %v1042
    %1331 = vmatpush.bf16.msra.mxu0 %v1018
    %1332 = vmatpush.bf16.msra.mxu0 %v994
    %1333 = vmatpush.bf16.msra.mxu0 %v970
    %1334 = vmatpush.bf16.msra.mxu0 %v946
    %1335 = vmatpush.bf16.msra.mxu0 %v922
    %1336 = vmatpush.bf16.msra.mxu0 %v898
    %1337 = vmatpush.bf16.msra.mxu0 %v874
    %1338 = vmatmul.bf16.gmra.mxu0 %v100
    %v1339 = vpop.f32.mrf.mxu0
    %v1340 = vadd.f32 0.0, %v1339
    %v1341 = vpop.f32.mrf.mxu0
    %v1342 = vadd.f32 0.0, %v1341
    %1343 = vmatmul.bf16.gmra.mxu0 %v101
    %v1344 = vpop.f32.mrf.mxu0
    %v1345 = vadd.f32 0.0, %v1344
    %v1346 = vpop.f32.mrf.mxu0
    %v1347 = vadd.f32 0.0, %v1346
    %1348 = vdwg.mxu0
    %1349 = vmatpush.bf16.msra.mxu0 %v1043
    %1350 = vmatpush.bf16.msra.mxu0 %v1019
    %1351 = vmatpush.bf16.msra.mxu0 %v995
    %1352 = vmatpush.bf16.msra.mxu0 %v971
    %1353 = vmatpush.bf16.msra.mxu0 %v947
    %1354 = vmatpush.bf16.msra.mxu0 %v923
    %1355 = vmatpush.bf16.msra.mxu0 %v899
    %1356 = vmatpush.bf16.msra.mxu0 %v875
    %1357 = vmatmul.bf16.gmra.mxu0 %v100
    %v1358 = vpop.f32.mrf.mxu0
    %v1359 = vadd.f32 0.0, %v1358
    %v1360 = vpop.f32.mrf.mxu0
    %v1361 = vadd.f32 0.0, %v1360
    %1362 = vmatmul.bf16.gmra.mxu0 %v101
    %v1363 = vpop.f32.mrf.mxu0
    %v1364 = vadd.f32 0.0, %v1363
    %v1365 = vpop.f32.mrf.mxu0
    %v1366 = vadd.f32 0.0, %v1365
    %1367 = vdwg.mxu0
    %1368 = vmatpush.bf16.msra.mxu0 %v1044
    %1369 = vmatpush.bf16.msra.mxu0 %v1020
    %1370 = vmatpush.bf16.msra.mxu0 %v996
    %1371 = vmatpush.bf16.msra.mxu0 %v972
    %1372 = vmatpush.bf16.msra.mxu0 %v948
    %1373 = vmatpush.bf16.msra.mxu0 %v924
    %1374 = vmatpush.bf16.msra.mxu0 %v900
    %1375 = vmatpush.bf16.msra.mxu0 %v876
    %1376 = vmatmul.bf16.gmra.mxu0 %v100
    %v1377 = vpop.f32.mrf.mxu0
    %v1378 = vadd.f32 0.0, %v1377
    %v1379 = vpop.f32.mrf.mxu0
    %v1380 = vadd.f32 0.0, %v1379
    %1381 = vmatmul.bf16.gmra.mxu0 %v101
    %v1382 = vpop.f32.mrf.mxu0
    %v1383 = vadd.f32 0.0, %v1382
    %v1384 = vpop.f32.mrf.mxu0
    %v1385 = vadd.f32 0.0, %v1384
    %1386 = vdwg.mxu0
    %1387 = vmatpush.bf16.msra.mxu0 %v1045
    %1388 = vmatpush.bf16.msra.mxu0 %v1021
    %1389 = vmatpush.bf16.msra.mxu0 %v997
    %1390 = vmatpush.bf16.msra.mxu0 %v973
    %1391 = vmatpush.bf16.msra.mxu0 %v949
    %1392 = vmatpush.bf16.msra.mxu0 %v925
    %1393 = vmatpush.bf16.msra.mxu0 %v901
    %1394 = vmatpush.bf16.msra.mxu0 %v877
    %1395 = vmatmul.bf16.gmra.mxu0 %v100
    %v1396 = vpop.f32.mrf.mxu0
    %v1397 = vadd.f32 0.0, %v1396
    %v1398 = vpop.f32.mrf.mxu0
    %v1399 = vadd.f32 0.0, %v1398
    %1400 = vmatmul.bf16.gmra.mxu0 %v101
    %v1401 = vpop.f32.mrf.mxu0
    %v1402 = vadd.f32 0.0, %v1401
    %v1403 = vpop.f32.mrf.mxu0
    %v1404 = vadd.f32 0.0, %v1403
    %1405 = vdwg.mxu0
    %1406 = vmatpush.bf16.msra.mxu0 %v1046
    %1407 = vmatpush.bf16.msra.mxu0 %v1022
    %1408 = vmatpush.bf16.msra.mxu0 %v998
    %1409 = vmatpush.bf16.msra.mxu0 %v974
    %1410 = vmatpush.bf16.msra.mxu0 %v950
    %1411 = vmatpush.bf16.msra.mxu0 %v926
    %1412 = vmatpush.bf16.msra.mxu0 %v902
    %1413 = vmatpush.bf16.msra.mxu0 %v878
    %1414 = vmatmul.bf16.gmra.mxu0 %v100
    %v1415 = vpop.f32.mrf.mxu0
    %v1416 = vadd.f32 0.0, %v1415
    %v1417 = vpop.f32.mrf.mxu0
    %v1418 = vadd.f32 0.0, %v1417
    %1419 = vmatmul.bf16.gmra.mxu0 %v101
    %v1420 = vpop.f32.mrf.mxu0
    %v1421 = vadd.f32 0.0, %v1420
    %v1422 = vpop.f32.mrf.mxu0
    %v1423 = vadd.f32 0.0, %v1422
    %1424 = vdwg.mxu0
    %1425 = vmatpush.bf16.msra.mxu0 %v1047
    %1426 = vmatpush.bf16.msra.mxu0 %v1023
    %1427 = vmatpush.bf16.msra.mxu0 %v999
    %1428 = vmatpush.bf16.msra.mxu0 %v975
    %1429 = vmatpush.bf16.msra.mxu0 %v951
    %1430 = vmatpush.bf16.msra.mxu0 %v927
    %1431 = vmatpush.bf16.msra.mxu0 %v903
    %1432 = vmatpush.bf16.msra.mxu0 %v879
    %1433 = vmatmul.bf16.gmra.mxu0 %v100
    %v1434 = vpop.f32.mrf.mxu0
    %v1435 = vadd.f32 0.0, %v1434
    %v1436 = vpop.f32.mrf.mxu0
    %v1437 = vadd.f32 0.0, %v1436
    %1438 = vmatmul.bf16.gmra.mxu0 %v101
    %v1439 = vpop.f32.mrf.mxu0
    %v1440 = vadd.f32 0.0, %v1439
    %v1441 = vpop.f32.mrf.mxu0
    %v1442 = vadd.f32 0.0, %v1441
    %1443 = vdwg.mxu0
    %1444 = vmatpush.bf16.msra.mxu0 %v1048
    %1445 = vmatpush.bf16.msra.mxu0 %v1024
    %1446 = vmatpush.bf16.msra.mxu0 %v1000
    %1447 = vmatpush.bf16.msra.mxu0 %v976
    %1448 = vmatpush.bf16.msra.mxu0 %v952
    %1449 = vmatpush.bf16.msra.mxu0 %v928
    %1450 = vmatpush.bf16.msra.mxu0 %v904
    %1451 = vmatpush.bf16.msra.mxu0 %v880
    %1452 = vmatmul.bf16.gmra.mxu0 %v100
    %v1453 = vpop.f32.mrf.mxu0
    %v1454 = vadd.f32 0.0, %v1453
    %v1455 = vpop.f32.mrf.mxu0
    %v1456 = vadd.f32 0.0, %v1455
    %1457 = vmatmul.bf16.gmra.mxu0 %v101
    %v1458 = vpop.f32.mrf.mxu0
    %v1459 = vadd.f32 0.0, %v1458
    %v1460 = vpop.f32.mrf.mxu0
    %v1461 = vadd.f32 0.0, %v1460
    %1462 = vdwg.mxu0
    %1463 = vmatpush.bf16.msra.mxu0 %v1049
    %1464 = vmatpush.bf16.msra.mxu0 %v1025
    %1465 = vmatpush.bf16.msra.mxu0 %v1001
    %1466 = vmatpush.bf16.msra.mxu0 %v977
    %1467 = vmatpush.bf16.msra.mxu0 %v953
    %1468 = vmatpush.bf16.msra.mxu0 %v929
    %1469 = vmatpush.bf16.msra.mxu0 %v905
    %1470 = vmatpush.bf16.msra.mxu0 %v881
    %1471 = vmatmul.bf16.gmra.mxu0 %v100
    %v1472 = vpop.f32.mrf.mxu0
    %v1473 = vadd.f32 0.0, %v1472
    %v1474 = vpop.f32.mrf.mxu0
    %v1475 = vadd.f32 0.0, %v1474
    %1476 = vmatmul.bf16.gmra.mxu0 %v101
    %v1477 = vpop.f32.mrf.mxu0
    %v1478 = vadd.f32 0.0, %v1477
    %v1479 = vpop.f32.mrf.mxu0
    %v1480 = vadd.f32 0.0, %v1479
    %1481 = vdwg.mxu0
    %1482 = vmatpush.bf16.msra.mxu0 %v1050
    %1483 = vmatpush.bf16.msra.mxu0 %v1026
    %1484 = vmatpush.bf16.msra.mxu0 %v1002
    %1485 = vmatpush.bf16.msra.mxu0 %v978
    %1486 = vmatpush.bf16.msra.mxu0 %v954
    %1487 = vmatpush.bf16.msra.mxu0 %v930
    %1488 = vmatpush.bf16.msra.mxu0 %v906
    %1489 = vmatpush.bf16.msra.mxu0 %v882
    %1490 = vmatmul.bf16.gmra.mxu0 %v100
    %v1491 = vpop.f32.mrf.mxu0
    %v1492 = vadd.f32 0.0, %v1491
    %v1493 = vpop.f32.mrf.mxu0
    %v1494 = vadd.f32 0.0, %v1493
    %1495 = vmatmul.bf16.gmra.mxu0 %v101
    %v1496 = vpop.f32.mrf.mxu0
    %v1497 = vadd.f32 0.0, %v1496
    %v1498 = vpop.f32.mrf.mxu0
    %v1499 = vadd.f32 0.0, %v1498
    %1500 = vdwg.mxu0
    %1501 = vmatpush.bf16.msra.mxu0 %v1051
    %1502 = vmatpush.bf16.msra.mxu0 %v1027
    %1503 = vmatpush.bf16.msra.mxu0 %v1003
    %1504 = vmatpush.bf16.msra.mxu0 %v979
    %1505 = vmatpush.bf16.msra.mxu0 %v955
    %1506 = vmatpush.bf16.msra.mxu0 %v931
    %1507 = vmatpush.bf16.msra.mxu0 %v907
    %1508 = vmatpush.bf16.msra.mxu0 %v883
    %1509 = vmatmul.bf16.gmra.mxu0 %v100
    %v1510 = vpop.f32.mrf.mxu0
    %v1511 = vadd.f32 0.0, %v1510
    %v1512 = vpop.f32.mrf.mxu0
    %v1513 = vadd.f32 0.0, %v1512
    %1514 = vmatmul.bf16.gmra.mxu0 %v101
    %v1515 = vpop.f32.mrf.mxu0
    %v1516 = vadd.f32 0.0, %v1515
    %v1517 = vpop.f32.mrf.mxu0
    %v1518 = vadd.f32 0.0, %v1517
    %1519 = vdwg.mxu0
    %1520 = vmatpush.bf16.msra.mxu0 %v1052
    %1521 = vmatpush.bf16.msra.mxu0 %v1028
    %1522 = vmatpush.bf16.msra.mxu0 %v1004
    %1523 = vmatpush.bf16.msra.mxu0 %v980
    %1524 = vmatpush.bf16.msra.mxu0 %v956
    %1525 = vmatpush.bf16.msra.mxu0 %v932
    %1526 = vmatpush.bf16.msra.mxu0 %v908
    %1527 = vmatpush.bf16.msra.mxu0 %v884
    %1528 = vmatmul.bf16.gmra.mxu0 %v100
    %v1529 = vpop.f32.mrf.mxu0
    %v1530 = vadd.f32 0.0, %v1529
    %v1531 = vpop.f32.mrf.mxu0
    %v1532 = vadd.f32 0.0, %v1531
    %1533 = vmatmul.bf16.gmra.mxu0 %v101
    %v1534 = vpop.f32.mrf.mxu0
    %v1535 = vadd.f32 0.0, %v1534
    %v1536 = vpop.f32.mrf.mxu0
    %v1537 = vadd.f32 0.0, %v1536
    %1538 = vdwg.mxu0
    %1539 = vmatpush.bf16.msra.mxu0 %v1053
    %1540 = vmatpush.bf16.msra.mxu0 %v1029
    %1541 = vmatpush.bf16.msra.mxu0 %v1005
    %1542 = vmatpush.bf16.msra.mxu0 %v981
    %1543 = vmatpush.bf16.msra.mxu0 %v957
    %1544 = vmatpush.bf16.msra.mxu0 %v933
    %1545 = vmatpush.bf16.msra.mxu0 %v909
    %1546 = vmatpush.bf16.msra.mxu0 %v885
    %1547 = vmatmul.bf16.gmra.mxu0 %v100
    %v1548 = vpop.f32.mrf.mxu0
    %v1549 = vadd.f32 0.0, %v1548
    %v1550 = vpop.f32.mrf.mxu0
    %v1551 = vadd.f32 0.0, %v1550
    %1552 = vmatmul.bf16.gmra.mxu0 %v101
    %v1553 = vpop.f32.mrf.mxu0
    %v1554 = vadd.f32 0.0, %v1553
    %v1555 = vpop.f32.mrf.mxu0
    %v1556 = vadd.f32 0.0, %v1555
    %1557 = vdwg.mxu0
    %1558 = vmatpush.bf16.msra.mxu0 %v1054
    %1559 = vmatpush.bf16.msra.mxu0 %v1030
    %1560 = vmatpush.bf16.msra.mxu0 %v1006
    %1561 = vmatpush.bf16.msra.mxu0 %v982
    %1562 = vmatpush.bf16.msra.mxu0 %v958
    %1563 = vmatpush.bf16.msra.mxu0 %v934
    %1564 = vmatpush.bf16.msra.mxu0 %v910
    %1565 = vmatpush.bf16.msra.mxu0 %v886
    %1566 = vmatmul.bf16.gmra.mxu0 %v100
    %v1567 = vpop.f32.mrf.mxu0
    %v1568 = vadd.f32 0.0, %v1567
    %v1569 = vpop.f32.mrf.mxu0
    %v1570 = vadd.f32 0.0, %v1569
    %1571 = vmatmul.bf16.gmra.mxu0 %v101
    %v1572 = vpop.f32.mrf.mxu0
    %v1573 = vadd.f32 0.0, %v1572
    %v1574 = vpop.f32.mrf.mxu0
    %v1575 = vadd.f32 0.0, %v1574
    %1576 = vdwg.mxu0
    %1577 = vmatpush.bf16.msra.mxu0 %v1055
    %1578 = vmatpush.bf16.msra.mxu0 %v1031
    %1579 = vmatpush.bf16.msra.mxu0 %v1007
    %1580 = vmatpush.bf16.msra.mxu0 %v983
    %1581 = vmatpush.bf16.msra.mxu0 %v959
    %1582 = vmatpush.bf16.msra.mxu0 %v935
    %1583 = vmatpush.bf16.msra.mxu0 %v911
    %1584 = vmatpush.bf16.msra.mxu0 %v887
    %1585 = vmatmul.bf16.gmra.mxu0 %v100
    %v1586 = vpop.f32.mrf.mxu0
    %v1587 = vadd.f32 0.0, %v1586
    %v1588 = vpop.f32.mrf.mxu0
    %v1589 = vadd.f32 0.0, %v1588
    %1590 = vmatmul.bf16.gmra.mxu0 %v101
    %v1591 = vpop.f32.mrf.mxu0
    %v1592 = vadd.f32 0.0, %v1591
    %v1593 = vpop.f32.mrf.mxu0
    %v1594 = vadd.f32 0.0, %v1593
    %1595 = vdwg.mxu0
    %1596 = vmatpush.bf16.msra.mxu0 %v1056
    %1597 = vmatpush.bf16.msra.mxu0 %v1032
    %1598 = vmatpush.bf16.msra.mxu0 %v1008
    %1599 = vmatpush.bf16.msra.mxu0 %v984
    %1600 = vmatpush.bf16.msra.mxu0 %v960
    %1601 = vmatpush.bf16.msra.mxu0 %v936
    %1602 = vmatpush.bf16.msra.mxu0 %v912
    %1603 = vmatpush.bf16.msra.mxu0 %v888
    %1604 = vmatmul.bf16.gmra.mxu0 %v100
    %v1605 = vpop.f32.mrf.mxu0
    %v1606 = vadd.f32 0.0, %v1605
    %v1607 = vpop.f32.mrf.mxu0
    %v1608 = vadd.f32 0.0, %v1607
    %1609 = vmatmul.bf16.gmra.mxu0 %v101
    %v1610 = vpop.f32.mrf.mxu0
    %v1611 = vadd.f32 0.0, %v1610
    %v1612 = vpop.f32.mrf.mxu0
    %v1613 = vadd.f32 0.0, %v1612
    %1614 = vdwg.mxu0
    %1615 = vmatpush.bf16.msra.mxu0 %v1057
    %1616 = vmatpush.bf16.msra.mxu0 %v1033
    %1617 = vmatpush.bf16.msra.mxu0 %v1009
    %1618 = vmatpush.bf16.msra.mxu0 %v985
    %1619 = vmatpush.bf16.msra.mxu0 %v961
    %1620 = vmatpush.bf16.msra.mxu0 %v937
    %1621 = vmatpush.bf16.msra.mxu0 %v913
    %1622 = vmatpush.bf16.msra.mxu0 %v889
    %1623 = vmatmul.bf16.gmra.mxu0 %v100
    %v1624 = vpop.f32.mrf.mxu0
    %v1625 = vadd.f32 0.0, %v1624
    %v1626 = vpop.f32.mrf.mxu0
    %v1627 = vadd.f32 0.0, %v1626
    %1628 = vmatmul.bf16.gmra.mxu0 %v101
    %v1629 = vpop.f32.mrf.mxu0
    %v1630 = vadd.f32 0.0, %v1629
    %v1631 = vpop.f32.mrf.mxu0
    %v1632 = vadd.f32 0.0, %v1631
    %1633 = vdwg.mxu0
    %1634 = vmatpush.bf16.msra.mxu0 %v1058
    %1635 = vmatpush.bf16.msra.mxu0 %v1034
    %1636 = vmatpush.bf16.msra.mxu0 %v1010
    %1637 = vmatpush.bf16.msra.mxu0 %v986
    %1638 = vmatpush.bf16.msra.mxu0 %v962
    %1639 = vmatpush.bf16.msra.mxu0 %v938
    %1640 = vmatpush.bf16.msra.mxu0 %v914
    %1641 = vmatpush.bf16.msra.mxu0 %v890
    %1642 = vmatmul.bf16.gmra.mxu0 %v100
    %v1643 = vpop.f32.mrf.mxu0
    %v1644 = vadd.f32 0.0, %v1643
    %v1645 = vpop.f32.mrf.mxu0
    %v1646 = vadd.f32 0.0, %v1645
    %1647 = vmatmul.bf16.gmra.mxu0 %v101
    %v1648 = vpop.f32.mrf.mxu0
    %v1649 = vadd.f32 0.0, %v1648
    %v1650 = vpop.f32.mrf.mxu0
    %v1651 = vadd.f32 0.0, %v1650
    %1652 = vdwg.mxu0
    %1653 = vmatpush.bf16.msra.mxu0 %v1059
    %1654 = vmatpush.bf16.msra.mxu0 %v1035
    %1655 = vmatpush.bf16.msra.mxu0 %v1011
    %1656 = vmatpush.bf16.msra.mxu0 %v987
    %1657 = vmatpush.bf16.msra.mxu0 %v963
    %1658 = vmatpush.bf16.msra.mxu0 %v939
    %1659 = vmatpush.bf16.msra.mxu0 %v915
    %1660 = vmatpush.bf16.msra.mxu0 %v891
    %1661 = vmatmul.bf16.gmra.mxu0 %v100
    %v1662 = vpop.f32.mrf.mxu0
    %v1663 = vadd.f32 0.0, %v1662
    %v1664 = vpop.f32.mrf.mxu0
    %v1665 = vadd.f32 0.0, %v1664
    %1666 = vmatmul.bf16.gmra.mxu0 %v101
    %v1667 = vpop.f32.mrf.mxu0
    %v1668 = vadd.f32 0.0, %v1667
    %v1669 = vpop.f32.mrf.mxu0
    %v1670 = vadd.f32 0.0, %v1669
    %1671 = vdwg.mxu0
    %1672 = vmatpush.bf16.msra.mxu0 %v1060
    %1673 = vmatpush.bf16.msra.mxu0 %v1036
    %1674 = vmatpush.bf16.msra.mxu0 %v1012
    %1675 = vmatpush.bf16.msra.mxu0 %v988
    %1676 = vmatpush.bf16.msra.mxu0 %v964
    %1677 = vmatpush.bf16.msra.mxu0 %v940
    %1678 = vmatpush.bf16.msra.mxu0 %v916
    %1679 = vmatpush.bf16.msra.mxu0 %v892
    %1680 = vmatmul.bf16.gmra.mxu0 %v100
    %v1681 = vpop.f32.mrf.mxu0
    %v1682 = vadd.f32 0.0, %v1681
    %v1683 = vpop.f32.mrf.mxu0
    %v1684 = vadd.f32 0.0, %v1683
    %1685 = vmatmul.bf16.gmra.mxu0 %v101
    %v1686 = vpop.f32.mrf.mxu0
    %v1687 = vadd.f32 0.0, %v1686
    %v1688 = vpop.f32.mrf.mxu0
    %v1689 = vadd.f32 0.0, %v1688
    %1690 = vdwg.mxu0
    %1691 = vmatpush.bf16.msra.mxu0 %v1061
    %1692 = vmatpush.bf16.msra.mxu0 %v1037
    %1693 = vmatpush.bf16.msra.mxu0 %v1013
    %1694 = vmatpush.bf16.msra.mxu0 %v989
    %1695 = vmatpush.bf16.msra.mxu0 %v965
    %1696 = vmatpush.bf16.msra.mxu0 %v941
    %1697 = vmatpush.bf16.msra.mxu0 %v917
    %1698 = vmatpush.bf16.msra.mxu0 %v893
    %1699 = vmatmul.bf16.gmra.mxu0 %v100
    %v1700 = vpop.f32.mrf.mxu0
    %v1701 = vadd.f32 0.0, %v1700
    %v1702 = vpop.f32.mrf.mxu0
    %v1703 = vadd.f32 0.0, %v1702
    %1704 = vmatmul.bf16.gmra.mxu0 %v101
    %v1705 = vpop.f32.mrf.mxu0
    %v1706 = vadd.f32 0.0, %v1705
    %v1707 = vpop.f32.mrf.mxu0
    %v1708 = vadd.f32 0.0, %v1707
    %1709 = vdwg.mxu0
    %v1710 = vpack.c.bf16 %v1283, %v1264
    %v1711 = vpack.c.bf16 %v1321, %v1302
    %v1712 = vpack.c.bf16 %v1359, %v1340
    %v1713 = vpack.c.bf16 %v1397, %v1378
    %v1714 = vpack.c.bf16 %v1435, %v1416
    %v1715 = vpack.c.bf16 %v1473, %v1454
    %v1716 = vpack.c.bf16 %v1511, %v1492
    %v1717 = vpack.c.bf16 %v1549, %v1530
    %v1718 = vpack.c.bf16 %v1587, %v1568
    %v1719 = vpack.c.bf16 %v1625, %v1606
    %v1720 = vpack.c.bf16 %v1663, %v1644
    %v1721 = vpack.c.bf16 %v1701, %v1682
    %v1722 = vpack.c.bf16 %v1285, %v1266
    %v1723 = vpack.c.bf16 %v1323, %v1304
    %v1724 = vpack.c.bf16 %v1361, %v1342
    %v1725 = vpack.c.bf16 %v1399, %v1380
    %v1726 = vpack.c.bf16 %v1437, %v1418
    %v1727 = vpack.c.bf16 %v1475, %v1456
    %v1728 = vpack.c.bf16 %v1513, %v1494
    %v1729 = vpack.c.bf16 %v1551, %v1532
    %v1730 = vpack.c.bf16 %v1589, %v1570
    %v1731 = vpack.c.bf16 %v1627, %v1608
    %v1732 = vpack.c.bf16 %v1665, %v1646
    %v1733 = vpack.c.bf16 %v1703, %v1684
    %v1734 = vpack.c.bf16 %v1288, %v1269
    %v1735 = vpack.c.bf16 %v1326, %v1307
    %v1736 = vpack.c.bf16 %v1364, %v1345
    %v1737 = vpack.c.bf16 %v1402, %v1383
    %v1738 = vpack.c.bf16 %v1440, %v1421
    %v1739 = vpack.c.bf16 %v1478, %v1459
    %v1740 = vpack.c.bf16 %v1516, %v1497
    %v1741 = vpack.c.bf16 %v1554, %v1535
    %v1742 = vpack.c.bf16 %v1592, %v1573
    %v1743 = vpack.c.bf16 %v1630, %v1611
    %v1744 = vpack.c.bf16 %v1668, %v1649
    %v1745 = vpack.c.bf16 %v1706, %v1687
    %v1746 = vpack.c.bf16 %v1290, %v1271
    %v1747 = vpack.c.bf16 %v1328, %v1309
    %v1748 = vpack.c.bf16 %v1366, %v1347
    %v1749 = vpack.c.bf16 %v1404, %v1385
    %v1750 = vpack.c.bf16 %v1442, %v1423
    %v1751 = vpack.c.bf16 %v1480, %v1461
    %v1752 = vpack.c.bf16 %v1518, %v1499
    %v1753 = vpack.c.bf16 %v1556, %v1537
    %v1754 = vpack.c.bf16 %v1594, %v1575
    %v1755 = vpack.c.bf16 %v1632, %v1613
    %v1756 = vpack.c.bf16 %v1670, %v1651
    %v1757 = vpack.c.bf16 %v1708, %v1689
    %1758 = vst [vmem:[%s5] sm:$0xff] %v1710
    %1759 = vst [vmem:[%s5 + $0x8] sm:$0xff] %v1711
    %1760 = vst [vmem:[%s5 + $0x10] sm:$0xff] %v1712
    %1761 = vst [vmem:[%s5 + $0x18] sm:$0xff] %v1713
    %1762 = vst [vmem:[%s5 + $0x20] sm:$0xff] %v1714
    %1763 = vst [vmem:[%s5 + $0x28] sm:$0xff] %v1715
    %1764 = vst [vmem:[%s5 + $0x30] sm:$0xff] %v1716
    %1765 = vst [vmem:[%s5 + $0x38] sm:$0xff] %v1717
    %1766 = vst [vmem:[%s5 + $0x40] sm:$0xff] %v1718
    %1767 = vst [vmem:[%s5 + $0x48] sm:$0xff] %v1719
    %1768 = vst [vmem:[%s5 + $0x50] sm:$0xff] %v1720
    %1769 = vst [vmem:[%s5 + $0x58] sm:$0xff] %v1721
    %1770 = vst [vmem:[%s5 + $0x60] sm:$0xff] %v1722
    %1771 = vst [vmem:[%s5 + $0x68] sm:$0xff] %v1723
    %1772 = vst [vmem:[%s5 + $0x70] sm:$0xff] %v1724
    %1773 = vst [vmem:[%s5 + $0x78] sm:$0xff] %v1725
    %1774 = vst [vmem:[%s5 + $0x80] sm:$0xff] %v1726
    %1775 = vst [vmem:[%s5 + $0x88] sm:$0xff] %v1727
    %1776 = vst [vmem:[%s5 + $0x90] sm:$0xff] %v1728
    %1777 = vst [vmem:[%s5 + $0x98] sm:$0xff] %v1729
    %1778 = vst [vmem:[%s5 + $0xa0] sm:$0xff] %v1730
    %1779 = vst [vmem:[%s5 + $0xa8] sm:$0xff] %v1731
    %1780 = vst [vmem:[%s5 + $0xb0] sm:$0xff] %v1732
    %1781 = vst [vmem:[%s5 + $0xb8] sm:$0xff] %v1733
    %1782 = vst [vmem:[%s5 + $0xc0] sm:$0xff] %v1734
    %1783 = vst [vmem:[%s5 + $0xc8] sm:$0xff] %v1735
    %1784 = vst [vmem:[%s5 + $0xd0] sm:$0xff] %v1736
    %1785 = vst [vmem:[%s5 + $0xd8] sm:$0xff] %v1737
    %1786 = vst [vmem:[%s5 + $0xe0] sm:$0xff] %v1738
    %1787 = vst [vmem:[%s5 + $0xe8] sm:$0xff] %v1739
    %1788 = vst [vmem:[%s5 + $0xf0] sm:$0xff] %v1740
    %1789 = vst [vmem:[%s5 + $0xf8] sm:$0xff] %v1741
    %1790 = vst [vmem:[%s5 + $0x100] sm:$0xff] %v1742
    %1791 = vst [vmem:[%s5 + $0x108] sm:$0xff] %v1743
    %1792 = vst [vmem:[%s5 + $0x110] sm:$0xff] %v1744
    %1793 = vst [vmem:[%s5 + $0x118] sm:$0xff] %v1745
    %1794 = vst [vmem:[%s5 + $0x120] sm:$0xff] %v1746
    %1795 = vst [vmem:[%s5 + $0x128] sm:$0xff] %v1747
    %1796 = vst [vmem:[%s5 + $0x130] sm:$0xff] %v1748
    %1797 = vst [vmem:[%s5 + $0x138] sm:$0xff] %v1749
    %1798 = vst [vmem:[%s5 + $0x140] sm:$0xff] %v1750
    %1799 = vst [vmem:[%s5 + $0x148] sm:$0xff] %v1751
    %1800 = vst [vmem:[%s5 + $0x150] sm:$0xff] %v1752
    %1801 = vst [vmem:[%s5 + $0x158] sm:$0xff] %v1753
    %1802 = vst [vmem:[%s5 + $0x160] sm:$0xff] %v1754
    %1803 = vst [vmem:[%s5 + $0x168] sm:$0xff] %v1755
    %1804 = vst [vmem:[%s5 + $0x170] sm:$0xff] %v1756
    %1805 = vst [vmem:[%s5 + $0x178] sm:$0xff] %v1757
    // Predicated region
    $region26: #{transformer_forward.5} parent=1 // pred_check
      _
    $region27: #{transformer_forward.5} parent=1 // pred_check_branch
      %1807 = sbr.rel (0) target = $region29
    $region28: #{transformer_forward.5} parent=1 // pred_region
      _
    $region29: #{transformer_forward.5} parent=1 // pred_fallthru
      _
    // Predicated region
    $region30: #{transformer_forward.5} parent=1 // pred_check
      _
    $region31: #{transformer_forward.5} parent=1 // pred_check_branch
      %1809 = sbr.rel (0) target = $region33
    $region32: #{transformer_forward.5} parent=1 // pred_region
      _
    $region33: #{transformer_forward.5} parent=1 // pred_fallthru
      _
    // Predicated region
    $region34: #{transformer_forward.5} parent=1 // pred_check
      _
    $region35: #{transformer_forward.5} parent=1 // pred_check_branch
      %1811 = sbr.rel (0) target = $region37
    $region36: #{transformer_forward.5} parent=1 // pred_region
      _
    $region37: #{transformer_forward.5} parent=1 // pred_fallthru
      _
    // Predicated region
    $region38: #{transformer_forward.5} parent=1 // pred_check
      _
    $region39: #{transformer_forward.5} parent=1 // pred_check_branch
      %1813 = sbr.rel (0) target = $region41
    $region40: #{transformer_forward.5} parent=1 // pred_region
      _
    $region41: #{transformer_forward.5} parent=1 // pred_fallthru
      _
    %1814 = vsyncpa [#allocation3], 1
    %1815 = vsyncpa [#allocation5], 1

// kernel: transformer_forward.7
$region0: #{transformer_forward.7}
  #allocation0 [shape = 'u32[]', space=smem, size = 0x4, offset = 0x4, fixed_abs, tag = 'smem constant byte address 0x4 - core index']
  #allocation1 [shape = 'u32[72,128]{1,0:T(1,128)}', space=vmem, size = 0x9000, scoped, tag = 'internal scratch']
  %s0 = inlined_call_operand.vmem [shape: f32[32,128], index: 0, kind: input, shape index: {}]
  %s1 = inlined_call_operand.vmem [shape: bf16[32,1024], index: 1, kind: input, shape index: {}]
  %s2 = inlined_call_operand.vmem [shape: bf16[1024,128], index: 2, kind: input, shape index: {}]
  %s3 = inlined_call_operand.vmem [shape: f32[1,128], index: 3, kind: input, shape index: {}]
  %s4 = inlined_call_operand.vmem [shape: f32[1,128], index: 4, kind: input, shape index: {}]
  %s5 = inlined_call_operand.vmem [shape: bf16[128,128], index: 5, kind: input, shape index: {}]
  %s6 = inlined_call_operand.vmem [shape: f32[1,128], index: 6, kind: input, shape index: {}]
  %s7 = inlined_call_operand.vmem [shape: f32[1,128], index: 7, kind: input, shape index: {}]
  %s8 = inlined_call_operand.vmem [shape: f32[1,128], index: 8, kind: input, shape index: {}]
  %s9 = inlined_call_operand.vmem [shape: bf16[128,3072], index: 9, kind: input, shape index: {}]
  %s10 = inlined_call_operand.vmem [shape: f32[32,128], index: 10, kind: output, shape index: {0}]
  %s11 = inlined_call_operand.vmem [shape: bf16[32,3072], index: 11, kind: output, shape index: {1}]
  %12 = xla_tuple %s10, %s11
  %s13 = sld [smem:[#allocation0]]
  $region58: #{transformer_forward.7} parent=0
    _
  %s15 = ssub.s32 1, %s13
  %s16 = scalar_select 0, %s15, %s13
  // Predicated region
  $region2: #{transformer_forward.7} parent=0 // pred_check
    _
  $region3: #{transformer_forward.7} parent=0 // pred_check_branch
    %18 = sbr.rel (0) target = $region5
  $region4: #{transformer_forward.7} parent=0 // pred_region
    _
  $region5: #{transformer_forward.7} parent=0 // pred_fallthru
    _
  // Predicated region
  $region6: #{transformer_forward.7} parent=0 // pred_check
    _
  $region7: #{transformer_forward.7} parent=0 // pred_check_branch
    %20 = sbr.rel (0) target = $region9
  $region8: #{transformer_forward.7} parent=0 // pred_region
    _
  $region9: #{transformer_forward.7} parent=0 // pred_fallthru
    _
  // Predicated region
  $region10: #{transformer_forward.7} parent=0 // pred_check
    _
  $region11: #{transformer_forward.7} parent=0 // pred_check_branch
    %22 = sbr.rel (0) target = $region13
  $region12: #{transformer_forward.7} parent=0 // pred_region
    _
  $region13: #{transformer_forward.7} parent=0 // pred_fallthru
    _
  // Predicated region
  $region14: #{transformer_forward.7} parent=0 // pred_check
    _
  $region15: #{transformer_forward.7} parent=0 // pred_check_branch
    %24 = sbr.rel (0) target = $region17
  $region16: #{transformer_forward.7} parent=0 // pred_region
    _
  $region17: #{transformer_forward.7} parent=0 // pred_fallthru
    _
  // Predicated region
  $region18: #{transformer_forward.7} parent=0 // pred_check
    _
  $region19: #{transformer_forward.7} parent=0 // pred_check_branch
    %26 = sbr.rel (0) target = $region21
  $region20: #{transformer_forward.7} parent=0 // pred_region
    _
  $region21: #{transformer_forward.7} parent=0 // pred_fallthru
    _
  // Predicated region
  $region22: #{transformer_forward.7} parent=0 // pred_check
    _
  $region23: #{transformer_forward.7} parent=0 // pred_check_branch
    %28 = sbr.rel (0) target = $region25
  $region24: #{transformer_forward.7} parent=0 // pred_region
    _
  $region25: #{transformer_forward.7} parent=0 // pred_fallthru
    _
  // Predicated region
  $region26: #{transformer_forward.7} parent=0 // pred_check
    _
  $region27: #{transformer_forward.7} parent=0 // pred_check_branch
    %30 = sbr.rel (0) target = $region29
  $region28: #{transformer_forward.7} parent=0 // pred_region
    _
  $region29: #{transformer_forward.7} parent=0 // pred_fallthru
    _
  // Predicated region
  $region30: #{transformer_forward.7} parent=0 // pred_check
    _
  $region31: #{transformer_forward.7} parent=0 // pred_check_branch
    %32 = sbr.rel (0) target = $region33
  $region32: #{transformer_forward.7} parent=0 // pred_region
    _
  $region33: #{transformer_forward.7} parent=0 // pred_fallthru
    _
  // Predicated region
  $region34: #{transformer_forward.7} parent=0 // pred_check
    _
  $region35: #{transformer_forward.7} parent=0 // pred_check_branch
    %34 = sbr.rel (0) target = $region37
  $region36: #{transformer_forward.7} parent=0 // pred_region
    _
  $region37: #{transformer_forward.7} parent=0 // pred_fallthru
    _
  // Predicated region
  $region38: #{transformer_forward.7} parent=0 // pred_check
    _
  $region39: #{transformer_forward.7} parent=0 // pred_check_branch
    %36 = sbr.rel (0) target = $region41
  $region40: #{transformer_forward.7} parent=0 // pred_region
    _
  $region41: #{transformer_forward.7} parent=0 // pred_fallthru
    _
  %v37 = vld [vmem:[%s0] sm:$0xff]
  %v38 = vld [vmem:[%s0 + $0x8] sm:$0xff]
  %v39 = vld [vmem:[%s0 + $0x10] sm:$0xff]
  %v40 = vld [vmem:[%s0 + $0x18] sm:$0xff]
  %v41 = vld [vmem:[%s1] sm:$0xff]
  %v42 = vld [vmem:[%s1 + $0x8] sm:$0xff]
  %v43 = vld [vmem:[%s1 + $0x10] sm:$0xff]
  %v44 = vld [vmem:[%s1 + $0x18] sm:$0xff]
  %v45 = vld [vmem:[%s1 + $0x20] sm:$0xff]
  %v46 = vld [vmem:[%s1 + $0x28] sm:$0xff]
  %v47 = vld [vmem:[%s1 + $0x30] sm:$0xff]
  %v48 = vld [vmem:[%s1 + $0x38] sm:$0xff]
  %v49 = vld [vmem:[%s1 + $0x40] sm:$0xff]
  %v50 = vld [vmem:[%s1 + $0x48] sm:$0xff]
  %v51 = vld [vmem:[%s1 + $0x50] sm:$0xff]
  %v52 = vld [vmem:[%s1 + $0x58] sm:$0xff]
  %v53 = vld [vmem:[%s1 + $0x60] sm:$0xff]
  %v54 = vld [vmem:[%s1 + $0x68] sm:$0xff]
  %v55 = vld [vmem:[%s1 + $0x70] sm:$0xff]
  %v56 = vld [vmem:[%s1 + $0x78] sm:$0xff]
  %v57 = vld [vmem:[%s2] sm:$0xf]
  %v58 = vld [vmem:[%s2 + $0x4] sm:$0xf]
  %v59 = vld [vmem:[%s2 + $0x8] sm:$0xf]
  %v60 = vld [vmem:[%s2 + $0xc] sm:$0xf]
  %v61 = vld [vmem:[%s2 + $0x10] sm:$0xf]
  %v62 = vld [vmem:[%s2 + $0x14] sm:$0xf]
  %v63 = vld [vmem:[%s2 + $0x18] sm:$0xf]
  %v64 = vld [vmem:[%s2 + $0x1c] sm:$0xf]
  %v65 = vld [vmem:[%s2 + $0x20] sm:$0xf]
  %v66 = vld [vmem:[%s2 + $0x24] sm:$0xf]
  %v67 = vld [vmem:[%s2 + $0x28] sm:$0xf]
  %v68 = vld [vmem:[%s2 + $0x2c] sm:$0xf]
  %v69 = vld [vmem:[%s2 + $0x30] sm:$0xf]
  %v70 = vld [vmem:[%s2 + $0x34] sm:$0xf]
  %v71 = vld [vmem:[%s2 + $0x38] sm:$0xf]
  %v72 = vld [vmem:[%s2 + $0x3c] sm:$0xf]
  %v73 = vld [vmem:[%s2 + $0x40] sm:$0xf]
  %v74 = vld [vmem:[%s2 + $0x44] sm:$0xf]
  %v75 = vld [vmem:[%s2 + $0x48] sm:$0xf]
  %v76 = vld [vmem:[%s2 + $0x4c] sm:$0xf]
  %v77 = vld [vmem:[%s2 + $0x50] sm:$0xf]
  %v78 = vld [vmem:[%s2 + $0x54] sm:$0xf]
  %v79 = vld [vmem:[%s2 + $0x58] sm:$0xf]
  %v80 = vld [vmem:[%s2 + $0x5c] sm:$0xf]
  %v81 = vld [vmem:[%s2 + $0x60] sm:$0xf]
  %v82 = vld [vmem:[%s2 + $0x64] sm:$0xf]
  %v83 = vld [vmem:[%s2 + $0x68] sm:$0xf]
  %v84 = vld [vmem:[%s2 + $0x6c] sm:$0xf]
  %v85 = vld [vmem:[%s2 + $0x70] sm:$0xf]
  %v86 = vld [vmem:[%s2 + $0x74] sm:$0xf]
  %v87 = vld [vmem:[%s2 + $0x78] sm:$0xf]
  %v88 = vld [vmem:[%s2 + $0x7c] sm:$0xf]
  %v89 = vld [vmem:[%s2 + $0x80] sm:$0xf]
  %v90 = vld [vmem:[%s2 + $0x84] sm:$0xf]
  %v91 = vld [vmem:[%s2 + $0x88] sm:$0xf]
  %v92 = vld [vmem:[%s2 + $0x8c] sm:$0xf]
  %v93 = vld [vmem:[%s2 + $0x90] sm:$0xf]
  %v94 = vld [vmem:[%s2 + $0x94] sm:$0xf]
  %v95 = vld [vmem:[%s2 + $0x98] sm:$0xf]
  %v96 = vld [vmem:[%s2 + $0x9c] sm:$0xf]
  %v97 = vld [vmem:[%s2 + $0xa0] sm:$0xf]
  %v98 = vld [vmem:[%s2 + $0xa4] sm:$0xf]
  %v99 = vld [vmem:[%s2 + $0xa8] sm:$0xf]
  %v100 = vld [vmem:[%s2 + $0xac] sm:$0xf]
  %v101 = vld [vmem:[%s2 + $0xb0] sm:$0xf]
  %v102 = vld [vmem:[%s2 + $0xb4] sm:$0xf]
  %v103 = vld [vmem:[%s2 + $0xb8] sm:$0xf]
  %v104 = vld [vmem:[%s2 + $0xbc] sm:$0xf]
  %v105 = vld [vmem:[%s2 + $0xc0] sm:$0xf]
  %v106 = vld [vmem:[%s2 + $0xc4] sm:$0xf]
  %v107 = vld [vmem:[%s2 + $0xc8] sm:$0xf]
  %v108 = vld [vmem:[%s2 + $0xcc] sm:$0xf]
  %v109 = vld [vmem:[%s2 + $0xd0] sm:$0xf]
  %v110 = vld [vmem:[%s2 + $0xd4] sm:$0xf]
  %v111 = vld [vmem:[%s2 + $0xd8] sm:$0xf]
  %v112 = vld [vmem:[%s2 + $0xdc] sm:$0xf]
  %v113 = vld [vmem:[%s2 + $0xe0] sm:$0xf]
  %v114 = vld [vmem:[%s2 + $0xe4] sm:$0xf]
  %v115 = vld [vmem:[%s2 + $0xe8] sm:$0xf]
  %v116 = vld [vmem:[%s2 + $0xec] sm:$0xf]
  %v117 = vld [vmem:[%s2 + $0xf0] sm:$0xf]
  %v118 = vld [vmem:[%s2 + $0xf4] sm:$0xf]
  %v119 = vld [vmem:[%s2 + $0xf8] sm:$0xf]
  %v120 = vld [vmem:[%s2 + $0xfc] sm:$0xf]
  %v121 = vld [vmem:[%s2 + $0x100] sm:$0xf]
  %v122 = vld [vmem:[%s2 + $0x104] sm:$0xf]
  %v123 = vld [vmem:[%s2 + $0x108] sm:$0xf]
  %v124 = vld [vmem:[%s2 + $0x10c] sm:$0xf]
  %v125 = vld [vmem:[%s2 + $0x110] sm:$0xf]
  %v126 = vld [vmem:[%s2 + $0x114] sm:$0xf]
  %v127 = vld [vmem:[%s2 + $0x118] sm:$0xf]
  %v128 = vld [vmem:[%s2 + $0x11c] sm:$0xf]
  %v129 = vld [vmem:[%s2 + $0x120] sm:$0xf]
  %v130 = vld [vmem:[%s2 + $0x124] sm:$0xf]
  %v131 = vld [vmem:[%s2 + $0x128] sm:$0xf]
  %v132 = vld [vmem:[%s2 + $0x12c] sm:$0xf]
  %v133 = vld [vmem:[%s2 + $0x130] sm:$0xf]
  %v134 = vld [vmem:[%s2 + $0x134] sm:$0xf]
  %v135 = vld [vmem:[%s2 + $0x138] sm:$0xf]
  %v136 = vld [vmem:[%s2 + $0x13c] sm:$0xf]
  %v137 = vld [vmem:[%s2 + $0x140] sm:$0xf]
  %v138 = vld [vmem:[%s2 + $0x144] sm:$0xf]
  %v139 = vld [vmem:[%s2 + $0x148] sm:$0xf]
  %v140 = vld [vmem:[%s2 + $0x14c] sm:$0xf]
  %v141 = vld [vmem:[%s2 + $0x150] sm:$0xf]
  %v142 = vld [vmem:[%s2 + $0x154] sm:$0xf]
  %v143 = vld [vmem:[%s2 + $0x158] sm:$0xf]
  %v144 = vld [vmem:[%s2 + $0x15c] sm:$0xf]
  %v145 = vld [vmem:[%s2 + $0x160] sm:$0xf]
  %v146 = vld [vmem:[%s2 + $0x164] sm:$0xf]
  %v147 = vld [vmem:[%s2 + $0x168] sm:$0xf]
  %v148 = vld [vmem:[%s2 + $0x16c] sm:$0xf]
  %v149 = vld [vmem:[%s2 + $0x170] sm:$0xf]
  %v150 = vld [vmem:[%s2 + $0x174] sm:$0xf]
  %v151 = vld [vmem:[%s2 + $0x178] sm:$0xf]
  %v152 = vld [vmem:[%s2 + $0x17c] sm:$0xf]
  %v153 = vld [vmem:[%s2 + $0x180] sm:$0xf]
  %v154 = vld [vmem:[%s2 + $0x184] sm:$0xf]
  %v155 = vld [vmem:[%s2 + $0x188] sm:$0xf]
  %v156 = vld [vmem:[%s2 + $0x18c] sm:$0xf]
  %v157 = vld [vmem:[%s2 + $0x190] sm:$0xf]
  %v158 = vld [vmem:[%s2 + $0x194] sm:$0xf]
  %v159 = vld [vmem:[%s2 + $0x198] sm:$0xf]
  %v160 = vld [vmem:[%s2 + $0x19c] sm:$0xf]
  %v161 = vld [vmem:[%s2 + $0x1a0] sm:$0xf]
  %v162 = vld [vmem:[%s2 + $0x1a4] sm:$0xf]
  %v163 = vld [vmem:[%s2 + $0x1a8] sm:$0xf]
  %v164 = vld [vmem:[%s2 + $0x1ac] sm:$0xf]
  %v165 = vld [vmem:[%s2 + $0x1b0] sm:$0xf]
  %v166 = vld [vmem:[%s2 + $0x1b4] sm:$0xf]
  %v167 = vld [vmem:[%s2 + $0x1b8] sm:$0xf]
  %v168 = vld [vmem:[%s2 + $0x1bc] sm:$0xf]
  %v169 = vld [vmem:[%s2 + $0x1c0] sm:$0xf]
  %v170 = vld [vmem:[%s2 + $0x1c4] sm:$0xf]
  %v171 = vld [vmem:[%s2 + $0x1c8] sm:$0xf]
  %v172 = vld [vmem:[%s2 + $0x1cc] sm:$0xf]
  %v173 = vld [vmem:[%s2 + $0x1d0] sm:$0xf]
  %v174 = vld [vmem:[%s2 + $0x1d4] sm:$0xf]
  %v175 = vld [vmem:[%s2 + $0x1d8] sm:$0xf]
  %v176 = vld [vmem:[%s2 + $0x1dc] sm:$0xf]
  %v177 = vld [vmem:[%s2 + $0x1e0] sm:$0xf]
  %v178 = vld [vmem:[%s2 + $0x1e4] sm:$0xf]
  %v179 = vld [vmem:[%s2 + $0x1e8] sm:$0xf]
  %v180 = vld [vmem:[%s2 + $0x1ec] sm:$0xf]
  %v181 = vld [vmem:[%s2 + $0x1f0] sm:$0xf]
  %v182 = vld [vmem:[%s2 + $0x1f4] sm:$0xf]
  %v183 = vld [vmem:[%s2 + $0x1f8] sm:$0xf]
  %v184 = vld [vmem:[%s2 + $0x1fc] sm:$0xf]
  %v185 = vld [vmem:[%s3] sm:$0x1]
  %v186 = vld [vmem:[%s4] sm:$0x1]
  %v187 = vld [vmem:[%s5] sm:$0xf]
  %v188 = vld [vmem:[%s5 + $0x4] sm:$0xf]
  %v189 = vld [vmem:[%s5 + $0x8] sm:$0xf]
  %v190 = vld [vmem:[%s5 + $0xc] sm:$0xf]
  %v191 = vld [vmem:[%s5 + $0x10] sm:$0xf]
  %v192 = vld [vmem:[%s5 + $0x14] sm:$0xf]
  %v193 = vld [vmem:[%s5 + $0x18] sm:$0xf]
  %v194 = vld [vmem:[%s5 + $0x1c] sm:$0xf]
  %v195 = vld [vmem:[%s5 + $0x20] sm:$0xf]
  %v196 = vld [vmem:[%s5 + $0x24] sm:$0xf]
  %v197 = vld [vmem:[%s5 + $0x28] sm:$0xf]
  %v198 = vld [vmem:[%s5 + $0x2c] sm:$0xf]
  %v199 = vld [vmem:[%s5 + $0x30] sm:$0xf]
  %v200 = vld [vmem:[%s5 + $0x34] sm:$0xf]
  %v201 = vld [vmem:[%s5 + $0x38] sm:$0xf]
  %v202 = vld [vmem:[%s5 + $0x3c] sm:$0xf]
  %v203 = vld [vmem:[%s6] sm:$0x1]
  %v204 = vld [vmem:[%s7] sm:$0x1]
  %v205 = vld [vmem:[%s8] sm:$0x1]
  %v222 = vunpack.c.l.b16 %v41
  %v223 = vunpack.c.h.b16 %v41
  %v224 = vunpack.c.l.b16 %v42
  %v225 = vunpack.c.h.b16 %v42
  %v226 = vunpack.c.l.b16 %v43
  %v227 = vunpack.c.h.b16 %v43
  %v228 = vunpack.c.l.b16 %v44
  %v229 = vunpack.c.h.b16 %v44
  %v230 = vunpack.c.l.b16 %v45
  %v231 = vunpack.c.h.b16 %v45
  %v232 = vunpack.c.l.b16 %v46
  %v233 = vunpack.c.h.b16 %v46
  %v234 = vunpack.c.l.b16 %v47
  %v235 = vunpack.c.h.b16 %v47
  %v236 = vunpack.c.l.b16 %v48
  %v237 = vunpack.c.h.b16 %v48
  %v238 = vunpack.c.l.b16 %v49
  %v239 = vunpack.c.h.b16 %v49
  %v240 = vunpack.c.l.b16 %v50
  %v241 = vunpack.c.h.b16 %v50
  %v242 = vunpack.c.l.b16 %v51
  %v243 = vunpack.c.h.b16 %v51
  %v244 = vunpack.c.l.b16 %v52
  %v245 = vunpack.c.h.b16 %v52
  %v246 = vunpack.c.l.b16 %v53
  %v247 = vunpack.c.h.b16 %v53
  %v248 = vunpack.c.l.b16 %v54
  %v249 = vunpack.c.h.b16 %v54
  %v250 = vunpack.c.l.b16 %v55
  %v251 = vunpack.c.h.b16 %v55
  %v252 = vunpack.c.l.b16 %v56
  %v253 = vunpack.c.h.b16 %v56
  %v254 = vpack.c.b16 %v230, %v222
  %v255 = vpack.c.b16 %v231, %v223
  %v256 = vpack.c.b16 %v232, %v224
  %v257 = vpack.c.b16 %v233, %v225
  %v258 = vpack.c.b16 %v234, %v226
  %v259 = vpack.c.b16 %v235, %v227
  %v260 = vpack.c.b16 %v236, %v228
  %v261 = vpack.c.b16 %v237, %v229
  %v262 = vpack.c.b16 %v246, %v238
  %v263 = vpack.c.b16 %v247, %v239
  %v264 = vpack.c.b16 %v248, %v240
  %v265 = vpack.c.b16 %v249, %v241
  %v266 = vpack.c.b16 %v250, %v242
  %v267 = vpack.c.b16 %v251, %v243
  %v268 = vpack.c.b16 %v252, %v244
  %v269 = vpack.c.b16 %v253, %v245
  %v414 = vunpack.c.l.b16 %v57
  %v415 = vunpack.c.l.b16 %v58
  %v416 = vunpack.c.l.b16 %v59
  %v417 = vunpack.c.l.b16 %v60
  %v418 = vunpack.c.l.b16 %v61
  %v419 = vunpack.c.l.b16 %v62
  %v420 = vunpack.c.l.b16 %v63
  %v421 = vunpack.c.l.b16 %v64
  %v422 = vunpack.c.l.b16 %v65
  %v423 = vunpack.c.l.b16 %v66
  %v424 = vunpack.c.l.b16 %v67
  %v425 = vunpack.c.l.b16 %v68
  %v426 = vunpack.c.l.b16 %v69
  %v427 = vunpack.c.l.b16 %v70
  %v428 = vunpack.c.l.b16 %v71
  %v429 = vunpack.c.l.b16 %v72
  %v430 = vunpack.c.l.b16 %v73
  %v431 = vunpack.c.l.b16 %v74
  %v432 = vunpack.c.l.b16 %v75
  %v433 = vunpack.c.l.b16 %v76
  %v434 = vunpack.c.l.b16 %v77
  %v435 = vunpack.c.l.b16 %v78
  %v436 = vunpack.c.l.b16 %v79
  %v437 = vunpack.c.l.b16 %v80
  %v438 = vunpack.c.l.b16 %v81
  %v439 = vunpack.c.l.b16 %v82
  %v440 = vunpack.c.l.b16 %v83
  %v441 = vunpack.c.l.b16 %v84
  %v442 = vunpack.c.l.b16 %v85
  %v443 = vunpack.c.l.b16 %v86
  %v444 = vunpack.c.l.b16 %v87
  %v445 = vunpack.c.l.b16 %v88
  %v446 = vunpack.c.l.b16 %v89
  %v447 = vunpack.c.l.b16 %v90
  %v448 = vunpack.c.l.b16 %v91
  %v449 = vunpack.c.l.b16 %v92
  %v450 = vunpack.c.l.b16 %v93
  %v451 = vunpack.c.l.b16 %v94
  %v452 = vunpack.c.l.b16 %v95
  %v453 = vunpack.c.l.b16 %v96
  %v454 = vunpack.c.l.b16 %v97
  %v455 = vunpack.c.l.b16 %v98
  %v456 = vunpack.c.l.b16 %v99
  %v457 = vunpack.c.l.b16 %v100
  %v458 = vunpack.c.l.b16 %v101
  %v459 = vunpack.c.l.b16 %v102
  %v460 = vunpack.c.l.b16 %v103
  %v461 = vunpack.c.l.b16 %v104
  %v462 = vunpack.c.l.b16 %v105
  %v463 = vunpack.c.l.b16 %v106
  %v464 = vunpack.c.l.b16 %v107
  %v465 = vunpack.c.l.b16 %v108
  %v466 = vunpack.c.l.b16 %v109
  %v467 = vunpack.c.l.b16 %v110
  %v468 = vunpack.c.l.b16 %v111
  %v469 = vunpack.c.l.b16 %v112
  %v470 = vunpack.c.l.b16 %v113
  %v471 = vunpack.c.l.b16 %v114
  %v472 = vunpack.c.l.b16 %v115
  %v473 = vunpack.c.l.b16 %v116
  %v474 = vunpack.c.l.b16 %v117
  %v475 = vunpack.c.l.b16 %v118
  %v476 = vunpack.c.l.b16 %v119
  %v477 = vunpack.c.l.b16 %v120
  %v478 = vunpack.c.l.b16 %v121
  %v479 = vunpack.c.l.b16 %v122
  %v480 = vunpack.c.l.b16 %v123
  %v481 = vunpack.c.l.b16 %v124
  %v482 = vunpack.c.l.b16 %v125
  %v483 = vunpack.c.l.b16 %v126
  %v484 = vunpack.c.l.b16 %v127
  %v485 = vunpack.c.l.b16 %v128
  %v486 = vunpack.c.l.b16 %v129
  %v487 = vunpack.c.l.b16 %v130
  %v488 = vunpack.c.l.b16 %v131
  %v489 = vunpack.c.l.b16 %v132
  %v490 = vunpack.c.l.b16 %v133
  %v491 = vunpack.c.l.b16 %v134
  %v492 = vunpack.c.l.b16 %v135
  %v493 = vunpack.c.l.b16 %v136
  %v494 = vunpack.c.l.b16 %v137
  %v495 = vunpack.c.l.b16 %v138
  %v496 = vunpack.c.l.b16 %v139
  %v497 = vunpack.c.l.b16 %v140
  %v498 = vunpack.c.l.b16 %v141
  %v499 = vunpack.c.l.b16 %v142
  %v500 = vunpack.c.l.b16 %v143
  %v501 = vunpack.c.l.b16 %v144
  %v502 = vunpack.c.l.b16 %v145
  %v503 = vunpack.c.l.b16 %v146
  %v504 = vunpack.c.l.b16 %v147
  %v505 = vunpack.c.l.b16 %v148
  %v506 = vunpack.c.l.b16 %v149
  %v507 = vunpack.c.l.b16 %v150
  %v508 = vunpack.c.l.b16 %v151
  %v509 = vunpack.c.l.b16 %v152
  %v510 = vunpack.c.l.b16 %v153
  %v511 = vunpack.c.l.b16 %v154
  %v512 = vunpack.c.l.b16 %v155
  %v513 = vunpack.c.l.b16 %v156
  %v514 = vunpack.c.l.b16 %v157
  %v515 = vunpack.c.l.b16 %v158
  %v516 = vunpack.c.l.b16 %v159
  %v517 = vunpack.c.l.b16 %v160
  %v518 = vunpack.c.l.b16 %v161
  %v519 = vunpack.c.l.b16 %v162
  %v520 = vunpack.c.l.b16 %v163
  %v521 = vunpack.c.l.b16 %v164
  %v522 = vunpack.c.l.b16 %v165
  %v523 = vunpack.c.l.b16 %v166
  %v524 = vunpack.c.l.b16 %v167
  %v525 = vunpack.c.l.b16 %v168
  %v526 = vunpack.c.l.b16 %v169
  %v527 = vunpack.c.l.b16 %v170
  %v528 = vunpack.c.l.b16 %v171
  %v529 = vunpack.c.l.b16 %v172
  %v530 = vunpack.c.l.b16 %v173
  %v531 = vunpack.c.l.b16 %v174
  %v532 = vunpack.c.l.b16 %v175
  %v533 = vunpack.c.l.b16 %v176
  %v534 = vunpack.c.l.b16 %v177
  %v535 = vunpack.c.l.b16 %v178
  %v536 = vunpack.c.l.b16 %v179
  %v537 = vunpack.c.l.b16 %v180
  %v538 = vunpack.c.l.b16 %v181
  %v539 = vunpack.c.l.b16 %v182
  %v540 = vunpack.c.l.b16 %v183
  %v541 = vunpack.c.l.b16 %v184
  %v542 = vpack.c.b16 %v415, %v414
  %v543 = vpack.c.b16 %v417, %v416
  %v544 = vpack.c.b16 %v419, %v418
  %v545 = vpack.c.b16 %v421, %v420
  %v546 = vpack.c.b16 %v423, %v422
  %v547 = vpack.c.b16 %v425, %v424
  %v548 = vpack.c.b16 %v427, %v426
  %v549 = vpack.c.b16 %v429, %v428
  %v550 = vpack.c.b16 %v431, %v430
  %v551 = vpack.c.b16 %v433, %v432
  %v552 = vpack.c.b16 %v435, %v434
  %v553 = vpack.c.b16 %v437, %v436
  %v554 = vpack.c.b16 %v439, %v438
  %v555 = vpack.c.b16 %v441, %v440
  %v556 = vpack.c.b16 %v443, %v442
  %v557 = vpack.c.b16 %v445, %v444
  %v558 = vpack.c.b16 %v447, %v446
  %v559 = vpack.c.b16 %v449, %v448
  %v560 = vpack.c.b16 %v451, %v450
  %v561 = vpack.c.b16 %v453, %v452
  %v562 = vpack.c.b16 %v455, %v454
  %v563 = vpack.c.b16 %v457, %v456
  %v564 = vpack.c.b16 %v459, %v458
  %v565 = vpack.c.b16 %v461, %v460
  %v566 = vpack.c.b16 %v463, %v462
  %v567 = vpack.c.b16 %v465, %v464
  %v568 = vpack.c.b16 %v467, %v466
  %v569 = vpack.c.b16 %v469, %v468
  %v570 = vpack.c.b16 %v471, %v470
  %v571 = vpack.c.b16 %v473, %v472
  %v572 = vpack.c.b16 %v475, %v474
  %v573 = vpack.c.b16 %v477, %v476
  %v574 = vpack.c.b16 %v479, %v478
  %v575 = vpack.c.b16 %v481, %v480
  %v576 = vpack.c.b16 %v483, %v482
  %v577 = vpack.c.b16 %v485, %v484
  %v578 = vpack.c.b16 %v487, %v486
  %v579 = vpack.c.b16 %v489, %v488
  %v580 = vpack.c.b16 %v491, %v490
  %v581 = vpack.c.b16 %v493, %v492
  %v582 = vpack.c.b16 %v495, %v494
  %v583 = vpack.c.b16 %v497, %v496
  %v584 = vpack.c.b16 %v499, %v498
  %v585 = vpack.c.b16 %v501, %v500
  %v586 = vpack.c.b16 %v503, %v502
  %v587 = vpack.c.b16 %v505, %v504
  %v588 = vpack.c.b16 %v507, %v506
  %v589 = vpack.c.b16 %v509, %v508
  %v590 = vpack.c.b16 %v511, %v510
  %v591 = vpack.c.b16 %v513, %v512
  %v592 = vpack.c.b16 %v515, %v514
  %v593 = vpack.c.b16 %v517, %v516
  %v594 = vpack.c.b16 %v519, %v518
  %v595 = vpack.c.b16 %v521, %v520
  %v596 = vpack.c.b16 %v523, %v522
  %v597 = vpack.c.b16 %v525, %v524
  %v598 = vpack.c.b16 %v527, %v526
  %v599 = vpack.c.b16 %v529, %v528
  %v600 = vpack.c.b16 %v531, %v530
  %v601 = vpack.c.b16 %v533, %v532
  %v602 = vpack.c.b16 %v535, %v534
  %v603 = vpack.c.b16 %v537, %v536
  %v604 = vpack.c.b16 %v539, %v538
  %v605 = vpack.c.b16 %v541, %v540
  %670 = vmatpush.bf16.msra.mxu0 %v549
  %671 = vmatpush.bf16.msra.mxu0 %v548
  %672 = vmatpush.bf16.msra.mxu0 %v547
  %673 = vmatpush.bf16.msra.mxu0 %v546
  %674 = vmatpush.bf16.msra.mxu0 %v545
  %675 = vmatpush.bf16.msra.mxu0 %v544
  %676 = vmatpush.bf16.msra.mxu0 %v543
  %677 = vmatpush.bf16.msra.mxu0 %v542
  %678 = vmatmul.bf16.gmra.mxu0 %v254
  %v679 = vpop.f32.mrf.mxu0
  %v680 = vadd.f32 0.0, %v679
  %v681 = vpop.f32.mrf.mxu0
  %v682 = vadd.f32 0.0, %v681
  %683 = vmatmul.bf16.gmra.mxu0 %v262
  %v684 = vpop.f32.mrf.mxu0
  %v685 = vadd.f32 0.0, %v684
  %v686 = vpop.f32.mrf.mxu0
  %v687 = vadd.f32 0.0, %v686
  %688 = vdwg.mxu0
  %689 = vmatpush.bf16.msra.mxu0 %v557
  %690 = vmatpush.bf16.msra.mxu0 %v556
  %691 = vmatpush.bf16.msra.mxu0 %v555
  %692 = vmatpush.bf16.msra.mxu0 %v554
  %693 = vmatpush.bf16.msra.mxu0 %v553
  %694 = vmatpush.bf16.msra.mxu0 %v552
  %695 = vmatpush.bf16.msra.mxu0 %v551
  %696 = vmatpush.bf16.msra.mxu0 %v550
  %697 = vmatmul.bf16.gmra.mxu0 %v255
  %v698 = vpop.f32.mrf.mxu0
  %v699 = vadd.f32 %v680, %v698
  %v700 = vpop.f32.mrf.mxu0
  %v701 = vadd.f32 %v682, %v700
  %702 = vmatmul.bf16.gmra.mxu0 %v263
  %v703 = vpop.f32.mrf.mxu0
  %v704 = vadd.f32 %v685, %v703
  %v705 = vpop.f32.mrf.mxu0
  %v706 = vadd.f32 %v687, %v705
  %707 = vdwg.mxu0
  %708 = vmatpush.bf16.msra.mxu0 %v565
  %709 = vmatpush.bf16.msra.mxu0 %v564
  %710 = vmatpush.bf16.msra.mxu0 %v563
  %711 = vmatpush.bf16.msra.mxu0 %v562
  %712 = vmatpush.bf16.msra.mxu0 %v561
  %713 = vmatpush.bf16.msra.mxu0 %v560
  %714 = vmatpush.bf16.msra.mxu0 %v559
  %715 = vmatpush.bf16.msra.mxu0 %v558
  %716 = vmatmul.bf16.gmra.mxu0 %v256
  %v717 = vpop.f32.mrf.mxu0
  %v718 = vadd.f32 %v699, %v717
  %v719 = vpop.f32.mrf.mxu0
  %v720 = vadd.f32 %v701, %v719
  %721 = vmatmul.bf16.gmra.mxu0 %v264
  %v722 = vpop.f32.mrf.mxu0
  %v723 = vadd.f32 %v704, %v722
  %v724 = vpop.f32.mrf.mxu0
  %v725 = vadd.f32 %v706, %v724
  %726 = vdwg.mxu0
  %727 = vmatpush.bf16.msra.mxu0 %v573
  %728 = vmatpush.bf16.msra.mxu0 %v572
  %729 = vmatpush.bf16.msra.mxu0 %v571
  %730 = vmatpush.bf16.msra.mxu0 %v570
  %731 = vmatpush.bf16.msra.mxu0 %v569
  %732 = vmatpush.bf16.msra.mxu0 %v568
  %733 = vmatpush.bf16.msra.mxu0 %v567
  %734 = vmatpush.bf16.msra.mxu0 %v566
  %735 = vmatmul.bf16.gmra.mxu0 %v257
  %v736 = vpop.f32.mrf.mxu0
  %v737 = vadd.f32 %v718, %v736
  %v738 = vpop.f32.mrf.mxu0
  %v739 = vadd.f32 %v720, %v738
  %740 = vmatmul.bf16.gmra.mxu0 %v265
  %v741 = vpop.f32.mrf.mxu0
  %v742 = vadd.f32 %v723, %v741
  %v743 = vpop.f32.mrf.mxu0
  %v744 = vadd.f32 %v725, %v743
  %745 = vdwg.mxu0
  %746 = vmatpush.bf16.msra.mxu0 %v581
  %747 = vmatpush.bf16.msra.mxu0 %v580
  %748 = vmatpush.bf16.msra.mxu0 %v579
  %749 = vmatpush.bf16.msra.mxu0 %v578
  %750 = vmatpush.bf16.msra.mxu0 %v577
  %751 = vmatpush.bf16.msra.mxu0 %v576
  %752 = vmatpush.bf16.msra.mxu0 %v575
  %753 = vmatpush.bf16.msra.mxu0 %v574
  %754 = vmatmul.bf16.gmra.mxu0 %v258
  %v755 = vpop.f32.mrf.mxu0
  %v756 = vadd.f32 %v737, %v755
  %v757 = vpop.f32.mrf.mxu0
  %v758 = vadd.f32 %v739, %v757
  %759 = vmatmul.bf16.gmra.mxu0 %v266
  %v760 = vpop.f32.mrf.mxu0
  %v761 = vadd.f32 %v742, %v760
  %v762 = vpop.f32.mrf.mxu0
  %v763 = vadd.f32 %v744, %v762
  %764 = vdwg.mxu0
  %765 = vmatpush.bf16.msra.mxu0 %v589
  %766 = vmatpush.bf16.msra.mxu0 %v588
  %767 = vmatpush.bf16.msra.mxu0 %v587
  %768 = vmatpush.bf16.msra.mxu0 %v586
  %769 = vmatpush.bf16.msra.mxu0 %v585
  %770 = vmatpush.bf16.msra.mxu0 %v584
  %771 = vmatpush.bf16.msra.mxu0 %v583
  %772 = vmatpush.bf16.msra.mxu0 %v582
  %773 = vmatmul.bf16.gmra.mxu0 %v259
  %v774 = vpop.f32.mrf.mxu0
  %v775 = vadd.f32 %v756, %v774
  %v776 = vpop.f32.mrf.mxu0
  %v777 = vadd.f32 %v758, %v776
  %778 = vmatmul.bf16.gmra.mxu0 %v267
  %v779 = vpop.f32.mrf.mxu0
  %v780 = vadd.f32 %v761, %v779
  %v781 = vpop.f32.mrf.mxu0
  %v782 = vadd.f32 %v763, %v781
  %783 = vdwg.mxu0
  %784 = vmatpush.bf16.msra.mxu0 %v597
  %785 = vmatpush.bf16.msra.mxu0 %v596
  %786 = vmatpush.bf16.msra.mxu0 %v595
  %787 = vmatpush.bf16.msra.mxu0 %v594
  %788 = vmatpush.bf16.msra.mxu0 %v593
  %789 = vmatpush.bf16.msra.mxu0 %v592
  %790 = vmatpush.bf16.msra.mxu0 %v591
  %791 = vmatpush.bf16.msra.mxu0 %v590
  %792 = vmatmul.bf16.gmra.mxu0 %v260
  %v793 = vpop.f32.mrf.mxu0
  %v794 = vadd.f32 %v775, %v793
  %v795 = vpop.f32.mrf.mxu0
  %v796 = vadd.f32 %v777, %v795
  %797 = vmatmul.bf16.gmra.mxu0 %v268
  %v798 = vpop.f32.mrf.mxu0
  %v799 = vadd.f32 %v780, %v798
  %v800 = vpop.f32.mrf.mxu0
  %v801 = vadd.f32 %v782, %v800
  %802 = vdwg.mxu0
  %803 = vmatpush.bf16.msra.mxu0 %v605
  %804 = vmatpush.bf16.msra.mxu0 %v604
  %805 = vmatpush.bf16.msra.mxu0 %v603
  %806 = vmatpush.bf16.msra.mxu0 %v602
  %807 = vmatpush.bf16.msra.mxu0 %v601
  %808 = vmatpush.bf16.msra.mxu0 %v600
  %809 = vmatpush.bf16.msra.mxu0 %v599
  %810 = vmatpush.bf16.msra.mxu0 %v598
  %811 = vmatmul.bf16.gmra.mxu0 %v261
  %v812 = vpop.f32.mrf.mxu0
  %v813 = vadd.f32 %v794, %v812
  %v814 = vpop.f32.mrf.mxu0
  %v815 = vadd.f32 %v796, %v814
  %816 = vmatmul.bf16.gmra.mxu0 %v269
  %v817 = vpop.f32.mrf.mxu0
  %v818 = vadd.f32 %v799, %v817
  %v819 = vpop.f32.mrf.mxu0
  %v820 = vadd.f32 %v801, %v819
  %821 = vdwg.mxu0
  %v822 = vadd.f32 %v37, %v813
  %v823 = vadd.f32 %v38, %v815
  %v824 = vadd.f32 %v39, %v818
  %v825 = vadd.f32 %v40, %v820
  %826 = vadd.xlane.f32.xlu0 %v822
  %v827 = vpop.xlane.xlu0 %826
  %828 = vadd.xlane.f32.xlu0 %v823
  %v829 = vpop.xlane.xlu0 %828
  %830 = vadd.xlane.f32.xlu0 %v824
  %v831 = vpop.xlane.xlu0 %830
  %832 = vadd.xlane.f32.xlu0 %v825
  %v833 = vpop.xlane.xlu0 %832
  %v834 = vrcp.pop 128.0
  %v835 = vmul.f32 128.0, %v834
  %v836 = vsub.f32 1.0, %v835
  %v837 = vmul.f32 %v834, %v836
  %v838 = vadd.f32 %v834, %v837
  %vm839 = vweird.f32 %v834
  %v840 = vsel %vm839, %v834, %v838
  %v841 = vmul.f32 %v827, %v840
  %v842 = vmul.f32 %v829, %v840
  %v843 = vmul.f32 %v831, %v840
  %v844 = vmul.f32 %v833, %v840
  %v845 = vsub.f32 %v822, %v841
  %v846 = vsub.f32 %v823, %v842
  %v847 = vsub.f32 %v824, %v843
  %v848 = vsub.f32 %v825, %v844
  %v849 = vmul.f32 %v845, %v845
  %v850 = vmul.f32 %v846, %v846
  %v851 = vmul.f32 %v847, %v847
  %v852 = vmul.f32 %v848, %v848
  %853 = vadd.xlane.f32.xlu0 %v849
  %v854 = vpop.xlane.xlu0 %853
  %855 = vadd.xlane.f32.xlu0 %v850
  %v856 = vpop.xlane.xlu0 %855
  %857 = vadd.xlane.f32.xlu0 %v851
  %v858 = vpop.xlane.xlu0 %857
  %859 = vadd.xlane.f32.xlu0 %v852
  %v860 = vpop.xlane.xlu0 %859
  %v861 = vmul.f32 %v854, %v840
  %v862 = vmul.f32 %v856, %v840
  %v863 = vmul.f32 %v858, %v840
  %v864 = vmul.f32 %v860, %v840
  %v865 = vadd.f32 %v861, 1e-05
  %v866 = vadd.f32 %v862, 1e-05
  %v867 = vadd.f32 %v863, 1e-05
  %v868 = vadd.f32 %v864, 1e-05
  %v869 = vrsqrt.pop %v865
  %v870 = vmul.f32 %v869, %v865
  %v871 = vmul.f32 %v870, %v869
  %v872 = vmul.f32 0.5, %v871
  %v873 = vsub.f32 1.5, %v872
  %v874 = vmul.f32 %v869, %v873
  %vm875 = vweird.f32 %v865
  %vm876 = vweird.f32 %v869
  %vm877 = vmor %vm875, %vm876
  %v878 = vsel %vm877, %v869, %v874
  %v879 = vrsqrt.pop %v866
  %v880 = vmul.f32 %v879, %v866
  %v881 = vmul.f32 %v880, %v879
  %v882 = vmul.f32 0.5, %v881
  %v883 = vsub.f32 1.5, %v882
  %v884 = vmul.f32 %v879, %v883
  %vm885 = vweird.f32 %v866
  %vm886 = vweird.f32 %v879
  %vm887 = vmor %vm885, %vm886
  %v888 = vsel %vm887, %v879, %v884
  %v889 = vrsqrt.pop %v867
  %v890 = vmul.f32 %v889, %v867
  %v891 = vmul.f32 %v890, %v889
  %v892 = vmul.f32 0.5, %v891
  %v893 = vsub.f32 1.5, %v892
  %v894 = vmul.f32 %v889, %v893
  %vm895 = vweird.f32 %v867
  %vm896 = vweird.f32 %v889
  %vm897 = vmor %vm895, %vm896
  %v898 = vsel %vm897, %v889, %v894
  %v899 = vrsqrt.pop %v868
  %v900 = vmul.f32 %v899, %v868
  %v901 = vmul.f32 %v900, %v899
  %v902 = vmul.f32 0.5, %v901
  %v903 = vsub.f32 1.5, %v902
  %v904 = vmul.f32 %v899, %v903
  %vm905 = vweird.f32 %v868
  %vm906 = vweird.f32 %v899
  %vm907 = vmor %vm905, %vm906
  %v908 = vsel %vm907, %v899, %v904
  %v909 = vmul.f32 %v845, %v878
  %v910 = vmul.f32 %v846, %v888
  %v911 = vmul.f32 %v847, %v898
  %v912 = vmul.f32 %v848, %v908
  %v914 = vperm.slane %v185, 0
  %v916 = vmul.f32 %v909, %v914
  %v917 = vmul.f32 %v910, %v914
  %v918 = vmul.f32 %v911, %v914
  %v919 = vmul.f32 %v912, %v914
  %v921 = vperm.slane %v186, 0
  %v923 = vadd.f32 %v916, %v921
  %v924 = vadd.f32 %v917, %v921
  %v925 = vadd.f32 %v918, %v921
  %v926 = vadd.f32 %v919, %v921
  %v927 = vpack.c.bf16 %v924, %v923
  %v928 = vpack.c.bf16 %v926, %v925
  %v930 = vperm.slane %v203, 0
  %v948 = vunpack.c.l.b16 %v187
  %v949 = vunpack.c.l.b16 %v188
  %v950 = vunpack.c.l.b16 %v189
  %v951 = vunpack.c.l.b16 %v190
  %v952 = vunpack.c.l.b16 %v191
  %v953 = vunpack.c.l.b16 %v192
  %v954 = vunpack.c.l.b16 %v193
  %v955 = vunpack.c.l.b16 %v194
  %v956 = vunpack.c.l.b16 %v195
  %v957 = vunpack.c.l.b16 %v196
  %v958 = vunpack.c.l.b16 %v197
  %v959 = vunpack.c.l.b16 %v198
  %v960 = vunpack.c.l.b16 %v199
  %v961 = vunpack.c.l.b16 %v200
  %v962 = vunpack.c.l.b16 %v201
  %v963 = vunpack.c.l.b16 %v202
  %v964 = vpack.c.b16 %v949, %v948
  %v965 = vpack.c.b16 %v951, %v950
  %v966 = vpack.c.b16 %v953, %v952
  %v967 = vpack.c.b16 %v955, %v954
  %v968 = vpack.c.b16 %v957, %v956
  %v969 = vpack.c.b16 %v959, %v958
  %v970 = vpack.c.b16 %v961, %v960
  %v971 = vpack.c.b16 %v963, %v962
  %980 = vmatpush.bf16.msra.mxu0 %v971
  %981 = vmatpush.bf16.msra.mxu0 %v970
  %982 = vmatpush.bf16.msra.mxu0 %v969
  %983 = vmatpush.bf16.msra.mxu0 %v968
  %984 = vmatpush.bf16.msra.mxu0 %v967
  %985 = vmatpush.bf16.msra.mxu0 %v966
  %986 = vmatpush.bf16.msra.mxu0 %v965
  %987 = vmatpush.bf16.msra.mxu0 %v964
  %988 = vmatmul.bf16.gmra.mxu0 %v927
  %v989 = vpop.f32.mrf.mxu0
  %v990 = vadd.f32 %v930, %v989
  %v991 = vpop.f32.mrf.mxu0
  %v992 = vadd.f32 %v930, %v991
  %993 = vmatmul.bf16.gmra.mxu0 %v928
  %v994 = vpop.f32.mrf.mxu0
  %v995 = vadd.f32 %v930, %v994
  %v996 = vpop.f32.mrf.mxu0
  %v997 = vadd.f32 %v930, %v996
  %998 = vdwg.mxu0
  %v999 = vmul.f32 %v923, 0.5
  %v1000 = vmul.f32 %v924, 0.5
  %v1001 = vmul.f32 %v925, 0.5
  %v1002 = vmul.f32 %v926, 0.5
  %v1003 = vmul.f32 %v923, 0.70710677
  %v1004 = vmul.f32 %v924, 0.70710677
  %v1005 = vmul.f32 %v925, 0.70710677
  %v1006 = vmul.f32 %v926, 0.70710677
  %v1007 = vmul.f32 %v1003, %v1003
  %v1008 = vmin.f32 16.0, %v1007
  %v1009 = vmul.f32 %v1008, 2.1237322e-06
  %v1010 = vadd.f32 %v1009, 0.00028619796
  %v1011 = vmul.f32 %v1008, %v1010
  %v1012 = vadd.f32 %v1011, 0.0036580483
  %v1013 = vmul.f32 %v1008, %v1012
  %v1014 = vadd.f32 %v1013, 0.05243302
  %v1015 = vmul.f32 %v1008, %v1014
  %v1016 = vadd.f32 %v1015, 0.18741608
  %v1017 = vmul.f32 %v1008, %v1016
  %v1018 = vadd.f32 %v1017, 1.1283791
  %v1019 = vmul.f32 %v1003, %v1018
  %v1020 = vmul.f32 %v1008, 3.8918573e-05
  %v1021 = vadd.f32 %v1020, 0.001143296
  %v1022 = vmul.f32 %v1008, %v1021
  %v1023 = vadd.f32 %v1022, 0.014752088
  %v1024 = vmul.f32 %v1008, %v1023
  %v1025 = vadd.f32 %v1024, 0.112945676
  %v1026 = vmul.f32 %v1008, %v1025
  %v1027 = vadd.f32 %v1026, 0.4994258
  %v1028 = vmul.f32 %v1008, %v1027
  %v1029 = vadd.f32 %v1028, 1.0
  %v1030 = vrcp.pop %v1029
  %v1031 = vmul.f32 %v1029, %v1030
  %v1032 = vsub.f32 1.0, %v1031
  %v1033 = vmul.f32 %v1030, %v1032
  %v1034 = vadd.f32 %v1030, %v1033
  %vm1035 = vweird.f32 %v1029
  %vm1036 = vweird.f32 %v1030
  %vm1037 = vmor %vm1035, %vm1036
  %v1038 = vsel %vm1037, %v1030, %v1034
  %v1039 = vand.u32 2147483647, %v1029
  %vm1040 = vcmp.eq.f32.partialorder %v1039, 8.507059e+37
  %v1041 = vand.u32 %v1029, 2147483648
  %v1042 = vor.u32 1.1754944e-38, %v1041
  %v1043 = vsel %vm1040, %v1042, %v1038
  %v1044 = vmul.f32 %v1019, %v1043
  %v1045 = vmin.f32 %v1044, 1.0
  %v1046 = vmax.f32 %v1045, -1.0
  %v1047 = vmul.f32 %v1004, %v1004
  %v1048 = vmin.f32 16.0, %v1047
  %v1049 = vmul.f32 %v1048, 2.1237322e-06
  %v1050 = vadd.f32 %v1049, 0.00028619796
  %v1051 = vmul.f32 %v1048, %v1050
  %v1052 = vadd.f32 %v1051, 0.0036580483
  %v1053 = vmul.f32 %v1048, %v1052
  %v1054 = vadd.f32 %v1053, 0.05243302
  %v1055 = vmul.f32 %v1048, %v1054
  %v1056 = vadd.f32 %v1055, 0.18741608
  %v1057 = vmul.f32 %v1048, %v1056
  %v1058 = vadd.f32 %v1057, 1.1283791
  %v1059 = vmul.f32 %v1004, %v1058
  %v1060 = vmul.f32 %v1048, 3.8918573e-05
  %v1061 = vadd.f32 %v1060, 0.001143296
  %v1062 = vmul.f32 %v1048, %v1061
  %v1063 = vadd.f32 %v1062, 0.014752088
  %v1064 = vmul.f32 %v1048, %v1063
  %v1065 = vadd.f32 %v1064, 0.112945676
  %v1066 = vmul.f32 %v1048, %v1065
  %v1067 = vadd.f32 %v1066, 0.4994258
  %v1068 = vmul.f32 %v1048, %v1067
  %v1069 = vadd.f32 %v1068, 1.0
  %v1070 = vrcp.pop %v1069
  %v1071 = vmul.f32 %v1069, %v1070
  %v1072 = vsub.f32 1.0, %v1071
  %v1073 = vmul.f32 %v1070, %v1072
  %v1074 = vadd.f32 %v1070, %v1073
  %vm1075 = vweird.f32 %v1069
  %vm1076 = vweird.f32 %v1070
  %vm1077 = vmor %vm1075, %vm1076
  %v1078 = vsel %vm1077, %v1070, %v1074
  %v1079 = vand.u32 2147483647, %v1069
  %vm1080 = vcmp.eq.f32.partialorder %v1079, 8.507059e+37
  %v1081 = vand.u32 %v1069, 2147483648
  %v1082 = vor.u32 1.1754944e-38, %v1081
  %v1083 = vsel %vm1080, %v1082, %v1078
  %v1084 = vmul.f32 %v1059, %v1083
  %v1085 = vmin.f32 %v1084, 1.0
  %v1086 = vmax.f32 %v1085, -1.0
  %v1087 = vmul.f32 %v1005, %v1005
  %v1088 = vmin.f32 16.0, %v1087
  %v1089 = vmul.f32 %v1088, 2.1237322e-06
  %v1090 = vadd.f32 %v1089, 0.00028619796
  %v1091 = vmul.f32 %v1088, %v1090
  %v1092 = vadd.f32 %v1091, 0.0036580483
  %v1093 = vmul.f32 %v1088, %v1092
  %v1094 = vadd.f32 %v1093, 0.05243302
  %v1095 = vmul.f32 %v1088, %v1094
  %v1096 = vadd.f32 %v1095, 0.18741608
  %v1097 = vmul.f32 %v1088, %v1096
  %v1098 = vadd.f32 %v1097, 1.1283791
  %v1099 = vmul.f32 %v1005, %v1098
  %v1100 = vmul.f32 %v1088, 3.8918573e-05
  %v1101 = vadd.f32 %v1100, 0.001143296
  %v1102 = vmul.f32 %v1088, %v1101
  %v1103 = vadd.f32 %v1102, 0.014752088
  %v1104 = vmul.f32 %v1088, %v1103
  %v1105 = vadd.f32 %v1104, 0.112945676
  %v1106 = vmul.f32 %v1088, %v1105
  %v1107 = vadd.f32 %v1106, 0.4994258
  %v1108 = vmul.f32 %v1088, %v1107
  %v1109 = vadd.f32 %v1108, 1.0
  %v1110 = vrcp.pop %v1109
  %v1111 = vmul.f32 %v1109, %v1110
  %v1112 = vsub.f32 1.0, %v1111
  %v1113 = vmul.f32 %v1110, %v1112
  %v1114 = vadd.f32 %v1110, %v1113
  %vm1115 = vweird.f32 %v1109
  %vm1116 = vweird.f32 %v1110
  %vm1117 = vmor %vm1115, %vm1116
  %v1118 = vsel %vm1117, %v1110, %v1114
  %v1119 = vand.u32 2147483647, %v1109
  %vm1120 = vcmp.eq.f32.partialorder %v1119, 8.507059e+37
  %v1121 = vand.u32 %v1109, 2147483648
  %v1122 = vor.u32 1.1754944e-38, %v1121
  %v1123 = vsel %vm1120, %v1122, %v1118
  %v1124 = vmul.f32 %v1099, %v1123
  %v1125 = vmin.f32 %v1124, 1.0
  %v1126 = vmax.f32 %v1125, -1.0
  %v1127 = vmul.f32 %v1006, %v1006
  %v1128 = vmin.f32 16.0, %v1127
  %v1129 = vmul.f32 %v1128, 2.1237322e-06
  %v1130 = vadd.f32 %v1129, 0.00028619796
  %v1131 = vmul.f32 %v1128, %v1130
  %v1132 = vadd.f32 %v1131, 0.0036580483
  %v1133 = vmul.f32 %v1128, %v1132
  %v1134 = vadd.f32 %v1133, 0.05243302
  %v1135 = vmul.f32 %v1128, %v1134
  %v1136 = vadd.f32 %v1135, 0.18741608
  %v1137 = vmul.f32 %v1128, %v1136
  %v1138 = vadd.f32 %v1137, 1.1283791
  %v1139 = vmul.f32 %v1006, %v1138
  %v1140 = vmul.f32 %v1128, 3.8918573e-05
  %v1141 = vadd.f32 %v1140, 0.001143296
  %v1142 = vmul.f32 %v1128, %v1141
  %v1143 = vadd.f32 %v1142, 0.014752088
  %v1144 = vmul.f32 %v1128, %v1143
  %v1145 = vadd.f32 %v1144, 0.112945676
  %v1146 = vmul.f32 %v1128, %v1145
  %v1147 = vadd.f32 %v1146, 0.4994258
  %v1148 = vmul.f32 %v1128, %v1147
  %v1149 = vadd.f32 %v1148, 1.0
  %v1150 = vrcp.pop %v1149
  %v1151 = vmul.f32 %v1149, %v1150
  %v1152 = vsub.f32 1.0, %v1151
  %v1153 = vmul.f32 %v1150, %v1152
  %v1154 = vadd.f32 %v1150, %v1153
  %vm1155 = vweird.f32 %v1149
  %vm1156 = vweird.f32 %v1150
  %vm1157 = vmor %vm1155, %vm1156
  %v1158 = vsel %vm1157, %v1150, %v1154
  %v1159 = vand.u32 2147483647, %v1149
  %vm1160 = vcmp.eq.f32.partialorder %v1159, 8.507059e+37
  %v1161 = vand.u32 %v1149, 2147483648
  %v1162 = vor.u32 1.1754944e-38, %v1161
  %v1163 = vsel %vm1160, %v1162, %v1158
  %v1164 = vmul.f32 %v1139, %v1163
  %v1165 = vmin.f32 %v1164, 1.0
  %v1166 = vmax.f32 %v1165, -1.0
  %v1167 = vadd.f32 %v1046, 1.0
  %v1168 = vadd.f32 %v1086, 1.0
  %v1169 = vadd.f32 %v1126, 1.0
  %v1170 = vadd.f32 %v1166, 1.0
  %v1171 = vmul.f32 %v999, %v1167
  %v1172 = vmul.f32 %v1000, %v1168
  %v1173 = vmul.f32 %v1001, %v1169
  %v1174 = vmul.f32 %v1002, %v1170
  %v1175 = vadd.f32 %v1171, %v990
  %v1176 = vadd.f32 %v1172, %v992
  %v1177 = vadd.f32 %v1173, %v995
  %v1178 = vadd.f32 %v1174, %v997
  %1179 = vadd.xlane.f32.xlu0 %v1175
  %v1180 = vpop.xlane.xlu0 %1179
  %1181 = vadd.xlane.f32.xlu0 %v1176
  %v1182 = vpop.xlane.xlu0 %1181
  %1183 = vadd.xlane.f32.xlu0 %v1177
  %v1184 = vpop.xlane.xlu0 %1183
  %1185 = vadd.xlane.f32.xlu0 %v1178
  %v1186 = vpop.xlane.xlu0 %1185
  %v1187 = vmul.f32 %v1180, %v840
  %v1188 = vmul.f32 %v1182, %v840
  %v1189 = vmul.f32 %v1184, %v840
  %v1190 = vmul.f32 %v1186, %v840
  %v1191 = vsub.f32 %v1175, %v1187
  %v1192 = vsub.f32 %v1176, %v1188
  %v1193 = vsub.f32 %v1177, %v1189
  %v1194 = vsub.f32 %v1178, %v1190
  %v1195 = vmul.f32 %v1191, %v1191
  %v1196 = vmul.f32 %v1192, %v1192
  %v1197 = vmul.f32 %v1193, %v1193
  %v1198 = vmul.f32 %v1194, %v1194
  %1199 = vadd.xlane.f32.xlu0 %v1195
  %v1200 = vpop.xlane.xlu0 %1199
  %1201 = vadd.xlane.f32.xlu0 %v1196
  %v1202 = vpop.xlane.xlu0 %1201
  %1203 = vadd.xlane.f32.xlu0 %v1197
  %v1204 = vpop.xlane.xlu0 %1203
  %1205 = vadd.xlane.f32.xlu0 %v1198
  %v1206 = vpop.xlane.xlu0 %1205
  %v1207 = vmul.f32 %v1200, %v840
  %v1208 = vmul.f32 %v1202, %v840
  %v1209 = vmul.f32 %v1204, %v840
  %v1210 = vmul.f32 %v1206, %v840
  %v1211 = vadd.f32 %v1207, 1e-05
  %v1212 = vadd.f32 %v1208, 1e-05
  %v1213 = vadd.f32 %v1209, 1e-05
  %v1214 = vadd.f32 %v1210, 1e-05
  %v1215 = vrsqrt.pop %v1211
  %v1216 = vmul.f32 %v1215, %v1211
  %v1217 = vmul.f32 %v1216, %v1215
  %v1218 = vmul.f32 0.5, %v1217
  %v1219 = vsub.f32 1.5, %v1218
  %v1220 = vmul.f32 %v1215, %v1219
  %vm1221 = vweird.f32 %v1211
  %vm1222 = vweird.f32 %v1215
  %vm1223 = vmor %vm1221, %vm1222
  %v1224 = vsel %vm1223, %v1215, %v1220
  %v1225 = vrsqrt.pop %v1212
  %v1226 = vmul.f32 %v1225, %v1212
  %v1227 = vmul.f32 %v1226, %v1225
  %v1228 = vmul.f32 0.5, %v1227
  %v1229 = vsub.f32 1.5, %v1228
  %v1230 = vmul.f32 %v1225, %v1229
  %vm1231 = vweird.f32 %v1212
  %vm1232 = vweird.f32 %v1225
  %vm1233 = vmor %vm1231, %vm1232
  %v1234 = vsel %vm1233, %v1225, %v1230
  %v1235 = vrsqrt.pop %v1213
  %v1236 = vmul.f32 %v1235, %v1213
  %v1237 = vmul.f32 %v1236, %v1235
  %v1238 = vmul.f32 0.5, %v1237
  %v1239 = vsub.f32 1.5, %v1238
  %v1240 = vmul.f32 %v1235, %v1239
  %vm1241 = vweird.f32 %v1213
  %vm1242 = vweird.f32 %v1235
  %vm1243 = vmor %vm1241, %vm1242
  %v1244 = vsel %vm1243, %v1235, %v1240
  %v1245 = vrsqrt.pop %v1214
  %v1246 = vmul.f32 %v1245, %v1214
  %v1247 = vmul.f32 %v1246, %v1245
  %v1248 = vmul.f32 0.5, %v1247
  %v1249 = vsub.f32 1.5, %v1248
  %v1250 = vmul.f32 %v1245, %v1249
  %vm1251 = vweird.f32 %v1214
  %vm1252 = vweird.f32 %v1245
  %vm1253 = vmor %vm1251, %vm1252
  %v1254 = vsel %vm1253, %v1245, %v1250
  %v1255 = vmul.f32 %v1191, %v1224
  %v1256 = vmul.f32 %v1192, %v1234
  %v1257 = vmul.f32 %v1193, %v1244
  %v1258 = vmul.f32 %v1194, %v1254
  %v1260 = vperm.slane %v204, 0
  %v1262 = vmul.f32 %v1255, %v1260
  %v1263 = vmul.f32 %v1256, %v1260
  %v1264 = vmul.f32 %v1257, %v1260
  %v1265 = vmul.f32 %v1258, %v1260
  %v1267 = vperm.slane %v205, 0
  %v1269 = vadd.f32 %v1262, %v1267
  %v1270 = vadd.f32 %v1263, %v1267
  %v1271 = vadd.f32 %v1264, %v1267
  %v1272 = vadd.f32 %v1265, %v1267
  %1273 = vst [vmem:[%s10] sm:$0xff] %v1269
  %1274 = vst [vmem:[%s10 + $0x8] sm:$0xff] %v1270
  %1275 = vst [vmem:[%s10 + $0x10] sm:$0xff] %v1271
  %1276 = vst [vmem:[%s10 + $0x18] sm:$0xff] %v1272
  %v1277 = vpack.c.bf16 %v1270, %v1269
  %v1278 = vpack.c.bf16 %v1272, %v1271
  %v1279 = vld [vmem:[%s9] sm:$0xff]
  %v1280 = vld [vmem:[%s9 + $0x8] sm:$0xff]
  %v1281 = vld [vmem:[%s9 + $0x10] sm:$0xff]
  %v1282 = vld [vmem:[%s9 + $0x18] sm:$0xff]
  %v1283 = vld [vmem:[%s9 + $0x20] sm:$0xff]
  %v1284 = vld [vmem:[%s9 + $0x28] sm:$0xff]
  %v1285 = vld [vmem:[%s9 + $0x30] sm:$0xff]
  %v1286 = vld [vmem:[%s9 + $0x38] sm:$0xff]
  %v1287 = vld [vmem:[%s9 + $0x40] sm:$0xff]
  %v1288 = vld [vmem:[%s9 + $0x48] sm:$0xff]
  %v1289 = vld [vmem:[%s9 + $0x50] sm:$0xff]
  %v1290 = vld [vmem:[%s9 + $0x58] sm:$0xff]
  %v1291 = vld [vmem:[%s9 + $0x60] sm:$0xff]
  %v1292 = vld [vmem:[%s9 + $0x68] sm:$0xff]
  %v1293 = vld [vmem:[%s9 + $0x70] sm:$0xff]
  %v1294 = vld [vmem:[%s9 + $0x78] sm:$0xff]
  %v1295 = vld [vmem:[%s9 + $0x80] sm:$0xff]
  %v1296 = vld [vmem:[%s9 + $0x88] sm:$0xff]
  %v1297 = vld [vmem:[%s9 + $0x90] sm:$0xff]
  %v1298 = vld [vmem:[%s9 + $0x98] sm:$0xff]
  %v1299 = vld [vmem:[%s9 + $0xa0] sm:$0xff]
  %v1300 = vld [vmem:[%s9 + $0xa8] sm:$0xff]
  %v1301 = vld [vmem:[%s9 + $0xb0] sm:$0xff]
  %v1302 = vld [vmem:[%s9 + $0xb8] sm:$0xff]
  %v1303 = vld [vmem:[%s9 + $0xc0] sm:$0xff]
  %v1304 = vld [vmem:[%s9 + $0xc8] sm:$0xff]
  %v1305 = vld [vmem:[%s9 + $0xd0] sm:$0xff]
  %v1306 = vld [vmem:[%s9 + $0xd8] sm:$0xff]
  %v1307 = vld [vmem:[%s9 + $0xe0] sm:$0xff]
  %v1308 = vld [vmem:[%s9 + $0xe8] sm:$0xff]
  %v1309 = vld [vmem:[%s9 + $0xf0] sm:$0xff]
  %v1310 = vld [vmem:[%s9 + $0xf8] sm:$0xff]
  %v1311 = vld [vmem:[%s9 + $0x100] sm:$0xff]
  %v1312 = vld [vmem:[%s9 + $0x108] sm:$0xff]
  %v1313 = vld [vmem:[%s9 + $0x110] sm:$0xff]
  %v1314 = vld [vmem:[%s9 + $0x118] sm:$0xff]
  %v1315 = vld [vmem:[%s9 + $0x120] sm:$0xff]
  %v1316 = vld [vmem:[%s9 + $0x128] sm:$0xff]
  %v1317 = vld [vmem:[%s9 + $0x130] sm:$0xff]
  %v1318 = vld [vmem:[%s9 + $0x138] sm:$0xff]
  %v1319 = vld [vmem:[%s9 + $0x140] sm:$0xff]
  %v1320 = vld [vmem:[%s9 + $0x148] sm:$0xff]
  %v1321 = vld [vmem:[%s9 + $0x150] sm:$0xff]
  %v1322 = vld [vmem:[%s9 + $0x158] sm:$0xff]
  %v1323 = vld [vmem:[%s9 + $0x160] sm:$0xff]
  %v1324 = vld [vmem:[%s9 + $0x168] sm:$0xff]
  %v1325 = vld [vmem:[%s9 + $0x170] sm:$0xff]
  %v1326 = vld [vmem:[%s9 + $0x178] sm:$0xff]
  %v1327 = vld [vmem:[%s9 + $0x180] sm:$0xff]
  %v1328 = vld [vmem:[%s9 + $0x188] sm:$0xff]
  %v1329 = vld [vmem:[%s9 + $0x190] sm:$0xff]
  %v1330 = vld [vmem:[%s9 + $0x198] sm:$0xff]
  %v1331 = vld [vmem:[%s9 + $0x1a0] sm:$0xff]
  %v1332 = vld [vmem:[%s9 + $0x1a8] sm:$0xff]
  %v1333 = vld [vmem:[%s9 + $0x1b0] sm:$0xff]
  %v1334 = vld [vmem:[%s9 + $0x1b8] sm:$0xff]
  %v1335 = vld [vmem:[%s9 + $0x1c0] sm:$0xff]
  %v1336 = vld [vmem:[%s9 + $0x1c8] sm:$0xff]
  %v1337 = vld [vmem:[%s9 + $0x1d0] sm:$0xff]
  %v1338 = vld [vmem:[%s9 + $0x1d8] sm:$0xff]
  %v1339 = vld [vmem:[%s9 + $0x1e0] sm:$0xff]
  %v1340 = vld [vmem:[%s9 + $0x1e8] sm:$0xff]
  %v1341 = vld [vmem:[%s9 + $0x1f0] sm:$0xff]
  %v1342 = vld [vmem:[%s9 + $0x1f8] sm:$0xff]
  %v1343 = vld [vmem:[%s9 + $0x200] sm:$0xff]
  %v1344 = vld [vmem:[%s9 + $0x208] sm:$0xff]
  %v1345 = vld [vmem:[%s9 + $0x210] sm:$0xff]
  %v1346 = vld [vmem:[%s9 + $0x218] sm:$0xff]
  %v1347 = vld [vmem:[%s9 + $0x220] sm:$0xff]
  %v1348 = vld [vmem:[%s9 + $0x228] sm:$0xff]
  %v1349 = vld [vmem:[%s9 + $0x230] sm:$0xff]
  %v1350 = vld [vmem:[%s9 + $0x238] sm:$0xff]
  %v1351 = vld [vmem:[%s9 + $0x240] sm:$0xff]
  %v1352 = vld [vmem:[%s9 + $0x248] sm:$0xff]
  %v1353 = vld [vmem:[%s9 + $0x250] sm:$0xff]
  %v1354 = vld [vmem:[%s9 + $0x258] sm:$0xff]
  %v1355 = vld [vmem:[%s9 + $0x260] sm:$0xff]
  %v1356 = vld [vmem:[%s9 + $0x268] sm:$0xff]
  %v1357 = vld [vmem:[%s9 + $0x270] sm:$0xff]
  %v1358 = vld [vmem:[%s9 + $0x278] sm:$0xff]
  %v1359 = vld [vmem:[%s9 + $0x280] sm:$0xff]
  %v1360 = vld [vmem:[%s9 + $0x288] sm:$0xff]
  %v1361 = vld [vmem:[%s9 + $0x290] sm:$0xff]
  %v1362 = vld [vmem:[%s9 + $0x298] sm:$0xff]
  %v1363 = vld [vmem:[%s9 + $0x2a0] sm:$0xff]
  %v1364 = vld [vmem:[%s9 + $0x2a8] sm:$0xff]
  %v1365 = vld [vmem:[%s9 + $0x2b0] sm:$0xff]
  %v1366 = vld [vmem:[%s9 + $0x2b8] sm:$0xff]
  %v1367 = vld [vmem:[%s9 + $0x2c0] sm:$0xff]
  %v1368 = vld [vmem:[%s9 + $0x2c8] sm:$0xff]
  %v1369 = vld [vmem:[%s9 + $0x2d0] sm:$0xff]
  %v1370 = vld [vmem:[%s9 + $0x2d8] sm:$0xff]
  %v1371 = vld [vmem:[%s9 + $0x2e0] sm:$0xff]
  %v1372 = vld [vmem:[%s9 + $0x2e8] sm:$0xff]
  %v1373 = vld [vmem:[%s9 + $0x2f0] sm:$0xff]
  %v1374 = vld [vmem:[%s9 + $0x2f8] sm:$0xff]
  %v1375 = vld [vmem:[%s9 + $0x300] sm:$0xff]
  %v1376 = vld [vmem:[%s9 + $0x308] sm:$0xff]
  %v1377 = vld [vmem:[%s9 + $0x310] sm:$0xff]
  %v1378 = vld [vmem:[%s9 + $0x318] sm:$0xff]
  %v1379 = vld [vmem:[%s9 + $0x320] sm:$0xff]
  %v1380 = vld [vmem:[%s9 + $0x328] sm:$0xff]
  %v1381 = vld [vmem:[%s9 + $0x330] sm:$0xff]
  %v1382 = vld [vmem:[%s9 + $0x338] sm:$0xff]
  %v1383 = vld [vmem:[%s9 + $0x340] sm:$0xff]
  %v1384 = vld [vmem:[%s9 + $0x348] sm:$0xff]
  %v1385 = vld [vmem:[%s9 + $0x350] sm:$0xff]
  %v1386 = vld [vmem:[%s9 + $0x358] sm:$0xff]
  %v1387 = vld [vmem:[%s9 + $0x360] sm:$0xff]
  %v1388 = vld [vmem:[%s9 + $0x368] sm:$0xff]
  %v1389 = vld [vmem:[%s9 + $0x370] sm:$0xff]
  %v1390 = vld [vmem:[%s9 + $0x378] sm:$0xff]
  %v1391 = vld [vmem:[%s9 + $0x380] sm:$0xff]
  %v1392 = vld [vmem:[%s9 + $0x388] sm:$0xff]
  %v1393 = vld [vmem:[%s9 + $0x390] sm:$0xff]
  %v1394 = vld [vmem:[%s9 + $0x398] sm:$0xff]
  %v1395 = vld [vmem:[%s9 + $0x3a0] sm:$0xff]
  %v1396 = vld [vmem:[%s9 + $0x3a8] sm:$0xff]
  %v1397 = vld [vmem:[%s9 + $0x3b0] sm:$0xff]
  %v1398 = vld [vmem:[%s9 + $0x3b8] sm:$0xff]
  %v1399 = vld [vmem:[%s9 + $0x3c0] sm:$0xff]
  %v1400 = vld [vmem:[%s9 + $0x3c8] sm:$0xff]
  %v1401 = vld [vmem:[%s9 + $0x3d0] sm:$0xff]
  %v1402 = vld [vmem:[%s9 + $0x3d8] sm:$0xff]
  %v1403 = vld [vmem:[%s9 + $0x3e0] sm:$0xff]
  %v1404 = vld [vmem:[%s9 + $0x3e8] sm:$0xff]
  %v1405 = vld [vmem:[%s9 + $0x3f0] sm:$0xff]
  %v1406 = vld [vmem:[%s9 + $0x3f8] sm:$0xff]
  %v1407 = vld [vmem:[%s9 + $0x400] sm:$0xff]
  %v1408 = vld [vmem:[%s9 + $0x408] sm:$0xff]
  %v1409 = vld [vmem:[%s9 + $0x410] sm:$0xff]
  %v1410 = vld [vmem:[%s9 + $0x418] sm:$0xff]
  %v1411 = vld [vmem:[%s9 + $0x420] sm:$0xff]
  %v1412 = vld [vmem:[%s9 + $0x428] sm:$0xff]
  %v1413 = vld [vmem:[%s9 + $0x430] sm:$0xff]
  %v1414 = vld [vmem:[%s9 + $0x438] sm:$0xff]
  %v1415 = vld [vmem:[%s9 + $0x440] sm:$0xff]
  %v1416 = vld [vmem:[%s9 + $0x448] sm:$0xff]
  %v1417 = vld [vmem:[%s9 + $0x450] sm:$0xff]
  %v1418 = vld [vmem:[%s9 + $0x458] sm:$0xff]
  %v1419 = vld [vmem:[%s9 + $0x460] sm:$0xff]
  %v1420 = vld [vmem:[%s9 + $0x468] sm:$0xff]
  %v1421 = vld [vmem:[%s9 + $0x470] sm:$0xff]
  %v1422 = vld [vmem:[%s9 + $0x478] sm:$0xff]
  %v1423 = vld [vmem:[%s9 + $0x480] sm:$0xff]
  %v1424 = vld [vmem:[%s9 + $0x488] sm:$0xff]
  %v1425 = vld [vmem:[%s9 + $0x490] sm:$0xff]
  %v1426 = vld [vmem:[%s9 + $0x498] sm:$0xff]
  %v1427 = vld [vmem:[%s9 + $0x4a0] sm:$0xff]
  %v1428 = vld [vmem:[%s9 + $0x4a8] sm:$0xff]
  %v1429 = vld [vmem:[%s9 + $0x4b0] sm:$0xff]
  %v1430 = vld [vmem:[%s9 + $0x4b8] sm:$0xff]
  %v1431 = vld [vmem:[%s9 + $0x4c0] sm:$0xff]
  %v1432 = vld [vmem:[%s9 + $0x4c8] sm:$0xff]
  %v1433 = vld [vmem:[%s9 + $0x4d0] sm:$0xff]
  %v1434 = vld [vmem:[%s9 + $0x4d8] sm:$0xff]
  %v1435 = vld [vmem:[%s9 + $0x4e0] sm:$0xff]
  %v1436 = vld [vmem:[%s9 + $0x4e8] sm:$0xff]
  %v1437 = vld [vmem:[%s9 + $0x4f0] sm:$0xff]
  %v1438 = vld [vmem:[%s9 + $0x4f8] sm:$0xff]
  %v1439 = vld [vmem:[%s9 + $0x500] sm:$0xff]
  %v1440 = vld [vmem:[%s9 + $0x508] sm:$0xff]
  %v1441 = vld [vmem:[%s9 + $0x510] sm:$0xff]
  %v1442 = vld [vmem:[%s9 + $0x518] sm:$0xff]
  %v1443 = vld [vmem:[%s9 + $0x520] sm:$0xff]
  %v1444 = vld [vmem:[%s9 + $0x528] sm:$0xff]
  %v1445 = vld [vmem:[%s9 + $0x530] sm:$0xff]
  %v1446 = vld [vmem:[%s9 + $0x538] sm:$0xff]
  %v1447 = vld [vmem:[%s9 + $0x540] sm:$0xff]
  %v1448 = vld [vmem:[%s9 + $0x548] sm:$0xff]
  %v1449 = vld [vmem:[%s9 + $0x550] sm:$0xff]
  %v1450 = vld [vmem:[%s9 + $0x558] sm:$0xff]
  %v1451 = vld [vmem:[%s9 + $0x560] sm:$0xff]
  %v1452 = vld [vmem:[%s9 + $0x568] sm:$0xff]
  %v1453 = vld [vmem:[%s9 + $0x570] sm:$0xff]
  %v1454 = vld [vmem:[%s9 + $0x578] sm:$0xff]
  %v1455 = vld [vmem:[%s9 + $0x580] sm:$0xff]
  %v1456 = vld [vmem:[%s9 + $0x588] sm:$0xff]
  %v1457 = vld [vmem:[%s9 + $0x590] sm:$0xff]
  %v1458 = vld [vmem:[%s9 + $0x598] sm:$0xff]
  %v1459 = vld [vmem:[%s9 + $0x5a0] sm:$0xff]
  %v1460 = vld [vmem:[%s9 + $0x5a8] sm:$0xff]
  %v1461 = vld [vmem:[%s9 + $0x5b0] sm:$0xff]
  %v1462 = vld [vmem:[%s9 + $0x5b8] sm:$0xff]
  %v1463 = vld [vmem:[%s9 + $0x5c0] sm:$0xff]
  %v1464 = vld [vmem:[%s9 + $0x5c8] sm:$0xff]
  %v1465 = vld [vmem:[%s9 + $0x5d0] sm:$0xff]
  %v1466 = vld [vmem:[%s9 + $0x5d8] sm:$0xff]
  %v1467 = vld [vmem:[%s9 + $0x5e0] sm:$0xff]
  %v1468 = vld [vmem:[%s9 + $0x5e8] sm:$0xff]
  %v1469 = vld [vmem:[%s9 + $0x5f0] sm:$0xff]
  %v1470 = vld [vmem:[%s9 + $0x5f8] sm:$0xff]
  %v1663 = vunpack.c.l.b16 %v1279
  %v1664 = vunpack.c.h.b16 %v1279
  %v1665 = vunpack.c.l.b16 %v1280
  %v1666 = vunpack.c.h.b16 %v1280
  %v1667 = vunpack.c.l.b16 %v1281
  %v1668 = vunpack.c.h.b16 %v1281
  %v1669 = vunpack.c.l.b16 %v1282
  %v1670 = vunpack.c.h.b16 %v1282
  %v1671 = vunpack.c.l.b16 %v1283
  %v1672 = vunpack.c.h.b16 %v1283
  %v1673 = vunpack.c.l.b16 %v1284
  %v1674 = vunpack.c.h.b16 %v1284
  %v1675 = vunpack.c.l.b16 %v1285
  %v1676 = vunpack.c.h.b16 %v1285
  %v1677 = vunpack.c.l.b16 %v1286
  %v1678 = vunpack.c.h.b16 %v1286
  %v1679 = vunpack.c.l.b16 %v1287
  %v1680 = vunpack.c.h.b16 %v1287
  %v1681 = vunpack.c.l.b16 %v1288
  %v1682 = vunpack.c.h.b16 %v1288
  %v1683 = vunpack.c.l.b16 %v1289
  %v1684 = vunpack.c.h.b16 %v1289
  %v1685 = vunpack.c.l.b16 %v1290
  %v1686 = vunpack.c.h.b16 %v1290
  %v1687 = vunpack.c.l.b16 %v1291
  %v1688 = vunpack.c.h.b16 %v1291
  %v1689 = vunpack.c.l.b16 %v1292
  %v1690 = vunpack.c.h.b16 %v1292
  %v1691 = vunpack.c.l.b16 %v1293
  %v1692 = vunpack.c.h.b16 %v1293
  %v1693 = vunpack.c.l.b16 %v1294
  %v1694 = vunpack.c.h.b16 %v1294
  %v1695 = vunpack.c.l.b16 %v1295
  %v1696 = vunpack.c.h.b16 %v1295
  %v1697 = vunpack.c.l.b16 %v1296
  %v1698 = vunpack.c.h.b16 %v1296
  %v1699 = vunpack.c.l.b16 %v1297
  %v1700 = vunpack.c.h.b16 %v1297
  %v1701 = vunpack.c.l.b16 %v1298
  %v1702 = vunpack.c.h.b16 %v1298
  %v1703 = vunpack.c.l.b16 %v1299
  %v1704 = vunpack.c.h.b16 %v1299
  %v1705 = vunpack.c.l.b16 %v1300
  %v1706 = vunpack.c.h.b16 %v1300
  %v1707 = vunpack.c.l.b16 %v1301
  %v1708 = vunpack.c.h.b16 %v1301
  %v1709 = vunpack.c.l.b16 %v1302
  %v1710 = vunpack.c.h.b16 %v1302
  %v1711 = vunpack.c.l.b16 %v1303
  %v1712 = vunpack.c.h.b16 %v1303
  %v1713 = vunpack.c.l.b16 %v1304
  %v1714 = vunpack.c.h.b16 %v1304
  %v1715 = vunpack.c.l.b16 %v1305
  %v1716 = vunpack.c.h.b16 %v1305
  %v1717 = vunpack.c.l.b16 %v1306
  %v1718 = vunpack.c.h.b16 %v1306
  %v1719 = vunpack.c.l.b16 %v1307
  %v1720 = vunpack.c.h.b16 %v1307
  %v1721 = vunpack.c.l.b16 %v1308
  %v1722 = vunpack.c.h.b16 %v1308
  %v1723 = vunpack.c.l.b16 %v1309
  %v1724 = vunpack.c.h.b16 %v1309
  %v1725 = vunpack.c.l.b16 %v1310
  %v1726 = vunpack.c.h.b16 %v1310
  %v1727 = vunpack.c.l.b16 %v1311
  %v1728 = vunpack.c.h.b16 %v1311
  %v1729 = vunpack.c.l.b16 %v1312
  %v1730 = vunpack.c.h.b16 %v1312
  %v1731 = vunpack.c.l.b16 %v1313
  %v1732 = vunpack.c.h.b16 %v1313
  %v1733 = vunpack.c.l.b16 %v1314
  %v1734 = vunpack.c.h.b16 %v1314
  %v1735 = vunpack.c.l.b16 %v1315
  %v1736 = vunpack.c.h.b16 %v1315
  %v1737 = vunpack.c.l.b16 %v1316
  %v1738 = vunpack.c.h.b16 %v1316
  %v1739 = vunpack.c.l.b16 %v1317
  %v1740 = vunpack.c.h.b16 %v1317
  %v1741 = vunpack.c.l.b16 %v1318
  %v1742 = vunpack.c.h.b16 %v1318
  %v1743 = vunpack.c.l.b16 %v1319
  %v1744 = vunpack.c.h.b16 %v1319
  %v1745 = vunpack.c.l.b16 %v1320
  %v1746 = vunpack.c.h.b16 %v1320
  %v1747 = vunpack.c.l.b16 %v1321
  %v1748 = vunpack.c.h.b16 %v1321
  %v1749 = vunpack.c.l.b16 %v1322
  %v1750 = vunpack.c.h.b16 %v1322
  %v1751 = vunpack.c.l.b16 %v1323
  %v1752 = vunpack.c.h.b16 %v1323
  %v1753 = vunpack.c.l.b16 %v1324
  %v1754 = vunpack.c.h.b16 %v1324
  %v1755 = vunpack.c.l.b16 %v1325
  %v1756 = vunpack.c.h.b16 %v1325
  %v1757 = vunpack.c.l.b16 %v1326
  %v1758 = vunpack.c.h.b16 %v1326
  %v1759 = vunpack.c.l.b16 %v1327
  %v1760 = vunpack.c.h.b16 %v1327
  %v1761 = vunpack.c.l.b16 %v1328
  %v1762 = vunpack.c.h.b16 %v1328
  %v1763 = vunpack.c.l.b16 %v1329
  %v1764 = vunpack.c.h.b16 %v1329
  %v1765 = vunpack.c.l.b16 %v1330
  %v1766 = vunpack.c.h.b16 %v1330
  %v1767 = vunpack.c.l.b16 %v1331
  %v1768 = vunpack.c.h.b16 %v1331
  %v1769 = vunpack.c.l.b16 %v1332
  %v1770 = vunpack.c.h.b16 %v1332
  %v1771 = vunpack.c.l.b16 %v1333
  %v1772 = vunpack.c.h.b16 %v1333
  %v1773 = vunpack.c.l.b16 %v1334
  %v1774 = vunpack.c.h.b16 %v1334
  %v1775 = vunpack.c.l.b16 %v1335
  %v1776 = vunpack.c.h.b16 %v1335
  %v1777 = vunpack.c.l.b16 %v1336
  %v1778 = vunpack.c.h.b16 %v1336
  %v1779 = vunpack.c.l.b16 %v1337
  %v1780 = vunpack.c.h.b16 %v1337
  %v1781 = vunpack.c.l.b16 %v1338
  %v1782 = vunpack.c.h.b16 %v1338
  %v1783 = vunpack.c.l.b16 %v1339
  %v1784 = vunpack.c.h.b16 %v1339
  %v1785 = vunpack.c.l.b16 %v1340
  %v1786 = vunpack.c.h.b16 %v1340
  %v1787 = vunpack.c.l.b16 %v1341
  %v1788 = vunpack.c.h.b16 %v1341
  %v1789 = vunpack.c.l.b16 %v1342
  %v1790 = vunpack.c.h.b16 %v1342
  %v1791 = vunpack.c.l.b16 %v1343
  %v1792 = vunpack.c.h.b16 %v1343
  %v1793 = vunpack.c.l.b16 %v1344
  %v1794 = vunpack.c.h.b16 %v1344
  %v1795 = vunpack.c.l.b16 %v1345
  %v1796 = vunpack.c.h.b16 %v1345
  %v1797 = vunpack.c.l.b16 %v1346
  %v1798 = vunpack.c.h.b16 %v1346
  %v1799 = vunpack.c.l.b16 %v1347
  %v1800 = vunpack.c.h.b16 %v1347
  %v1801 = vunpack.c.l.b16 %v1348
  %v1802 = vunpack.c.h.b16 %v1348
  %v1803 = vunpack.c.l.b16 %v1349
  %v1804 = vunpack.c.h.b16 %v1349
  %v1805 = vunpack.c.l.b16 %v1350
  %v1806 = vunpack.c.h.b16 %v1350
  %v1807 = vunpack.c.l.b16 %v1351
  %v1808 = vunpack.c.h.b16 %v1351
  %v1809 = vunpack.c.l.b16 %v1352
  %v1810 = vunpack.c.h.b16 %v1352
  %v1811 = vunpack.c.l.b16 %v1353
  %v1812 = vunpack.c.h.b16 %v1353
  %v1813 = vunpack.c.l.b16 %v1354
  %v1814 = vunpack.c.h.b16 %v1354
  %v1815 = vunpack.c.l.b16 %v1355
  %v1816 = vunpack.c.h.b16 %v1355
  %v1817 = vunpack.c.l.b16 %v1356
  %v1818 = vunpack.c.h.b16 %v1356
  %v1819 = vunpack.c.l.b16 %v1357
  %v1820 = vunpack.c.h.b16 %v1357
  %v1821 = vunpack.c.l.b16 %v1358
  %v1822 = vunpack.c.h.b16 %v1358
  %v1823 = vunpack.c.l.b16 %v1359
  %v1824 = vunpack.c.h.b16 %v1359
  %v1825 = vunpack.c.l.b16 %v1360
  %v1826 = vunpack.c.h.b16 %v1360
  %v1827 = vunpack.c.l.b16 %v1361
  %v1828 = vunpack.c.h.b16 %v1361
  %v1829 = vunpack.c.l.b16 %v1362
  %v1830 = vunpack.c.h.b16 %v1362
  %v1831 = vunpack.c.l.b16 %v1363
  %v1832 = vunpack.c.h.b16 %v1363
  %v1833 = vunpack.c.l.b16 %v1364
  %v1834 = vunpack.c.h.b16 %v1364
  %v1835 = vunpack.c.l.b16 %v1365
  %v1836 = vunpack.c.h.b16 %v1365
  %v1837 = vunpack.c.l.b16 %v1366
  %v1838 = vunpack.c.h.b16 %v1366
  %v1839 = vunpack.c.l.b16 %v1367
  %v1840 = vunpack.c.h.b16 %v1367
  %v1841 = vunpack.c.l.b16 %v1368
  %v1842 = vunpack.c.h.b16 %v1368
  %v1843 = vunpack.c.l.b16 %v1369
  %v1844 = vunpack.c.h.b16 %v1369
  %v1845 = vunpack.c.l.b16 %v1370
  %v1846 = vunpack.c.h.b16 %v1370
  %v1847 = vunpack.c.l.b16 %v1371
  %v1848 = vunpack.c.h.b16 %v1371
  %v1849 = vunpack.c.l.b16 %v1372
  %v1850 = vunpack.c.h.b16 %v1372
  %v1851 = vunpack.c.l.b16 %v1373
  %v1852 = vunpack.c.h.b16 %v1373
  %v1853 = vunpack.c.l.b16 %v1374
  %v1854 = vunpack.c.h.b16 %v1374
  %v1855 = vunpack.c.l.b16 %v1375
  %v1856 = vunpack.c.h.b16 %v1375
  %v1857 = vunpack.c.l.b16 %v1376
  %v1858 = vunpack.c.h.b16 %v1376
  %v1859 = vunpack.c.l.b16 %v1377
  %v1860 = vunpack.c.h.b16 %v1377
  %v1861 = vunpack.c.l.b16 %v1378
  %v1862 = vunpack.c.h.b16 %v1378
  %v1863 = vunpack.c.l.b16 %v1379
  %v1864 = vunpack.c.h.b16 %v1379
  %v1865 = vunpack.c.l.b16 %v1380
  %v1866 = vunpack.c.h.b16 %v1380
  %v1867 = vunpack.c.l.b16 %v1381
  %v1868 = vunpack.c.h.b16 %v1381
  %v1869 = vunpack.c.l.b16 %v1382
  %v1870 = vunpack.c.h.b16 %v1382
  %v1871 = vunpack.c.l.b16 %v1383
  %v1872 = vunpack.c.h.b16 %v1383
  %v1873 = vunpack.c.l.b16 %v1384
  %v1874 = vunpack.c.h.b16 %v1384
  %v1875 = vunpack.c.l.b16 %v1385
  %v1876 = vunpack.c.h.b16 %v1385
  %v1877 = vunpack.c.l.b16 %v1386
  %v1878 = vunpack.c.h.b16 %v1386
  %v1879 = vunpack.c.l.b16 %v1387
  %v1880 = vunpack.c.h.b16 %v1387
  %v1881 = vunpack.c.l.b16 %v1388
  %v1882 = vunpack.c.h.b16 %v1388
  %v1883 = vunpack.c.l.b16 %v1389
  %v1884 = vunpack.c.h.b16 %v1389
  %v1885 = vunpack.c.l.b16 %v1390
  %v1886 = vunpack.c.h.b16 %v1390
  %v1887 = vunpack.c.l.b16 %v1391
  %v1888 = vunpack.c.h.b16 %v1391
  %v1889 = vunpack.c.l.b16 %v1392
  %v1890 = vunpack.c.h.b16 %v1392
  %v1891 = vunpack.c.l.b16 %v1393
  %v1892 = vunpack.c.h.b16 %v1393
  %v1893 = vunpack.c.l.b16 %v1394
  %v1894 = vunpack.c.h.b16 %v1394
  %v1895 = vunpack.c.l.b16 %v1395
  %v1896 = vunpack.c.h.b16 %v1395
  %v1897 = vunpack.c.l.b16 %v1396
  %v1898 = vunpack.c.h.b16 %v1396
  %v1899 = vunpack.c.l.b16 %v1397
  %v1900 = vunpack.c.h.b16 %v1397
  %v1901 = vunpack.c.l.b16 %v1398
  %v1902 = vunpack.c.h.b16 %v1398
  %v1903 = vunpack.c.l.b16 %v1399
  %v1904 = vunpack.c.h.b16 %v1399
  %v1905 = vunpack.c.l.b16 %v1400
  %v1906 = vunpack.c.h.b16 %v1400
  %v1907 = vunpack.c.l.b16 %v1401
  %v1908 = vunpack.c.h.b16 %v1401
  %v1909 = vunpack.c.l.b16 %v1402
  %v1910 = vunpack.c.h.b16 %v1402
  %v1911 = vunpack.c.l.b16 %v1403
  %v1912 = vunpack.c.h.b16 %v1403
  %v1913 = vunpack.c.l.b16 %v1404
  %v1914 = vunpack.c.h.b16 %v1404
  %v1915 = vunpack.c.l.b16 %v1405
  %v1916 = vunpack.c.h.b16 %v1405
  %v1917 = vunpack.c.l.b16 %v1406
  %v1918 = vunpack.c.h.b16 %v1406
  %v1919 = vunpack.c.l.b16 %v1407
  %v1920 = vunpack.c.h.b16 %v1407
  %v1921 = vunpack.c.l.b16 %v1408
  %v1922 = vunpack.c.h.b16 %v1408
  %v1923 = vunpack.c.l.b16 %v1409
  %v1924 = vunpack.c.h.b16 %v1409
  %v1925 = vunpack.c.l.b16 %v1410
  %v1926 = vunpack.c.h.b16 %v1410
  %v1927 = vunpack.c.l.b16 %v1411
  %v1928 = vunpack.c.h.b16 %v1411
  %v1929 = vunpack.c.l.b16 %v1412
  %v1930 = vunpack.c.h.b16 %v1412
  %v1931 = vunpack.c.l.b16 %v1413
  %v1932 = vunpack.c.h.b16 %v1413
  %v1933 = vunpack.c.l.b16 %v1414
  %v1934 = vunpack.c.h.b16 %v1414
  %v1935 = vunpack.c.l.b16 %v1415
  %v1936 = vunpack.c.h.b16 %v1415
  %v1937 = vunpack.c.l.b16 %v1416
  %v1938 = vunpack.c.h.b16 %v1416
  %v1939 = vunpack.c.l.b16 %v1417
  %v1940 = vunpack.c.h.b16 %v1417
  %v1941 = vunpack.c.l.b16 %v1418
  %v1942 = vunpack.c.h.b16 %v1418
  %v1943 = vunpack.c.l.b16 %v1419
  %v1944 = vunpack.c.h.b16 %v1419
  %v1945 = vunpack.c.l.b16 %v1420
  %v1946 = vunpack.c.h.b16 %v1420
  %v1947 = vunpack.c.l.b16 %v1421
  %v1948 = vunpack.c.h.b16 %v1421
  %v1949 = vunpack.c.l.b16 %v1422
  %v1950 = vunpack.c.h.b16 %v1422
  %v1951 = vunpack.c.l.b16 %v1423
  %v1952 = vunpack.c.h.b16 %v1423
  %v1953 = vunpack.c.l.b16 %v1424
  %v1954 = vunpack.c.h.b16 %v1424
  %v1955 = vunpack.c.l.b16 %v1425
  %v1956 = vunpack.c.h.b16 %v1425
  %v1957 = vunpack.c.l.b16 %v1426
  %v1958 = vunpack.c.h.b16 %v1426
  %v1959 = vunpack.c.l.b16 %v1427
  %v1960 = vunpack.c.h.b16 %v1427
  %v1961 = vunpack.c.l.b16 %v1428
  %v1962 = vunpack.c.h.b16 %v1428
  %v1963 = vunpack.c.l.b16 %v1429
  %v1964 = vunpack.c.h.b16 %v1429
  %v1965 = vunpack.c.l.b16 %v1430
  %v1966 = vunpack.c.h.b16 %v1430
  %v1967 = vunpack.c.l.b16 %v1431
  %v1968 = vunpack.c.h.b16 %v1431
  %v1969 = vunpack.c.l.b16 %v1432
  %v1970 = vunpack.c.h.b16 %v1432
  %v1971 = vunpack.c.l.b16 %v1433
  %v1972 = vunpack.c.h.b16 %v1433
  %v1973 = vunpack.c.l.b16 %v1434
  %v1974 = vunpack.c.h.b16 %v1434
  %v1975 = vunpack.c.l.b16 %v1435
  %v1976 = vunpack.c.h.b16 %v1435
  %v1977 = vunpack.c.l.b16 %v1436
  %v1978 = vunpack.c.h.b16 %v1436
  %v1979 = vunpack.c.l.b16 %v1437
  %v1980 = vunpack.c.h.b16 %v1437
  %v1981 = vunpack.c.l.b16 %v1438
  %v1982 = vunpack.c.h.b16 %v1438
  %v1983 = vunpack.c.l.b16 %v1439
  %v1984 = vunpack.c.h.b16 %v1439
  %v1985 = vunpack.c.l.b16 %v1440
  %v1986 = vunpack.c.h.b16 %v1440
  %v1987 = vunpack.c.l.b16 %v1441
  %v1988 = vunpack.c.h.b16 %v1441
  %v1989 = vunpack.c.l.b16 %v1442
  %v1990 = vunpack.c.h.b16 %v1442
  %v1991 = vunpack.c.l.b16 %v1443
  %v1992 = vunpack.c.h.b16 %v1443
  %v1993 = vunpack.c.l.b16 %v1444
  %v1994 = vunpack.c.h.b16 %v1444
  %v1995 = vunpack.c.l.b16 %v1445
  %v1996 = vunpack.c.h.b16 %v1445
  %v1997 = vunpack.c.l.b16 %v1446
  %v1998 = vunpack.c.h.b16 %v1446
  %v1999 = vunpack.c.l.b16 %v1447
  %v2000 = vunpack.c.h.b16 %v1447
  %v2001 = vunpack.c.l.b16 %v1448
  %v2002 = vunpack.c.h.b16 %v1448
  %v2003 = vunpack.c.l.b16 %v1449
  %v2004 = vunpack.c.h.b16 %v1449
  %v2005 = vunpack.c.l.b16 %v1450
  %v2006 = vunpack.c.h.b16 %v1450
  %v2007 = vunpack.c.l.b16 %v1451
  %v2008 = vunpack.c.h.b16 %v1451
  %v2009 = vunpack.c.l.b16 %v1452
  %v2010 = vunpack.c.h.b16 %v1452
  %v2011 = vunpack.c.l.b16 %v1453
  %v2012 = vunpack.c.h.b16 %v1453
  %v2013 = vunpack.c.l.b16 %v1454
  %v2014 = vunpack.c.h.b16 %v1454
  %v2015 = vunpack.c.l.b16 %v1455
  %v2016 = vunpack.c.h.b16 %v1455
  %v2017 = vunpack.c.l.b16 %v1456
  %v2018 = vunpack.c.h.b16 %v1456
  %v2019 = vunpack.c.l.b16 %v1457
  %v2020 = vunpack.c.h.b16 %v1457
  %v2021 = vunpack.c.l.b16 %v1458
  %v2022 = vunpack.c.h.b16 %v1458
  %v2023 = vunpack.c.l.b16 %v1459
  %v2024 = vunpack.c.h.b16 %v1459
  %v2025 = vunpack.c.l.b16 %v1460
  %v2026 = vunpack.c.h.b16 %v1460
  %v2027 = vunpack.c.l.b16 %v1461
  %v2028 = vunpack.c.h.b16 %v1461
  %v2029 = vunpack.c.l.b16 %v1462
  %v2030 = vunpack.c.h.b16 %v1462
  %v2031 = vunpack.c.l.b16 %v1463
  %v2032 = vunpack.c.h.b16 %v1463
  %v2033 = vunpack.c.l.b16 %v1464
  %v2034 = vunpack.c.h.b16 %v1464
  %v2035 = vunpack.c.l.b16 %v1465
  %v2036 = vunpack.c.h.b16 %v1465
  %v2037 = vunpack.c.l.b16 %v1466
  %v2038 = vunpack.c.h.b16 %v1466
  %v2039 = vunpack.c.l.b16 %v1467
  %v2040 = vunpack.c.h.b16 %v1467
  %v2041 = vunpack.c.l.b16 %v1468
  %v2042 = vunpack.c.h.b16 %v1468
  %v2043 = vunpack.c.l.b16 %v1469
  %v2044 = vunpack.c.h.b16 %v1469
  %v2045 = vunpack.c.l.b16 %v1470
  %v2046 = vunpack.c.h.b16 %v1470
  %v2047 = vpack.c.b16 %v1687, %v1663
  %v2048 = vpack.c.b16 %v1688, %v1664
  %v2049 = vpack.c.b16 %v1689, %v1665
  %v2050 = vpack.c.b16 %v1690, %v1666
  %v2051 = vpack.c.b16 %v1691, %v1667
  %v2052 = vpack.c.b16 %v1692, %v1668
  %v2053 = vpack.c.b16 %v1693, %v1669
  %v2054 = vpack.c.b16 %v1694, %v1670
  %v2055 = vpack.c.b16 %v1695, %v1671
  %v2056 = vpack.c.b16 %v1696, %v1672
  %v2057 = vpack.c.b16 %v1697, %v1673
  %v2058 = vpack.c.b16 %v1698, %v1674
  %v2059 = vpack.c.b16 %v1699, %v1675
  %v2060 = vpack.c.b16 %v1700, %v1676
  %v2061 = vpack.c.b16 %v1701, %v1677
  %v2062 = vpack.c.b16 %v1702, %v1678
  %v2063 = vpack.c.b16 %v1703, %v1679
  %v2064 = vpack.c.b16 %v1704, %v1680
  %v2065 = vpack.c.b16 %v1705, %v1681
  %v2066 = vpack.c.b16 %v1706, %v1682
  %v2067 = vpack.c.b16 %v1707, %v1683
  %v2068 = vpack.c.b16 %v1708, %v1684
  %v2069 = vpack.c.b16 %v1709, %v1685
  %v2070 = vpack.c.b16 %v1710, %v1686
  %v2071 = vpack.c.b16 %v1735, %v1711
  %v2072 = vpack.c.b16 %v1736, %v1712
  %v2073 = vpack.c.b16 %v1737, %v1713
  %v2074 = vpack.c.b16 %v1738, %v1714
  %v2075 = vpack.c.b16 %v1739, %v1715
  %v2076 = vpack.c.b16 %v1740, %v1716
  %v2077 = vpack.c.b16 %v1741, %v1717
  %v2078 = vpack.c.b16 %v1742, %v1718
  %v2079 = vpack.c.b16 %v1743, %v1719
  %v2080 = vpack.c.b16 %v1744, %v1720
  %v2081 = vpack.c.b16 %v1745, %v1721
  %v2082 = vpack.c.b16 %v1746, %v1722
  %v2083 = vpack.c.b16 %v1747, %v1723
  %v2084 = vpack.c.b16 %v1748, %v1724
  %v2085 = vpack.c.b16 %v1749, %v1725
  %v2086 = vpack.c.b16 %v1750, %v1726
  %v2087 = vpack.c.b16 %v1751, %v1727
  %v2088 = vpack.c.b16 %v1752, %v1728
  %v2089 = vpack.c.b16 %v1753, %v1729
  %v2090 = vpack.c.b16 %v1754, %v1730
  %v2091 = vpack.c.b16 %v1755, %v1731
  %v2092 = vpack.c.b16 %v1756, %v1732
  %v2093 = vpack.c.b16 %v1757, %v1733
  %v2094 = vpack.c.b16 %v1758, %v1734
  %v2095 = vpack.c.b16 %v1783, %v1759
  %v2096 = vpack.c.b16 %v1784, %v1760
  %v2097 = vpack.c.b16 %v1785, %v1761
  %v2098 = vpack.c.b16 %v1786, %v1762
  %v2099 = vpack.c.b16 %v1787, %v1763
  %v2100 = vpack.c.b16 %v1788, %v1764
  %v2101 = vpack.c.b16 %v1789, %v1765
  %v2102 = vpack.c.b16 %v1790, %v1766
  %v2103 = vpack.c.b16 %v1791, %v1767
  %v2104 = vpack.c.b16 %v1792, %v1768
  %v2105 = vpack.c.b16 %v1793, %v1769
  %v2106 = vpack.c.b16 %v1794, %v1770
  %v2107 = vpack.c.b16 %v1795, %v1771
  %v2108 = vpack.c.b16 %v1796, %v1772
  %v2109 = vpack.c.b16 %v1797, %v1773
  %v2110 = vpack.c.b16 %v1798, %v1774
  %v2111 = vpack.c.b16 %v1799, %v1775
  %v2112 = vpack.c.b16 %v1800, %v1776
  %v2113 = vpack.c.b16 %v1801, %v1777
  %v2114 = vpack.c.b16 %v1802, %v1778
  %v2115 = vpack.c.b16 %v1803, %v1779
  %v2116 = vpack.c.b16 %v1804, %v1780
  %v2117 = vpack.c.b16 %v1805, %v1781
  %v2118 = vpack.c.b16 %v1806, %v1782
  %v2119 = vpack.c.b16 %v1831, %v1807
  %v2120 = vpack.c.b16 %v1832, %v1808
  %v2121 = vpack.c.b16 %v1833, %v1809
  %v2122 = vpack.c.b16 %v1834, %v1810
  %v2123 = vpack.c.b16 %v1835, %v1811
  %v2124 = vpack.c.b16 %v1836, %v1812
  %v2125 = vpack.c.b16 %v1837, %v1813
  %v2126 = vpack.c.b16 %v1838, %v1814
  %v2127 = vpack.c.b16 %v1839, %v1815
  %v2128 = vpack.c.b16 %v1840, %v1816
  %v2129 = vpack.c.b16 %v1841, %v1817
  %v2130 = vpack.c.b16 %v1842, %v1818
  %v2131 = vpack.c.b16 %v1843, %v1819
  %v2132 = vpack.c.b16 %v1844, %v1820
  %v2133 = vpack.c.b16 %v1845, %v1821
  %v2134 = vpack.c.b16 %v1846, %v1822
  %v2135 = vpack.c.b16 %v1847, %v1823
  %v2136 = vpack.c.b16 %v1848, %v1824
  %v2137 = vpack.c.b16 %v1849, %v1825
  %v2138 = vpack.c.b16 %v1850, %v1826
  %v2139 = vpack.c.b16 %v1851, %v1827
  %v2140 = vpack.c.b16 %v1852, %v1828
  %v2141 = vpack.c.b16 %v1853, %v1829
  %v2142 = vpack.c.b16 %v1854, %v1830
  %v2143 = vpack.c.b16 %v1879, %v1855
  %v2144 = vpack.c.b16 %v1880, %v1856
  %v2145 = vpack.c.b16 %v1881, %v1857
  %v2146 = vpack.c.b16 %v1882, %v1858
  %v2147 = vpack.c.b16 %v1883, %v1859
  %v2148 = vpack.c.b16 %v1884, %v1860
  %v2149 = vpack.c.b16 %v1885, %v1861
  %v2150 = vpack.c.b16 %v1886, %v1862
  %v2151 = vpack.c.b16 %v1887, %v1863
  %v2152 = vpack.c.b16 %v1888, %v1864
  %v2153 = vpack.c.b16 %v1889, %v1865
  %v2154 = vpack.c.b16 %v1890, %v1866
  %v2155 = vpack.c.b16 %v1891, %v1867
  %v2156 = vpack.c.b16 %v1892, %v1868
  %v2157 = vpack.c.b16 %v1893, %v1869
  %v2158 = vpack.c.b16 %v1894, %v1870
  %v2159 = vpack.c.b16 %v1895, %v1871
  %v2160 = vpack.c.b16 %v1896, %v1872
  %v2161 = vpack.c.b16 %v1897, %v1873
  %v2162 = vpack.c.b16 %v1898, %v1874
  %v2163 = vpack.c.b16 %v1899, %v1875
  %v2164 = vpack.c.b16 %v1900, %v1876
  %v2165 = vpack.c.b16 %v1901, %v1877
  %v2166 = vpack.c.b16 %v1902, %v1878
  %v2167 = vpack.c.b16 %v1927, %v1903
  %v2168 = vpack.c.b16 %v1928, %v1904
  %v2169 = vpack.c.b16 %v1929, %v1905
  %v2170 = vpack.c.b16 %v1930, %v1906
  %v2171 = vpack.c.b16 %v1931, %v1907
  %v2172 = vpack.c.b16 %v1932, %v1908
  %v2173 = vpack.c.b16 %v1933, %v1909
  %v2174 = vpack.c.b16 %v1934, %v1910
  %v2175 = vpack.c.b16 %v1935, %v1911
  %v2176 = vpack.c.b16 %v1936, %v1912
  %v2177 = vpack.c.b16 %v1937, %v1913
  %v2178 = vpack.c.b16 %v1938, %v1914
  %v2179 = vpack.c.b16 %v1939, %v1915
  %v2180 = vpack.c.b16 %v1940, %v1916
  %v2181 = vpack.c.b16 %v1941, %v1917
  %v2182 = vpack.c.b16 %v1942, %v1918
  %v2183 = vpack.c.b16 %v1943, %v1919
  %v2184 = vpack.c.b16 %v1944, %v1920
  %v2185 = vpack.c.b16 %v1945, %v1921
  %v2186 = vpack.c.b16 %v1946, %v1922
  %v2187 = vpack.c.b16 %v1947, %v1923
  %v2188 = vpack.c.b16 %v1948, %v1924
  %v2189 = vpack.c.b16 %v1949, %v1925
  %v2190 = vpack.c.b16 %v1950, %v1926
  %v2191 = vpack.c.b16 %v1975, %v1951
  %v2192 = vpack.c.b16 %v1976, %v1952
  %v2193 = vpack.c.b16 %v1977, %v1953
  %v2194 = vpack.c.b16 %v1978, %v1954
  %v2195 = vpack.c.b16 %v1979, %v1955
  %v2196 = vpack.c.b16 %v1980, %v1956
  %v2197 = vpack.c.b16 %v1981, %v1957
  %v2198 = vpack.c.b16 %v1982, %v1958
  %v2199 = vpack.c.b16 %v1983, %v1959
  %v2200 = vpack.c.b16 %v1984, %v1960
  %v2201 = vpack.c.b16 %v1985, %v1961
  %v2202 = vpack.c.b16 %v1986, %v1962
  %v2203 = vpack.c.b16 %v1987, %v1963
  %v2204 = vpack.c.b16 %v1988, %v1964
  %v2205 = vpack.c.b16 %v1989, %v1965
  %v2206 = vpack.c.b16 %v1990, %v1966
  %v2207 = vpack.c.b16 %v1991, %v1967
  %v2208 = vpack.c.b16 %v1992, %v1968
  %v2209 = vpack.c.b16 %v1993, %v1969
  %v2210 = vpack.c.b16 %v1994, %v1970
  %v2211 = vpack.c.b16 %v1995, %v1971
  %v2212 = vpack.c.b16 %v1996, %v1972
  %v2213 = vpack.c.b16 %v1997, %v1973
  %v2214 = vpack.c.b16 %v1998, %v1974
  %v2215 = vpack.c.b16 %v2023, %v1999
  %v2216 = vpack.c.b16 %v2024, %v2000
  %v2217 = vpack.c.b16 %v2025, %v2001
  %v2218 = vpack.c.b16 %v2026, %v2002
  %v2219 = vpack.c.b16 %v2027, %v2003
  %v2220 = vpack.c.b16 %v2028, %v2004
  %v2221 = vpack.c.b16 %v2029, %v2005
  %v2222 = vpack.c.b16 %v2030, %v2006
  %v2223 = vpack.c.b16 %v2031, %v2007
  %v2224 = vpack.c.b16 %v2032, %v2008
  %v2225 = vpack.c.b16 %v2033, %v2009
  %v2226 = vpack.c.b16 %v2034, %v2010
  %v2227 = vpack.c.b16 %v2035, %v2011
  %v2228 = vpack.c.b16 %v2036, %v2012
  %v2229 = vpack.c.b16 %v2037, %v2013
  %v2230 = vpack.c.b16 %v2038, %v2014
  %v2231 = vpack.c.b16 %v2039, %v2015
  %v2232 = vpack.c.b16 %v2040, %v2016
  %v2233 = vpack.c.b16 %v2041, %v2017
  %v2234 = vpack.c.b16 %v2042, %v2018
  %v2235 = vpack.c.b16 %v2043, %v2019
  %v2236 = vpack.c.b16 %v2044, %v2020
  %v2237 = vpack.c.b16 %v2045, %v2021
  %v2238 = vpack.c.b16 %v2046, %v2022
  %2431 = vmatpush.bf16.msra.mxu0 %v2215
  %2432 = vmatpush.bf16.msra.mxu0 %v2191
  %2433 = vmatpush.bf16.msra.mxu0 %v2167
  %2434 = vmatpush.bf16.msra.mxu0 %v2143
  %2435 = vmatpush.bf16.msra.mxu0 %v2119
  %2436 = vmatpush.bf16.msra.mxu0 %v2095
  %2437 = vmatpush.bf16.msra.mxu0 %v2071
  %2438 = vmatpush.bf16.msra.mxu0 %v2047
  %2439 = vmatmul.bf16.gmra.mxu0 %v1277
  %v2440 = vpop.f32.mrf.mxu0
  %v2441 = vadd.f32 0.0, %v2440
  %v2442 = vpop.f32.mrf.mxu0
  %v2443 = vadd.f32 0.0, %v2442
  %2444 = vmatmul.bf16.gmra.mxu0 %v1278
  %v2445 = vpop.f32.mrf.mxu0
  %v2446 = vadd.f32 0.0, %v2445
  %v2447 = vpop.f32.mrf.mxu0
  %v2448 = vadd.f32 0.0, %v2447
  %2449 = vdwg.mxu0
  %2450 = vmatpush.bf16.msra.mxu0 %v2216
  %2451 = vmatpush.bf16.msra.mxu0 %v2192
  %2452 = vmatpush.bf16.msra.mxu0 %v2168
  %2453 = vmatpush.bf16.msra.mxu0 %v2144
  %2454 = vmatpush.bf16.msra.mxu0 %v2120
  %2455 = vmatpush.bf16.msra.mxu0 %v2096
  %2456 = vmatpush.bf16.msra.mxu0 %v2072
  %2457 = vmatpush.bf16.msra.mxu0 %v2048
  %2458 = vmatmul.bf16.gmra.mxu0 %v1277
  %v2459 = vpop.f32.mrf.mxu0
  %v2460 = vadd.f32 0.0, %v2459
  %v2461 = vpop.f32.mrf.mxu0
  %v2462 = vadd.f32 0.0, %v2461
  %2463 = vmatmul.bf16.gmra.mxu0 %v1278
  %v2464 = vpop.f32.mrf.mxu0
  %v2465 = vadd.f32 0.0, %v2464
  %v2466 = vpop.f32.mrf.mxu0
  %v2467 = vadd.f32 0.0, %v2466
  %2468 = vdwg.mxu0
  %2469 = vmatpush.bf16.msra.mxu0 %v2217
  %2470 = vmatpush.bf16.msra.mxu0 %v2193
  %2471 = vmatpush.bf16.msra.mxu0 %v2169
  %2472 = vmatpush.bf16.msra.mxu0 %v2145
  %2473 = vmatpush.bf16.msra.mxu0 %v2121
  %2474 = vmatpush.bf16.msra.mxu0 %v2097
  %2475 = vmatpush.bf16.msra.mxu0 %v2073
  %2476 = vmatpush.bf16.msra.mxu0 %v2049
  %2477 = vmatmul.bf16.gmra.mxu0 %v1277
  %v2478 = vpop.f32.mrf.mxu0
  %v2479 = vadd.f32 0.0, %v2478
  %v2480 = vpop.f32.mrf.mxu0
  %v2481 = vadd.f32 0.0, %v2480
  %2482 = vmatmul.bf16.gmra.mxu0 %v1278
  %v2483 = vpop.f32.mrf.mxu0
  %v2484 = vadd.f32 0.0, %v2483
  %v2485 = vpop.f32.mrf.mxu0
  %v2486 = vadd.f32 0.0, %v2485
  %2487 = vdwg.mxu0
  %2488 = vmatpush.bf16.msra.mxu0 %v2218
  %2489 = vmatpush.bf16.msra.mxu0 %v2194
  %2490 = vmatpush.bf16.msra.mxu0 %v2170
  %2491 = vmatpush.bf16.msra.mxu0 %v2146
  %2492 = vmatpush.bf16.msra.mxu0 %v2122
  %2493 = vmatpush.bf16.msra.mxu0 %v2098
  %2494 = vmatpush.bf16.msra.mxu0 %v2074
  %2495 = vmatpush.bf16.msra.mxu0 %v2050
  %2496 = vmatmul.bf16.gmra.mxu0 %v1277
  %v2497 = vpop.f32.mrf.mxu0
  %v2498 = vadd.f32 0.0, %v2497
  %v2499 = vpop.f32.mrf.mxu0
  %v2500 = vadd.f32 0.0, %v2499
  %2501 = vmatmul.bf16.gmra.mxu0 %v1278
  %v2502 = vpop.f32.mrf.mxu0
  %v2503 = vadd.f32 0.0, %v2502
  %v2504 = vpop.f32.mrf.mxu0
  %v2505 = vadd.f32 0.0, %v2504
  %2506 = vdwg.mxu0
  %2507 = vmatpush.bf16.msra.mxu0 %v2219
  %2508 = vmatpush.bf16.msra.mxu0 %v2195
  %2509 = vmatpush.bf16.msra.mxu0 %v2171
  %2510 = vmatpush.bf16.msra.mxu0 %v2147
  %2511 = vmatpush.bf16.msra.mxu0 %v2123
  %2512 = vmatpush.bf16.msra.mxu0 %v2099
  %2513 = vmatpush.bf16.msra.mxu0 %v2075
  %2514 = vmatpush.bf16.msra.mxu0 %v2051
  %2515 = vmatmul.bf16.gmra.mxu0 %v1277
  %v2516 = vpop.f32.mrf.mxu0
  %v2517 = vadd.f32 0.0, %v2516
  %v2518 = vpop.f32.mrf.mxu0
  %v2519 = vadd.f32 0.0, %v2518
  %2520 = vmatmul.bf16.gmra.mxu0 %v1278
  %v2521 = vpop.f32.mrf.mxu0
  %v2522 = vadd.f32 0.0, %v2521
  %v2523 = vpop.f32.mrf.mxu0
  %v2524 = vadd.f32 0.0, %v2523
  %2525 = vdwg.mxu0
  %2526 = vmatpush.bf16.msra.mxu0 %v2220
  %2527 = vmatpush.bf16.msra.mxu0 %v2196
  %2528 = vmatpush.bf16.msra.mxu0 %v2172
  %2529 = vmatpush.bf16.msra.mxu0 %v2148
  %2530 = vmatpush.bf16.msra.mxu0 %v2124
  %2531 = vmatpush.bf16.msra.mxu0 %v2100
  %2532 = vmatpush.bf16.msra.mxu0 %v2076
  %2533 = vmatpush.bf16.msra.mxu0 %v2052
  %2534 = vmatmul.bf16.gmra.mxu0 %v1277
  %v2535 = vpop.f32.mrf.mxu0
  %v2536 = vadd.f32 0.0, %v2535
  %v2537 = vpop.f32.mrf.mxu0
  %v2538 = vadd.f32 0.0, %v2537
  %2539 = vmatmul.bf16.gmra.mxu0 %v1278
  %v2540 = vpop.f32.mrf.mxu0
  %v2541 = vadd.f32 0.0, %v2540
  %v2542 = vpop.f32.mrf.mxu0
  %v2543 = vadd.f32 0.0, %v2542
  %2544 = vdwg.mxu0
  %2545 = vmatpush.bf16.msra.mxu0 %v2221
  %2546 = vmatpush.bf16.msra.mxu0 %v2197
  %2547 = vmatpush.bf16.msra.mxu0 %v2173
  %2548 = vmatpush.bf16.msra.mxu0 %v2149
  %2549 = vmatpush.bf16.msra.mxu0 %v2125
  %2550 = vmatpush.bf16.msra.mxu0 %v2101
  %2551 = vmatpush.bf16.msra.mxu0 %v2077
  %2552 = vmatpush.bf16.msra.mxu0 %v2053
  %2553 = vmatmul.bf16.gmra.mxu0 %v1277
  %v2554 = vpop.f32.mrf.mxu0
  %v2555 = vadd.f32 0.0, %v2554
  %v2556 = vpop.f32.mrf.mxu0
  %v2557 = vadd.f32 0.0, %v2556
  %2558 = vmatmul.bf16.gmra.mxu0 %v1278
  %v2559 = vpop.f32.mrf.mxu0
  %v2560 = vadd.f32 0.0, %v2559
  %v2561 = vpop.f32.mrf.mxu0
  %v2562 = vadd.f32 0.0, %v2561
  %2563 = vdwg.mxu0
  %2564 = vmatpush.bf16.msra.mxu0 %v2222
  %2565 = vmatpush.bf16.msra.mxu0 %v2198
  %2566 = vmatpush.bf16.msra.mxu0 %v2174
  %2567 = vmatpush.bf16.msra.mxu0 %v2150
  %2568 = vmatpush.bf16.msra.mxu0 %v2126
  %2569 = vmatpush.bf16.msra.mxu0 %v2102
  %2570 = vmatpush.bf16.msra.mxu0 %v2078
  %2571 = vmatpush.bf16.msra.mxu0 %v2054
  %2572 = vmatmul.bf16.gmra.mxu0 %v1277
  %v2573 = vpop.f32.mrf.mxu0
  %v2574 = vadd.f32 0.0, %v2573
  %v2575 = vpop.f32.mrf.mxu0
  %v2576 = vadd.f32 0.0, %v2575
  %2577 = vmatmul.bf16.gmra.mxu0 %v1278
  %v2578 = vpop.f32.mrf.mxu0
  %v2579 = vadd.f32 0.0, %v2578
  %v2580 = vpop.f32.mrf.mxu0
  %v2581 = vadd.f32 0.0, %v2580
  %2582 = vdwg.mxu0
  %2583 = vmatpush.bf16.msra.mxu0 %v2223
  %2584 = vmatpush.bf16.msra.mxu0 %v2199
  %2585 = vmatpush.bf16.msra.mxu0 %v2175
  %2586 = vmatpush.bf16.msra.mxu0 %v2151
  %2587 = vmatpush.bf16.msra.mxu0 %v2127
  %2588 = vmatpush.bf16.msra.mxu0 %v2103
  %2589 = vmatpush.bf16.msra.mxu0 %v2079
  %2590 = vmatpush.bf16.msra.mxu0 %v2055
  %2591 = vmatmul.bf16.gmra.mxu0 %v1277
  %v2592 = vpop.f32.mrf.mxu0
  %v2593 = vadd.f32 0.0, %v2592
  %v2594 = vpop.f32.mrf.mxu0
  %v2595 = vadd.f32 0.0, %v2594
  %2596 = vmatmul.bf16.gmra.mxu0 %v1278
  %v2597 = vpop.f32.mrf.mxu0
  %v2598 = vadd.f32 0.0, %v2597
  %v2599 = vpop.f32.mrf.mxu0
  %v2600 = vadd.f32 0.0, %v2599
  %2601 = vdwg.mxu0
  %2602 = vmatpush.bf16.msra.mxu0 %v2224
  %2603 = vmatpush.bf16.msra.mxu0 %v2200
  %2604 = vmatpush.bf16.msra.mxu0 %v2176
  %2605 = vmatpush.bf16.msra.mxu0 %v2152
  %2606 = vmatpush.bf16.msra.mxu0 %v2128
  %2607 = vmatpush.bf16.msra.mxu0 %v2104
  %2608 = vmatpush.bf16.msra.mxu0 %v2080
  %2609 = vmatpush.bf16.msra.mxu0 %v2056
  %2610 = vmatmul.bf16.gmra.mxu0 %v1277
  %v2611 = vpop.f32.mrf.mxu0
  %v2612 = vadd.f32 0.0, %v2611
  %v2613 = vpop.f32.mrf.mxu0
  %v2614 = vadd.f32 0.0, %v2613
  %2615 = vmatmul.bf16.gmra.mxu0 %v1278
  %v2616 = vpop.f32.mrf.mxu0
  %v2617 = vadd.f32 0.0, %v2616
  %v2618 = vpop.f32.mrf.mxu0
  %v2619 = vadd.f32 0.0, %v2618
  %2620 = vdwg.mxu0
  %2621 = vmatpush.bf16.msra.mxu0 %v2225
  %2622 = vmatpush.bf16.msra.mxu0 %v2201
  %2623 = vmatpush.bf16.msra.mxu0 %v2177
  %2624 = vmatpush.bf16.msra.mxu0 %v2153
  %2625 = vmatpush.bf16.msra.mxu0 %v2129
  %2626 = vmatpush.bf16.msra.mxu0 %v2105
  %2627 = vmatpush.bf16.msra.mxu0 %v2081
  %2628 = vmatpush.bf16.msra.mxu0 %v2057
  %2629 = vmatmul.bf16.gmra.mxu0 %v1277
  %v2630 = vpop.f32.mrf.mxu0
  %v2631 = vadd.f32 0.0, %v2630
  %v2632 = vpop.f32.mrf.mxu0
  %v2633 = vadd.f32 0.0, %v2632
  %2634 = vmatmul.bf16.gmra.mxu0 %v1278
  %v2635 = vpop.f32.mrf.mxu0
  %v2636 = vadd.f32 0.0, %v2635
  %v2637 = vpop.f32.mrf.mxu0
  %v2638 = vadd.f32 0.0, %v2637
  %2639 = vdwg.mxu0
  %2640 = vmatpush.bf16.msra.mxu0 %v2226
  %2641 = vmatpush.bf16.msra.mxu0 %v2202
  %2642 = vmatpush.bf16.msra.mxu0 %v2178
  %2643 = vmatpush.bf16.msra.mxu0 %v2154
  %2644 = vmatpush.bf16.msra.mxu0 %v2130
  %2645 = vmatpush.bf16.msra.mxu0 %v2106
  %2646 = vmatpush.bf16.msra.mxu0 %v2082
  %2647 = vmatpush.bf16.msra.mxu0 %v2058
  %2648 = vmatmul.bf16.gmra.mxu0 %v1277
  %v2649 = vpop.f32.mrf.mxu0
  %v2650 = vadd.f32 0.0, %v2649
  %v2651 = vpop.f32.mrf.mxu0
  %v2652 = vadd.f32 0.0, %v2651
  %2653 = vmatmul.bf16.gmra.mxu0 %v1278
  %v2654 = vpop.f32.mrf.mxu0
  %v2655 = vadd.f32 0.0, %v2654
  %v2656 = vpop.f32.mrf.mxu0
  %v2657 = vadd.f32 0.0, %v2656
  %2658 = vdwg.mxu0
  %2659 = vmatpush.bf16.msra.mxu0 %v2227
  %2660 = vmatpush.bf16.msra.mxu0 %v2203
  %2661 = vmatpush.bf16.msra.mxu0 %v2179
  %2662 = vmatpush.bf16.msra.mxu0 %v2155
  %2663 = vmatpush.bf16.msra.mxu0 %v2131
  %2664 = vmatpush.bf16.msra.mxu0 %v2107
  %2665 = vmatpush.bf16.msra.mxu0 %v2083
  %2666 = vmatpush.bf16.msra.mxu0 %v2059
  %2667 = vmatmul.bf16.gmra.mxu0 %v1277
  %v2668 = vpop.f32.mrf.mxu0
  %v2669 = vadd.f32 0.0, %v2668
  %v2670 = vpop.f32.mrf.mxu0
  %v2671 = vadd.f32 0.0, %v2670
  %2672 = vmatmul.bf16.gmra.mxu0 %v1278
  %v2673 = vpop.f32.mrf.mxu0
  %v2674 = vadd.f32 0.0, %v2673
  %v2675 = vpop.f32.mrf.mxu0
  %v2676 = vadd.f32 0.0, %v2675
  %2677 = vdwg.mxu0
  %2678 = vmatpush.bf16.msra.mxu0 %v2228
  %2679 = vmatpush.bf16.msra.mxu0 %v2204
  %2680 = vmatpush.bf16.msra.mxu0 %v2180
  %2681 = vmatpush.bf16.msra.mxu0 %v2156
  %2682 = vmatpush.bf16.msra.mxu0 %v2132
  %2683 = vmatpush.bf16.msra.mxu0 %v2108
  %2684 = vmatpush.bf16.msra.mxu0 %v2084
  %2685 = vmatpush.bf16.msra.mxu0 %v2060
  %2686 = vmatmul.bf16.gmra.mxu0 %v1277
  %v2687 = vpop.f32.mrf.mxu0
  %v2688 = vadd.f32 0.0, %v2687
  %v2689 = vpop.f32.mrf.mxu0
  %v2690 = vadd.f32 0.0, %v2689
  %2691 = vmatmul.bf16.gmra.mxu0 %v1278
  %v2692 = vpop.f32.mrf.mxu0
  %v2693 = vadd.f32 0.0, %v2692
  %v2694 = vpop.f32.mrf.mxu0
  %v2695 = vadd.f32 0.0, %v2694
  %2696 = vdwg.mxu0
  %2697 = vmatpush.bf16.msra.mxu0 %v2229
  %2698 = vmatpush.bf16.msra.mxu0 %v2205
  %2699 = vmatpush.bf16.msra.mxu0 %v2181
  %2700 = vmatpush.bf16.msra.mxu0 %v2157
  %2701 = vmatpush.bf16.msra.mxu0 %v2133
  %2702 = vmatpush.bf16.msra.mxu0 %v2109
  %2703 = vmatpush.bf16.msra.mxu0 %v2085
  %2704 = vmatpush.bf16.msra.mxu0 %v2061
  %2705 = vmatmul.bf16.gmra.mxu0 %v1277
  %v2706 = vpop.f32.mrf.mxu0
  %v2707 = vadd.f32 0.0, %v2706
  %v2708 = vpop.f32.mrf.mxu0
  %v2709 = vadd.f32 0.0, %v2708
  %2710 = vmatmul.bf16.gmra.mxu0 %v1278
  %v2711 = vpop.f32.mrf.mxu0
  %v2712 = vadd.f32 0.0, %v2711
  %v2713 = vpop.f32.mrf.mxu0
  %v2714 = vadd.f32 0.0, %v2713
  %2715 = vdwg.mxu0
  %2716 = vmatpush.bf16.msra.mxu0 %v2230
  %2717 = vmatpush.bf16.msra.mxu0 %v2206
  %2718 = vmatpush.bf16.msra.mxu0 %v2182
  %2719 = vmatpush.bf16.msra.mxu0 %v2158
  %2720 = vmatpush.bf16.msra.mxu0 %v2134
  %2721 = vmatpush.bf16.msra.mxu0 %v2110
  %2722 = vmatpush.bf16.msra.mxu0 %v2086
  %2723 = vmatpush.bf16.msra.mxu0 %v2062
  %2724 = vmatmul.bf16.gmra.mxu0 %v1277
  %v2725 = vpop.f32.mrf.mxu0
  %v2726 = vadd.f32 0.0, %v2725
  %v2727 = vpop.f32.mrf.mxu0
  %v2728 = vadd.f32 0.0, %v2727
  %2729 = vmatmul.bf16.gmra.mxu0 %v1278
  %v2730 = vpop.f32.mrf.mxu0
  %v2731 = vadd.f32 0.0, %v2730
  %v2732 = vpop.f32.mrf.mxu0
  %v2733 = vadd.f32 0.0, %v2732
  %2734 = vdwg.mxu0
  %2735 = vmatpush.bf16.msra.mxu0 %v2231
  %2736 = vmatpush.bf16.msra.mxu0 %v2207
  %2737 = vmatpush.bf16.msra.mxu0 %v2183
  %2738 = vmatpush.bf16.msra.mxu0 %v2159
  %2739 = vmatpush.bf16.msra.mxu0 %v2135
  %2740 = vmatpush.bf16.msra.mxu0 %v2111
  %2741 = vmatpush.bf16.msra.mxu0 %v2087
  %2742 = vmatpush.bf16.msra.mxu0 %v2063
  %2743 = vmatmul.bf16.gmra.mxu0 %v1277
  %v2744 = vpop.f32.mrf.mxu0
  %v2745 = vadd.f32 0.0, %v2744
  %v2746 = vpop.f32.mrf.mxu0
  %v2747 = vadd.f32 0.0, %v2746
  %2748 = vmatmul.bf16.gmra.mxu0 %v1278
  %v2749 = vpop.f32.mrf.mxu0
  %v2750 = vadd.f32 0.0, %v2749
  %v2751 = vpop.f32.mrf.mxu0
  %v2752 = vadd.f32 0.0, %v2751
  %2753 = vdwg.mxu0
  %2754 = vmatpush.bf16.msra.mxu0 %v2232
  %2755 = vmatpush.bf16.msra.mxu0 %v2208
  %2756 = vmatpush.bf16.msra.mxu0 %v2184
  %2757 = vmatpush.bf16.msra.mxu0 %v2160
  %2758 = vmatpush.bf16.msra.mxu0 %v2136
  %2759 = vmatpush.bf16.msra.mxu0 %v2112
  %2760 = vmatpush.bf16.msra.mxu0 %v2088
  %2761 = vmatpush.bf16.msra.mxu0 %v2064
  %2762 = vmatmul.bf16.gmra.mxu0 %v1277
  %v2763 = vpop.f32.mrf.mxu0
  %v2764 = vadd.f32 0.0, %v2763
  %v2765 = vpop.f32.mrf.mxu0
  %v2766 = vadd.f32 0.0, %v2765
  %2767 = vmatmul.bf16.gmra.mxu0 %v1278
  %v2768 = vpop.f32.mrf.mxu0
  %v2769 = vadd.f32 0.0, %v2768
  %v2770 = vpop.f32.mrf.mxu0
  %v2771 = vadd.f32 0.0, %v2770
  %2772 = vdwg.mxu0
  %2773 = vmatpush.bf16.msra.mxu0 %v2233
  %2774 = vmatpush.bf16.msra.mxu0 %v2209
  %2775 = vmatpush.bf16.msra.mxu0 %v2185
  %2776 = vmatpush.bf16.msra.mxu0 %v2161
  %2777 = vmatpush.bf16.msra.mxu0 %v2137
  %2778 = vmatpush.bf16.msra.mxu0 %v2113
  %2779 = vmatpush.bf16.msra.mxu0 %v2089
  %2780 = vmatpush.bf16.msra.mxu0 %v2065
  %2781 = vmatmul.bf16.gmra.mxu0 %v1277
  %v2782 = vpop.f32.mrf.mxu0
  %v2783 = vadd.f32 0.0, %v2782
  %v2784 = vpop.f32.mrf.mxu0
  %v2785 = vadd.f32 0.0, %v2784
  %2786 = vmatmul.bf16.gmra.mxu0 %v1278
  %v2787 = vpop.f32.mrf.mxu0
  %v2788 = vadd.f32 0.0, %v2787
  %v2789 = vpop.f32.mrf.mxu0
  %v2790 = vadd.f32 0.0, %v2789
  %2791 = vdwg.mxu0
  %2792 = vmatpush.bf16.msra.mxu0 %v2234
  %2793 = vmatpush.bf16.msra.mxu0 %v2210
  %2794 = vmatpush.bf16.msra.mxu0 %v2186
  %2795 = vmatpush.bf16.msra.mxu0 %v2162
  %2796 = vmatpush.bf16.msra.mxu0 %v2138
  %2797 = vmatpush.bf16.msra.mxu0 %v2114
  %2798 = vmatpush.bf16.msra.mxu0 %v2090
  %2799 = vmatpush.bf16.msra.mxu0 %v2066
  %2800 = vmatmul.bf16.gmra.mxu0 %v1277
  %v2801 = vpop.f32.mrf.mxu0
  %v2802 = vadd.f32 0.0, %v2801
  %v2803 = vpop.f32.mrf.mxu0
  %v2804 = vadd.f32 0.0, %v2803
  %2805 = vmatmul.bf16.gmra.mxu0 %v1278
  %v2806 = vpop.f32.mrf.mxu0
  %v2807 = vadd.f32 0.0, %v2806
  %v2808 = vpop.f32.mrf.mxu0
  %v2809 = vadd.f32 0.0, %v2808
  %2810 = vdwg.mxu0
  %2811 = vmatpush.bf16.msra.mxu0 %v2235
  %2812 = vmatpush.bf16.msra.mxu0 %v2211
  %2813 = vmatpush.bf16.msra.mxu0 %v2187
  %2814 = vmatpush.bf16.msra.mxu0 %v2163
  %2815 = vmatpush.bf16.msra.mxu0 %v2139
  %2816 = vmatpush.bf16.msra.mxu0 %v2115
  %2817 = vmatpush.bf16.msra.mxu0 %v2091
  %2818 = vmatpush.bf16.msra.mxu0 %v2067
  %2819 = vmatmul.bf16.gmra.mxu0 %v1277
  %v2820 = vpop.f32.mrf.mxu0
  %v2821 = vadd.f32 0.0, %v2820
  %v2822 = vpop.f32.mrf.mxu0
  %v2823 = vadd.f32 0.0, %v2822
  %2824 = vmatmul.bf16.gmra.mxu0 %v1278
  %v2825 = vpop.f32.mrf.mxu0
  %v2826 = vadd.f32 0.0, %v2825
  %v2827 = vpop.f32.mrf.mxu0
  %v2828 = vadd.f32 0.0, %v2827
  %2829 = vdwg.mxu0
  %2830 = vmatpush.bf16.msra.mxu0 %v2236
  %2831 = vmatpush.bf16.msra.mxu0 %v2212
  %2832 = vmatpush.bf16.msra.mxu0 %v2188
  %2833 = vmatpush.bf16.msra.mxu0 %v2164
  %2834 = vmatpush.bf16.msra.mxu0 %v2140
  %2835 = vmatpush.bf16.msra.mxu0 %v2116
  %2836 = vmatpush.bf16.msra.mxu0 %v2092
  %2837 = vmatpush.bf16.msra.mxu0 %v2068
  %2838 = vmatmul.bf16.gmra.mxu0 %v1277
  %v2839 = vpop.f32.mrf.mxu0
  %v2840 = vadd.f32 0.0, %v2839
  %v2841 = vpop.f32.mrf.mxu0
  %v2842 = vadd.f32 0.0, %v2841
  %2843 = vmatmul.bf16.gmra.mxu0 %v1278
  %v2844 = vpop.f32.mrf.mxu0
  %v2845 = vadd.f32 0.0, %v2844
  %v2846 = vpop.f32.mrf.mxu0
  %v2847 = vadd.f32 0.0, %v2846
  %2848 = vdwg.mxu0
  %2849 = vmatpush.bf16.msra.mxu0 %v2237
  %2850 = vmatpush.bf16.msra.mxu0 %v2213
  %2851 = vmatpush.bf16.msra.mxu0 %v2189
  %2852 = vmatpush.bf16.msra.mxu0 %v2165
  %2853 = vmatpush.bf16.msra.mxu0 %v2141
  %2854 = vmatpush.bf16.msra.mxu0 %v2117
  %2855 = vmatpush.bf16.msra.mxu0 %v2093
  %2856 = vmatpush.bf16.msra.mxu0 %v2069
  %2857 = vmatmul.bf16.gmra.mxu0 %v1277
  %v2858 = vpop.f32.mrf.mxu0
  %v2859 = vadd.f32 0.0, %v2858
  %v2860 = vpop.f32.mrf.mxu0
  %v2861 = vadd.f32 0.0, %v2860
  %2862 = vmatmul.bf16.gmra.mxu0 %v1278
  %v2863 = vpop.f32.mrf.mxu0
  %v2864 = vadd.f32 0.0, %v2863
  %v2865 = vpop.f32.mrf.mxu0
  %v2866 = vadd.f32 0.0, %v2865
  %2867 = vdwg.mxu0
  %2868 = vmatpush.bf16.msra.mxu0 %v2238
  %2869 = vmatpush.bf16.msra.mxu0 %v2214
  %2870 = vmatpush.bf16.msra.mxu0 %v2190
  %2871 = vmatpush.bf16.msra.mxu0 %v2166
  %2872 = vmatpush.bf16.msra.mxu0 %v2142
  %2873 = vmatpush.bf16.msra.mxu0 %v2118
  %2874 = vmatpush.bf16.msra.mxu0 %v2094
  %2875 = vmatpush.bf16.msra.mxu0 %v2070
  %2876 = vmatmul.bf16.gmra.mxu0 %v1277
  %v2877 = vpop.f32.mrf.mxu0
  %v2878 = vadd.f32 0.0, %v2877
  %v2879 = vpop.f32.mrf.mxu0
  %v2880 = vadd.f32 0.0, %v2879
  %2881 = vmatmul.bf16.gmra.mxu0 %v1278
  %v2882 = vpop.f32.mrf.mxu0
  %v2883 = vadd.f32 0.0, %v2882
  %v2884 = vpop.f32.mrf.mxu0
  %v2885 = vadd.f32 0.0, %v2884
  %2886 = vdwg.mxu0
  %v2887 = vpack.c.bf16 %v2460, %v2441
  %v2888 = vpack.c.bf16 %v2498, %v2479
  %v2889 = vpack.c.bf16 %v2536, %v2517
  %v2890 = vpack.c.bf16 %v2574, %v2555
  %v2891 = vpack.c.bf16 %v2612, %v2593
  %v2892 = vpack.c.bf16 %v2650, %v2631
  %v2893 = vpack.c.bf16 %v2688, %v2669
  %v2894 = vpack.c.bf16 %v2726, %v2707
  %v2895 = vpack.c.bf16 %v2764, %v2745
  %v2896 = vpack.c.bf16 %v2802, %v2783
  %v2897 = vpack.c.bf16 %v2840, %v2821
  %v2898 = vpack.c.bf16 %v2878, %v2859
  %v2899 = vpack.c.bf16 %v2462, %v2443
  %v2900 = vpack.c.bf16 %v2500, %v2481
  %v2901 = vpack.c.bf16 %v2538, %v2519
  %v2902 = vpack.c.bf16 %v2576, %v2557
  %v2903 = vpack.c.bf16 %v2614, %v2595
  %v2904 = vpack.c.bf16 %v2652, %v2633
  %v2905 = vpack.c.bf16 %v2690, %v2671
  %v2906 = vpack.c.bf16 %v2728, %v2709
  %v2907 = vpack.c.bf16 %v2766, %v2747
  %v2908 = vpack.c.bf16 %v2804, %v2785
  %v2909 = vpack.c.bf16 %v2842, %v2823
  %v2910 = vpack.c.bf16 %v2880, %v2861
  %v2911 = vpack.c.bf16 %v2465, %v2446
  %v2912 = vpack.c.bf16 %v2503, %v2484
  %v2913 = vpack.c.bf16 %v2541, %v2522
  %v2914 = vpack.c.bf16 %v2579, %v2560
  %v2915 = vpack.c.bf16 %v2617, %v2598
  %v2916 = vpack.c.bf16 %v2655, %v2636
  %v2917 = vpack.c.bf16 %v2693, %v2674
  %v2918 = vpack.c.bf16 %v2731, %v2712
  %v2919 = vpack.c.bf16 %v2769, %v2750
  %v2920 = vpack.c.bf16 %v2807, %v2788
  %v2921 = vpack.c.bf16 %v2845, %v2826
  %v2922 = vpack.c.bf16 %v2883, %v2864
  %v2923 = vpack.c.bf16 %v2467, %v2448
  %v2924 = vpack.c.bf16 %v2505, %v2486
  %v2925 = vpack.c.bf16 %v2543, %v2524
  %v2926 = vpack.c.bf16 %v2581, %v2562
  %v2927 = vpack.c.bf16 %v2619, %v2600
  %v2928 = vpack.c.bf16 %v2657, %v2638
  %v2929 = vpack.c.bf16 %v2695, %v2676
  %v2930 = vpack.c.bf16 %v2733, %v2714
  %v2931 = vpack.c.bf16 %v2771, %v2752
  %v2932 = vpack.c.bf16 %v2809, %v2790
  %v2933 = vpack.c.bf16 %v2847, %v2828
  %v2934 = vpack.c.bf16 %v2885, %v2866
  %2935 = vst [vmem:[%s11] sm:$0xff] %v2887
  %2936 = vst [vmem:[%s11 + $0x8] sm:$0xff] %v2888
  %2937 = vst [vmem:[%s11 + $0x10] sm:$0xff] %v2889
  %2938 = vst [vmem:[%s11 + $0x18] sm:$0xff] %v2890
  %2939 = vst [vmem:[%s11 + $0x20] sm:$0xff] %v2891
  %2940 = vst [vmem:[%s11 + $0x28] sm:$0xff] %v2892
  %2941 = vst [vmem:[%s11 + $0x30] sm:$0xff] %v2893
  %2942 = vst [vmem:[%s11 + $0x38] sm:$0xff] %v2894
  %2943 = vst [vmem:[%s11 + $0x40] sm:$0xff] %v2895
  %2944 = vst [vmem:[%s11 + $0x48] sm:$0xff] %v2896
  %2945 = vst [vmem:[%s11 + $0x50] sm:$0xff] %v2897
  %2946 = vst [vmem:[%s11 + $0x58] sm:$0xff] %v2898
  %2947 = vst [vmem:[%s11 + $0x60] sm:$0xff] %v2899
  %2948 = vst [vmem:[%s11 + $0x68] sm:$0xff] %v2900
  %2949 = vst [vmem:[%s11 + $0x70] sm:$0xff] %v2901
  %2950 = vst [vmem:[%s11 + $0x78] sm:$0xff] %v2902
  %2951 = vst [vmem:[%s11 + $0x80] sm:$0xff] %v2903
  %2952 = vst [vmem:[%s11 + $0x88] sm:$0xff] %v2904
  %2953 = vst [vmem:[%s11 + $0x90] sm:$0xff] %v2905
  %2954 = vst [vmem:[%s11 + $0x98] sm:$0xff] %v2906
  %2955 = vst [vmem:[%s11 + $0xa0] sm:$0xff] %v2907
  %2956 = vst [vmem:[%s11 + $0xa8] sm:$0xff] %v2908
  %2957 = vst [vmem:[%s11 + $0xb0] sm:$0xff] %v2909
  %2958 = vst [vmem:[%s11 + $0xb8] sm:$0xff] %v2910
  %2959 = vst [vmem:[%s11 + $0xc0] sm:$0xff] %v2911
  %2960 = vst [vmem:[%s11 + $0xc8] sm:$0xff] %v2912
  %2961 = vst [vmem:[%s11 + $0xd0] sm:$0xff] %v2913
  %2962 = vst [vmem:[%s11 + $0xd8] sm:$0xff] %v2914
  %2963 = vst [vmem:[%s11 + $0xe0] sm:$0xff] %v2915
  %2964 = vst [vmem:[%s11 + $0xe8] sm:$0xff] %v2916
  %2965 = vst [vmem:[%s11 + $0xf0] sm:$0xff] %v2917
  %2966 = vst [vmem:[%s11 + $0xf8] sm:$0xff] %v2918
  %2967 = vst [vmem:[%s11 + $0x100] sm:$0xff] %v2919
  %2968 = vst [vmem:[%s11 + $0x108] sm:$0xff] %v2920
  %2969 = vst [vmem:[%s11 + $0x110] sm:$0xff] %v2921
  %2970 = vst [vmem:[%s11 + $0x118] sm:$0xff] %v2922
  %2971 = vst [vmem:[%s11 + $0x120] sm:$0xff] %v2923
  %2972 = vst [vmem:[%s11 + $0x128] sm:$0xff] %v2924
  %2973 = vst [vmem:[%s11 + $0x130] sm:$0xff] %v2925
  %2974 = vst [vmem:[%s11 + $0x138] sm:$0xff] %v2926
  %2975 = vst [vmem:[%s11 + $0x140] sm:$0xff] %v2927
  %2976 = vst [vmem:[%s11 + $0x148] sm:$0xff] %v2928
  %2977 = vst [vmem:[%s11 + $0x150] sm:$0xff] %v2929
  %2978 = vst [vmem:[%s11 + $0x158] sm:$0xff] %v2930
  %2979 = vst [vmem:[%s11 + $0x160] sm:$0xff] %v2931
  %2980 = vst [vmem:[%s11 + $0x168] sm:$0xff] %v2932
  %2981 = vst [vmem:[%s11 + $0x170] sm:$0xff] %v2933
  %2982 = vst [vmem:[%s11 + $0x178] sm:$0xff] %v2934
  // Predicated region
  $region42: #{transformer_forward.7} parent=0 // pred_check
    _
  $region43: #{transformer_forward.7} parent=0 // pred_check_branch
    %2984 = sbr.rel (0) target = $region45
  $region44: #{transformer_forward.7} parent=0 // pred_region
    _
  $region45: #{transformer_forward.7} parent=0 // pred_fallthru
    _
  // Predicated region
  $region46: #{transformer_forward.7} parent=0 // pred_check
    _
  $region47: #{transformer_forward.7} parent=0 // pred_check_branch
    %2986 = sbr.rel (0) target = $region49
  $region48: #{transformer_forward.7} parent=0 // pred_region
    _
  $region49: #{transformer_forward.7} parent=0 // pred_fallthru
    _
  // Predicated region
  $region50: #{transformer_forward.7} parent=0 // pred_check
    _
  $region51: #{transformer_forward.7} parent=0 // pred_check_branch
    %2988 = sbr.rel (0) target = $region53
  $region52: #{transformer_forward.7} parent=0 // pred_region
    _
  $region53: #{transformer_forward.7} parent=0 // pred_fallthru
    _
  // Predicated region
  $region54: #{transformer_forward.7} parent=0 // pred_check
    _
  $region55: #{transformer_forward.7} parent=0 // pred_check_branch
    %2990 = sbr.rel (0) target = $region57
  $region56: #{transformer_forward.7} parent=0 // pred_region
    _
  $region57: #{transformer_forward.7} parent=0 // pred_fallthru
    _

</llo_original>
